<compile_context>
chip_gen: v6e
topology: v6e:2x2x1
jax: 0.10.0
libtpu: 0.0.40
codegen_flags: <defaults>
</compile_context>

<pallas_src>
import functools

import jax
import jax.numpy as jnp
from jax.experimental import pallas as pl
from jax.experimental.pallas import tpu as pltpu


def _round_up(x, m):
    return (x + m - 1) // m * m


def _pad_tiles(K, N):
    """Choose K/N padding and tile sizes (256-wide where shapes allow)."""
    Kp128 = _round_up(max(K, 1), 128)
    tk = min(256, Kp128)
    Kp = _round_up(K, tk)
    Np = _round_up(max(N, 1), 128)
    tn = min(256, Np)
    return Kp, tk, Np, tn


# ---------------------------------------------------------------------------
# Pallas kernels: tiled bf16 matmul, f32 accumulation in the resident output
# block, fused BN-scale/bias (+ optional residual) + ReLU epilogue.
# ---------------------------------------------------------------------------
def _mm_kernel(x_ref, w_ref, s_ref, b_ref, o_ref, *, relu):
    k = pl.program_id(2)

    @pl.when(k == 0)
    def _():
        o_ref[...] = jnp.zeros_like(o_ref)

    o_ref[...] += jnp.dot(x_ref[...], w_ref[...],
                          preferred_element_type=jnp.float32)

    @pl.when(k == pl.num_programs(2) - 1)
    def _():
        y = o_ref[...] * s_ref[...] + b_ref[...]
        if relu:
            y = jnp.maximum(y, 0.0)
        o_ref[...] = y


def _mm_res_kernel(x_ref, w_ref, s_ref, b_ref, r_ref, o_ref, *, relu):
    k = pl.program_id(2)

    @pl.when(k == 0)
    def _():
        o_ref[...] = jnp.zeros_like(o_ref)

    o_ref[...] += jnp.dot(x_ref[...], w_ref[...],
                          preferred_element_type=jnp.float32)

    @pl.when(k == pl.num_programs(2) - 1)
    def _():
        y = o_ref[...] * s_ref[...] + b_ref[...] + r_ref[...]
        if relu:
            y = jnp.maximum(y, 0.0)
        o_ref[...] = y


def fused_matmul_padded(xp, wp, sp, bp, rp=None, *, relu, tm, tk, tn):
    """xp:(Mp,Kp) bf16, wp:(Kp,Np) bf16, sp/bp:(1,Np) f32, rp:(Mp,Np) f32."""
    Mp, Kp = xp.shape
    Np = wp.shape[1]
    grid = (Mp // tm, Np // tn, Kp // tk)

    in_specs = [
        pl.BlockSpec((tm, tk), lambda i, j, k: (i, k)),   # activation patches
        pl.BlockSpec((tk, tn), lambda i, j, k: (k, j)),   # weights
        pl.BlockSpec((1, tn), lambda i, j, k: (0, j)),    # bn scale
        pl.BlockSpec((1, tn), lambda i, j, k: (0, j)),    # bn bias
    ]
    args = [xp, wp, sp, bp]
    if rp is not None:
        in_specs.append(pl.BlockSpec((tm, tn), lambda i, j, k: (i, j)))
        args.append(rp)
        kernel = functools.partial(_mm_res_kernel, relu=relu)
    else:
        kernel = functools.partial(_mm_kernel, relu=relu)

    return pl.pallas_call(
        kernel,
        out_shape=jax.ShapeDtypeStruct((Mp, Np), jnp.float32),
        grid_spec=pltpu.PrefetchScalarGridSpec(
            num_scalar_prefetch=0,
            grid=grid,
            in_specs=in_specs,
            out_specs=pl.BlockSpec((tm, tn), lambda i, j, k: (i, j)),
        ),
        compiler_params=pltpu.CompilerParams(
            dimension_semantics=("parallel", "parallel", "arbitrary"),
            vmem_limit_bytes=64 * 1024 * 1024,
        ),
    )(*args)


# ---------------------------------------------------------------------------
# Glue: im2col (directly into padded bf16 buffer) + conv wrapper + blocks
# ---------------------------------------------------------------------------
def _im2col3x3_padded(x, stride, Mp, Kp):
    """x:(N,H,W,C) f32 -> padded bf16 patch matrix (Mp,Kp); pad=1, k=3."""
    N, H, W, C = x.shape
    xpad = jnp.pad(x, ((0, 0), (1, 1), (1, 1), (0, 0)))
    Ho = (H + 2 - 3) // stride + 1
    Wo = (W + 2 - 3) // stride + 1
    M = N * Ho * Wo
    out = jnp.zeros((Mp, Kp), jnp.bfloat16)
    idx = 0
    for dy in range(3):
        for dx in range(3):
            sl = xpad[:, dy:dy + stride * (Ho - 1) + 1:stride,
                      dx:dx + stride * (Wo - 1) + 1:stride, :]
            out = out.at[:M, idx * C:(idx + 1) * C].set(
                sl.reshape(M, C).astype(jnp.bfloat16))
            idx += 1
    return out, M, Ho, Wo


def conv3x3_bn(x, cw, stride=1, residual=None, relu=True):
    """x:(N,H,W,Cin) f32 -> (N,Ho,Wo,Cout) f32, using pre-padded bf16 weights."""
    N, H, W, _ = x.shape
    Ho = (H + 2 - 3) // stride + 1
    Wo = (W + 2 - 3) // stride + 1
    M = N * Ho * Wo
    tm = min(256, _round_up(M, 8))
    Mp = _round_up(M, tm)
    xp, _, _, _ = _im2col3x3_padded(x, stride, Mp, cw['Kp'])
    cout, Np = cw['cout'], cw['Np']
    if residual is not None:
        rm = residual.reshape(M, cout).astype(jnp.float32)
        rp = jnp.pad(rm, ((0, Mp - M), (0, Np - cout)))
    else:
        rp = None
    out = fused_matmul_padded(xp, cw['w'], cw['s'], cw['b'], rp, relu=relu,
                              tm=tm, tk=cw['tk'], tn=cw['tn'])
    return out[:M, :cout].reshape(N, Ho, Wo, cout)


def residual_block(x, blk):
    out = conv3x3_bn(x, blk['conv1'], stride=blk['stride'], relu=True)
    if 'down' in blk:  # downsample: conv3x3(stride) + BN, no relu (per spec)
        res = conv3x3_bn(x, blk['down'], stride=blk['stride'], relu=False)
    else:
        res = x
    # out = relu(bn2(conv2(out)) + residual)  -- residual + relu fused in kernel
    out = conv3x3_bn(out, blk['conv2'], stride=1, residual=res, relu=True)
    return out


def resnet_forward(x_nchw, params):
    x = jnp.transpose(x_nchw, (0, 2, 3, 1)).astype(jnp.float32)  # NCHW -> NHWC
    # stem: conv3x3(3,16) + BN + ReLU
    x = conv3x3_bn(x, params['stem'], stride=1, relu=True)
    for blocks in params['stages']:
        for blk in blocks:
            x = residual_block(x, blk)
    # AdaptiveAvgPool2d((1,1)): explicit spatial mean (tiny VPU reduction),
    # then Linear(128, num_classes) through the same fused Pallas matmul.
    pooled = jnp.mean(x, axis=(1, 2))  # (N, C) f32
    fc = params['fc']
    N = pooled.shape[0]
    Mp = _round_up(N, 8)
    xp = jnp.zeros((Mp, fc['Kp']), jnp.bfloat16).at[:N, :fc['cin']].set(
        pooled.astype(jnp.bfloat16))
    out = fused_matmul_padded(xp, fc['w'], fc['s'], fc['b'], None, relu=False,
                              tm=Mp, tk=fc['tk'], tn=fc['tn'])
    return out[:N, :fc['cout']]


# ---------------------------------------------------------------------------
# Deterministic parameter initialization: weights / BN are padded + cast to
# their kernel layout ONCE here (no per-forward padding).
# ---------------------------------------------------------------------------
def _bn_fold(key, c):
    k1, k2, k3, k4 = jax.random.split(key, 4)
    gamma = 1.0 + 0.1 * jax.random.normal(k1, (c,), jnp.float32)
    beta = 0.1 * jax.random.normal(k2, (c,), jnp.float32)
    mean = 0.1 * jax.random.normal(k3, (c,), jnp.float32)
    var = 0.9 + 0.1 * jnp.abs(jax.random.normal(k4, (c,), jnp.float32))
    eps = 1e-5
    scale = gamma / jnp.sqrt(var + eps)
    bias = beta - mean * scale
    return scale, bias


def _prep_conv_bn(kw, kbn, cin, cout):
    K = 9 * cin
    Kp, tk, Np, tn = _pad_tiles(K, cout)
    w = jax.random.normal(kw, (3, 3, cin, cout), jnp.float32)
    w = (w * (1.0 / jnp.sqrt(9.0 * cin))).reshape(K, cout)  # (ky,kx,cin) order
    wp = jnp.zeros((Kp, Np), jnp.bfloat16).at[:K, :cout].set(
        w.astype(jnp.bfloat16))
    scale, bias = _bn_fold(kbn, cout)
    sp = jnp.zeros((1, Np), jnp.float32).at[0, :cout].set(scale)
    bp = jnp.zeros((1, Np), jnp.float32).at[0, :cout].set(bias)
    return {'w': wp, 's': sp, 'b': bp, 'Kp': Kp, 'tk': tk, 'Np': Np, 'tn': tn,
            'cout': cout}


def _prep_fc(key, cin, num_classes):
    Kp, tk, Np, tn = _pad_tiles(cin, num_classes)
    kw, kb = jax.random.split(key)
    w = jax.random.normal(kw, (cin, num_classes), jnp.float32) / jnp.sqrt(
        float(cin))
    b = 0.1 * jax.random.normal(kb, (num_classes,), jnp.float32)
    wp = jnp.zeros((Kp, Np), jnp.bfloat16).at[:cin, :num_classes].set(
        w.astype(jnp.bfloat16))
    sp = jnp.zeros((1, Np), jnp.float32).at[0, :num_classes].set(1.0)
    bp = jnp.zeros((1, Np), jnp.float32).at[0, :num_classes].set(b)
    return {'w': wp, 's': sp, 'b': bp, 'Kp': Kp, 'tk': tk, 'Np': Np, 'tn': tn,
            'cin': cin, 'cout': num_classes}


def init_resnet_params(key, layers, num_classes):
    keys = iter(jax.random.split(key, 512))
    params = {}
    params['stem'] = _prep_conv_bn(next(keys), next(keys), 3, 16)
    in_c = 16
    stages = []
    for out_c, nblocks, stride in zip((16, 32, 64, 128), layers, (1, 2, 2, 2)):
        blocks = []
        for b in range(nblocks):
            s = stride if b == 0 else 1
            blk = {
                'stride': s,
                'conv1': _prep_conv_bn(next(keys), next(keys), in_c, out_c),
                'conv2': _prep_conv_bn(next(keys), next(keys), out_c, out_c),
            }
            if s != 1 or in_c != out_c:
                blk['down'] = _prep_conv_bn(next(keys), next(keys), in_c, out_c)
            blocks.append(blk)
            in_c = out_c
        stages.append(blocks)
    params['stages'] = stages
    params['fc'] = _prep_fc(next(keys), 128, num_classes)
    return params


if __name__ == "__main__":
    key = jax.random.PRNGKey(0)
    kx, kp = jax.random.split(key)
    # PyTorch forward expects NCHW; 3 input channels, small 16x16 spatial.
    x = jax.random.normal(kx, (2, 3, 16, 16), jnp.float32)
    params = init_resnet_params(kp, layers=(1, 1, 1, 1), num_classes=3)
    fwd = jax.jit(lambda inp: resnet_forward(inp, params))
    out = fwd(x)
    jax.block_until_ready(out)
    assert out.shape == (2, 3), out.shape
    print("KERNEL_OK")
</pallas_src>

<mosaic_0001>
module attributes {stable_mosaic.version = 11 : i64} {
  func.func @_mm_kernel(%arg0: i32, %arg1: i32, %arg2: i32, %arg3: memref<256x128xbf16, #tpu.memory_space<vmem>>, %arg4: memref<128x128xbf16, #tpu.memory_space<vmem>>, %arg5: memref<1x128xf32, #tpu.memory_space<vmem>>, %arg6: memref<1x128xf32, #tpu.memory_space<vmem>>, %arg7: memref<256x128xf32, #tpu.memory_space<vmem>>) attributes {dimension_semantics = [#tpu.dimension_semantics<parallel>, #tpu.dimension_semantics<parallel>, #tpu.dimension_semantics<arbitrary>], iteration_bounds = array<i64: 2, 1, 1>, scalar_prefetch = 0 : i64, scratch_operands = 0 : i64, tpu.core_type = #tpu.core_type<tc>, window_params = [{transform_indices = @transform_0, window_bounds = array<i64: 256, 128>}, {transform_indices = @transform_1, window_bounds = array<i64: 128, 128>}, {transform_indices = @transform_2, window_bounds = array<i64: 1, 128>}, {transform_indices = @transform_3, window_bounds = array<i64: 1, 128>}, {transform_indices = @transform_4, window_bounds = array<i64: 256, 128>}]} {
    %c0_i32 = arith.constant 0 : i32
    %0 = arith.cmpi eq, %arg2, %c0_i32 : i32
    %1 = arith.extui %0 : i1 to i32
    %c0_i32_0 = arith.constant 0 : i32
    %2 = arith.cmpi ne, %1, %c0_i32_0 : i32
    scf.if %2 {
      %cst_10 = arith.constant 0.000000e+00 : f32
      %12 = vector.broadcast %cst_10 : f32 to vector<256x128xf32>
      %c0_11 = arith.constant 0 : index
      %c0_12 = arith.constant 0 : index
      %13 = vector.load %arg7[%c0_11, %c0_12] : memref<256x128xf32, #tpu.memory_space<vmem>>, vector<256x128xf32>
      tpu.vector_store %arg7[%c0_11, %c0_12], %12 {strides = array<i32>} : memref<256x128xf32, #tpu.memory_space<vmem>>, vector<256x128xf32>,
    } else {
    }
    %c0 = arith.constant 0 : index
    %c0_1 = arith.constant 0 : index
    %3 = vector.load %arg7[%c0, %c0_1] : memref<256x128xf32, #tpu.memory_space<vmem>>, vector<256x128xf32>
    %c0_2 = arith.constant 0 : index
    %c0_3 = arith.constant 0 : index
    %4 = vector.load %arg3[%c0_2, %c0_3] : memref<256x128xbf16, #tpu.memory_space<vmem>>, vector<256x128xbf16>
    %c0_4 = arith.constant 0 : index
    %c0_5 = arith.constant 0 : index
    %5 = vector.load %arg4[%c0_4, %c0_5] : memref<128x128xbf16, #tpu.memory_space<vmem>>, vector<128x128xbf16>
    %cst = arith.constant dense<0.000000e+00> : vector<256x128xf32>
    %6 = tpu.matmul %4, %5, %cst {dimension_numbers = #tpu.dot_dimension_numbers<[1], [0], [0], [1], [0, 0, 1, 1], [], []>} : vector<256x128xbf16>, vector<128x128xbf16>, vector<256x128xf32> -> vector<256x128xf32>
    %7 = arith.addf %3, %6 : vector<256x128xf32>
    %c0_6 = arith.constant 0 : index
    %c0_7 = arith.constant 0 : index
    %8 = vector.load %arg7[%c0_6, %c0_7] : memref<256x128xf32, #tpu.memory_space<vmem>>, vector<256x128xf32>
    tpu.vector_store %arg7[%c0_6, %c0_7], %7 {strides = array<i32>} : memref<256x128xf32, #tpu.memory_space<vmem>>, vector<256x128xf32>,
    %c0_i32_8 = arith.constant 0 : i32
    %9 = arith.cmpi eq, %arg2, %c0_i32_8 : i32
    %10 = arith.extui %9 : i1 to i32
    %c0_i32_9 = arith.constant 0 : i32
    %11 = arith.cmpi ne, %10, %c0_i32_9 : i32
    scf.if %11 {
      %c0_10 = arith.constant 0 : index
      %c0_11 = arith.constant 0 : index
      %12 = vector.load %arg7[%c0_10, %c0_11] : memref<256x128xf32, #tpu.memory_space<vmem>>, vector<256x128xf32>
      %c0_12 = arith.constant 0 : index
      %c0_13 = arith.constant 0 : index
      %13 = vector.load %arg5[%c0_12, %c0_13] : memref<1x128xf32, #tpu.memory_space<vmem>>, vector<1x128xf32>
      %14 = vector.broadcast %13 : vector<1x128xf32> to vector<256x128xf32>
      %15 = arith.mulf %12, %14 : vector<256x128xf32>
      %c0_14 = arith.constant 0 : index
      %c0_15 = arith.constant 0 : index
      %16 = vector.load %arg6[%c0_14, %c0_15] : memref<1x128xf32, #tpu.memory_space<vmem>>, vector<1x128xf32>
      %17 = vector.broadcast %16 : vector<1x128xf32> to vector<256x128xf32>
      %18 = arith.addf %15, %17 : vector<256x128xf32>
      %cst_16 = arith.constant 0.000000e+00 : f32
      %19 = vector.broadcast %cst_16 : f32 to vector<256x128xf32>
      %20 = arith.maximumf %18, %19 : vector<256x128xf32>
      %c0_17 = arith.constant 0 : index
      %c0_18 = arith.constant 0 : index
      %21 = vector.load %arg7[%c0_17, %c0_18] : memref<256x128xf32, #tpu.memory_space<vmem>>, vector<256x128xf32>
      tpu.vector_store %arg7[%c0_17, %c0_18], %20 {strides = array<i32>} : memref<256x128xf32, #tpu.memory_space<vmem>>, vector<256x128xf32>,
    } else {
    }
    return
  }
  func.func @transform_0(%arg0: i32, %arg1: i32, %arg2: i32) -> (i32, i32) {
    %c0_i32 = arith.constant 0 : i32
    return %arg0, %arg2 : i32, i32
  }
  func.func @transform_1(%arg0: i32, %arg1: i32, %arg2: i32) -> (i32, i32) {
    %c0_i32 = arith.constant 0 : i32
    return %arg2, %arg1 : i32, i32
  }
  func.func @transform_2(%arg0: i32, %arg1: i32, %arg2: i32) -> (i32, i32) {
    %c0_i32 = arith.constant 0 : i32
    %c0_i32_0 = arith.constant 0 : i32
    return %c0_i32, %arg1 : i32, i32
  }
  func.func @transform_3(%arg0: i32, %arg1: i32, %arg2: i32) -> (i32, i32) {
    %c0_i32 = arith.constant 0 : i32
    %c0_i32_0 = arith.constant 0 : i32
    return %c0_i32, %arg1 : i32, i32
  }
  func.func @transform_4(%arg0: i32, %arg1: i32, %arg2: i32) -> (i32, i32) {
    %c0_i32 = arith.constant 0 : i32
    return %arg0, %arg1 : i32, i32
  }
}

module attributes {stable_mosaic.version = 11 : i64} {
  func.func @_mm_kernel(%arg0: i32, %arg1: i32, %arg2: i32, %arg3: memref<256x256xbf16, #tpu.memory_space<vmem>>, %arg4: memref<256x128xbf16, #tpu.memory_space<vmem>>, %arg5: memref<1x128xf32, #tpu.memory_space<vmem>>, %arg6: memref<1x128xf32, #tpu.memory_space<vmem>>, %arg7: memref<256x128xf32, #tpu.memory_space<vmem>>) attributes {dimension_semantics = [#tpu.dimension_semantics<parallel>, #tpu.dimension_semantics<parallel>, #tpu.dimension_semantics<arbitrary>], iteration_bounds = array<i64: 2, 1, 1>, scalar_prefetch = 0 : i64, scratch_operands = 0 : i64, tpu.core_type = #tpu.core_type<tc>, window_params = [{transform_indices = @transform_0, window_bounds = array<i64: 256, 256>}, {transform_indices = @transform_1, window_bounds = array<i64: 256, 128>}, {transform_indices = @transform_2, window_bounds = array<i64: 1, 128>}, {transform_indices = @transform_3, window_bounds = array<i64: 1, 128>}, {transform_indices = @transform_4, window_bounds = array<i64: 256, 128>}]} {
    %c0_i32 = arith.constant 0 : i32
    %0 = arith.cmpi eq, %arg2, %c0_i32 : i32
    %1 = arith.extui %0 : i1 to i32
    %c0_i32_0 = arith.constant 0 : i32
    %2 = arith.cmpi ne, %1, %c0_i32_0 : i32
    scf.if %2 {
      %cst_10 = arith.constant 0.000000e+00 : f32
      %12 = vector.broadcast %cst_10 : f32 to vector<256x128xf32>
      %c0_11 = arith.constant 0 : index
      %c0_12 = arith.constant 0 : index
      %13 = vector.load %arg7[%c0_11, %c0_12] : memref<256x128xf32, #tpu.memory_space<vmem>>, vector<256x128xf32>
      tpu.vector_store %arg7[%c0_11, %c0_12], %12 {strides = array<i32>} : memref<256x128xf32, #tpu.memory_space<vmem>>, vector<256x128xf32>,
    } else {
    }
    %c0 = arith.constant 0 : index
    %c0_1 = arith.constant 0 : index
    %3 = vector.load %arg7[%c0, %c0_1] : memref<256x128xf32, #tpu.memory_space<vmem>>, vector<256x128xf32>
    %c0_2 = arith.constant 0 : index
    %c0_3 = arith.constant 0 : index
    %4 = vector.load %arg3[%c0_2, %c0_3] : memref<256x256xbf16, #tpu.memory_space<vmem>>, vector<256x256xbf16>
    %c0_4 = arith.constant 0 : index
    %c0_5 = arith.constant 0 : index
    %5 = vector.load %arg4[%c0_4, %c0_5] : memref<256x128xbf16, #tpu.memory_space<vmem>>, vector<256x128xbf16>
    %cst = arith.constant dense<0.000000e+00> : vector<256x128xf32>
    %6 = tpu.matmul %4, %5, %cst {dimension_numbers = #tpu.dot_dimension_numbers<[1], [0], [0], [1], [0, 0, 1, 1], [], []>} : vector<256x256xbf16>, vector<256x128xbf16>, vector<256x128xf32> -> vector<256x128xf32>
    %7 = arith.addf %3, %6 : vector<256x128xf32>
    %c0_6 = arith.constant 0 : index
    %c0_7 = arith.constant 0 : index
    %8 = vector.load %arg7[%c0_6, %c0_7] : memref<256x128xf32, #tpu.memory_space<vmem>>, vector<256x128xf32>
    tpu.vector_store %arg7[%c0_6, %c0_7], %7 {strides = array<i32>} : memref<256x128xf32, #tpu.memory_space<vmem>>, vector<256x128xf32>,
    %c0_i32_8 = arith.constant 0 : i32
    %9 = arith.cmpi eq, %arg2, %c0_i32_8 : i32
    %10 = arith.extui %9 : i1 to i32
    %c0_i32_9 = arith.constant 0 : i32
    %11 = arith.cmpi ne, %10, %c0_i32_9 : i32
    scf.if %11 {
      %c0_10 = arith.constant 0 : index
      %c0_11 = arith.constant 0 : index
      %12 = vector.load %arg7[%c0_10, %c0_11] : memref<256x128xf32, #tpu.memory_space<vmem>>, vector<256x128xf32>
      %c0_12 = arith.constant 0 : index
      %c0_13 = arith.constant 0 : index
      %13 = vector.load %arg5[%c0_12, %c0_13] : memref<1x128xf32, #tpu.memory_space<vmem>>, vector<1x128xf32>
      %14 = vector.broadcast %13 : vector<1x128xf32> to vector<256x128xf32>
      %15 = arith.mulf %12, %14 : vector<256x128xf32>
      %c0_14 = arith.constant 0 : index
      %c0_15 = arith.constant 0 : index
      %16 = vector.load %arg6[%c0_14, %c0_15] : memref<1x128xf32, #tpu.memory_space<vmem>>, vector<1x128xf32>
      %17 = vector.broadcast %16 : vector<1x128xf32> to vector<256x128xf32>
      %18 = arith.addf %15, %17 : vector<256x128xf32>
      %cst_16 = arith.constant 0.000000e+00 : f32
      %19 = vector.broadcast %cst_16 : f32 to vector<256x128xf32>
      %20 = arith.maximumf %18, %19 : vector<256x128xf32>
      %c0_17 = arith.constant 0 : index
      %c0_18 = arith.constant 0 : index
      %21 = vector.load %arg7[%c0_17, %c0_18] : memref<256x128xf32, #tpu.memory_space<vmem>>, vector<256x128xf32>
      tpu.vector_store %arg7[%c0_17, %c0_18], %20 {strides = array<i32>} : memref<256x128xf32, #tpu.memory_space<vmem>>, vector<256x128xf32>,
    } else {
    }
    return
  }
  func.func @transform_0(%arg0: i32, %arg1: i32, %arg2: i32) -> (i32, i32) {
    %c0_i32 = arith.constant 0 : i32
    return %arg0, %arg2 : i32, i32
  }
  func.func @transform_1(%arg0: i32, %arg1: i32, %arg2: i32) -> (i32, i32) {
    %c0_i32 = arith.constant 0 : i32
    return %arg2, %arg1 : i32, i32
  }
  func.func @transform_2(%arg0: i32, %arg1: i32, %arg2: i32) -> (i32, i32) {
    %c0_i32 = arith.constant 0 : i32
    %c0_i32_0 = arith.constant 0 : i32
    return %c0_i32, %arg1 : i32, i32
  }
  func.func @transform_3(%arg0: i32, %arg1: i32, %arg2: i32) -> (i32, i32) {
    %c0_i32 = arith.constant 0 : i32
    %c0_i32_0 = arith.constant 0 : i32
    return %c0_i32, %arg1 : i32, i32
  }
  func.func @transform_4(%arg0: i32, %arg1: i32, %arg2: i32) -> (i32, i32) {
    %c0_i32 = arith.constant 0 : i32
    return %arg0, %arg1 : i32, i32
  }
}

module attributes {stable_mosaic.version = 11 : i64} {
  func.func @_mm_res_kernel(%arg0: i32, %arg1: i32, %arg2: i32, %arg3: memref<256x256xbf16, #tpu.memory_space<vmem>>, %arg4: memref<256x128xbf16, #tpu.memory_space<vmem>>, %arg5: memref<1x128xf32, #tpu.memory_space<vmem>>, %arg6: memref<1x128xf32, #tpu.memory_space<vmem>>, %arg7: memref<256x128xf32, #tpu.memory_space<vmem>>, %arg8: memref<256x128xf32, #tpu.memory_space<vmem>>) attributes {dimension_semantics = [#tpu.dimension_semantics<parallel>, #tpu.dimension_semantics<parallel>, #tpu.dimension_semantics<arbitrary>], iteration_bounds = array<i64: 2, 1, 1>, scalar_prefetch = 0 : i64, scratch_operands = 0 : i64, tpu.core_type = #tpu.core_type<tc>, window_params = [{transform_indices = @transform_0, window_bounds = array<i64: 256, 256>}, {transform_indices = @transform_1, window_bounds = array<i64: 256, 128>}, {transform_indices = @transform_2, window_bounds = array<i64: 1, 128>}, {transform_indices = @transform_3, window_bounds = array<i64: 1, 128>}, {transform_indices = @transform_4, window_bounds = array<i64: 256, 128>}, {transform_indices = @transform_5, window_bounds = array<i64: 256, 128>}]} {
    %c0_i32 = arith.constant 0 : i32
    %0 = arith.cmpi eq, %arg2, %c0_i32 : i32
    %1 = arith.extui %0 : i1 to i32
    %c0_i32_0 = arith.constant 0 : i32
    %2 = arith.cmpi ne, %1, %c0_i32_0 : i32
    scf.if %2 {
      %cst_10 = arith.constant 0.000000e+00 : f32
      %12 = vector.broadcast %cst_10 : f32 to vector<256x128xf32>
      %c0_11 = arith.constant 0 : index
      %c0_12 = arith.constant 0 : index
      %13 = vector.load %arg8[%c0_11, %c0_12] : memref<256x128xf32, #tpu.memory_space<vmem>>, vector<256x128xf32>
      tpu.vector_store %arg8[%c0_11, %c0_12], %12 {strides = array<i32>} : memref<256x128xf32, #tpu.memory_space<vmem>>, vector<256x128xf32>,
    } else {
    }
    %c0 = arith.constant 0 : index
    %c0_1 = arith.constant 0 : index
    %3 = vector.load %arg8[%c0, %c0_1] : memref<256x128xf32, #tpu.memory_space<vmem>>, vector<256x128xf32>
    %c0_2 = arith.constant 0 : index
    %c0_3 = arith.constant 0 : index
    %4 = vector.load %arg3[%c0_2, %c0_3] : memref<256x256xbf16, #tpu.memory_space<vmem>>, vector<256x256xbf16>
    %c0_4 = arith.constant 0 : index
    %c0_5 = arith.constant 0 : index
    %5 = vector.load %arg4[%c0_4, %c0_5] : memref<256x128xbf16, #tpu.memory_space<vmem>>, vector<256x128xbf16>
    %cst = arith.constant dense<0.000000e+00> : vector<256x128xf32>
    %6 = tpu.matmul %4, %5, %cst {dimension_numbers = #tpu.dot_dimension_numbers<[1], [0], [0], [1], [0, 0, 1, 1], [], []>} : vector<256x256xbf16>, vector<256x128xbf16>, vector<256x128xf32> -> vector<256x128xf32>
    %7 = arith.addf %3, %6 : vector<256x128xf32>
    %c0_6 = arith.constant 0 : index
    %c0_7 = arith.constant 0 : index
    %8 = vector.load %arg8[%c0_6, %c0_7] : memref<256x128xf32, #tpu.memory_space<vmem>>, vector<256x128xf32>
    tpu.vector_store %arg8[%c0_6, %c0_7], %7 {strides = array<i32>} : memref<256x128xf32, #tpu.memory_space<vmem>>, vector<256x128xf32>,
    %c0_i32_8 = arith.constant 0 : i32
    %9 = arith.cmpi eq, %arg2, %c0_i32_8 : i32
    %10 = arith.extui %9 : i1 to i32
    %c0_i32_9 = arith.constant 0 : i32
    %11 = arith.cmpi ne, %10, %c0_i32_9 : i32
    scf.if %11 {
      %c0_10 = arith.constant 0 : index
      %c0_11 = arith.constant 0 : index
      %12 = vector.load %arg8[%c0_10, %c0_11] : memref<256x128xf32, #tpu.memory_space<vmem>>, vector<256x128xf32>
      %c0_12 = arith.constant 0 : index
      %c0_13 = arith.constant 0 : index
      %13 = vector.load %arg5[%c0_12, %c0_13] : memref<1x128xf32, #tpu.memory_space<vmem>>, vector<1x128xf32>
      %14 = vector.broadcast %13 : vector<1x128xf32> to vector<256x128xf32>
      %15 = arith.mulf %12, %14 : vector<256x128xf32>
      %c0_14 = arith.constant 0 : index
      %c0_15 = arith.constant 0 : index
      %16 = vector.load %arg6[%c0_14, %c0_15] : memref<1x128xf32, #tpu.memory_space<vmem>>, vector<1x128xf32>
      %17 = vector.broadcast %16 : vector<1x128xf32> to vector<256x128xf32>
      %18 = arith.addf %15, %17 : vector<256x128xf32>
      %c0_16 = arith.constant 0 : index
      %c0_17 = arith.constant 0 : index
      %19 = vector.load %arg7[%c0_16, %c0_17] : memref<256x128xf32, #tpu.memory_space<vmem>>, vector<256x128xf32>
      %20 = arith.addf %18, %19 : vector<256x128xf32>
      %cst_18 = arith.constant 0.000000e+00 : f32
      %21 = vector.broadcast %cst_18 : f32 to vector<256x128xf32>
      %22 = arith.maximumf %20, %21 : vector<256x128xf32>
      %c0_19 = arith.constant 0 : index
      %c0_20 = arith.constant 0 : index
      %23 = vector.load %arg8[%c0_19, %c0_20] : memref<256x128xf32, #tpu.memory_space<vmem>>, vector<256x128xf32>
      tpu.vector_store %arg8[%c0_19, %c0_20], %22 {strides = array<i32>} : memref<256x128xf32, #tpu.memory_space<vmem>>, vector<256x128xf32>,
    } else {
    }
    return
  }
  func.func @transform_0(%arg0: i32, %arg1: i32, %arg2: i32) -> (i32, i32) {
    %c0_i32 = arith.constant 0 : i32
    return %arg0, %arg2 : i32, i32
  }
  func.func @transform_1(%arg0: i32, %arg1: i32, %arg2: i32) -> (i32, i32) {
    %c0_i32 = arith.constant 0 : i32
    return %arg2, %arg1 : i32, i32
  }
  func.func @transform_2(%arg0: i32, %arg1: i32, %arg2: i32) -> (i32, i32) {
    %c0_i32 = arith.constant 0 : i32
    %c0_i32_0 = arith.constant 0 : i32
    return %c0_i32, %arg1 : i32, i32
  }
  func.func @transform_3(%arg0: i32, %arg1: i32, %arg2: i32) -> (i32, i32) {
    %c0_i32 = arith.constant 0 : i32
    %c0_i32_0 = arith.constant 0 : i32
    return %c0_i32, %arg1 : i32, i32
  }
  func.func @transform_4(%arg0: i32, %arg1: i32, %arg2: i32) -> (i32, i32) {
    %c0_i32 = arith.constant 0 : i32
    return %arg0, %arg1 : i32, i32
  }
  func.func @transform_5(%arg0: i32, %arg1: i32, %arg2: i32) -> (i32, i32) {
    %c0_i32 = arith.constant 0 : i32
    return %arg0, %arg1 : i32, i32
  }
}

module attributes {stable_mosaic.version = 11 : i64} {
  func.func @_mm_kernel(%arg0: i32, %arg1: i32, %arg2: i32, %arg3: memref<128x256xbf16, #tpu.memory_space<vmem>>, %arg4: memref<256x128xbf16, #tpu.memory_space<vmem>>, %arg5: memref<1x128xf32, #tpu.memory_space<vmem>>, %arg6: memref<1x128xf32, #tpu.memory_space<vmem>>, %arg7: memref<128x128xf32, #tpu.memory_space<vmem>>) attributes {dimension_semantics = [#tpu.dimension_semantics<parallel>, #tpu.dimension_semantics<parallel>, #tpu.dimension_semantics<arbitrary>], iteration_bounds = array<i64: 1, 1, 1>, scalar_prefetch = 0 : i64, scratch_operands = 0 : i64, tpu.core_type = #tpu.core_type<tc>, window_params = [{transform_indices = @transform_0, window_bounds = array<i64: 128, 256>}, {transform_indices = @transform_1, window_bounds = array<i64: 256, 128>}, {transform_indices = @transform_2, window_bounds = array<i64: 1, 128>}, {transform_indices = @transform_3, window_bounds = array<i64: 1, 128>}, {transform_indices = @transform_4, window_bounds = array<i64: 128, 128>}]} {
    %c0_i32 = arith.constant 0 : i32
    %0 = arith.cmpi eq, %arg2, %c0_i32 : i32
    %1 = arith.extui %0 : i1 to i32
    %c0_i32_0 = arith.constant 0 : i32
    %2 = arith.cmpi ne, %1, %c0_i32_0 : i32
    scf.if %2 {
      %cst_10 = arith.constant 0.000000e+00 : f32
      %12 = vector.broadcast %cst_10 : f32 to vector<128x128xf32>
      %c0_11 = arith.constant 0 : index
      %c0_12 = arith.constant 0 : index
      %13 = vector.load %arg7[%c0_11, %c0_12] : memref<128x128xf32, #tpu.memory_space<vmem>>, vector<128x128xf32>
      tpu.vector_store %arg7[%c0_11, %c0_12], %12 {strides = array<i32>} : memref<128x128xf32, #tpu.memory_space<vmem>>, vector<128x128xf32>,
    } else {
    }
    %c0 = arith.constant 0 : index
    %c0_1 = arith.constant 0 : index
    %3 = vector.load %arg7[%c0, %c0_1] : memref<128x128xf32, #tpu.memory_space<vmem>>, vector<128x128xf32>
    %c0_2 = arith.constant 0 : index
    %c0_3 = arith.constant 0 : index
    %4 = vector.load %arg3[%c0_2, %c0_3] : memref<128x256xbf16, #tpu.memory_space<vmem>>, vector<128x256xbf16>
    %c0_4 = arith.constant 0 : index
    %c0_5 = arith.constant 0 : index
    %5 = vector.load %arg4[%c0_4, %c0_5] : memref<256x128xbf16, #tpu.memory_space<vmem>>, vector<256x128xbf16>
    %cst = arith.constant dense<0.000000e+00> : vector<128x128xf32>
    %6 = tpu.matmul %4, %5, %cst {dimension_numbers = #tpu.dot_dimension_numbers<[1], [0], [0], [1], [0, 0, 1, 1], [], []>} : vector<128x256xbf16>, vector<256x128xbf16>, vector<128x128xf32> -> vector<128x128xf32>
    %7 = arith.addf %3, %6 : vector<128x128xf32>
    %c0_6 = arith.constant 0 : index
    %c0_7 = arith.constant 0 : index
    %8 = vector.load %arg7[%c0_6, %c0_7] : memref<128x128xf32, #tpu.memory_space<vmem>>, vector<128x128xf32>
    tpu.vector_store %arg7[%c0_6, %c0_7], %7 {strides = array<i32>} : memref<128x128xf32, #tpu.memory_space<vmem>>, vector<128x128xf32>,
    %c0_i32_8 = arith.constant 0 : i32
    %9 = arith.cmpi eq, %arg2, %c0_i32_8 : i32
    %10 = arith.extui %9 : i1 to i32
    %c0_i32_9 = arith.constant 0 : i32
    %11 = arith.cmpi ne, %10, %c0_i32_9 : i32
    scf.if %11 {
      %c0_10 = arith.constant 0 : index
      %c0_11 = arith.constant 0 : index
      %12 = vector.load %arg7[%c0_10, %c0_11] : memref<128x128xf32, #tpu.memory_space<vmem>>, vector<128x128xf32>
      %c0_12 = arith.constant 0 : index
      %c0_13 = arith.constant 0 : index
      %13 = vector.load %arg5[%c0_12, %c0_13] : memref<1x128xf32, #tpu.memory_space<vmem>>, vector<1x128xf32>
      %14 = vector.broadcast %13 : vector<1x128xf32> to vector<128x128xf32>
      %15 = arith.mulf %12, %14 : vector<128x128xf32>
      %c0_14 = arith.constant 0 : index
      %c0_15 = arith.constant 0 : index
      %16 = vector.load %arg6[%c0_14, %c0_15] : memref<1x128xf32, #tpu.memory_space<vmem>>, vector<1x128xf32>
      %17 = vector.broadcast %16 : vector<1x128xf32> to vector<128x128xf32>
      %18 = arith.addf %15, %17 : vector<128x128xf32>
      %cst_16 = arith.constant 0.000000e+00 : f32
      %19 = vector.broadcast %cst_16 : f32 to vector<128x128xf32>
      %20 = arith.maximumf %18, %19 : vector<128x128xf32>
      %c0_17 = arith.constant 0 : index
      %c0_18 = arith.constant 0 : index
      %21 = vector.load %arg7[%c0_17, %c0_18] : memref<128x128xf32, #tpu.memory_space<vmem>>, vector<128x128xf32>
      tpu.vector_store %arg7[%c0_17, %c0_18], %20 {strides = array<i32>} : memref<128x128xf32, #tpu.memory_space<vmem>>, vector<128x128xf32>,
    } else {
    }
    return
  }
  func.func @transform_0(%arg0: i32, %arg1: i32, %arg2: i32) -> (i32, i32) {
    %c0_i32 = arith.constant 0 : i32
    return %arg0, %arg2 : i32, i32
  }
  func.func @transform_1(%arg0: i32, %arg1: i32, %arg2: i32) -> (i32, i32) {
    %c0_i32 = arith.constant 0 : i32
    return %arg2, %arg1 : i32, i32
  }
  func.func @transform_2(%arg0: i32, %arg1: i32, %arg2: i32) -> (i32, i32) {
    %c0_i32 = arith.constant 0 : i32
    %c0_i32_0 = arith.constant 0 : i32
    return %c0_i32, %arg1 : i32, i32
  }
  func.func @transform_3(%arg0: i32, %arg1: i32, %arg2: i32) -> (i32, i32) {
    %c0_i32 = arith.constant 0 : i32
    %c0_i32_0 = arith.constant 0 : i32
    return %c0_i32, %arg1 : i32, i32
  }
  func.func @transform_4(%arg0: i32, %arg1: i32, %arg2: i32) -> (i32, i32) {
    %c0_i32 = arith.constant 0 : i32
    return %arg0, %arg1 : i32, i32
  }
}

module attributes {stable_mosaic.version = 11 : i64} {
  func.func @_mm_res_kernel(%arg0: i32, %arg1: i32, %arg2: i32, %arg3: memref<128x256xbf16, #tpu.memory_space<vmem>>, %arg4: memref<256x128xbf16, #tpu.memory_space<vmem>>, %arg5: memref<1x128xf32, #tpu.memory_space<vmem>>, %arg6: memref<1x128xf32, #tpu.memory_space<vmem>>, %arg7: memref<128x128xf32, #tpu.memory_space<vmem>>, %arg8: memref<128x128xf32, #tpu.memory_space<vmem>>) attributes {dimension_semantics = [#tpu.dimension_semantics<parallel>, #tpu.dimension_semantics<parallel>, #tpu.dimension_semantics<arbitrary>], iteration_bounds = array<i64: 1, 1, 2>, scalar_prefetch = 0 : i64, scratch_operands = 0 : i64, tpu.core_type = #tpu.core_type<tc>, window_params = [{transform_indices = @transform_0, window_bounds = array<i64: 128, 256>}, {transform_indices = @transform_1, window_bounds = array<i64: 256, 128>}, {transform_indices = @transform_2, window_bounds = array<i64: 1, 128>}, {transform_indices = @transform_3, window_bounds = array<i64: 1, 128>}, {transform_indices = @transform_4, window_bounds = array<i64: 128, 128>}, {transform_indices = @transform_5, window_bounds = array<i64: 128, 128>}]} {
    %c0_i32 = arith.constant 0 : i32
    %0 = arith.cmpi eq, %arg2, %c0_i32 : i32
    %1 = arith.extui %0 : i1 to i32
    %c0_i32_0 = arith.constant 0 : i32
    %2 = arith.cmpi ne, %1, %c0_i32_0 : i32
    scf.if %2 {
      %cst_9 = arith.constant 0.000000e+00 : f32
      %12 = vector.broadcast %cst_9 : f32 to vector<128x128xf32>
      %c0_10 = arith.constant 0 : index
      %c0_11 = arith.constant 0 : index
      %13 = vector.load %arg8[%c0_10, %c0_11] : memref<128x128xf32, #tpu.memory_space<vmem>>, vector<128x128xf32>
      tpu.vector_store %arg8[%c0_10, %c0_11], %12 {strides = array<i32>} : memref<128x128xf32, #tpu.memory_space<vmem>>, vector<128x128xf32>,
    } else {
    }
    %c0 = arith.constant 0 : index
    %c0_1 = arith.constant 0 : index
    %3 = vector.load %arg8[%c0, %c0_1] : memref<128x128xf32, #tpu.memory_space<vmem>>, vector<128x128xf32>
    %c0_2 = arith.constant 0 : index
    %c0_3 = arith.constant 0 : index
    %4 = vector.load %arg3[%c0_2, %c0_3] : memref<128x256xbf16, #tpu.memory_space<vmem>>, vector<128x256xbf16>
    %c0_4 = arith.constant 0 : index
    %c0_5 = arith.constant 0 : index
    %5 = vector.load %arg4[%c0_4, %c0_5] : memref<256x128xbf16, #tpu.memory_space<vmem>>, vector<256x128xbf16>
    %cst = arith.constant dense<0.000000e+00> : vector<128x128xf32>
    %6 = tpu.matmul %4, %5, %cst {dimension_numbers = #tpu.dot_dimension_numbers<[1], [0], [0], [1], [0, 0, 1, 1], [], []>} : vector<128x256xbf16>, vector<256x128xbf16>, vector<128x128xf32> -> vector<128x128xf32>
    %7 = arith.addf %3, %6 : vector<128x128xf32>
    %c0_6 = arith.constant 0 : index
    %c0_7 = arith.constant 0 : index
    %8 = vector.load %arg8[%c0_6, %c0_7] : memref<128x128xf32, #tpu.memory_space<vmem>>, vector<128x128xf32>
    tpu.vector_store %arg8[%c0_6, %c0_7], %7 {strides = array<i32>} : memref<128x128xf32, #tpu.memory_space<vmem>>, vector<128x128xf32>,
    %c1_i32 = arith.constant 1 : i32
    %9 = arith.cmpi eq, %arg2, %c1_i32 : i32
    %10 = arith.extui %9 : i1 to i32
    %c0_i32_8 = arith.constant 0 : i32
    %11 = arith.cmpi ne, %10, %c0_i32_8 : i32
    scf.if %11 {
      %c0_9 = arith.constant 0 : index
      %c0_10 = arith.constant 0 : index
      %12 = vector.load %arg8[%c0_9, %c0_10] : memref<128x128xf32, #tpu.memory_space<vmem>>, vector<128x128xf32>
      %c0_11 = arith.constant 0 : index
      %c0_12 = arith.constant 0 : index
      %13 = vector.load %arg5[%c0_11, %c0_12] : memref<1x128xf32, #tpu.memory_space<vmem>>, vector<1x128xf32>
      %14 = vector.broadcast %13 : vector<1x128xf32> to vector<128x128xf32>
      %15 = arith.mulf %12, %14 : vector<128x128xf32>
      %c0_13 = arith.constant 0 : index
      %c0_14 = arith.constant 0 : index
      %16 = vector.load %arg6[%c0_13, %c0_14] : memref<1x128xf32, #tpu.memory_space<vmem>>, vector<1x128xf32>
      %17 = vector.broadcast %16 : vector<1x128xf32> to vector<128x128xf32>
      %18 = arith.addf %15, %17 : vector<128x128xf32>
      %c0_15 = arith.constant 0 : index
      %c0_16 = arith.constant 0 : index
      %19 = vector.load %arg7[%c0_15, %c0_16] : memref<128x128xf32, #tpu.memory_space<vmem>>, vector<128x128xf32>
      %20 = arith.addf %18, %19 : vector<128x128xf32>
      %cst_17 = arith.constant 0.000000e+00 : f32
      %21 = vector.broadcast %cst_17 : f32 to vector<128x128xf32>
      %22 = arith.maximumf %20, %21 : vector<128x128xf32>
      %c0_18 = arith.constant 0 : index
      %c0_19 = arith.constant 0 : index
      %23 = vector.load %arg8[%c0_18, %c0_19] : memref<128x128xf32, #tpu.memory_space<vmem>>, vector<128x128xf32>
      tpu.vector_store %arg8[%c0_18, %c0_19], %22 {strides = array<i32>} : memref<128x128xf32, #tpu.memory_space<vmem>>, vector<128x128xf32>,
    } else {
    }
    return
  }
  func.func @transform_0(%arg0: i32, %arg1: i32, %arg2: i32) -> (i32, i32) {
    %c0_i32 = arith.constant 0 : i32
    return %arg0, %arg2 : i32, i32
  }
  func.func @transform_1(%arg0: i32, %arg1: i32, %arg2: i32) -> (i32, i32) {
    %c0_i32 = arith.constant 0 : i32
    return %arg2, %arg1 : i32, i32
  }
  func.func @transform_2(%arg0: i32, %arg1: i32, %arg2: i32) -> (i32, i32) {
    %c0_i32 = arith.constant 0 : i32
    %c0_i32_0 = arith.constant 0 : i32
    return %c0_i32, %arg1 : i32, i32
  }
  func.func @transform_3(%arg0: i32, %arg1: i32, %arg2: i32) -> (i32, i32) {
    %c0_i32 = arith.constant 0 : i32
    %c0_i32_0 = arith.constant 0 : i32
    return %c0_i32, %arg1 : i32, i32
  }
  func.func @transform_4(%arg0: i32, %arg1: i32, %arg2: i32) -> (i32, i32) {
    %c0_i32 = arith.constant 0 : i32
    return %arg0, %arg1 : i32, i32
  }
  func.func @transform_5(%arg0: i32, %arg1: i32, %arg2: i32) -> (i32, i32) {
    %c0_i32 = arith.constant 0 : i32
    return %arg0, %arg1 : i32, i32
  }
}

module attributes {stable_mosaic.version = 11 : i64} {
  func.func @_mm_kernel(%arg0: i32, %arg1: i32, %arg2: i32, %arg3: memref<128x256xbf16, #tpu.memory_space<vmem>>, %arg4: memref<256x128xbf16, #tpu.memory_space<vmem>>, %arg5: memref<1x128xf32, #tpu.memory_space<vmem>>, %arg6: memref<1x128xf32, #tpu.memory_space<vmem>>, %arg7: memref<128x128xf32, #tpu.memory_space<vmem>>) attributes {dimension_semantics = [#tpu.dimension_semantics<parallel>, #tpu.dimension_semantics<parallel>, #tpu.dimension_semantics<arbitrary>], iteration_bounds = array<i64: 1, 1, 1>, scalar_prefetch = 0 : i64, scratch_operands = 0 : i64, tpu.core_type = #tpu.core_type<tc>, window_params = [{transform_indices = @transform_0, window_bounds = array<i64: 128, 256>}, {transform_indices = @transform_1, window_bounds = array<i64: 256, 128>}, {transform_indices = @transform_2, window_bounds = array<i64: 1, 128>}, {transform_indices = @transform_3, window_bounds = array<i64: 1, 128>}, {transform_indices = @transform_4, window_bounds = array<i64: 128, 128>}]} {
    %c0_i32 = arith.constant 0 : i32
    %0 = arith.cmpi eq, %arg2, %c0_i32 : i32
    %1 = arith.extui %0 : i1 to i32
    %c0_i32_0 = arith.constant 0 : i32
    %2 = arith.cmpi ne, %1, %c0_i32_0 : i32
    scf.if %2 {
      %cst_10 = arith.constant 0.000000e+00 : f32
      %12 = vector.broadcast %cst_10 : f32 to vector<128x128xf32>
      %c0_11 = arith.constant 0 : index
      %c0_12 = arith.constant 0 : index
      %13 = vector.load %arg7[%c0_11, %c0_12] : memref<128x128xf32, #tpu.memory_space<vmem>>, vector<128x128xf32>
      tpu.vector_store %arg7[%c0_11, %c0_12], %12 {strides = array<i32>} : memref<128x128xf32, #tpu.memory_space<vmem>>, vector<128x128xf32>,
    } else {
    }
    %c0 = arith.constant 0 : index
    %c0_1 = arith.constant 0 : index
    %3 = vector.load %arg7[%c0, %c0_1] : memref<128x128xf32, #tpu.memory_space<vmem>>, vector<128x128xf32>
    %c0_2 = arith.constant 0 : index
    %c0_3 = arith.constant 0 : index
    %4 = vector.load %arg3[%c0_2, %c0_3] : memref<128x256xbf16, #tpu.memory_space<vmem>>, vector<128x256xbf16>
    %c0_4 = arith.constant 0 : index
    %c0_5 = arith.constant 0 : index
    %5 = vector.load %arg4[%c0_4, %c0_5] : memref<256x128xbf16, #tpu.memory_space<vmem>>, vector<256x128xbf16>
    %cst = arith.constant dense<0.000000e+00> : vector<128x128xf32>
    %6 = tpu.matmul %4, %5, %cst {dimension_numbers = #tpu.dot_dimension_numbers<[1], [0], [0], [1], [0, 0, 1, 1], [], []>} : vector<128x256xbf16>, vector<256x128xbf16>, vector<128x128xf32> -> vector<128x128xf32>
    %7 = arith.addf %3, %6 : vector<128x128xf32>
    %c0_6 = arith.constant 0 : index
    %c0_7 = arith.constant 0 : index
    %8 = vector.load %arg7[%c0_6, %c0_7] : memref<128x128xf32, #tpu.memory_space<vmem>>, vector<128x128xf32>
    tpu.vector_store %arg7[%c0_6, %c0_7], %7 {strides = array<i32>} : memref<128x128xf32, #tpu.memory_space<vmem>>, vector<128x128xf32>,
    %c0_i32_8 = arith.constant 0 : i32
    %9 = arith.cmpi eq, %arg2, %c0_i32_8 : i32
    %10 = arith.extui %9 : i1 to i32
    %c0_i32_9 = arith.constant 0 : i32
    %11 = arith.cmpi ne, %10, %c0_i32_9 : i32
    scf.if %11 {
      %c0_10 = arith.constant 0 : index
      %c0_11 = arith.constant 0 : index
      %12 = vector.load %arg7[%c0_10, %c0_11] : memref<128x128xf32, #tpu.memory_space<vmem>>, vector<128x128xf32>
      %c0_12 = arith.constant 0 : index
      %c0_13 = arith.constant 0 : index
      %13 = vector.load %arg5[%c0_12, %c0_13] : memref<1x128xf32, #tpu.memory_space<vmem>>, vector<1x128xf32>
      %14 = vector.broadcast %13 : vector<1x128xf32> to vector<128x128xf32>
      %15 = arith.mulf %12, %14 : vector<128x128xf32>
      %c0_14 = arith.constant 0 : index
      %c0_15 = arith.constant 0 : index
      %16 = vector.load %arg6[%c0_14, %c0_15] : memref<1x128xf32, #tpu.memory_space<vmem>>, vector<1x128xf32>
      %17 = vector.broadcast %16 : vector<1x128xf32> to vector<128x128xf32>
      %18 = arith.addf %15, %17 : vector<128x128xf32>
      %c0_16 = arith.constant 0 : index
      %c0_17 = arith.constant 0 : index
      %19 = vector.load %arg7[%c0_16, %c0_17] : memref<128x128xf32, #tpu.memory_space<vmem>>, vector<128x128xf32>
      tpu.vector_store %arg7[%c0_16, %c0_17], %18 {strides = array<i32>} : memref<128x128xf32, #tpu.memory_space<vmem>>, vector<128x128xf32>,
    } else {
    }
    return
  }
  func.func @transform_0(%arg0: i32, %arg1: i32, %arg2: i32) -> (i32, i32) {
    %c0_i32 = arith.constant 0 : i32
    return %arg0, %arg2 : i32, i32
  }
  func.func @transform_1(%arg0: i32, %arg1: i32, %arg2: i32) -> (i32, i32) {
    %c0_i32 = arith.constant 0 : i32
    return %arg2, %arg1 : i32, i32
  }
  func.func @transform_2(%arg0: i32, %arg1: i32, %arg2: i32) -> (i32, i32) {
    %c0_i32 = arith.constant 0 : i32
    %c0_i32_0 = arith.constant 0 : i32
    return %c0_i32, %arg1 : i32, i32
  }
  func.func @transform_3(%arg0: i32, %arg1: i32, %arg2: i32) -> (i32, i32) {
    %c0_i32 = arith.constant 0 : i32
    %c0_i32_0 = arith.constant 0 : i32
    return %c0_i32, %arg1 : i32, i32
  }
  func.func @transform_4(%arg0: i32, %arg1: i32, %arg2: i32) -> (i32, i32) {
    %c0_i32 = arith.constant 0 : i32
    return %arg0, %arg1 : i32, i32
  }
}

module attributes {stable_mosaic.version = 11 : i64} {
  func.func @_mm_kernel(%arg0: i32, %arg1: i32, %arg2: i32, %arg3: memref<32x256xbf16, #tpu.memory_space<vmem>>, %arg4: memref<256x128xbf16, #tpu.memory_space<vmem>>, %arg5: memref<1x128xf32, #tpu.memory_space<vmem>>, %arg6: memref<1x128xf32, #tpu.memory_space<vmem>>, %arg7: memref<32x128xf32, #tpu.memory_space<vmem>>) attributes {dimension_semantics = [#tpu.dimension_semantics<parallel>, #tpu.dimension_semantics<parallel>, #tpu.dimension_semantics<arbitrary>], iteration_bounds = array<i64: 1, 1, 2>, scalar_prefetch = 0 : i64, scratch_operands = 0 : i64, tpu.core_type = #tpu.core_type<tc>, window_params = [{transform_indices = @transform_0, window_bounds = array<i64: 32, 256>}, {transform_indices = @transform_1, window_bounds = array<i64: 256, 128>}, {transform_indices = @transform_2, window_bounds = array<i64: 1, 128>}, {transform_indices = @transform_3, window_bounds = array<i64: 1, 128>}, {transform_indices = @transform_4, window_bounds = array<i64: 32, 128>}]} {
    %c0_i32 = arith.constant 0 : i32
    %0 = arith.cmpi eq, %arg2, %c0_i32 : i32
    %1 = arith.extui %0 : i1 to i32
    %c0_i32_0 = arith.constant 0 : i32
    %2 = arith.cmpi ne, %1, %c0_i32_0 : i32
    scf.if %2 {
      %cst_9 = arith.constant 0.000000e+00 : f32
      %12 = vector.broadcast %cst_9 : f32 to vector<32x128xf32>
      %c0_10 = arith.constant 0 : index
      %c0_11 = arith.constant 0 : index
      %13 = vector.load %arg7[%c0_10, %c0_11] : memref<32x128xf32, #tpu.memory_space<vmem>>, vector<32x128xf32>
      tpu.vector_store %arg7[%c0_10, %c0_11], %12 {strides = array<i32>} : memref<32x128xf32, #tpu.memory_space<vmem>>, vector<32x128xf32>,
    } else {
    }
    %c0 = arith.constant 0 : index
    %c0_1 = arith.constant 0 : index
    %3 = vector.load %arg7[%c0, %c0_1] : memref<32x128xf32, #tpu.memory_space<vmem>>, vector<32x128xf32>
    %c0_2 = arith.constant 0 : index
    %c0_3 = arith.constant 0 : index
    %4 = vector.load %arg3[%c0_2, %c0_3] : memref<32x256xbf16, #tpu.memory_space<vmem>>, vector<32x256xbf16>
    %c0_4 = arith.constant 0 : index
    %c0_5 = arith.constant 0 : index
    %5 = vector.load %arg4[%c0_4, %c0_5] : memref<256x128xbf16, #tpu.memory_space<vmem>>, vector<256x128xbf16>
    %cst = arith.constant dense<0.000000e+00> : vector<32x128xf32>
    %6 = tpu.matmul %4, %5, %cst {dimension_numbers = #tpu.dot_dimension_numbers<[1], [0], [0], [1], [0, 0, 1, 1], [], []>} : vector<32x256xbf16>, vector<256x128xbf16>, vector<32x128xf32> -> vector<32x128xf32>
    %7 = arith.addf %3, %6 : vector<32x128xf32>
    %c0_6 = arith.constant 0 : index
    %c0_7 = arith.constant 0 : index
    %8 = vector.load %arg7[%c0_6, %c0_7] : memref<32x128xf32, #tpu.memory_space<vmem>>, vector<32x128xf32>
    tpu.vector_store %arg7[%c0_6, %c0_7], %7 {strides = array<i32>} : memref<32x128xf32, #tpu.memory_space<vmem>>, vector<32x128xf32>,
    %c1_i32 = arith.constant 1 : i32
    %9 = arith.cmpi eq, %arg2, %c1_i32 : i32
    %10 = arith.extui %9 : i1 to i32
    %c0_i32_8 = arith.constant 0 : i32
    %11 = arith.cmpi ne, %10, %c0_i32_8 : i32
    scf.if %11 {
      %c0_9 = arith.constant 0 : index
      %c0_10 = arith.constant 0 : index
      %12 = vector.load %arg7[%c0_9, %c0_10] : memref<32x128xf32, #tpu.memory_space<vmem>>, vector<32x128xf32>
      %c0_11 = arith.constant 0 : index
      %c0_12 = arith.constant 0 : index
      %13 = vector.load %arg5[%c0_11, %c0_12] : memref<1x128xf32, #tpu.memory_space<vmem>>, vector<1x128xf32>
      %14 = vector.broadcast %13 : vector<1x128xf32> to vector<32x128xf32>
      %15 = arith.mulf %12, %14 : vector<32x128xf32>
      %c0_13 = arith.constant 0 : index
      %c0_14 = arith.constant 0 : index
      %16 = vector.load %arg6[%c0_13, %c0_14] : memref<1x128xf32, #tpu.memory_space<vmem>>, vector<1x128xf32>
      %17 = vector.broadcast %16 : vector<1x128xf32> to vector<32x128xf32>
      %18 = arith.addf %15, %17 : vector<32x128xf32>
      %cst_15 = arith.constant 0.000000e+00 : f32
      %19 = vector.broadcast %cst_15 : f32 to vector<32x128xf32>
      %20 = arith.maximumf %18, %19 : vector<32x128xf32>
      %c0_16 = arith.constant 0 : index
      %c0_17 = arith.constant 0 : index
      %21 = vector.load %arg7[%c0_16, %c0_17] : memref<32x128xf32, #tpu.memory_space<vmem>>, vector<32x128xf32>
      tpu.vector_store %arg7[%c0_16, %c0_17], %20 {strides = array<i32>} : memref<32x128xf32, #tpu.memory_space<vmem>>, vector<32x128xf32>,
    } else {
    }
    return
  }
  func.func @transform_0(%arg0: i32, %arg1: i32, %arg2: i32) -> (i32, i32) {
    %c0_i32 = arith.constant 0 : i32
    return %arg0, %arg2 : i32, i32
  }
  func.func @transform_1(%arg0: i32, %arg1: i32, %arg2: i32) -> (i32, i32) {
    %c0_i32 = arith.constant 0 : i32
    return %arg2, %arg1 : i32, i32
  }
  func.func @transform_2(%arg0: i32, %arg1: i32, %arg2: i32) -> (i32, i32) {
    %c0_i32 = arith.constant 0 : i32
    %c0_i32_0 = arith.constant 0 : i32
    return %c0_i32, %arg1 : i32, i32
  }
  func.func @transform_3(%arg0: i32, %arg1: i32, %arg2: i32) -> (i32, i32) {
    %c0_i32 = arith.constant 0 : i32
    %c0_i32_0 = arith.constant 0 : i32
    return %c0_i32, %arg1 : i32, i32
  }
  func.func @transform_4(%arg0: i32, %arg1: i32, %arg2: i32) -> (i32, i32) {
    %c0_i32 = arith.constant 0 : i32
    return %arg0, %arg1 : i32, i32
  }
}

module attributes {stable_mosaic.version = 11 : i64} {
  func.func @_mm_kernel(%arg0: i32, %arg1: i32, %arg2: i32, %arg3: memref<32x256xbf16, #tpu.memory_space<vmem>>, %arg4: memref<256x128xbf16, #tpu.memory_space<vmem>>, %arg5: memref<1x128xf32, #tpu.memory_space<vmem>>, %arg6: memref<1x128xf32, #tpu.memory_space<vmem>>, %arg7: memref<32x128xf32, #tpu.memory_space<vmem>>) attributes {dimension_semantics = [#tpu.dimension_semantics<parallel>, #tpu.dimension_semantics<parallel>, #tpu.dimension_semantics<arbitrary>], iteration_bounds = array<i64: 1, 1, 2>, scalar_prefetch = 0 : i64, scratch_operands = 0 : i64, tpu.core_type = #tpu.core_type<tc>, window_params = [{transform_indices = @transform_0, window_bounds = array<i64: 32, 256>}, {transform_indices = @transform_1, window_bounds = array<i64: 256, 128>}, {transform_indices = @transform_2, window_bounds = array<i64: 1, 128>}, {transform_indices = @transform_3, window_bounds = array<i64: 1, 128>}, {transform_indices = @transform_4, window_bounds = array<i64: 32, 128>}]} {
    %c0_i32 = arith.constant 0 : i32
    %0 = arith.cmpi eq, %arg2, %c0_i32 : i32
    %1 = arith.extui %0 : i1 to i32
    %c0_i32_0 = arith.constant 0 : i32
    %2 = arith.cmpi ne, %1, %c0_i32_0 : i32
    scf.if %2 {
      %cst_9 = arith.constant 0.000000e+00 : f32
      %12 = vector.broadcast %cst_9 : f32 to vector<32x128xf32>
      %c0_10 = arith.constant 0 : index
      %c0_11 = arith.constant 0 : index
      %13 = vector.load %arg7[%c0_10, %c0_11] : memref<32x128xf32, #tpu.memory_space<vmem>>, vector<32x128xf32>
      tpu.vector_store %arg7[%c0_10, %c0_11], %12 {strides = array<i32>} : memref<32x128xf32, #tpu.memory_space<vmem>>, vector<32x128xf32>,
    } else {
    }
    %c0 = arith.constant 0 : index
    %c0_1 = arith.constant 0 : index
    %3 = vector.load %arg7[%c0, %c0_1] : memref<32x128xf32, #tpu.memory_space<vmem>>, vector<32x128xf32>
    %c0_2 = arith.constant 0 : index
    %c0_3 = arith.constant 0 : index
    %4 = vector.load %arg3[%c0_2, %c0_3] : memref<32x256xbf16, #tpu.memory_space<vmem>>, vector<32x256xbf16>
    %c0_4 = arith.constant 0 : index
    %c0_5 = arith.constant 0 : index
    %5 = vector.load %arg4[%c0_4, %c0_5] : memref<256x128xbf16, #tpu.memory_space<vmem>>, vector<256x128xbf16>
    %cst = arith.constant dense<0.000000e+00> : vector<32x128xf32>
    %6 = tpu.matmul %4, %5, %cst {dimension_numbers = #tpu.dot_dimension_numbers<[1], [0], [0], [1], [0, 0, 1, 1], [], []>} : vector<32x256xbf16>, vector<256x128xbf16>, vector<32x128xf32> -> vector<32x128xf32>
    %7 = arith.addf %3, %6 : vector<32x128xf32>
    %c0_6 = arith.constant 0 : index
    %c0_7 = arith.constant 0 : index
    %8 = vector.load %arg7[%c0_6, %c0_7] : memref<32x128xf32, #tpu.memory_space<vmem>>, vector<32x128xf32>
    tpu.vector_store %arg7[%c0_6, %c0_7], %7 {strides = array<i32>} : memref<32x128xf32, #tpu.memory_space<vmem>>, vector<32x128xf32>,
    %c1_i32 = arith.constant 1 : i32
    %9 = arith.cmpi eq, %arg2, %c1_i32 : i32
    %10 = arith.extui %9 : i1 to i32
    %c0_i32_8 = arith.constant 0 : i32
    %11 = arith.cmpi ne, %10, %c0_i32_8 : i32
    scf.if %11 {
      %c0_9 = arith.constant 0 : index
      %c0_10 = arith.constant 0 : index
      %12 = vector.load %arg7[%c0_9, %c0_10] : memref<32x128xf32, #tpu.memory_space<vmem>>, vector<32x128xf32>
      %c0_11 = arith.constant 0 : index
      %c0_12 = arith.constant 0 : index
      %13 = vector.load %arg5[%c0_11, %c0_12] : memref<1x128xf32, #tpu.memory_space<vmem>>, vector<1x128xf32>
      %14 = vector.broadcast %13 : vector<1x128xf32> to vector<32x128xf32>
      %15 = arith.mulf %12, %14 : vector<32x128xf32>
      %c0_13 = arith.constant 0 : index
      %c0_14 = arith.constant 0 : index
      %16 = vector.load %arg6[%c0_13, %c0_14] : memref<1x128xf32, #tpu.memory_space<vmem>>, vector<1x128xf32>
      %17 = vector.broadcast %16 : vector<1x128xf32> to vector<32x128xf32>
      %18 = arith.addf %15, %17 : vector<32x128xf32>
      %c0_15 = arith.constant 0 : index
      %c0_16 = arith.constant 0 : index
      %19 = vector.load %arg7[%c0_15, %c0_16] : memref<32x128xf32, #tpu.memory_space<vmem>>, vector<32x128xf32>
      tpu.vector_store %arg7[%c0_15, %c0_16], %18 {strides = array<i32>} : memref<32x128xf32, #tpu.memory_space<vmem>>, vector<32x128xf32>,
    } else {
    }
    return
  }
  func.func @transform_0(%arg0: i32, %arg1: i32, %arg2: i32) -> (i32, i32) {
    %c0_i32 = arith.constant 0 : i32
    return %arg0, %arg2 : i32, i32
  }
  func.func @transform_1(%arg0: i32, %arg1: i32, %arg2: i32) -> (i32, i32) {
    %c0_i32 = arith.constant 0 : i32
    return %arg2, %arg1 : i32, i32
  }
  func.func @transform_2(%arg0: i32, %arg1: i32, %arg2: i32) -> (i32, i32) {
    %c0_i32 = arith.constant 0 : i32
    %c0_i32_0 = arith.constant 0 : i32
    return %c0_i32, %arg1 : i32, i32
  }
  func.func @transform_3(%arg0: i32, %arg1: i32, %arg2: i32) -> (i32, i32) {
    %c0_i32 = arith.constant 0 : i32
    %c0_i32_0 = arith.constant 0 : i32
    return %c0_i32, %arg1 : i32, i32
  }
  func.func @transform_4(%arg0: i32, %arg1: i32, %arg2: i32) -> (i32, i32) {
    %c0_i32 = arith.constant 0 : i32
    return %arg0, %arg1 : i32, i32
  }
}

module attributes {stable_mosaic.version = 11 : i64} {
  func.func @_mm_res_kernel(%arg0: i32, %arg1: i32, %arg2: i32, %arg3: memref<32x256xbf16, #tpu.memory_space<vmem>>, %arg4: memref<256x128xbf16, #tpu.memory_space<vmem>>, %arg5: memref<1x128xf32, #tpu.memory_space<vmem>>, %arg6: memref<1x128xf32, #tpu.memory_space<vmem>>, %arg7: memref<32x128xf32, #tpu.memory_space<vmem>>, %arg8: memref<32x128xf32, #tpu.memory_space<vmem>>) attributes {dimension_semantics = [#tpu.dimension_semantics<parallel>, #tpu.dimension_semantics<parallel>, #tpu.dimension_semantics<arbitrary>], iteration_bounds = array<i64: 1, 1, 3>, scalar_prefetch = 0 : i64, scratch_operands = 0 : i64, tpu.core_type = #tpu.core_type<tc>, window_params = [{transform_indices = @transform_0, window_bounds = array<i64: 32, 256>}, {transform_indices = @transform_1, window_bounds = array<i64: 256, 128>}, {transform_indices = @transform_2, window_bounds = array<i64: 1, 128>}, {transform_indices = @transform_3, window_bounds = array<i64: 1, 128>}, {transform_indices = @transform_4, window_bounds = array<i64: 32, 128>}, {transform_indices = @transform_5, window_bounds = array<i64: 32, 128>}]} {
    %c0_i32 = arith.constant 0 : i32
    %0 = arith.cmpi eq, %arg2, %c0_i32 : i32
    %1 = arith.extui %0 : i1 to i32
    %c0_i32_0 = arith.constant 0 : i32
    %2 = arith.cmpi ne, %1, %c0_i32_0 : i32
    scf.if %2 {
      %cst_9 = arith.constant 0.000000e+00 : f32
      %12 = vector.broadcast %cst_9 : f32 to vector<32x128xf32>
      %c0_10 = arith.constant 0 : index
      %c0_11 = arith.constant 0 : index
      %13 = vector.load %arg8[%c0_10, %c0_11] : memref<32x128xf32, #tpu.memory_space<vmem>>, vector<32x128xf32>
      tpu.vector_store %arg8[%c0_10, %c0_11], %12 {strides = array<i32>} : memref<32x128xf32, #tpu.memory_space<vmem>>, vector<32x128xf32>,
    } else {
    }
    %c0 = arith.constant 0 : index
    %c0_1 = arith.constant 0 : index
    %3 = vector.load %arg8[%c0, %c0_1] : memref<32x128xf32, #tpu.memory_space<vmem>>, vector<32x128xf32>
    %c0_2 = arith.constant 0 : index
    %c0_3 = arith.constant 0 : index
    %4 = vector.load %arg3[%c0_2, %c0_3] : memref<32x256xbf16, #tpu.memory_space<vmem>>, vector<32x256xbf16>
    %c0_4 = arith.constant 0 : index
    %c0_5 = arith.constant 0 : index
    %5 = vector.load %arg4[%c0_4, %c0_5] : memref<256x128xbf16, #tpu.memory_space<vmem>>, vector<256x128xbf16>
    %cst = arith.constant dense<0.000000e+00> : vector<32x128xf32>
    %6 = tpu.matmul %4, %5, %cst {dimension_numbers = #tpu.dot_dimension_numbers<[1], [0], [0], [1], [0, 0, 1, 1], [], []>} : vector<32x256xbf16>, vector<256x128xbf16>, vector<32x128xf32> -> vector<32x128xf32>
    %7 = arith.addf %3, %6 : vector<32x128xf32>
    %c0_6 = arith.constant 0 : index
    %c0_7 = arith.constant 0 : index
    %8 = vector.load %arg8[%c0_6, %c0_7] : memref<32x128xf32, #tpu.memory_space<vmem>>, vector<32x128xf32>
    tpu.vector_store %arg8[%c0_6, %c0_7], %7 {strides = array<i32>} : memref<32x128xf32, #tpu.memory_space<vmem>>, vector<32x128xf32>,
    %c2_i32 = arith.constant 2 : i32
    %9 = arith.cmpi eq, %arg2, %c2_i32 : i32
    %10 = arith.extui %9 : i1 to i32
    %c0_i32_8 = arith.constant 0 : i32
    %11 = arith.cmpi ne, %10, %c0_i32_8 : i32
    scf.if %11 {
      %c0_9 = arith.constant 0 : index
      %c0_10 = arith.constant 0 : index
      %12 = vector.load %arg8[%c0_9, %c0_10] : memref<32x128xf32, #tpu.memory_space<vmem>>, vector<32x128xf32>
      %c0_11 = arith.constant 0 : index
      %c0_12 = arith.constant 0 : index
      %13 = vector.load %arg5[%c0_11, %c0_12] : memref<1x128xf32, #tpu.memory_space<vmem>>, vector<1x128xf32>
      %14 = vector.broadcast %13 : vector<1x128xf32> to vector<32x128xf32>
      %15 = arith.mulf %12, %14 : vector<32x128xf32>
      %c0_13 = arith.constant 0 : index
      %c0_14 = arith.constant 0 : index
      %16 = vector.load %arg6[%c0_13, %c0_14] : memref<1x128xf32, #tpu.memory_space<vmem>>, vector<1x128xf32>
      %17 = vector.broadcast %16 : vector<1x128xf32> to vector<32x128xf32>
      %18 = arith.addf %15, %17 : vector<32x128xf32>
      %c0_15 = arith.constant 0 : index
      %c0_16 = arith.constant 0 : index
      %19 = vector.load %arg7[%c0_15, %c0_16] : memref<32x128xf32, #tpu.memory_space<vmem>>, vector<32x128xf32>
      %20 = arith.addf %18, %19 : vector<32x128xf32>
      %cst_17 = arith.constant 0.000000e+00 : f32
      %21 = vector.broadcast %cst_17 : f32 to vector<32x128xf32>
      %22 = arith.maximumf %20, %21 : vector<32x128xf32>
      %c0_18 = arith.constant 0 : index
      %c0_19 = arith.constant 0 : index
      %23 = vector.load %arg8[%c0_18, %c0_19] : memref<32x128xf32, #tpu.memory_space<vmem>>, vector<32x128xf32>
      tpu.vector_store %arg8[%c0_18, %c0_19], %22 {strides = array<i32>} : memref<32x128xf32, #tpu.memory_space<vmem>>, vector<32x128xf32>,
    } else {
    }
    return
  }
  func.func @transform_0(%arg0: i32, %arg1: i32, %arg2: i32) -> (i32, i32) {
    %c0_i32 = arith.constant 0 : i32
    return %arg0, %arg2 : i32, i32
  }
  func.func @transform_1(%arg0: i32, %arg1: i32, %arg2: i32) -> (i32, i32) {
    %c0_i32 = arith.constant 0 : i32
    return %arg2, %arg1 : i32, i32
  }
  func.func @transform_2(%arg0: i32, %arg1: i32, %arg2: i32) -> (i32, i32) {
    %c0_i32 = arith.constant 0 : i32
    %c0_i32_0 = arith.constant 0 : i32
    return %c0_i32, %arg1 : i32, i32
  }
  func.func @transform_3(%arg0: i32, %arg1: i32, %arg2: i32) -> (i32, i32) {
    %c0_i32 = arith.constant 0 : i32
    %c0_i32_0 = arith.constant 0 : i32
    return %c0_i32, %arg1 : i32, i32
  }
  func.func @transform_4(%arg0: i32, %arg1: i32, %arg2: i32) -> (i32, i32) {
    %c0_i32 = arith.constant 0 : i32
    return %arg0, %arg1 : i32, i32
  }
  func.func @transform_5(%arg0: i32, %arg1: i32, %arg2: i32) -> (i32, i32) {
    %c0_i32 = arith.constant 0 : i32
    return %arg0, %arg1 : i32, i32
  }
}

module attributes {stable_mosaic.version = 11 : i64} {
  func.func @_mm_kernel(%arg0: i32, %arg1: i32, %arg2: i32, %arg3: memref<8x256xbf16, #tpu.memory_space<vmem>>, %arg4: memref<256x128xbf16, #tpu.memory_space<vmem>>, %arg5: memref<1x128xf32, #tpu.memory_space<vmem>>, %arg6: memref<1x128xf32, #tpu.memory_space<vmem>>, %arg7: memref<8x128xf32, #tpu.memory_space<vmem>>) attributes {dimension_semantics = [#tpu.dimension_semantics<parallel>, #tpu.dimension_semantics<parallel>, #tpu.dimension_semantics<arbitrary>], iteration_bounds = array<i64: 1, 1, 3>, scalar_prefetch = 0 : i64, scratch_operands = 0 : i64, tpu.core_type = #tpu.core_type<tc>, window_params = [{transform_indices = @transform_0, window_bounds = array<i64: 8, 256>}, {transform_indices = @transform_1, window_bounds = array<i64: 256, 128>}, {transform_indices = @transform_2, window_bounds = array<i64: 1, 128>}, {transform_indices = @transform_3, window_bounds = array<i64: 1, 128>}, {transform_indices = @transform_4, window_bounds = array<i64: 8, 128>}]} {
    %c0_i32 = arith.constant 0 : i32
    %0 = arith.cmpi eq, %arg2, %c0_i32 : i32
    %1 = arith.extui %0 : i1 to i32
    %c0_i32_0 = arith.constant 0 : i32
    %2 = arith.cmpi ne, %1, %c0_i32_0 : i32
    scf.if %2 {
      %cst_9 = arith.constant 0.000000e+00 : f32
      %12 = vector.broadcast %cst_9 : f32 to vector<8x128xf32>
      %c0_10 = arith.constant 0 : index
      %c0_11 = arith.constant 0 : index
      %13 = vector.load %arg7[%c0_10, %c0_11] : memref<8x128xf32, #tpu.memory_space<vmem>>, vector<8x128xf32>
      tpu.vector_store %arg7[%c0_10, %c0_11], %12 {strides = array<i32>} : memref<8x128xf32, #tpu.memory_space<vmem>>, vector<8x128xf32>,
    } else {
    }
    %c0 = arith.constant 0 : index
    %c0_1 = arith.constant 0 : index
    %3 = vector.load %arg7[%c0, %c0_1] : memref<8x128xf32, #tpu.memory_space<vmem>>, vector<8x128xf32>
    %c0_2 = arith.constant 0 : index
    %c0_3 = arith.constant 0 : index
    %4 = vector.load %arg3[%c0_2, %c0_3] : memref<8x256xbf16, #tpu.memory_space<vmem>>, vector<8x256xbf16>
    %c0_4 = arith.constant 0 : index
    %c0_5 = arith.constant 0 : index
    %5 = vector.load %arg4[%c0_4, %c0_5] : memref<256x128xbf16, #tpu.memory_space<vmem>>, vector<256x128xbf16>
    %cst = arith.constant dense<0.000000e+00> : vector<8x128xf32>
    %6 = tpu.matmul %4, %5, %cst {dimension_numbers = #tpu.dot_dimension_numbers<[1], [0], [0], [1], [0, 0, 1, 1], [], []>} : vector<8x256xbf16>, vector<256x128xbf16>, vector<8x128xf32> -> vector<8x128xf32>
    %7 = arith.addf %3, %6 : vector<8x128xf32>
    %c0_6 = arith.constant 0 : index
    %c0_7 = arith.constant 0 : index
    %8 = vector.load %arg7[%c0_6, %c0_7] : memref<8x128xf32, #tpu.memory_space<vmem>>, vector<8x128xf32>
    tpu.vector_store %arg7[%c0_6, %c0_7], %7 {strides = array<i32>} : memref<8x128xf32, #tpu.memory_space<vmem>>, vector<8x128xf32>,
    %c2_i32 = arith.constant 2 : i32
    %9 = arith.cmpi eq, %arg2, %c2_i32 : i32
    %10 = arith.extui %9 : i1 to i32
    %c0_i32_8 = arith.constant 0 : i32
    %11 = arith.cmpi ne, %10, %c0_i32_8 : i32
    scf.if %11 {
      %c0_9 = arith.constant 0 : index
      %c0_10 = arith.constant 0 : index
      %12 = vector.load %arg7[%c0_9, %c0_10] : memref<8x128xf32, #tpu.memory_space<vmem>>, vector<8x128xf32>
      %c0_11 = arith.constant 0 : index
      %c0_12 = arith.constant 0 : index
      %13 = vector.load %arg5[%c0_11, %c0_12] : memref<1x128xf32, #tpu.memory_space<vmem>>, vector<1x128xf32>
      %14 = vector.broadcast %13 : vector<1x128xf32> to vector<8x128xf32>
      %15 = arith.mulf %12, %14 : vector<8x128xf32>
      %c0_13 = arith.constant 0 : index
      %c0_14 = arith.constant 0 : index
      %16 = vector.load %arg6[%c0_13, %c0_14] : memref<1x128xf32, #tpu.memory_space<vmem>>, vector<1x128xf32>
      %17 = vector.broadcast %16 : vector<1x128xf32> to vector<8x128xf32>
      %18 = arith.addf %15, %17 : vector<8x128xf32>
      %cst_15 = arith.constant 0.000000e+00 : f32
      %19 = vector.broadcast %cst_15 : f32 to vector<8x128xf32>
      %20 = arith.maximumf %18, %19 : vector<8x128xf32>
      %c0_16 = arith.constant 0 : index
      %c0_17 = arith.constant 0 : index
      %21 = vector.load %arg7[%c0_16, %c0_17] : memref<8x128xf32, #tpu.memory_space<vmem>>, vector<8x128xf32>
      tpu.vector_store %arg7[%c0_16, %c0_17], %20 {strides = array<i32>} : memref<8x128xf32, #tpu.memory_space<vmem>>, vector<8x128xf32>,
    } else {
    }
    return
  }
  func.func @transform_0(%arg0: i32, %arg1: i32, %arg2: i32) -> (i32, i32) {
    %c0_i32 = arith.constant 0 : i32
    return %arg0, %arg2 : i32, i32
  }
  func.func @transform_1(%arg0: i32, %arg1: i32, %arg2: i32) -> (i32, i32) {
    %c0_i32 = arith.constant 0 : i32
    return %arg2, %arg1 : i32, i32
  }
  func.func @transform_2(%arg0: i32, %arg1: i32, %arg2: i32) -> (i32, i32) {
    %c0_i32 = arith.constant 0 : i32
    %c0_i32_0 = arith.constant 0 : i32
    return %c0_i32, %arg1 : i32, i32
  }
  func.func @transform_3(%arg0: i32, %arg1: i32, %arg2: i32) -> (i32, i32) {
    %c0_i32 = arith.constant 0 : i32
    %c0_i32_0 = arith.constant 0 : i32
    return %c0_i32, %arg1 : i32, i32
  }
  func.func @transform_4(%arg0: i32, %arg1: i32, %arg2: i32) -> (i32, i32) {
    %c0_i32 = arith.constant 0 : i32
    return %arg0, %arg1 : i32, i32
  }
}

module attributes {stable_mosaic.version = 11 : i64} {
  func.func @_mm_kernel(%arg0: i32, %arg1: i32, %arg2: i32, %arg3: memref<8x256xbf16, #tpu.memory_space<vmem>>, %arg4: memref<256x128xbf16, #tpu.memory_space<vmem>>, %arg5: memref<1x128xf32, #tpu.memory_space<vmem>>, %arg6: memref<1x128xf32, #tpu.memory_space<vmem>>, %arg7: memref<8x128xf32, #tpu.memory_space<vmem>>) attributes {dimension_semantics = [#tpu.dimension_semantics<parallel>, #tpu.dimension_semantics<parallel>, #tpu.dimension_semantics<arbitrary>], iteration_bounds = array<i64: 1, 1, 3>, scalar_prefetch = 0 : i64, scratch_operands = 0 : i64, tpu.core_type = #tpu.core_type<tc>, window_params = [{transform_indices = @transform_0, window_bounds = array<i64: 8, 256>}, {transform_indices = @transform_1, window_bounds = array<i64: 256, 128>}, {transform_indices = @transform_2, window_bounds = array<i64: 1, 128>}, {transform_indices = @transform_3, window_bounds = array<i64: 1, 128>}, {transform_indices = @transform_4, window_bounds = array<i64: 8, 128>}]} {
    %c0_i32 = arith.constant 0 : i32
    %0 = arith.cmpi eq, %arg2, %c0_i32 : i32
    %1 = arith.extui %0 : i1 to i32
    %c0_i32_0 = arith.constant 0 : i32
    %2 = arith.cmpi ne, %1, %c0_i32_0 : i32
    scf.if %2 {
      %cst_9 = arith.constant 0.000000e+00 : f32
      %12 = vector.broadcast %cst_9 : f32 to vector<8x128xf32>
      %c0_10 = arith.constant 0 : index
      %c0_11 = arith.constant 0 : index
      %13 = vector.load %arg7[%c0_10, %c0_11] : memref<8x128xf32, #tpu.memory_space<vmem>>, vector<8x128xf32>
      tpu.vector_store %arg7[%c0_10, %c0_11], %12 {strides = array<i32>} : memref<8x128xf32, #tpu.memory_space<vmem>>, vector<8x128xf32>,
    } else {
    }
    %c0 = arith.constant 0 : index
    %c0_1 = arith.constant 0 : index
    %3 = vector.load %arg7[%c0, %c0_1] : memref<8x128xf32, #tpu.memory_space<vmem>>, vector<8x128xf32>
    %c0_2 = arith.constant 0 : index
    %c0_3 = arith.constant 0 : index
    %4 = vector.load %arg3[%c0_2, %c0_3] : memref<8x256xbf16, #tpu.memory_space<vmem>>, vector<8x256xbf16>
    %c0_4 = arith.constant 0 : index
    %c0_5 = arith.constant 0 : index
    %5 = vector.load %arg4[%c0_4, %c0_5] : memref<256x128xbf16, #tpu.memory_space<vmem>>, vector<256x128xbf16>
    %cst = arith.constant dense<0.000000e+00> : vector<8x128xf32>
    %6 = tpu.matmul %4, %5, %cst {dimension_numbers = #tpu.dot_dimension_numbers<[1], [0], [0], [1], [0, 0, 1, 1], [], []>} : vector<8x256xbf16>, vector<256x128xbf16>, vector<8x128xf32> -> vector<8x128xf32>
    %7 = arith.addf %3, %6 : vector<8x128xf32>
    %c0_6 = arith.constant 0 : index
    %c0_7 = arith.constant 0 : index
    %8 = vector.load %arg7[%c0_6, %c0_7] : memref<8x128xf32, #tpu.memory_space<vmem>>, vector<8x128xf32>
    tpu.vector_store %arg7[%c0_6, %c0_7], %7 {strides = array<i32>} : memref<8x128xf32, #tpu.memory_space<vmem>>, vector<8x128xf32>,
    %c2_i32 = arith.constant 2 : i32
    %9 = arith.cmpi eq, %arg2, %c2_i32 : i32
    %10 = arith.extui %9 : i1 to i32
    %c0_i32_8 = arith.constant 0 : i32
    %11 = arith.cmpi ne, %10, %c0_i32_8 : i32
    scf.if %11 {
      %c0_9 = arith.constant 0 : index
      %c0_10 = arith.constant 0 : index
      %12 = vector.load %arg7[%c0_9, %c0_10] : memref<8x128xf32, #tpu.memory_space<vmem>>, vector<8x128xf32>
      %c0_11 = arith.constant 0 : index
      %c0_12 = arith.constant 0 : index
      %13 = vector.load %arg5[%c0_11, %c0_12] : memref<1x128xf32, #tpu.memory_space<vmem>>, vector<1x128xf32>
      %14 = vector.broadcast %13 : vector<1x128xf32> to vector<8x128xf32>
      %15 = arith.mulf %12, %14 : vector<8x128xf32>
      %c0_13 = arith.constant 0 : index
      %c0_14 = arith.constant 0 : index
      %16 = vector.load %arg6[%c0_13, %c0_14] : memref<1x128xf32, #tpu.memory_space<vmem>>, vector<1x128xf32>
      %17 = vector.broadcast %16 : vector<1x128xf32> to vector<8x128xf32>
      %18 = arith.addf %15, %17 : vector<8x128xf32>
      %c0_15 = arith.constant 0 : index
      %c0_16 = arith.constant 0 : index
      %19 = vector.load %arg7[%c0_15, %c0_16] : memref<8x128xf32, #tpu.memory_space<vmem>>, vector<8x128xf32>
      tpu.vector_store %arg7[%c0_15, %c0_16], %18 {strides = array<i32>} : memref<8x128xf32, #tpu.memory_space<vmem>>, vector<8x128xf32>,
    } else {
    }
    return
  }
  func.func @transform_0(%arg0: i32, %arg1: i32, %arg2: i32) -> (i32, i32) {
    %c0_i32 = arith.constant 0 : i32
    return %arg0, %arg2 : i32, i32
  }
  func.func @transform_1(%arg0: i32, %arg1: i32, %arg2: i32) -> (i32, i32) {
    %c0_i32 = arith.constant 0 : i32
    return %arg2, %arg1 : i32, i32
  }
  func.func @transform_2(%arg0: i32, %arg1: i32, %arg2: i32) -> (i32, i32) {
    %c0_i32 = arith.constant 0 : i32
    %c0_i32_0 = arith.constant 0 : i32
    return %c0_i32, %arg1 : i32, i32
  }
  func.func @transform_3(%arg0: i32, %arg1: i32, %arg2: i32) -> (i32, i32) {
    %c0_i32 = arith.constant 0 : i32
    %c0_i32_0 = arith.constant 0 : i32
    return %c0_i32, %arg1 : i32, i32
  }
  func.func @transform_4(%arg0: i32, %arg1: i32, %arg2: i32) -> (i32, i32) {
    %c0_i32 = arith.constant 0 : i32
    return %arg0, %arg1 : i32, i32
  }
}

module attributes {stable_mosaic.version = 11 : i64} {
  func.func @_mm_res_kernel(%arg0: i32, %arg1: i32, %arg2: i32, %arg3: memref<8x256xbf16, #tpu.memory_space<vmem>>, %arg4: memref<256x128xbf16, #tpu.memory_space<vmem>>, %arg5: memref<1x128xf32, #tpu.memory_space<vmem>>, %arg6: memref<1x128xf32, #tpu.memory_space<vmem>>, %arg7: memref<8x128xf32, #tpu.memory_space<vmem>>, %arg8: memref<8x128xf32, #tpu.memory_space<vmem>>) attributes {dimension_semantics = [#tpu.dimension_semantics<parallel>, #tpu.dimension_semantics<parallel>, #tpu.dimension_semantics<arbitrary>], iteration_bounds = array<i64: 1, 1, 5>, scalar_prefetch = 0 : i64, scratch_operands = 0 : i64, tpu.core_type = #tpu.core_type<tc>, window_params = [{transform_indices = @transform_0, window_bounds = array<i64: 8, 256>}, {transform_indices = @transform_1, window_bounds = array<i64: 256, 128>}, {transform_indices = @transform_2, window_bounds = array<i64: 1, 128>}, {transform_indices = @transform_3, window_bounds = array<i64: 1, 128>}, {transform_indices = @transform_4, window_bounds = array<i64: 8, 128>}, {transform_indices = @transform_5, window_bounds = array<i64: 8, 128>}]} {
    %c0_i32 = arith.constant 0 : i32
    %0 = arith.cmpi eq, %arg2, %c0_i32 : i32
    %1 = arith.extui %0 : i1 to i32
    %c0_i32_0 = arith.constant 0 : i32
    %2 = arith.cmpi ne, %1, %c0_i32_0 : i32
    scf.if %2 {
      %cst_9 = arith.constant 0.000000e+00 : f32
      %12 = vector.broadcast %cst_9 : f32 to vector<8x128xf32>
      %c0_10 = arith.constant 0 : index
      %c0_11 = arith.constant 0 : index
      %13 = vector.load %arg8[%c0_10, %c0_11] : memref<8x128xf32, #tpu.memory_space<vmem>>, vector<8x128xf32>
      tpu.vector_store %arg8[%c0_10, %c0_11], %12 {strides = array<i32>} : memref<8x128xf32, #tpu.memory_space<vmem>>, vector<8x128xf32>,
    } else {
    }
    %c0 = arith.constant 0 : index
    %c0_1 = arith.constant 0 : index
    %3 = vector.load %arg8[%c0, %c0_1] : memref<8x128xf32, #tpu.memory_space<vmem>>, vector<8x128xf32>
    %c0_2 = arith.constant 0 : index
    %c0_3 = arith.constant 0 : index
    %4 = vector.load %arg3[%c0_2, %c0_3] : memref<8x256xbf16, #tpu.memory_space<vmem>>, vector<8x256xbf16>
    %c0_4 = arith.constant 0 : index
    %c0_5 = arith.constant 0 : index
    %5 = vector.load %arg4[%c0_4, %c0_5] : memref<256x128xbf16, #tpu.memory_space<vmem>>, vector<256x128xbf16>
    %cst = arith.constant dense<0.000000e+00> : vector<8x128xf32>
    %6 = tpu.matmul %4, %5, %cst {dimension_numbers = #tpu.dot_dimension_numbers<[1], [0], [0], [1], [0, 0, 1, 1], [], []>} : vector<8x256xbf16>, vector<256x128xbf16>, vector<8x128xf32> -> vector<8x128xf32>
    %7 = arith.addf %3, %6 : vector<8x128xf32>
    %c0_6 = arith.constant 0 : index
    %c0_7 = arith.constant 0 : index
    %8 = vector.load %arg8[%c0_6, %c0_7] : memref<8x128xf32, #tpu.memory_space<vmem>>, vector<8x128xf32>
    tpu.vector_store %arg8[%c0_6, %c0_7], %7 {strides = array<i32>} : memref<8x128xf32, #tpu.memory_space<vmem>>, vector<8x128xf32>,
    %c4_i32 = arith.constant 4 : i32
    %9 = arith.cmpi eq, %arg2, %c4_i32 : i32
    %10 = arith.extui %9 : i1 to i32
    %c0_i32_8 = arith.constant 0 : i32
    %11 = arith.cmpi ne, %10, %c0_i32_8 : i32
    scf.if %11 {
      %c0_9 = arith.constant 0 : index
      %c0_10 = arith.constant 0 : index
      %12 = vector.load %arg8[%c0_9, %c0_10] : memref<8x128xf32, #tpu.memory_space<vmem>>, vector<8x128xf32>
      %c0_11 = arith.constant 0 : index
      %c0_12 = arith.constant 0 : index
      %13 = vector.load %arg5[%c0_11, %c0_12] : memref<1x128xf32, #tpu.memory_space<vmem>>, vector<1x128xf32>
      %14 = vector.broadcast %13 : vector<1x128xf32> to vector<8x128xf32>
      %15 = arith.mulf %12, %14 : vector<8x128xf32>
      %c0_13 = arith.constant 0 : index
      %c0_14 = arith.constant 0 : index
      %16 = vector.load %arg6[%c0_13, %c0_14] : memref<1x128xf32, #tpu.memory_space<vmem>>, vector<1x128xf32>
      %17 = vector.broadcast %16 : vector<1x128xf32> to vector<8x128xf32>
      %18 = arith.addf %15, %17 : vector<8x128xf32>
      %c0_15 = arith.constant 0 : index
      %c0_16 = arith.constant 0 : index
      %19 = vector.load %arg7[%c0_15, %c0_16] : memref<8x128xf32, #tpu.memory_space<vmem>>, vector<8x128xf32>
      %20 = arith.addf %18, %19 : vector<8x128xf32>
      %cst_17 = arith.constant 0.000000e+00 : f32
      %21 = vector.broadcast %cst_17 : f32 to vector<8x128xf32>
      %22 = arith.maximumf %20, %21 : vector<8x128xf32>
      %c0_18 = arith.constant 0 : index
      %c0_19 = arith.constant 0 : index
      %23 = vector.load %arg8[%c0_18, %c0_19] : memref<8x128xf32, #tpu.memory_space<vmem>>, vector<8x128xf32>
      tpu.vector_store %arg8[%c0_18, %c0_19], %22 {strides = array<i32>} : memref<8x128xf32, #tpu.memory_space<vmem>>, vector<8x128xf32>,
    } else {
    }
    return
  }
  func.func @transform_0(%arg0: i32, %arg1: i32, %arg2: i32) -> (i32, i32) {
    %c0_i32 = arith.constant 0 : i32
    return %arg0, %arg2 : i32, i32
  }
  func.func @transform_1(%arg0: i32, %arg1: i32, %arg2: i32) -> (i32, i32) {
    %c0_i32 = arith.constant 0 : i32
    return %arg2, %arg1 : i32, i32
  }
  func.func @transform_2(%arg0: i32, %arg1: i32, %arg2: i32) -> (i32, i32) {
    %c0_i32 = arith.constant 0 : i32
    %c0_i32_0 = arith.constant 0 : i32
    return %c0_i32, %arg1 : i32, i32
  }
  func.func @transform_3(%arg0: i32, %arg1: i32, %arg2: i32) -> (i32, i32) {
    %c0_i32 = arith.constant 0 : i32
    %c0_i32_0 = arith.constant 0 : i32
    return %c0_i32, %arg1 : i32, i32
  }
  func.func @transform_4(%arg0: i32, %arg1: i32, %arg2: i32) -> (i32, i32) {
    %c0_i32 = arith.constant 0 : i32
    return %arg0, %arg1 : i32, i32
  }
  func.func @transform_5(%arg0: i32, %arg1: i32, %arg2: i32) -> (i32, i32) {
    %c0_i32 = arith.constant 0 : i32
    return %arg0, %arg1 : i32, i32
  }
}

module attributes {stable_mosaic.version = 11 : i64} {
  func.func @_mm_kernel(%arg0: i32, %arg1: i32, %arg2: i32, %arg3: memref<8x128xbf16, #tpu.memory_space<vmem>>, %arg4: memref<128x128xbf16, #tpu.memory_space<vmem>>, %arg5: memref<1x128xf32, #tpu.memory_space<vmem>>, %arg6: memref<1x128xf32, #tpu.memory_space<vmem>>, %arg7: memref<8x128xf32, #tpu.memory_space<vmem>>) attributes {dimension_semantics = [#tpu.dimension_semantics<parallel>, #tpu.dimension_semantics<parallel>, #tpu.dimension_semantics<arbitrary>], iteration_bounds = array<i64: 1, 1, 1>, scalar_prefetch = 0 : i64, scratch_operands = 0 : i64, tpu.core_type = #tpu.core_type<tc>, window_params = [{transform_indices = @transform_0, window_bounds = array<i64: 8, 128>}, {transform_indices = @transform_1, window_bounds = array<i64: 128, 128>}, {transform_indices = @transform_2, window_bounds = array<i64: 1, 128>}, {transform_indices = @transform_3, window_bounds = array<i64: 1, 128>}, {transform_indices = @transform_4, window_bounds = array<i64: 8, 128>}]} {
    %c0_i32 = arith.constant 0 : i32
    %0 = arith.cmpi eq, %arg2, %c0_i32 : i32
    %1 = arith.extui %0 : i1 to i32
    %c0_i32_0 = arith.constant 0 : i32
    %2 = arith.cmpi ne, %1, %c0_i32_0 : i32
    scf.if %2 {
      %cst_10 = arith.constant 0.000000e+00 : f32
      %12 = vector.broadcast %cst_10 : f32 to vector<8x128xf32>
      %c0_11 = arith.constant 0 : index
      %c0_12 = arith.constant 0 : index
      %13 = vector.load %arg7[%c0_11, %c0_12] : memref<8x128xf32, #tpu.memory_space<vmem>>, vector<8x128xf32>
      tpu.vector_store %arg7[%c0_11, %c0_12], %12 {strides = array<i32>} : memref<8x128xf32, #tpu.memory_space<vmem>>, vector<8x128xf32>,
    } else {
    }
    %c0 = arith.constant 0 : index
    %c0_1 = arith.constant 0 : index
    %3 = vector.load %arg7[%c0, %c0_1] : memref<8x128xf32, #tpu.memory_space<vmem>>, vector<8x128xf32>
    %c0_2 = arith.constant 0 : index
    %c0_3 = arith.constant 0 : index
    %4 = vector.load %arg3[%c0_2, %c0_3] : memref<8x128xbf16, #tpu.memory_space<vmem>>, vector<8x128xbf16>
    %c0_4 = arith.constant 0 : index
    %c0_5 = arith.constant 0 : index
    %5 = vector.load %arg4[%c0_4, %c0_5] : memref<128x128xbf16, #tpu.memory_space<vmem>>, vector<128x128xbf16>
    %cst = arith.constant dense<0.000000e+00> : vector<8x128xf32>
    %6 = tpu.matmul %4, %5, %cst {dimension_numbers = #tpu.dot_dimension_numbers<[1], [0], [0], [1], [0, 0, 1, 1], [], []>} : vector<8x128xbf16>, vector<128x128xbf16>, vector<8x128xf32> -> vector<8x128xf32>
    %7 = arith.addf %3, %6 : vector<8x128xf32>
    %c0_6 = arith.constant 0 : index
    %c0_7 = arith.constant 0 : index
    %8 = vector.load %arg7[%c0_6, %c0_7] : memref<8x128xf32, #tpu.memory_space<vmem>>, vector<8x128xf32>
    tpu.vector_store %arg7[%c0_6, %c0_7], %7 {strides = array<i32>} : memref<8x128xf32, #tpu.memory_space<vmem>>, vector<8x128xf32>,
    %c0_i32_8 = arith.constant 0 : i32
    %9 = arith.cmpi eq, %arg2, %c0_i32_8 : i32
    %10 = arith.extui %9 : i1 to i32
    %c0_i32_9 = arith.constant 0 : i32
    %11 = arith.cmpi ne, %10, %c0_i32_9 : i32
    scf.if %11 {
      %c0_10 = arith.constant 0 : index
      %c0_11 = arith.constant 0 : index
      %12 = vector.load %arg7[%c0_10, %c0_11] : memref<8x128xf32, #tpu.memory_space<vmem>>, vector<8x128xf32>
      %c0_12 = arith.constant 0 : index
      %c0_13 = arith.constant 0 : index
      %13 = vector.load %arg5[%c0_12, %c0_13] : memref<1x128xf32, #tpu.memory_space<vmem>>, vector<1x128xf32>
      %14 = vector.broadcast %13 : vector<1x128xf32> to vector<8x128xf32>
      %15 = arith.mulf %12, %14 : vector<8x128xf32>
      %c0_14 = arith.constant 0 : index
      %c0_15 = arith.constant 0 : index
      %16 = vector.load %arg6[%c0_14, %c0_15] : memref<1x128xf32, #tpu.memory_space<vmem>>, vector<1x128xf32>
      %17 = vector.broadcast %16 : vector<1x128xf32> to vector<8x128xf32>
      %18 = arith.addf %15, %17 : vector<8x128xf32>
      %c0_16 = arith.constant 0 : index
      %c0_17 = arith.constant 0 : index
      %19 = vector.load %arg7[%c0_16, %c0_17] : memref<8x128xf32, #tpu.memory_space<vmem>>, vector<8x128xf32>
      tpu.vector_store %arg7[%c0_16, %c0_17], %18 {strides = array<i32>} : memref<8x128xf32, #tpu.memory_space<vmem>>, vector<8x128xf32>,
    } else {
    }
    return
  }
  func.func @transform_0(%arg0: i32, %arg1: i32, %arg2: i32) -> (i32, i32) {
    %c0_i32 = arith.constant 0 : i32
    return %arg0, %arg2 : i32, i32
  }
  func.func @transform_1(%arg0: i32, %arg1: i32, %arg2: i32) -> (i32, i32) {
    %c0_i32 = arith.constant 0 : i32
    return %arg2, %arg1 : i32, i32
  }
  func.func @transform_2(%arg0: i32, %arg1: i32, %arg2: i32) -> (i32, i32) {
    %c0_i32 = arith.constant 0 : i32
    %c0_i32_0 = arith.constant 0 : i32
    return %c0_i32, %arg1 : i32, i32
  }
  func.func @transform_3(%arg0: i32, %arg1: i32, %arg2: i32) -> (i32, i32) {
    %c0_i32 = arith.constant 0 : i32
    %c0_i32_0 = arith.constant 0 : i32
    return %c0_i32, %arg1 : i32, i32
  }
  func.func @transform_4(%arg0: i32, %arg1: i32, %arg2: i32) -> (i32, i32) {
    %c0_i32 = arith.constant 0 : i32
    return %arg0, %arg1 : i32, i32
  }
}

</mosaic_0001>

<llo_original>
// kernel: _lambda_.13
$region0: #{_lambda_.13}
  #allocation0 [shape = 'u32[]', space=smem, size = 0x4, offset = 0x4, fixed_abs, tag = 'smem constant byte address 0x4 - core index']
  #allocation1 [shape = 'u32[144,128]{1,0:T(1,128)}', space=vmem, size = 0x12000, scoped, tag = 'internal scratch']
  %s0 = inlined_call_operand.vmem [shape: bf16[512,128], index: 0, kind: input, shape index: {}]
  %s1 = inlined_call_operand.vmem [shape: bf16[128,128], index: 1, kind: input, shape index: {}]
  %s2 = inlined_call_operand.vmem [shape: f32[1,128], index: 2, kind: input, shape index: {}]
  %s3 = inlined_call_operand.vmem [shape: f32[1,128], index: 3, kind: input, shape index: {}]
  %s4 = inlined_call_operand.vmem [shape: f32[512,128], index: 4, kind: output, shape index: {}]
  %s5 = sld [smem:[#allocation0]]
  $region57: #{_lambda_.13} parent=0
    _
  %s7 = ssub.s32 1, %s5
  %s8 = scalar_select 0, %s7, %s5
  loop: start=0, step=1, limit=4
  $region2: #{_lambda_.13} parent=0 // loop_pre_header
    _
  $region3: #{_lambda_.13} parent=0 // loop_header
    %s10 = sphi 0, %s14
    %p11 = scmp.ge.s32.totalorder %s10, 4
    %s17 = sphi 0, %s36
    %s18 = sphi 0, %s32
    %s19 = sphi 0, %s28
    %s20 = sphi 0, %s17
    %s21 = sphi 0, %s18
    %s22 = sphi 0, %s19
    %s23 = sphi 0, %s20
    %s24 = sphi 0, %s21
    %s25 = sphi 0, %s22
    %s41 = sphi 0, %s43
    %s44 = sphi 0, %s41
    %s45 = sphi 0, %s44
    %s61 = sphi 0, %s45
    %s69 = sphi 0, %s71
    %s72 = sphi 0, %s69
    %s73 = sphi 0, %s72
    %s89 = sphi 0, %s73
    %s95 = sphi 0, %s97
    %s98 = sphi 0, %s95
    %s99 = sphi 0, %s98
    %s115 = sphi 0, %s99
    %s121 = sphi 0, %s123
    %s124 = sphi 0, %s121
    %s125 = sphi 0, %s124
    %s141 = sphi 0, %s125
    %s149 = sphi 0, %s151
    %s152 = sphi 0, %s149
    %s153 = sphi 0, %s152
    %s169 = sphi 0, %s153
  $region4: #{_lambda_.13} parent=0 // loop_header_branch
    %13 = sbr.rel (%p11) target = $region8
  $region5: #{_lambda_.13} parent=0 // loop_body
    %s15 = ssub.s32 %s10, 1
    %s16 = ssub.s32 %s10, 2
    %s26 = sadd.s32 1, %s19
    %p27 = scmp.ge.s32.totalorder %s26, 1
    %s28 = scalar_select %p27, 0, %s26
    %s29 = sadd.s32 1, %s18
    %s30 = scalar_select %p27, %s29, %s18
    %p31 = scmp.ge.s32.totalorder %s30, 1
    %s32 = scalar_select %p31, 0, %s30
    %s33 = sadd.s32 1, %s17
    %s34 = scalar_select %p31, %s33, %s17
    %p35 = scmp.ge.s32.totalorder %s34, 2
    %s36 = scalar_select %p35, 0, %s34
    %s37 = ssub.s32 %s17, %s36
    %s38 = ssub.s32 %s19, %s28
    %s39 = sor.u32 %s37, %s38
    %p40 = scmp.eq.s32.totalorder %s39, 0
    %s42 = sadd.s32 %s41, 1
    %s43 = scalar_select %p40, %s41, %s42
    %p46 = pneg %p40
    %p47 = scmp.eq.s32.totalorder %s10, 1
    %p48 = por %p46, %p47
    %p49 = scmp.ne.s32.totalorder %s41, %s44
    %p50 = scmp.eq.s32.totalorder %s10, 0
    %p51 = por %p49, %p50
    %p52 = scmp.ne.s32.totalorder %s41, %s44
    %p53 = scmp.eq.s32.totalorder %s15, 1
    %p54 = por %p52, %p53
    %p55 = scmp.ne.s32.totalorder %s44, %s45
    %p56 = scmp.eq.s32.totalorder %s15, 0
    %p57 = por %p55, %p56
    %p58 = scmp.ne.s32.totalorder %s44, %s45
    %p59 = scmp.eq.s32.totalorder %s16, 1
    %p60 = por %p58, %p59
    %p62 = scmp.ne.s32.totalorder %s45, %s61
    %p63 = scmp.eq.s32.totalorder %s16, 0
    %p64 = por %p62, %p63
    %s65 = ssub.s32 %s19, %s28
    %s66 = ssub.s32 %s18, %s32
    %s67 = sor.u32 %s65, %s66
    %p68 = scmp.eq.s32.totalorder %s67, 0
    %s70 = sadd.s32 %s69, 1
    %s71 = scalar_select %p68, %s69, %s70
    %p74 = pneg %p68
    %p75 = scmp.eq.s32.totalorder %s10, 1
    %p76 = por %p74, %p75
    %p77 = scmp.ne.s32.totalorder %s69, %s72
    %p78 = scmp.eq.s32.totalorder %s10, 0
    %p79 = por %p77, %p78
    %p80 = scmp.ne.s32.totalorder %s69, %s72
    %p81 = scmp.eq.s32.totalorder %s15, 1
    %p82 = por %p80, %p81
    %p83 = scmp.ne.s32.totalorder %s72, %s73
    %p84 = scmp.eq.s32.totalorder %s15, 0
    %p85 = por %p83, %p84
    %p86 = scmp.ne.s32.totalorder %s72, %s73
    %p87 = scmp.eq.s32.totalorder %s16, 1
    %p88 = por %p86, %p87
    %p90 = scmp.ne.s32.totalorder %s73, %s89
    %p91 = scmp.eq.s32.totalorder %s16, 0
    %p92 = por %p90, %p91
    %s93 = ssub.s32 %s18, %s32
    %p94 = scmp.eq.s32.totalorder %s93, 0
    %s96 = sadd.s32 %s95, 1
    %s97 = scalar_select %p94, %s95, %s96
    %p100 = pneg %p94
    %p101 = scmp.eq.s32.totalorder %s10, 1
    %p102 = por %p100, %p101
    %p103 = scmp.ne.s32.totalorder %s95, %s98
    %p104 = scmp.eq.s32.totalorder %s10, 0
    %p105 = por %p103, %p104
    %p106 = scmp.ne.s32.totalorder %s95, %s98
    %p107 = scmp.eq.s32.totalorder %s15, 1
    %p108 = por %p106, %p107
    %p109 = scmp.ne.s32.totalorder %s98, %s99
    %p110 = scmp.eq.s32.totalorder %s15, 0
    %p111 = por %p109, %p110
    %p112 = scmp.ne.s32.totalorder %s98, %s99
    %p113 = scmp.eq.s32.totalorder %s16, 1
    %p114 = por %p112, %p113
    %p116 = scmp.ne.s32.totalorder %s99, %s115
    %p117 = scmp.eq.s32.totalorder %s16, 0
    %p118 = por %p116, %p117
    %s119 = ssub.s32 %s18, %s32
    %p120 = scmp.eq.s32.totalorder %s119, 0
    %s122 = sadd.s32 %s121, 1
    %s123 = scalar_select %p120, %s121, %s122
    %p126 = pneg %p120
    %p127 = scmp.eq.s32.totalorder %s10, 1
    %p128 = por %p126, %p127
    %p129 = scmp.ne.s32.totalorder %s121, %s124
    %p130 = scmp.eq.s32.totalorder %s10, 0
    %p131 = por %p129, %p130
    %p132 = scmp.ne.s32.totalorder %s121, %s124
    %p133 = scmp.eq.s32.totalorder %s15, 1
    %p134 = por %p132, %p133
    %p135 = scmp.ne.s32.totalorder %s124, %s125
    %p136 = scmp.eq.s32.totalorder %s15, 0
    %p137 = por %p135, %p136
    %p138 = scmp.ne.s32.totalorder %s124, %s125
    %p139 = scmp.eq.s32.totalorder %s16, 1
    %p140 = por %p138, %p139
    %p142 = scmp.ne.s32.totalorder %s125, %s141
    %p143 = scmp.eq.s32.totalorder %s16, 0
    %p144 = por %p142, %p143
    %s145 = ssub.s32 %s17, %s36
    %s146 = ssub.s32 %s18, %s32
    %s147 = sor.u32 %s145, %s146
    %p148 = scmp.eq.s32.totalorder %s147, 0
    %s150 = sadd.s32 %s149, 1
    %s151 = scalar_select %p148, %s149, %s150
    %p154 = pneg %p148
    %p155 = scmp.eq.s32.totalorder %s10, 1
    %p156 = por %p154, %p155
    %p157 = scmp.ne.s32.totalorder %s149, %s152
    %p158 = scmp.eq.s32.totalorder %s10, 0
    %p159 = por %p157, %p158
    %p160 = scmp.ne.s32.totalorder %s149, %s152
    %p161 = scmp.eq.s32.totalorder %s15, 1
    %p162 = por %p160, %p161
    %p163 = scmp.ne.s32.totalorder %s152, %s153
    %p164 = scmp.eq.s32.totalorder %s15, 0
    %p165 = por %p163, %p164
    %p166 = scmp.ne.s32.totalorder %s152, %s153
    %p167 = scmp.eq.s32.totalorder %s16, 1
    %p168 = por %p166, %p167
    %p170 = scmp.ne.s32.totalorder %s153, %s169
    %p171 = scmp.eq.s32.totalorder %s16, 0
    %p172 = por %p170, %p171
    %p173 = scmp.le.s32.totalorder 1, %s10
    %p174 = scmp.lt.s32.totalorder %s10, 3
    %p175 = pnand %p173, %p174
    %p176 = pneg %p175
    // Predicated region
    $region9: #{_lambda_.13} parent=5 // pred_check
      _
    $region10: #{_lambda_.13} parent=5 // pred_check_branch
      %178 = sbr.rel (%p175) target = $region12
    $region11: #{_lambda_.13} parent=5 // pred_region
      %s179 = ssub.s32 %s10, 1
      // Predicated region
      $region13: #{_lambda_.13} parent=11 // pred_check
        %p180 = pneg %p85
      $region14: #{_lambda_.13} parent=11 // pred_check_branch
        %182 = sbr.rel (%p180) target = $region16
      $region15: #{_lambda_.13} parent=11 // pred_region
        %s183 = smul.u32 16, %s22
        %p184 = scmp.lt.s32.totalorder %s183, 15
        %s185 = scalar_select %p184, %s183, 15
        %p186 = scmp.lt.s32.totalorder %s21, 0
        %s187 = scalar_select %p186, %s21, 0
        %s188 = sadd.s32 %s187, %s185
        %s189 = smul.addr %s188, 4
        %s190 = scalar_lea.vmem %s1, %s189
        %s191 = smul.u32 16, %s22
      $region16: #{_lambda_.13} parent=11 // pred_fallthru
        _
      // Predicated region
      $region17: #{_lambda_.13} parent=11 // pred_check
        %p192 = pneg %p111
      $region18: #{_lambda_.13} parent=11 // pred_check_branch
        %194 = sbr.rel (%p192) target = $region20
      $region19: #{_lambda_.13} parent=11 // pred_region
        %p195 = scmp.lt.s32.totalorder %s21, 0
        %s196 = scalar_select %p195, %s21, 0
        %s197 = scalar_lea.vmem %s2, %s196
      $region20: #{_lambda_.13} parent=11 // pred_fallthru
        _
      // Predicated region
      $region21: #{_lambda_.13} parent=11 // pred_check
        %p198 = pneg %p137
      $region22: #{_lambda_.13} parent=11 // pred_check_branch
        %200 = sbr.rel (%p198) target = $region24
      $region23: #{_lambda_.13} parent=11 // pred_region
        %p201 = scmp.lt.s32.totalorder %s21, 0
        %s202 = scalar_select %p201, %s21, 0
        %s203 = scalar_lea.vmem %s3, %s202
      $region24: #{_lambda_.13} parent=11 // pred_fallthru
        _
    $region12: #{_lambda_.13} parent=5 // pred_fallthru
      _
    %p204 = scmp.lt.s32.totalorder %s10, 2
    // Predicated region
    $region25: #{_lambda_.13} parent=5 // pred_check
      %p205 = pneg %p204
    $region26: #{_lambda_.13} parent=5 // pred_check_branch
      %207 = sbr.rel (%p205) target = $region28
    $region27: #{_lambda_.13} parent=5 // pred_region
      // Predicated region
      $region29: #{_lambda_.13} parent=27 // pred_check
        %p208 = pneg %p51
      $region30: #{_lambda_.13} parent=27 // pred_check_branch
        %210 = sbr.rel (%p208) target = $region32
      $region31: #{_lambda_.13} parent=27 // pred_region
        %s211 = smul.u32 32, %s17
        %p212 = scmp.lt.s32.totalorder %s211, 63
        %s213 = scalar_select %p212, %s211, 63
        %p214 = scmp.lt.s32.totalorder %s19, 0
        %s215 = scalar_select %p214, %s19, 0
        %s216 = sadd.s32 %s215, %s213
        %s217 = smul.addr %s216, 4
        %s218 = scalar_lea.vmem %s0, %s217
        %s219 = smul.u32 32, %s17
      $region32: #{_lambda_.13} parent=27 // pred_fallthru
        _
    $region28: #{_lambda_.13} parent=5 // pred_fallthru
      _
    %p220 = scmp.le.s32.totalorder 1, %s10
    %p221 = scmp.lt.s32.totalorder %s10, 3
    %p222 = pnand %p220, %p221
    %p223 = pneg %p222
    // Predicated region
    $region33: #{_lambda_.13} parent=5 // pred_check
      _
    $region34: #{_lambda_.13} parent=5 // pred_check_branch
      %225 = sbr.rel (%p222) target = $region36
    $region35: #{_lambda_.13} parent=5 // pred_region
      %s226 = ssub.s32 %s10, 1
      %s227 = smul.u32 32, %s20
      %p228 = scmp.lt.s32.totalorder %s227, 63
      %s229 = scalar_select %p228, %s227, 63
      %p230 = scmp.lt.s32.totalorder %s22, 0
      %s231 = scalar_select %p230, %s22, 0
      %s232 = sadd.s32 %s231, %s229
      %s233 = smul.addr %s232, 4
      %s234 = scalar_lea.vmem %s0, %s233
      %p235 = pneg %p57
      %p236 = pneg %p54
      %s237 = smul.u32 16, %s22
      %p238 = scmp.lt.s32.totalorder %s237, 15
      %s239 = scalar_select %p238, %s237, 15
      %p240 = scmp.lt.s32.totalorder %s21, 0
      %s241 = scalar_select %p240, %s21, 0
      %s242 = sadd.s32 %s241, %s239
      %s243 = smul.addr %s242, 4
      %s244 = scalar_lea.vmem %s1, %s243
      %p245 = pneg %p85
      %p246 = pneg %p82
      %p247 = scmp.lt.s32.totalorder %s21, 0
      %s248 = scalar_select %p247, %s21, 0
      %s249 = scalar_lea.vmem %s2, %s248
      %p250 = pneg %p111
      %p251 = pneg %p108
      %p252 = scmp.lt.s32.totalorder %s21, 0
      %s253 = scalar_select %p252, %s21, 0
      %s254 = scalar_lea.vmem %s3, %s253
      %p255 = pneg %p137
      %p256 = pneg %p134
      %p257 = pneg %p165
      %p258 = pneg %p162
      %s259 = smul.u32 32, %s20
      %p260 = scmp.lt.s32.totalorder %s259, 63
      %s261 = scalar_select %p260, %s259, 63
      %p262 = scmp.lt.s32.totalorder %s21, 0
      %s263 = scalar_select %p262, %s21, 0
      %s264 = sadd.s32 %s263, %s261
      %s265 = smul.addr %s264, 8
      %s266 = scalar_lea.vmem %s4, %s265
      %s267 = smul.u32 32, %s20
      %p268 = scmp.lt.s32.totalorder %s267, 63
      %s269 = scalar_select %p268, %s267, 63
      %p270 = scmp.lt.s32.totalorder %s22, 0
      %s271 = scalar_select %p270, %s22, 0
      %s272 = sadd.s32 %s271, %s269
      %s273 = smul.addr %s272, 4
      %s274 = scalar_lea.vmem %s0, %s273
      %s275 = smul.u32 32, %s20
      %s276 = smul.u32 16, %s22
      %p277 = scmp.lt.s32.totalorder %s276, 15
      %s278 = scalar_select %p277, %s276, 15
      %p279 = scmp.lt.s32.totalorder %s21, 0
      %s280 = scalar_select %p279, %s21, 0
      %s281 = sadd.s32 %s280, %s278
      %s282 = smul.addr %s281, 4
      %s283 = scalar_lea.vmem %s1, %s282
      %s284 = smul.u32 16, %s22
      %p285 = scmp.lt.s32.totalorder %s21, 0
      %s286 = scalar_select %p285, %s21, 0
      %s287 = scalar_lea.vmem %s2, %s286
      %p288 = scmp.lt.s32.totalorder %s21, 0
      %s289 = scalar_select %p288, %s21, 0
      %s290 = scalar_lea.vmem %s3, %s289
      %s291 = smul.u32 32, %s20
      %p292 = scmp.lt.s32.totalorder %s291, 63
      %s293 = scalar_select %p292, %s291, 63
      %p294 = scmp.lt.s32.totalorder %s21, 0
      %s295 = scalar_select %p294, %s21, 0
      %s296 = sadd.s32 %s295, %s293
      %s297 = smul.addr %s296, 8
      %s298 = scalar_lea.vmem %s4, %s297
      %s299 = smul.u32 32, %s20
      %p301 = scmp.eq.s32.totalorder %s22, 0
      // Predicated region
      $region37: #{_lambda_.13} parent=35 // pred_check
        %p302 = pneg %p301
      $region38: #{_lambda_.13} parent=35 // pred_check_branch
        %304 = sbr.rel (%p302) target = $region40
      $region39: #{_lambda_.13} parent=35 // pred_region
        %305 = vst [vmem:[%s298] sm:$0xff] 0.0
        %306 = vst [vmem:[%s298 + $0x8] sm:$0xff] 0.0
        %307 = vst [vmem:[%s298 + $0x10] sm:$0xff] 0.0
        %308 = vst [vmem:[%s298 + $0x18] sm:$0xff] 0.0
        %309 = vst [vmem:[%s298 + $0x20] sm:$0xff] 0.0
        %310 = vst [vmem:[%s298 + $0x28] sm:$0xff] 0.0
        %311 = vst [vmem:[%s298 + $0x30] sm:$0xff] 0.0
        %312 = vst [vmem:[%s298 + $0x38] sm:$0xff] 0.0
        %313 = vst [vmem:[%s298 + $0x40] sm:$0xff] 0.0
        %314 = vst [vmem:[%s298 + $0x48] sm:$0xff] 0.0
        %315 = vst [vmem:[%s298 + $0x50] sm:$0xff] 0.0
        %316 = vst [vmem:[%s298 + $0x58] sm:$0xff] 0.0
        %317 = vst [vmem:[%s298 + $0x60] sm:$0xff] 0.0
        %318 = vst [vmem:[%s298 + $0x68] sm:$0xff] 0.0
        %319 = vst [vmem:[%s298 + $0x70] sm:$0xff] 0.0
        %320 = vst [vmem:[%s298 + $0x78] sm:$0xff] 0.0
        %321 = vst [vmem:[%s298 + $0x80] sm:$0xff] 0.0
        %322 = vst [vmem:[%s298 + $0x88] sm:$0xff] 0.0
        %323 = vst [vmem:[%s298 + $0x90] sm:$0xff] 0.0
        %324 = vst [vmem:[%s298 + $0x98] sm:$0xff] 0.0
        %325 = vst [vmem:[%s298 + $0xa0] sm:$0xff] 0.0
        %326 = vst [vmem:[%s298 + $0xa8] sm:$0xff] 0.0
        %327 = vst [vmem:[%s298 + $0xb0] sm:$0xff] 0.0
        %328 = vst [vmem:[%s298 + $0xb8] sm:$0xff] 0.0
        %329 = vst [vmem:[%s298 + $0xc0] sm:$0xff] 0.0
        %330 = vst [vmem:[%s298 + $0xc8] sm:$0xff] 0.0
        %331 = vst [vmem:[%s298 + $0xd0] sm:$0xff] 0.0
        %332 = vst [vmem:[%s298 + $0xd8] sm:$0xff] 0.0
        %333 = vst [vmem:[%s298 + $0xe0] sm:$0xff] 0.0
        %334 = vst [vmem:[%s298 + $0xe8] sm:$0xff] 0.0
        %335 = vst [vmem:[%s298 + $0xf0] sm:$0xff] 0.0
        %336 = vst [vmem:[%s298 + $0xf8] sm:$0xff] 0.0
      $region40: #{_lambda_.13} parent=35 // pred_fallthru
        _
      %v337 = vld [vmem:[%s298] sm:$0xff]
      %v338 = vld [vmem:[%s298 + $0x8] sm:$0xff]
      %v339 = vld [vmem:[%s298 + $0x10] sm:$0xff]
      %v340 = vld [vmem:[%s298 + $0x18] sm:$0xff]
      %v341 = vld [vmem:[%s298 + $0x20] sm:$0xff]
      %v342 = vld [vmem:[%s298 + $0x28] sm:$0xff]
      %v343 = vld [vmem:[%s298 + $0x30] sm:$0xff]
      %v344 = vld [vmem:[%s298 + $0x38] sm:$0xff]
      %v345 = vld [vmem:[%s298 + $0x40] sm:$0xff]
      %v346 = vld [vmem:[%s298 + $0x48] sm:$0xff]
      %v347 = vld [vmem:[%s298 + $0x50] sm:$0xff]
      %v348 = vld [vmem:[%s298 + $0x58] sm:$0xff]
      %v349 = vld [vmem:[%s298 + $0x60] sm:$0xff]
      %v350 = vld [vmem:[%s298 + $0x68] sm:$0xff]
      %v351 = vld [vmem:[%s298 + $0x70] sm:$0xff]
      %v352 = vld [vmem:[%s298 + $0x78] sm:$0xff]
      %v353 = vld [vmem:[%s298 + $0x80] sm:$0xff]
      %v354 = vld [vmem:[%s298 + $0x88] sm:$0xff]
      %v355 = vld [vmem:[%s298 + $0x90] sm:$0xff]
      %v356 = vld [vmem:[%s298 + $0x98] sm:$0xff]
      %v357 = vld [vmem:[%s298 + $0xa0] sm:$0xff]
      %v358 = vld [vmem:[%s298 + $0xa8] sm:$0xff]
      %v359 = vld [vmem:[%s298 + $0xb0] sm:$0xff]
      %v360 = vld [vmem:[%s298 + $0xb8] sm:$0xff]
      %v361 = vld [vmem:[%s298 + $0xc0] sm:$0xff]
      %v362 = vld [vmem:[%s298 + $0xc8] sm:$0xff]
      %v363 = vld [vmem:[%s298 + $0xd0] sm:$0xff]
      %v364 = vld [vmem:[%s298 + $0xd8] sm:$0xff]
      %v365 = vld [vmem:[%s298 + $0xe0] sm:$0xff]
      %v366 = vld [vmem:[%s298 + $0xe8] sm:$0xff]
      %v367 = vld [vmem:[%s298 + $0xf0] sm:$0xff]
      %v368 = vld [vmem:[%s298 + $0xf8] sm:$0xff]
      %v369 = vld [vmem:[%s274] sm:$0xf]
      %v370 = vld [vmem:[%s274 + $0x4] sm:$0xf]
      %v371 = vld [vmem:[%s274 + $0x8] sm:$0xf]
      %v372 = vld [vmem:[%s274 + $0xc] sm:$0xf]
      %v373 = vld [vmem:[%s274 + $0x10] sm:$0xf]
      %v374 = vld [vmem:[%s274 + $0x14] sm:$0xf]
      %v375 = vld [vmem:[%s274 + $0x18] sm:$0xf]
      %v376 = vld [vmem:[%s274 + $0x1c] sm:$0xf]
      %v377 = vld [vmem:[%s274 + $0x20] sm:$0xf]
      %v378 = vld [vmem:[%s274 + $0x24] sm:$0xf]
      %v379 = vld [vmem:[%s274 + $0x28] sm:$0xf]
      %v380 = vld [vmem:[%s274 + $0x2c] sm:$0xf]
      %v381 = vld [vmem:[%s274 + $0x30] sm:$0xf]
      %v382 = vld [vmem:[%s274 + $0x34] sm:$0xf]
      %v383 = vld [vmem:[%s274 + $0x38] sm:$0xf]
      %v384 = vld [vmem:[%s274 + $0x3c] sm:$0xf]
      %v385 = vld [vmem:[%s274 + $0x40] sm:$0xf]
      %v386 = vld [vmem:[%s274 + $0x44] sm:$0xf]
      %v387 = vld [vmem:[%s274 + $0x48] sm:$0xf]
      %v388 = vld [vmem:[%s274 + $0x4c] sm:$0xf]
      %v389 = vld [vmem:[%s274 + $0x50] sm:$0xf]
      %v390 = vld [vmem:[%s274 + $0x54] sm:$0xf]
      %v391 = vld [vmem:[%s274 + $0x58] sm:$0xf]
      %v392 = vld [vmem:[%s274 + $0x5c] sm:$0xf]
      %v393 = vld [vmem:[%s274 + $0x60] sm:$0xf]
      %v394 = vld [vmem:[%s274 + $0x64] sm:$0xf]
      %v395 = vld [vmem:[%s274 + $0x68] sm:$0xf]
      %v396 = vld [vmem:[%s274 + $0x6c] sm:$0xf]
      %v397 = vld [vmem:[%s274 + $0x70] sm:$0xf]
      %v398 = vld [vmem:[%s274 + $0x74] sm:$0xf]
      %v399 = vld [vmem:[%s274 + $0x78] sm:$0xf]
      %v400 = vld [vmem:[%s274 + $0x7c] sm:$0xf]
      %v401 = vld [vmem:[%s283] sm:$0xf]
      %v402 = vld [vmem:[%s283 + $0x4] sm:$0xf]
      %v403 = vld [vmem:[%s283 + $0x8] sm:$0xf]
      %v404 = vld [vmem:[%s283 + $0xc] sm:$0xf]
      %v405 = vld [vmem:[%s283 + $0x10] sm:$0xf]
      %v406 = vld [vmem:[%s283 + $0x14] sm:$0xf]
      %v407 = vld [vmem:[%s283 + $0x18] sm:$0xf]
      %v408 = vld [vmem:[%s283 + $0x1c] sm:$0xf]
      %v409 = vld [vmem:[%s283 + $0x20] sm:$0xf]
      %v410 = vld [vmem:[%s283 + $0x24] sm:$0xf]
      %v411 = vld [vmem:[%s283 + $0x28] sm:$0xf]
      %v412 = vld [vmem:[%s283 + $0x2c] sm:$0xf]
      %v413 = vld [vmem:[%s283 + $0x30] sm:$0xf]
      %v414 = vld [vmem:[%s283 + $0x34] sm:$0xf]
      %v415 = vld [vmem:[%s283 + $0x38] sm:$0xf]
      %v416 = vld [vmem:[%s283 + $0x3c] sm:$0xf]
      %v449 = vunpack.c.l.b16 %v369
      %v450 = vunpack.c.l.b16 %v370
      %v451 = vunpack.c.l.b16 %v371
      %v452 = vunpack.c.l.b16 %v372
      %v453 = vunpack.c.l.b16 %v373
      %v454 = vunpack.c.l.b16 %v374
      %v455 = vunpack.c.l.b16 %v375
      %v456 = vunpack.c.l.b16 %v376
      %v457 = vunpack.c.l.b16 %v377
      %v458 = vunpack.c.l.b16 %v378
      %v459 = vunpack.c.l.b16 %v379
      %v460 = vunpack.c.l.b16 %v380
      %v461 = vunpack.c.l.b16 %v381
      %v462 = vunpack.c.l.b16 %v382
      %v463 = vunpack.c.l.b16 %v383
      %v464 = vunpack.c.l.b16 %v384
      %v465 = vunpack.c.l.b16 %v385
      %v466 = vunpack.c.l.b16 %v386
      %v467 = vunpack.c.l.b16 %v387
      %v468 = vunpack.c.l.b16 %v388
      %v469 = vunpack.c.l.b16 %v389
      %v470 = vunpack.c.l.b16 %v390
      %v471 = vunpack.c.l.b16 %v391
      %v472 = vunpack.c.l.b16 %v392
      %v473 = vunpack.c.l.b16 %v393
      %v474 = vunpack.c.l.b16 %v394
      %v475 = vunpack.c.l.b16 %v395
      %v476 = vunpack.c.l.b16 %v396
      %v477 = vunpack.c.l.b16 %v397
      %v478 = vunpack.c.l.b16 %v398
      %v479 = vunpack.c.l.b16 %v399
      %v480 = vunpack.c.l.b16 %v400
      %v481 = vpack.c.b16 %v450, %v449
      %v482 = vpack.c.b16 %v452, %v451
      %v483 = vpack.c.b16 %v454, %v453
      %v484 = vpack.c.b16 %v456, %v455
      %v485 = vpack.c.b16 %v458, %v457
      %v486 = vpack.c.b16 %v460, %v459
      %v487 = vpack.c.b16 %v462, %v461
      %v488 = vpack.c.b16 %v464, %v463
      %v489 = vpack.c.b16 %v466, %v465
      %v490 = vpack.c.b16 %v468, %v467
      %v491 = vpack.c.b16 %v470, %v469
      %v492 = vpack.c.b16 %v472, %v471
      %v493 = vpack.c.b16 %v474, %v473
      %v494 = vpack.c.b16 %v476, %v475
      %v495 = vpack.c.b16 %v478, %v477
      %v496 = vpack.c.b16 %v480, %v479
      %v529 = vunpack.c.l.b16 %v401
      %v530 = vunpack.c.l.b16 %v402
      %v531 = vunpack.c.l.b16 %v403
      %v532 = vunpack.c.l.b16 %v404
      %v533 = vunpack.c.l.b16 %v405
      %v534 = vunpack.c.l.b16 %v406
      %v535 = vunpack.c.l.b16 %v407
      %v536 = vunpack.c.l.b16 %v408
      %v537 = vunpack.c.l.b16 %v409
      %v538 = vunpack.c.l.b16 %v410
      %v539 = vunpack.c.l.b16 %v411
      %v540 = vunpack.c.l.b16 %v412
      %v541 = vunpack.c.l.b16 %v413
      %v542 = vunpack.c.l.b16 %v414
      %v543 = vunpack.c.l.b16 %v415
      %v544 = vunpack.c.l.b16 %v416
      %v545 = vpack.c.b16 %v530, %v529
      %v546 = vpack.c.b16 %v532, %v531
      %v547 = vpack.c.b16 %v534, %v533
      %v548 = vpack.c.b16 %v536, %v535
      %v549 = vpack.c.b16 %v538, %v537
      %v550 = vpack.c.b16 %v540, %v539
      %v551 = vpack.c.b16 %v542, %v541
      %v552 = vpack.c.b16 %v544, %v543
      %561 = vmatprep.subr.bf16.mxu0 0
      %562 = vmatpush1.bf16.msra.mxu0 %v552
      %563 = vmatprep.subr.bf16.mxu0 0
      %564 = vmatpush1.bf16.msra.mxu0 %v551
      %565 = vmatprep.subr.bf16.mxu0 0
      %566 = vmatpush1.bf16.msra.mxu0 %v550
      %567 = vmatprep.subr.bf16.mxu0 0
      %568 = vmatpush1.bf16.msra.mxu0 %v549
      %569 = vmatprep.subr.bf16.mxu0 0
      %570 = vmatpush1.bf16.msra.mxu0 %v548
      %571 = vmatprep.subr.bf16.mxu0 0
      %572 = vmatpush1.bf16.msra.mxu0 %v547
      %573 = vmatprep.subr.bf16.mxu0 0
      %574 = vmatpush1.bf16.msra.mxu0 %v546
      %575 = vmatprep.subr.bf16.mxu0 0
      %576 = vmatpush1.bf16.msra.mxu0 %v545
      %577 = vmatprep.subr.bf16.mxu0 0
      %578 = vmatpush2.bf16.msra.mxu0 0
      %579 = vmatprep.subr.bf16.mxu0 0
      %580 = vmatpush2.bf16.msra.mxu0 0
      %581 = vmatprep.subr.bf16.mxu0 0
      %582 = vmatpush2.bf16.msra.mxu0 0
      %583 = vmatprep.subr.bf16.mxu0 0
      %584 = vmatpush2.bf16.msra.mxu0 0
      %585 = vmatprep.subr.bf16.mxu0 0
      %586 = vmatpush2.bf16.msra.mxu0 0
      %587 = vmatprep.subr.bf16.mxu0 0
      %588 = vmatpush2.bf16.msra.mxu0 0
      %589 = vmatprep.subr.bf16.mxu0 0
      %590 = vmatpush2.bf16.msra.mxu0 0
      %591 = vmatprep.subr.bf16.mxu0 0
      %592 = vmatpush2.bf16.msra.mxu0 0
      %593 = vmatprep.mubr.bf16.mxu0 0
      %594 = vmatmul.mubr.bf16.gmra.mxu0 %v481
      %v595 = vpop.f32.mrf.mxu0
      %v596 = vadd.f32 0.0, %v595
      %v597 = vpop.f32.mrf.mxu0
      %v598 = vpop.f32.mrf.mxu0
      %v599 = vadd.f32 0.0, %v598
      %v600 = vpop.f32.mrf.mxu0
      %601 = vmatprep.mubr.bf16.mxu0 0
      %602 = vmatmul.mubr.bf16.gmra.mxu0 %v482
      %v603 = vpop.f32.mrf.mxu0
      %v604 = vadd.f32 0.0, %v603
      %v605 = vpop.f32.mrf.mxu0
      %v606 = vpop.f32.mrf.mxu0
      %v607 = vadd.f32 0.0, %v606
      %v608 = vpop.f32.mrf.mxu0
      %609 = vmatprep.mubr.bf16.mxu0 0
      %610 = vmatmul.mubr.bf16.gmra.mxu0 %v483
      %v611 = vpop.f32.mrf.mxu0
      %v612 = vadd.f32 0.0, %v611
      %v613 = vpop.f32.mrf.mxu0
      %v614 = vpop.f32.mrf.mxu0
      %v615 = vadd.f32 0.0, %v614
      %v616 = vpop.f32.mrf.mxu0
      %617 = vmatprep.mubr.bf16.mxu0 0
      %618 = vmatmul.mubr.bf16.gmra.mxu0 %v484
      %v619 = vpop.f32.mrf.mxu0
      %v620 = vadd.f32 0.0, %v619
      %v621 = vpop.f32.mrf.mxu0
      %v622 = vpop.f32.mrf.mxu0
      %v623 = vadd.f32 0.0, %v622
      %v624 = vpop.f32.mrf.mxu0
      %625 = vmatprep.mubr.bf16.mxu0 0
      %626 = vmatmul.mubr.bf16.gmra.mxu0 %v485
      %v627 = vpop.f32.mrf.mxu0
      %v628 = vadd.f32 0.0, %v627
      %v629 = vpop.f32.mrf.mxu0
      %v630 = vpop.f32.mrf.mxu0
      %v631 = vadd.f32 0.0, %v630
      %v632 = vpop.f32.mrf.mxu0
      %633 = vmatprep.mubr.bf16.mxu0 0
      %634 = vmatmul.mubr.bf16.gmra.mxu0 %v486
      %v635 = vpop.f32.mrf.mxu0
      %v636 = vadd.f32 0.0, %v635
      %v637 = vpop.f32.mrf.mxu0
      %v638 = vpop.f32.mrf.mxu0
      %v639 = vadd.f32 0.0, %v638
      %v640 = vpop.f32.mrf.mxu0
      %641 = vmatprep.mubr.bf16.mxu0 0
      %642 = vmatmul.mubr.bf16.gmra.mxu0 %v487
      %v643 = vpop.f32.mrf.mxu0
      %v644 = vadd.f32 0.0, %v643
      %v645 = vpop.f32.mrf.mxu0
      %v646 = vpop.f32.mrf.mxu0
      %v647 = vadd.f32 0.0, %v646
      %v648 = vpop.f32.mrf.mxu0
      %649 = vmatprep.mubr.bf16.mxu0 0
      %650 = vmatmul.mubr.bf16.gmra.mxu0 %v488
      %v651 = vpop.f32.mrf.mxu0
      %v652 = vadd.f32 0.0, %v651
      %v653 = vpop.f32.mrf.mxu0
      %v654 = vpop.f32.mrf.mxu0
      %v655 = vadd.f32 0.0, %v654
      %v656 = vpop.f32.mrf.mxu0
      %657 = vmatprep.mubr.bf16.mxu0 0
      %658 = vmatmul.mubr.bf16.gmra.mxu0 %v489
      %v659 = vpop.f32.mrf.mxu0
      %v660 = vadd.f32 0.0, %v659
      %v661 = vpop.f32.mrf.mxu0
      %v662 = vpop.f32.mrf.mxu0
      %v663 = vadd.f32 0.0, %v662
      %v664 = vpop.f32.mrf.mxu0
      %665 = vmatprep.mubr.bf16.mxu0 0
      %666 = vmatmul.mubr.bf16.gmra.mxu0 %v490
      %v667 = vpop.f32.mrf.mxu0
      %v668 = vadd.f32 0.0, %v667
      %v669 = vpop.f32.mrf.mxu0
      %v670 = vpop.f32.mrf.mxu0
      %v671 = vadd.f32 0.0, %v670
      %v672 = vpop.f32.mrf.mxu0
      %673 = vmatprep.mubr.bf16.mxu0 0
      %674 = vmatmul.mubr.bf16.gmra.mxu0 %v491
      %v675 = vpop.f32.mrf.mxu0
      %v676 = vadd.f32 0.0, %v675
      %v677 = vpop.f32.mrf.mxu0
      %v678 = vpop.f32.mrf.mxu0
      %v679 = vadd.f32 0.0, %v678
      %v680 = vpop.f32.mrf.mxu0
      %681 = vmatprep.mubr.bf16.mxu0 0
      %682 = vmatmul.mubr.bf16.gmra.mxu0 %v492
      %v683 = vpop.f32.mrf.mxu0
      %v684 = vadd.f32 0.0, %v683
      %v685 = vpop.f32.mrf.mxu0
      %v686 = vpop.f32.mrf.mxu0
      %v687 = vadd.f32 0.0, %v686
      %v688 = vpop.f32.mrf.mxu0
      %689 = vmatprep.mubr.bf16.mxu0 0
      %690 = vmatmul.mubr.bf16.gmra.mxu0 %v493
      %v691 = vpop.f32.mrf.mxu0
      %v692 = vadd.f32 0.0, %v691
      %v693 = vpop.f32.mrf.mxu0
      %v694 = vpop.f32.mrf.mxu0
      %v695 = vadd.f32 0.0, %v694
      %v696 = vpop.f32.mrf.mxu0
      %697 = vmatprep.mubr.bf16.mxu0 0
      %698 = vmatmul.mubr.bf16.gmra.mxu0 %v494
      %v699 = vpop.f32.mrf.mxu0
      %v700 = vadd.f32 0.0, %v699
      %v701 = vpop.f32.mrf.mxu0
      %v702 = vpop.f32.mrf.mxu0
      %v703 = vadd.f32 0.0, %v702
      %v704 = vpop.f32.mrf.mxu0
      %705 = vmatprep.mubr.bf16.mxu0 0
      %706 = vmatmul.mubr.bf16.gmra.mxu0 %v495
      %v707 = vpop.f32.mrf.mxu0
      %v708 = vadd.f32 0.0, %v707
      %v709 = vpop.f32.mrf.mxu0
      %v710 = vpop.f32.mrf.mxu0
      %v711 = vadd.f32 0.0, %v710
      %v712 = vpop.f32.mrf.mxu0
      %713 = vmatprep.mubr.bf16.mxu0 0
      %714 = vmatmul.mubr.bf16.gmra.mxu0 %v496
      %v715 = vpop.f32.mrf.mxu0
      %v716 = vadd.f32 0.0, %v715
      %v717 = vpop.f32.mrf.mxu0
      %v718 = vpop.f32.mrf.mxu0
      %v719 = vadd.f32 0.0, %v718
      %v720 = vpop.f32.mrf.mxu0
      %721 = vdwg.mxu0
      %v722 = vadd.f32 %v337, %v596
      %v723 = vadd.f32 %v338, %v599
      %v724 = vadd.f32 %v339, %v604
      %v725 = vadd.f32 %v340, %v607
      %v726 = vadd.f32 %v341, %v612
      %v727 = vadd.f32 %v342, %v615
      %v728 = vadd.f32 %v343, %v620
      %v729 = vadd.f32 %v344, %v623
      %v730 = vadd.f32 %v345, %v628
      %v731 = vadd.f32 %v346, %v631
      %v732 = vadd.f32 %v347, %v636
      %v733 = vadd.f32 %v348, %v639
      %v734 = vadd.f32 %v349, %v644
      %v735 = vadd.f32 %v350, %v647
      %v736 = vadd.f32 %v351, %v652
      %v737 = vadd.f32 %v352, %v655
      %v738 = vadd.f32 %v353, %v660
      %v739 = vadd.f32 %v354, %v663
      %v740 = vadd.f32 %v355, %v668
      %v741 = vadd.f32 %v356, %v671
      %v742 = vadd.f32 %v357, %v676
      %v743 = vadd.f32 %v358, %v679
      %v744 = vadd.f32 %v359, %v684
      %v745 = vadd.f32 %v360, %v687
      %v746 = vadd.f32 %v361, %v692
      %v747 = vadd.f32 %v362, %v695
      %v748 = vadd.f32 %v363, %v700
      %v749 = vadd.f32 %v364, %v703
      %v750 = vadd.f32 %v365, %v708
      %v751 = vadd.f32 %v366, %v711
      %v752 = vadd.f32 %v367, %v716
      %v753 = vadd.f32 %v368, %v719
      %754 = vst [vmem:[%s298] sm:$0xff] %v722
      %755 = vst [vmem:[%s298 + $0x8] sm:$0xff] %v723
      %756 = vst [vmem:[%s298 + $0x10] sm:$0xff] %v724
      %757 = vst [vmem:[%s298 + $0x18] sm:$0xff] %v725
      %758 = vst [vmem:[%s298 + $0x20] sm:$0xff] %v726
      %759 = vst [vmem:[%s298 + $0x28] sm:$0xff] %v727
      %760 = vst [vmem:[%s298 + $0x30] sm:$0xff] %v728
      %761 = vst [vmem:[%s298 + $0x38] sm:$0xff] %v729
      %762 = vst [vmem:[%s298 + $0x40] sm:$0xff] %v730
      %763 = vst [vmem:[%s298 + $0x48] sm:$0xff] %v731
      %764 = vst [vmem:[%s298 + $0x50] sm:$0xff] %v732
      %765 = vst [vmem:[%s298 + $0x58] sm:$0xff] %v733
      %766 = vst [vmem:[%s298 + $0x60] sm:$0xff] %v734
      %767 = vst [vmem:[%s298 + $0x68] sm:$0xff] %v735
      %768 = vst [vmem:[%s298 + $0x70] sm:$0xff] %v736
      %769 = vst [vmem:[%s298 + $0x78] sm:$0xff] %v737
      %770 = vst [vmem:[%s298 + $0x80] sm:$0xff] %v738
      %771 = vst [vmem:[%s298 + $0x88] sm:$0xff] %v739
      %772 = vst [vmem:[%s298 + $0x90] sm:$0xff] %v740
      %773 = vst [vmem:[%s298 + $0x98] sm:$0xff] %v741
      %774 = vst [vmem:[%s298 + $0xa0] sm:$0xff] %v742
      %775 = vst [vmem:[%s298 + $0xa8] sm:$0xff] %v743
      %776 = vst [vmem:[%s298 + $0xb0] sm:$0xff] %v744
      %777 = vst [vmem:[%s298 + $0xb8] sm:$0xff] %v745
      %778 = vst [vmem:[%s298 + $0xc0] sm:$0xff] %v746
      %779 = vst [vmem:[%s298 + $0xc8] sm:$0xff] %v747
      %780 = vst [vmem:[%s298 + $0xd0] sm:$0xff] %v748
      %781 = vst [vmem:[%s298 + $0xd8] sm:$0xff] %v749
      %782 = vst [vmem:[%s298 + $0xe0] sm:$0xff] %v750
      %783 = vst [vmem:[%s298 + $0xe8] sm:$0xff] %v751
      %784 = vst [vmem:[%s298 + $0xf0] sm:$0xff] %v752
      %785 = vst [vmem:[%s298 + $0xf8] sm:$0xff] %v753
      // Predicated region
      $region41: #{_lambda_.13} parent=35 // pred_check
        %p786 = pneg %p301
      $region42: #{_lambda_.13} parent=35 // pred_check_branch
        %788 = sbr.rel (%p786) target = $region44
      $region43: #{_lambda_.13} parent=35 // pred_region
        %v789 = vld [vmem:[%s298] sm:$0xff]
        %v790 = vld [vmem:[%s298 + $0x8] sm:$0xff]
        %v791 = vld [vmem:[%s298 + $0x10] sm:$0xff]
        %v792 = vld [vmem:[%s298 + $0x18] sm:$0xff]
        %v793 = vld [vmem:[%s298 + $0x20] sm:$0xff]
        %v794 = vld [vmem:[%s298 + $0x28] sm:$0xff]
        %v795 = vld [vmem:[%s298 + $0x30] sm:$0xff]
        %v796 = vld [vmem:[%s298 + $0x38] sm:$0xff]
        %v797 = vld [vmem:[%s298 + $0x40] sm:$0xff]
        %v798 = vld [vmem:[%s298 + $0x48] sm:$0xff]
        %v799 = vld [vmem:[%s298 + $0x50] sm:$0xff]
        %v800 = vld [vmem:[%s298 + $0x58] sm:$0xff]
        %v801 = vld [vmem:[%s298 + $0x60] sm:$0xff]
        %v802 = vld [vmem:[%s298 + $0x68] sm:$0xff]
        %v803 = vld [vmem:[%s298 + $0x70] sm:$0xff]
        %v804 = vld [vmem:[%s298 + $0x78] sm:$0xff]
        %v805 = vld [vmem:[%s298 + $0x80] sm:$0xff]
        %v806 = vld [vmem:[%s298 + $0x88] sm:$0xff]
        %v807 = vld [vmem:[%s298 + $0x90] sm:$0xff]
        %v808 = vld [vmem:[%s298 + $0x98] sm:$0xff]
        %v809 = vld [vmem:[%s298 + $0xa0] sm:$0xff]
        %v810 = vld [vmem:[%s298 + $0xa8] sm:$0xff]
        %v811 = vld [vmem:[%s298 + $0xb0] sm:$0xff]
        %v812 = vld [vmem:[%s298 + $0xb8] sm:$0xff]
        %v813 = vld [vmem:[%s298 + $0xc0] sm:$0xff]
        %v814 = vld [vmem:[%s298 + $0xc8] sm:$0xff]
        %v815 = vld [vmem:[%s298 + $0xd0] sm:$0xff]
        %v816 = vld [vmem:[%s298 + $0xd8] sm:$0xff]
        %v817 = vld [vmem:[%s298 + $0xe0] sm:$0xff]
        %v818 = vld [vmem:[%s298 + $0xe8] sm:$0xff]
        %v819 = vld [vmem:[%s298 + $0xf0] sm:$0xff]
        %v820 = vld [vmem:[%s298 + $0xf8] sm:$0xff]
        %v821 = vld [vmem:[%s287] sm:$0x1]
        %v823 = vlaneseq
        %v824 = vshrl.u32 %v823, 7
        %v825 = vsub.s32 0, %v824
        %v826 = vrot.slane %v821, %v825
        %v828 = vmul.f32 %v789, %v826
        %v829 = vmul.f32 %v790, %v826
        %v830 = vmul.f32 %v791, %v826
        %v831 = vmul.f32 %v792, %v826
        %v832 = vmul.f32 %v793, %v826
        %v833 = vmul.f32 %v794, %v826
        %v834 = vmul.f32 %v795, %v826
        %v835 = vmul.f32 %v796, %v826
        %v836 = vmul.f32 %v797, %v826
        %v837 = vmul.f32 %v798, %v826
        %v838 = vmul.f32 %v799, %v826
        %v839 = vmul.f32 %v800, %v826
        %v840 = vmul.f32 %v801, %v826
        %v841 = vmul.f32 %v802, %v826
        %v842 = vmul.f32 %v803, %v826
        %v843 = vmul.f32 %v804, %v826
        %v844 = vmul.f32 %v805, %v826
        %v845 = vmul.f32 %v806, %v826
        %v846 = vmul.f32 %v807, %v826
        %v847 = vmul.f32 %v808, %v826
        %v848 = vmul.f32 %v809, %v826
        %v849 = vmul.f32 %v810, %v826
        %v850 = vmul.f32 %v811, %v826
        %v851 = vmul.f32 %v812, %v826
        %v852 = vmul.f32 %v813, %v826
        %v853 = vmul.f32 %v814, %v826
        %v854 = vmul.f32 %v815, %v826
        %v855 = vmul.f32 %v816, %v826
        %v856 = vmul.f32 %v817, %v826
        %v857 = vmul.f32 %v818, %v826
        %v858 = vmul.f32 %v819, %v826
        %v859 = vmul.f32 %v820, %v826
        %v860 = vld [vmem:[%s290] sm:$0x1]
        %v862 = vlaneseq
        %v863 = vshrl.u32 %v862, 7
        %v864 = vsub.s32 0, %v863
        %v865 = vrot.slane %v860, %v864
        %v867 = vadd.f32 %v828, %v865
        %v868 = vadd.f32 %v829, %v865
        %v869 = vadd.f32 %v830, %v865
        %v870 = vadd.f32 %v831, %v865
        %v871 = vadd.f32 %v832, %v865
        %v872 = vadd.f32 %v833, %v865
        %v873 = vadd.f32 %v834, %v865
        %v874 = vadd.f32 %v835, %v865
        %v875 = vadd.f32 %v836, %v865
        %v876 = vadd.f32 %v837, %v865
        %v877 = vadd.f32 %v838, %v865
        %v878 = vadd.f32 %v839, %v865
        %v879 = vadd.f32 %v840, %v865
        %v880 = vadd.f32 %v841, %v865
        %v881 = vadd.f32 %v842, %v865
        %v882 = vadd.f32 %v843, %v865
        %v883 = vadd.f32 %v844, %v865
        %v884 = vadd.f32 %v845, %v865
        %v885 = vadd.f32 %v846, %v865
        %v886 = vadd.f32 %v847, %v865
        %v887 = vadd.f32 %v848, %v865
        %v888 = vadd.f32 %v849, %v865
        %v889 = vadd.f32 %v850, %v865
        %v890 = vadd.f32 %v851, %v865
        %v891 = vadd.f32 %v852, %v865
        %v892 = vadd.f32 %v853, %v865
        %v893 = vadd.f32 %v854, %v865
        %v894 = vadd.f32 %v855, %v865
        %v895 = vadd.f32 %v856, %v865
        %v896 = vadd.f32 %v857, %v865
        %v897 = vadd.f32 %v858, %v865
        %v898 = vadd.f32 %v859, %v865
        %v899 = vmax.f32 %v867, 0.0
        %v900 = vmax.f32 %v868, 0.0
        %v901 = vmax.f32 %v869, 0.0
        %v902 = vmax.f32 %v870, 0.0
        %v903 = vmax.f32 %v871, 0.0
        %v904 = vmax.f32 %v872, 0.0
        %v905 = vmax.f32 %v873, 0.0
        %v906 = vmax.f32 %v874, 0.0
        %v907 = vmax.f32 %v875, 0.0
        %v908 = vmax.f32 %v876, 0.0
        %v909 = vmax.f32 %v877, 0.0
        %v910 = vmax.f32 %v878, 0.0
        %v911 = vmax.f32 %v879, 0.0
        %v912 = vmax.f32 %v880, 0.0
        %v913 = vmax.f32 %v881, 0.0
        %v914 = vmax.f32 %v882, 0.0
        %v915 = vmax.f32 %v883, 0.0
        %v916 = vmax.f32 %v884, 0.0
        %v917 = vmax.f32 %v885, 0.0
        %v918 = vmax.f32 %v886, 0.0
        %v919 = vmax.f32 %v887, 0.0
        %v920 = vmax.f32 %v888, 0.0
        %v921 = vmax.f32 %v889, 0.0
        %v922 = vmax.f32 %v890, 0.0
        %v923 = vmax.f32 %v891, 0.0
        %v924 = vmax.f32 %v892, 0.0
        %v925 = vmax.f32 %v893, 0.0
        %v926 = vmax.f32 %v894, 0.0
        %v927 = vmax.f32 %v895, 0.0
        %v928 = vmax.f32 %v896, 0.0
        %v929 = vmax.f32 %v897, 0.0
        %v930 = vmax.f32 %v898, 0.0
        %931 = vst [vmem:[%s298] sm:$0xff] %v899
        %932 = vst [vmem:[%s298 + $0x8] sm:$0xff] %v900
        %933 = vst [vmem:[%s298 + $0x10] sm:$0xff] %v901
        %934 = vst [vmem:[%s298 + $0x18] sm:$0xff] %v902
        %935 = vst [vmem:[%s298 + $0x20] sm:$0xff] %v903
        %936 = vst [vmem:[%s298 + $0x28] sm:$0xff] %v904
        %937 = vst [vmem:[%s298 + $0x30] sm:$0xff] %v905
        %938 = vst [vmem:[%s298 + $0x38] sm:$0xff] %v906
        %939 = vst [vmem:[%s298 + $0x40] sm:$0xff] %v907
        %940 = vst [vmem:[%s298 + $0x48] sm:$0xff] %v908
        %941 = vst [vmem:[%s298 + $0x50] sm:$0xff] %v909
        %942 = vst [vmem:[%s298 + $0x58] sm:$0xff] %v910
        %943 = vst [vmem:[%s298 + $0x60] sm:$0xff] %v911
        %944 = vst [vmem:[%s298 + $0x68] sm:$0xff] %v912
        %945 = vst [vmem:[%s298 + $0x70] sm:$0xff] %v913
        %946 = vst [vmem:[%s298 + $0x78] sm:$0xff] %v914
        %947 = vst [vmem:[%s298 + $0x80] sm:$0xff] %v915
        %948 = vst [vmem:[%s298 + $0x88] sm:$0xff] %v916
        %949 = vst [vmem:[%s298 + $0x90] sm:$0xff] %v917
        %950 = vst [vmem:[%s298 + $0x98] sm:$0xff] %v918
        %951 = vst [vmem:[%s298 + $0xa0] sm:$0xff] %v919
        %952 = vst [vmem:[%s298 + $0xa8] sm:$0xff] %v920
        %953 = vst [vmem:[%s298 + $0xb0] sm:$0xff] %v921
        %954 = vst [vmem:[%s298 + $0xb8] sm:$0xff] %v922
        %955 = vst [vmem:[%s298 + $0xc0] sm:$0xff] %v923
        %956 = vst [vmem:[%s298 + $0xc8] sm:$0xff] %v924
        %957 = vst [vmem:[%s298 + $0xd0] sm:$0xff] %v925
        %958 = vst [vmem:[%s298 + $0xd8] sm:$0xff] %v926
        %959 = vst [vmem:[%s298 + $0xe0] sm:$0xff] %v927
        %960 = vst [vmem:[%s298 + $0xe8] sm:$0xff] %v928
        %961 = vst [vmem:[%s298 + $0xf0] sm:$0xff] %v929
        %962 = vst [vmem:[%s298 + $0xf8] sm:$0xff] %v930
      $region44: #{_lambda_.13} parent=35 // pred_fallthru
        _
      %s963 = smul.u32 32, %s20
      %p964 = scmp.lt.s32.totalorder %s963, 63
      %s965 = scalar_select %p964, %s963, 63
      %p966 = scmp.lt.s32.totalorder %s21, 0
      %s967 = scalar_select %p966, %s21, 0
      %s968 = sadd.s32 %s967, %s965
      %s969 = smul.addr %s968, 8
      %s970 = scalar_lea.vmem %s4, %s969
      // Predicated region
      $region45: #{_lambda_.13} parent=35 // pred_check
        %p971 = pneg %p162
      $region46: #{_lambda_.13} parent=35 // pred_check_branch
        %973 = sbr.rel (%p971) target = $region48
      $region47: #{_lambda_.13} parent=35 // pred_region
        %s974 = smul.u32 32, %s20
      $region48: #{_lambda_.13} parent=35 // pred_fallthru
        _
    $region36: #{_lambda_.13} parent=5 // pred_fallthru
      _
    %p975 = scmp.le.s32.totalorder 2, %s10
    // Predicated region
    $region49: #{_lambda_.13} parent=5 // pred_check
      %p976 = pneg %p975
    $region50: #{_lambda_.13} parent=5 // pred_check_branch
      %978 = sbr.rel (%p976) target = $region52
    $region51: #{_lambda_.13} parent=5 // pred_region
      %s979 = ssub.s32 %s10, 2
      // Predicated region
      $region53: #{_lambda_.13} parent=51 // pred_check
        %p980 = pneg %p168
      $region54: #{_lambda_.13} parent=51 // pred_check_branch
        %982 = sbr.rel (%p980) target = $region56
      $region55: #{_lambda_.13} parent=51 // pred_region
        %s983 = smul.u32 32, %s23
        %p984 = scmp.lt.s32.totalorder %s983, 63
        %s985 = scalar_select %p984, %s983, 63
        %p986 = scmp.lt.s32.totalorder %s24, 0
        %s987 = scalar_select %p986, %s24, 0
        %s988 = sadd.s32 %s987, %s985
        %s989 = smul.addr %s988, 8
        %s990 = scalar_lea.vmem %s4, %s989
      $region56: #{_lambda_.13} parent=51 // pred_fallthru
        _
    $region52: #{_lambda_.13} parent=5 // pred_fallthru
      _
  $region6: #{_lambda_.13} parent=0 // loop_footer
    %s14 = sadd.s32 1, %s10
  $region7: #{_lambda_.13} parent=0 // loop_footer_branch
    %9 = sbr.rel target = $region3
  $region8: #{_lambda_.13} parent=0 // loop_exit
    _

// kernel: _lambda_.14
$region0: #{_lambda_.14}
  #allocation0 [shape = 'u32[]', space=smem, size = 0x4, offset = 0x4, fixed_abs, tag = 'smem constant byte address 0x4 - core index']
  #allocation1 [shape = 'u32[144,128]{1,0:T(1,128)}', space=vmem, size = 0x12000, scoped, tag = 'internal scratch']
  %s0 = inlined_call_operand.vmem [shape: bf16[512,256], index: 0, kind: input, shape index: {}]
  %s1 = inlined_call_operand.vmem [shape: bf16[256,128], index: 1, kind: input, shape index: {}]
  %s2 = inlined_call_operand.vmem [shape: f32[1,128], index: 2, kind: input, shape index: {}]
  %s3 = inlined_call_operand.vmem [shape: f32[1,128], index: 3, kind: input, shape index: {}]
  %s4 = inlined_call_operand.vmem [shape: f32[512,128], index: 4, kind: output, shape index: {}]
  %s5 = sld [smem:[#allocation0]]
  $region57: #{_lambda_.14} parent=0
    _
  %s7 = ssub.s32 1, %s5
  %s8 = scalar_select 0, %s7, %s5
  loop: start=0, step=1, limit=4
  $region2: #{_lambda_.14} parent=0 // loop_pre_header
    _
  $region3: #{_lambda_.14} parent=0 // loop_header
    %s10 = sphi 0, %s14
    %p11 = scmp.ge.s32.totalorder %s10, 4
    %s17 = sphi 0, %s36
    %s18 = sphi 0, %s32
    %s19 = sphi 0, %s28
    %s20 = sphi 0, %s17
    %s21 = sphi 0, %s18
    %s22 = sphi 0, %s19
    %s23 = sphi 0, %s20
    %s24 = sphi 0, %s21
    %s25 = sphi 0, %s22
    %s41 = sphi 0, %s43
    %s44 = sphi 0, %s41
    %s45 = sphi 0, %s44
    %s61 = sphi 0, %s45
    %s69 = sphi 0, %s71
    %s72 = sphi 0, %s69
    %s73 = sphi 0, %s72
    %s89 = sphi 0, %s73
    %s95 = sphi 0, %s97
    %s98 = sphi 0, %s95
    %s99 = sphi 0, %s98
    %s115 = sphi 0, %s99
    %s121 = sphi 0, %s123
    %s124 = sphi 0, %s121
    %s125 = sphi 0, %s124
    %s141 = sphi 0, %s125
    %s149 = sphi 0, %s151
    %s152 = sphi 0, %s149
    %s153 = sphi 0, %s152
    %s169 = sphi 0, %s153
  $region4: #{_lambda_.14} parent=0 // loop_header_branch
    %13 = sbr.rel (%p11) target = $region8
  $region5: #{_lambda_.14} parent=0 // loop_body
    %s15 = ssub.s32 %s10, 1
    %s16 = ssub.s32 %s10, 2
    %s26 = sadd.s32 1, %s19
    %p27 = scmp.ge.s32.totalorder %s26, 1
    %s28 = scalar_select %p27, 0, %s26
    %s29 = sadd.s32 1, %s18
    %s30 = scalar_select %p27, %s29, %s18
    %p31 = scmp.ge.s32.totalorder %s30, 1
    %s32 = scalar_select %p31, 0, %s30
    %s33 = sadd.s32 1, %s17
    %s34 = scalar_select %p31, %s33, %s17
    %p35 = scmp.ge.s32.totalorder %s34, 2
    %s36 = scalar_select %p35, 0, %s34
    %s37 = ssub.s32 %s17, %s36
    %s38 = ssub.s32 %s19, %s28
    %s39 = sor.u32 %s37, %s38
    %p40 = scmp.eq.s32.totalorder %s39, 0
    %s42 = sadd.s32 %s41, 1
    %s43 = scalar_select %p40, %s41, %s42
    %p46 = pneg %p40
    %p47 = scmp.eq.s32.totalorder %s10, 1
    %p48 = por %p46, %p47
    %p49 = scmp.ne.s32.totalorder %s41, %s44
    %p50 = scmp.eq.s32.totalorder %s10, 0
    %p51 = por %p49, %p50
    %p52 = scmp.ne.s32.totalorder %s41, %s44
    %p53 = scmp.eq.s32.totalorder %s15, 1
    %p54 = por %p52, %p53
    %p55 = scmp.ne.s32.totalorder %s44, %s45
    %p56 = scmp.eq.s32.totalorder %s15, 0
    %p57 = por %p55, %p56
    %p58 = scmp.ne.s32.totalorder %s44, %s45
    %p59 = scmp.eq.s32.totalorder %s16, 1
    %p60 = por %p58, %p59
    %p62 = scmp.ne.s32.totalorder %s45, %s61
    %p63 = scmp.eq.s32.totalorder %s16, 0
    %p64 = por %p62, %p63
    %s65 = ssub.s32 %s19, %s28
    %s66 = ssub.s32 %s18, %s32
    %s67 = sor.u32 %s65, %s66
    %p68 = scmp.eq.s32.totalorder %s67, 0
    %s70 = sadd.s32 %s69, 1
    %s71 = scalar_select %p68, %s69, %s70
    %p74 = pneg %p68
    %p75 = scmp.eq.s32.totalorder %s10, 1
    %p76 = por %p74, %p75
    %p77 = scmp.ne.s32.totalorder %s69, %s72
    %p78 = scmp.eq.s32.totalorder %s10, 0
    %p79 = por %p77, %p78
    %p80 = scmp.ne.s32.totalorder %s69, %s72
    %p81 = scmp.eq.s32.totalorder %s15, 1
    %p82 = por %p80, %p81
    %p83 = scmp.ne.s32.totalorder %s72, %s73
    %p84 = scmp.eq.s32.totalorder %s15, 0
    %p85 = por %p83, %p84
    %p86 = scmp.ne.s32.totalorder %s72, %s73
    %p87 = scmp.eq.s32.totalorder %s16, 1
    %p88 = por %p86, %p87
    %p90 = scmp.ne.s32.totalorder %s73, %s89
    %p91 = scmp.eq.s32.totalorder %s16, 0
    %p92 = por %p90, %p91
    %s93 = ssub.s32 %s18, %s32
    %p94 = scmp.eq.s32.totalorder %s93, 0
    %s96 = sadd.s32 %s95, 1
    %s97 = scalar_select %p94, %s95, %s96
    %p100 = pneg %p94
    %p101 = scmp.eq.s32.totalorder %s10, 1
    %p102 = por %p100, %p101
    %p103 = scmp.ne.s32.totalorder %s95, %s98
    %p104 = scmp.eq.s32.totalorder %s10, 0
    %p105 = por %p103, %p104
    %p106 = scmp.ne.s32.totalorder %s95, %s98
    %p107 = scmp.eq.s32.totalorder %s15, 1
    %p108 = por %p106, %p107
    %p109 = scmp.ne.s32.totalorder %s98, %s99
    %p110 = scmp.eq.s32.totalorder %s15, 0
    %p111 = por %p109, %p110
    %p112 = scmp.ne.s32.totalorder %s98, %s99
    %p113 = scmp.eq.s32.totalorder %s16, 1
    %p114 = por %p112, %p113
    %p116 = scmp.ne.s32.totalorder %s99, %s115
    %p117 = scmp.eq.s32.totalorder %s16, 0
    %p118 = por %p116, %p117
    %s119 = ssub.s32 %s18, %s32
    %p120 = scmp.eq.s32.totalorder %s119, 0
    %s122 = sadd.s32 %s121, 1
    %s123 = scalar_select %p120, %s121, %s122
    %p126 = pneg %p120
    %p127 = scmp.eq.s32.totalorder %s10, 1
    %p128 = por %p126, %p127
    %p129 = scmp.ne.s32.totalorder %s121, %s124
    %p130 = scmp.eq.s32.totalorder %s10, 0
    %p131 = por %p129, %p130
    %p132 = scmp.ne.s32.totalorder %s121, %s124
    %p133 = scmp.eq.s32.totalorder %s15, 1
    %p134 = por %p132, %p133
    %p135 = scmp.ne.s32.totalorder %s124, %s125
    %p136 = scmp.eq.s32.totalorder %s15, 0
    %p137 = por %p135, %p136
    %p138 = scmp.ne.s32.totalorder %s124, %s125
    %p139 = scmp.eq.s32.totalorder %s16, 1
    %p140 = por %p138, %p139
    %p142 = scmp.ne.s32.totalorder %s125, %s141
    %p143 = scmp.eq.s32.totalorder %s16, 0
    %p144 = por %p142, %p143
    %s145 = ssub.s32 %s17, %s36
    %s146 = ssub.s32 %s18, %s32
    %s147 = sor.u32 %s145, %s146
    %p148 = scmp.eq.s32.totalorder %s147, 0
    %s150 = sadd.s32 %s149, 1
    %s151 = scalar_select %p148, %s149, %s150
    %p154 = pneg %p148
    %p155 = scmp.eq.s32.totalorder %s10, 1
    %p156 = por %p154, %p155
    %p157 = scmp.ne.s32.totalorder %s149, %s152
    %p158 = scmp.eq.s32.totalorder %s10, 0
    %p159 = por %p157, %p158
    %p160 = scmp.ne.s32.totalorder %s149, %s152
    %p161 = scmp.eq.s32.totalorder %s15, 1
    %p162 = por %p160, %p161
    %p163 = scmp.ne.s32.totalorder %s152, %s153
    %p164 = scmp.eq.s32.totalorder %s15, 0
    %p165 = por %p163, %p164
    %p166 = scmp.ne.s32.totalorder %s152, %s153
    %p167 = scmp.eq.s32.totalorder %s16, 1
    %p168 = por %p166, %p167
    %p170 = scmp.ne.s32.totalorder %s153, %s169
    %p171 = scmp.eq.s32.totalorder %s16, 0
    %p172 = por %p170, %p171
    %p173 = scmp.le.s32.totalorder 1, %s10
    %p174 = scmp.lt.s32.totalorder %s10, 3
    %p175 = pnand %p173, %p174
    %p176 = pneg %p175
    // Predicated region
    $region9: #{_lambda_.14} parent=5 // pred_check
      _
    $region10: #{_lambda_.14} parent=5 // pred_check_branch
      %178 = sbr.rel (%p175) target = $region12
    $region11: #{_lambda_.14} parent=5 // pred_region
      %s179 = ssub.s32 %s10, 1
      // Predicated region
      $region13: #{_lambda_.14} parent=11 // pred_check
        %p180 = pneg %p85
      $region14: #{_lambda_.14} parent=11 // pred_check_branch
        %182 = sbr.rel (%p180) target = $region16
      $region15: #{_lambda_.14} parent=11 // pred_region
        %s183 = smul.u32 32, %s22
        %p184 = scmp.lt.s32.totalorder %s183, 31
        %s185 = scalar_select %p184, %s183, 31
        %p186 = scmp.lt.s32.totalorder %s21, 0
        %s187 = scalar_select %p186, %s21, 0
        %s188 = sadd.s32 %s187, %s185
        %s189 = smul.addr %s188, 4
        %s190 = scalar_lea.vmem %s1, %s189
        %s191 = smul.u32 32, %s22
      $region16: #{_lambda_.14} parent=11 // pred_fallthru
        _
      // Predicated region
      $region17: #{_lambda_.14} parent=11 // pred_check
        %p192 = pneg %p111
      $region18: #{_lambda_.14} parent=11 // pred_check_branch
        %194 = sbr.rel (%p192) target = $region20
      $region19: #{_lambda_.14} parent=11 // pred_region
        %p195 = scmp.lt.s32.totalorder %s21, 0
        %s196 = scalar_select %p195, %s21, 0
        %s197 = scalar_lea.vmem %s2, %s196
      $region20: #{_lambda_.14} parent=11 // pred_fallthru
        _
      // Predicated region
      $region21: #{_lambda_.14} parent=11 // pred_check
        %p198 = pneg %p137
      $region22: #{_lambda_.14} parent=11 // pred_check_branch
        %200 = sbr.rel (%p198) target = $region24
      $region23: #{_lambda_.14} parent=11 // pred_region
        %p201 = scmp.lt.s32.totalorder %s21, 0
        %s202 = scalar_select %p201, %s21, 0
        %s203 = scalar_lea.vmem %s3, %s202
      $region24: #{_lambda_.14} parent=11 // pred_fallthru
        _
    $region12: #{_lambda_.14} parent=5 // pred_fallthru
      _
    %p204 = scmp.lt.s32.totalorder %s10, 2
    // Predicated region
    $region25: #{_lambda_.14} parent=5 // pred_check
      %p205 = pneg %p204
    $region26: #{_lambda_.14} parent=5 // pred_check_branch
      %207 = sbr.rel (%p205) target = $region28
    $region27: #{_lambda_.14} parent=5 // pred_region
      // Predicated region
      $region29: #{_lambda_.14} parent=27 // pred_check
        %p208 = pneg %p51
      $region30: #{_lambda_.14} parent=27 // pred_check_branch
        %210 = sbr.rel (%p208) target = $region32
      $region31: #{_lambda_.14} parent=27 // pred_region
        %s211 = smul.u32 32, %s17
        %s212 = smul.u32 2, %s19
        %p213 = scmp.lt.s32.totalorder %s211, 63
        %s214 = scalar_select %p213, %s211, 63
        %p215 = scmp.lt.s32.totalorder %s212, 1
        %s216 = scalar_select %p215, %s212, 1
        %s217 = smul.addr %s214, 2
        %s218 = sadd.s32 %s216, %s217
        %s219 = smul.addr %s218, 4
        %s220 = scalar_lea.vmem %s0, %s219
        %s221 = smul.u32 32, %s17
        %s222 = smul.u32 2, %s19
      $region32: #{_lambda_.14} parent=27 // pred_fallthru
        _
    $region28: #{_lambda_.14} parent=5 // pred_fallthru
      _
    %p223 = scmp.le.s32.totalorder 1, %s10
    %p224 = scmp.lt.s32.totalorder %s10, 3
    %p225 = pnand %p223, %p224
    %p226 = pneg %p225
    // Predicated region
    $region33: #{_lambda_.14} parent=5 // pred_check
      _
    $region34: #{_lambda_.14} parent=5 // pred_check_branch
      %228 = sbr.rel (%p225) target = $region36
    $region35: #{_lambda_.14} parent=5 // pred_region
      %s229 = ssub.s32 %s10, 1
      %s230 = smul.u32 32, %s20
      %s231 = smul.u32 2, %s22
      %p232 = scmp.lt.s32.totalorder %s230, 63
      %s233 = scalar_select %p232, %s230, 63
      %p234 = scmp.lt.s32.totalorder %s231, 1
      %s235 = scalar_select %p234, %s231, 1
      %s236 = smul.addr %s233, 2
      %s237 = sadd.s32 %s235, %s236
      %s238 = smul.addr %s237, 4
      %s239 = scalar_lea.vmem %s0, %s238
      %p240 = pneg %p57
      %p241 = pneg %p54
      %s242 = smul.u32 32, %s22
      %p243 = scmp.lt.s32.totalorder %s242, 31
      %s244 = scalar_select %p243, %s242, 31
      %p245 = scmp.lt.s32.totalorder %s21, 0
      %s246 = scalar_select %p245, %s21, 0
      %s247 = sadd.s32 %s246, %s244
      %s248 = smul.addr %s247, 4
      %s249 = scalar_lea.vmem %s1, %s248
      %p250 = pneg %p85
      %p251 = pneg %p82
      %p252 = scmp.lt.s32.totalorder %s21, 0
      %s253 = scalar_select %p252, %s21, 0
      %s254 = scalar_lea.vmem %s2, %s253
      %p255 = pneg %p111
      %p256 = pneg %p108
      %p257 = scmp.lt.s32.totalorder %s21, 0
      %s258 = scalar_select %p257, %s21, 0
      %s259 = scalar_lea.vmem %s3, %s258
      %p260 = pneg %p137
      %p261 = pneg %p134
      %p262 = pneg %p165
      %p263 = pneg %p162
      %s264 = smul.u32 32, %s20
      %p265 = scmp.lt.s32.totalorder %s264, 63
      %s266 = scalar_select %p265, %s264, 63
      %p267 = scmp.lt.s32.totalorder %s21, 0
      %s268 = scalar_select %p267, %s21, 0
      %s269 = sadd.s32 %s268, %s266
      %s270 = smul.addr %s269, 8
      %s271 = scalar_lea.vmem %s4, %s270
      %s272 = smul.u32 32, %s20
      %s273 = smul.u32 2, %s22
      %p274 = scmp.lt.s32.totalorder %s272, 63
      %s275 = scalar_select %p274, %s272, 63
      %p276 = scmp.lt.s32.totalorder %s273, 1
      %s277 = scalar_select %p276, %s273, 1
      %s278 = smul.addr %s275, 2
      %s279 = sadd.s32 %s277, %s278
      %s280 = smul.addr %s279, 4
      %s281 = scalar_lea.vmem %s0, %s280
      %s282 = smul.u32 32, %s20
      %s283 = smul.u32 2, %s22
      %s284 = smul.u32 32, %s22
      %p285 = scmp.lt.s32.totalorder %s284, 31
      %s286 = scalar_select %p285, %s284, 31
      %p287 = scmp.lt.s32.totalorder %s21, 0
      %s288 = scalar_select %p287, %s21, 0
      %s289 = sadd.s32 %s288, %s286
      %s290 = smul.addr %s289, 4
      %s291 = scalar_lea.vmem %s1, %s290
      %s292 = smul.u32 32, %s22
      %p293 = scmp.lt.s32.totalorder %s21, 0
      %s294 = scalar_select %p293, %s21, 0
      %s295 = scalar_lea.vmem %s2, %s294
      %p296 = scmp.lt.s32.totalorder %s21, 0
      %s297 = scalar_select %p296, %s21, 0
      %s298 = scalar_lea.vmem %s3, %s297
      %s299 = smul.u32 32, %s20
      %p300 = scmp.lt.s32.totalorder %s299, 63
      %s301 = scalar_select %p300, %s299, 63
      %p302 = scmp.lt.s32.totalorder %s21, 0
      %s303 = scalar_select %p302, %s21, 0
      %s304 = sadd.s32 %s303, %s301
      %s305 = smul.addr %s304, 8
      %s306 = scalar_lea.vmem %s4, %s305
      %s307 = smul.u32 32, %s20
      %p309 = scmp.eq.s32.totalorder %s22, 0
      // Predicated region
      $region37: #{_lambda_.14} parent=35 // pred_check
        %p310 = pneg %p309
      $region38: #{_lambda_.14} parent=35 // pred_check_branch
        %312 = sbr.rel (%p310) target = $region40
      $region39: #{_lambda_.14} parent=35 // pred_region
        %313 = vst [vmem:[%s306] sm:$0xff] 0.0
        %314 = vst [vmem:[%s306 + $0x8] sm:$0xff] 0.0
        %315 = vst [vmem:[%s306 + $0x10] sm:$0xff] 0.0
        %316 = vst [vmem:[%s306 + $0x18] sm:$0xff] 0.0
        %317 = vst [vmem:[%s306 + $0x20] sm:$0xff] 0.0
        %318 = vst [vmem:[%s306 + $0x28] sm:$0xff] 0.0
        %319 = vst [vmem:[%s306 + $0x30] sm:$0xff] 0.0
        %320 = vst [vmem:[%s306 + $0x38] sm:$0xff] 0.0
        %321 = vst [vmem:[%s306 + $0x40] sm:$0xff] 0.0
        %322 = vst [vmem:[%s306 + $0x48] sm:$0xff] 0.0
        %323 = vst [vmem:[%s306 + $0x50] sm:$0xff] 0.0
        %324 = vst [vmem:[%s306 + $0x58] sm:$0xff] 0.0
        %325 = vst [vmem:[%s306 + $0x60] sm:$0xff] 0.0
        %326 = vst [vmem:[%s306 + $0x68] sm:$0xff] 0.0
        %327 = vst [vmem:[%s306 + $0x70] sm:$0xff] 0.0
        %328 = vst [vmem:[%s306 + $0x78] sm:$0xff] 0.0
        %329 = vst [vmem:[%s306 + $0x80] sm:$0xff] 0.0
        %330 = vst [vmem:[%s306 + $0x88] sm:$0xff] 0.0
        %331 = vst [vmem:[%s306 + $0x90] sm:$0xff] 0.0
        %332 = vst [vmem:[%s306 + $0x98] sm:$0xff] 0.0
        %333 = vst [vmem:[%s306 + $0xa0] sm:$0xff] 0.0
        %334 = vst [vmem:[%s306 + $0xa8] sm:$0xff] 0.0
        %335 = vst [vmem:[%s306 + $0xb0] sm:$0xff] 0.0
        %336 = vst [vmem:[%s306 + $0xb8] sm:$0xff] 0.0
        %337 = vst [vmem:[%s306 + $0xc0] sm:$0xff] 0.0
        %338 = vst [vmem:[%s306 + $0xc8] sm:$0xff] 0.0
        %339 = vst [vmem:[%s306 + $0xd0] sm:$0xff] 0.0
        %340 = vst [vmem:[%s306 + $0xd8] sm:$0xff] 0.0
        %341 = vst [vmem:[%s306 + $0xe0] sm:$0xff] 0.0
        %342 = vst [vmem:[%s306 + $0xe8] sm:$0xff] 0.0
        %343 = vst [vmem:[%s306 + $0xf0] sm:$0xff] 0.0
        %344 = vst [vmem:[%s306 + $0xf8] sm:$0xff] 0.0
      $region40: #{_lambda_.14} parent=35 // pred_fallthru
        _
      %v345 = vld [vmem:[%s306] sm:$0xff]
      %v346 = vld [vmem:[%s306 + $0x8] sm:$0xff]
      %v347 = vld [vmem:[%s306 + $0x10] sm:$0xff]
      %v348 = vld [vmem:[%s306 + $0x18] sm:$0xff]
      %v349 = vld [vmem:[%s306 + $0x20] sm:$0xff]
      %v350 = vld [vmem:[%s306 + $0x28] sm:$0xff]
      %v351 = vld [vmem:[%s306 + $0x30] sm:$0xff]
      %v352 = vld [vmem:[%s306 + $0x38] sm:$0xff]
      %v353 = vld [vmem:[%s306 + $0x40] sm:$0xff]
      %v354 = vld [vmem:[%s306 + $0x48] sm:$0xff]
      %v355 = vld [vmem:[%s306 + $0x50] sm:$0xff]
      %v356 = vld [vmem:[%s306 + $0x58] sm:$0xff]
      %v357 = vld [vmem:[%s306 + $0x60] sm:$0xff]
      %v358 = vld [vmem:[%s306 + $0x68] sm:$0xff]
      %v359 = vld [vmem:[%s306 + $0x70] sm:$0xff]
      %v360 = vld [vmem:[%s306 + $0x78] sm:$0xff]
      %v361 = vld [vmem:[%s306 + $0x80] sm:$0xff]
      %v362 = vld [vmem:[%s306 + $0x88] sm:$0xff]
      %v363 = vld [vmem:[%s306 + $0x90] sm:$0xff]
      %v364 = vld [vmem:[%s306 + $0x98] sm:$0xff]
      %v365 = vld [vmem:[%s306 + $0xa0] sm:$0xff]
      %v366 = vld [vmem:[%s306 + $0xa8] sm:$0xff]
      %v367 = vld [vmem:[%s306 + $0xb0] sm:$0xff]
      %v368 = vld [vmem:[%s306 + $0xb8] sm:$0xff]
      %v369 = vld [vmem:[%s306 + $0xc0] sm:$0xff]
      %v370 = vld [vmem:[%s306 + $0xc8] sm:$0xff]
      %v371 = vld [vmem:[%s306 + $0xd0] sm:$0xff]
      %v372 = vld [vmem:[%s306 + $0xd8] sm:$0xff]
      %v373 = vld [vmem:[%s306 + $0xe0] sm:$0xff]
      %v374 = vld [vmem:[%s306 + $0xe8] sm:$0xff]
      %v375 = vld [vmem:[%s306 + $0xf0] sm:$0xff]
      %v376 = vld [vmem:[%s306 + $0xf8] sm:$0xff]
      %v377 = vld [vmem:[%s281] sm:$0xff]
      %v378 = vld [vmem:[%s281 + $0x8] sm:$0xff]
      %v379 = vld [vmem:[%s281 + $0x10] sm:$0xff]
      %v380 = vld [vmem:[%s281 + $0x18] sm:$0xff]
      %v381 = vld [vmem:[%s281 + $0x20] sm:$0xff]
      %v382 = vld [vmem:[%s281 + $0x28] sm:$0xff]
      %v383 = vld [vmem:[%s281 + $0x30] sm:$0xff]
      %v384 = vld [vmem:[%s281 + $0x38] sm:$0xff]
      %v385 = vld [vmem:[%s281 + $0x40] sm:$0xff]
      %v386 = vld [vmem:[%s281 + $0x48] sm:$0xff]
      %v387 = vld [vmem:[%s281 + $0x50] sm:$0xff]
      %v388 = vld [vmem:[%s281 + $0x58] sm:$0xff]
      %v389 = vld [vmem:[%s281 + $0x60] sm:$0xff]
      %v390 = vld [vmem:[%s281 + $0x68] sm:$0xff]
      %v391 = vld [vmem:[%s281 + $0x70] sm:$0xff]
      %v392 = vld [vmem:[%s281 + $0x78] sm:$0xff]
      %v393 = vld [vmem:[%s281 + $0x80] sm:$0xff]
      %v394 = vld [vmem:[%s281 + $0x88] sm:$0xff]
      %v395 = vld [vmem:[%s281 + $0x90] sm:$0xff]
      %v396 = vld [vmem:[%s281 + $0x98] sm:$0xff]
      %v397 = vld [vmem:[%s281 + $0xa0] sm:$0xff]
      %v398 = vld [vmem:[%s281 + $0xa8] sm:$0xff]
      %v399 = vld [vmem:[%s281 + $0xb0] sm:$0xff]
      %v400 = vld [vmem:[%s281 + $0xb8] sm:$0xff]
      %v401 = vld [vmem:[%s281 + $0xc0] sm:$0xff]
      %v402 = vld [vmem:[%s281 + $0xc8] sm:$0xff]
      %v403 = vld [vmem:[%s281 + $0xd0] sm:$0xff]
      %v404 = vld [vmem:[%s281 + $0xd8] sm:$0xff]
      %v405 = vld [vmem:[%s281 + $0xe0] sm:$0xff]
      %v406 = vld [vmem:[%s281 + $0xe8] sm:$0xff]
      %v407 = vld [vmem:[%s281 + $0xf0] sm:$0xff]
      %v408 = vld [vmem:[%s281 + $0xf8] sm:$0xff]
      %v409 = vld [vmem:[%s291] sm:$0xf]
      %v410 = vld [vmem:[%s291 + $0x4] sm:$0xf]
      %v411 = vld [vmem:[%s291 + $0x8] sm:$0xf]
      %v412 = vld [vmem:[%s291 + $0xc] sm:$0xf]
      %v413 = vld [vmem:[%s291 + $0x10] sm:$0xf]
      %v414 = vld [vmem:[%s291 + $0x14] sm:$0xf]
      %v415 = vld [vmem:[%s291 + $0x18] sm:$0xf]
      %v416 = vld [vmem:[%s291 + $0x1c] sm:$0xf]
      %v417 = vld [vmem:[%s291 + $0x20] sm:$0xf]
      %v418 = vld [vmem:[%s291 + $0x24] sm:$0xf]
      %v419 = vld [vmem:[%s291 + $0x28] sm:$0xf]
      %v420 = vld [vmem:[%s291 + $0x2c] sm:$0xf]
      %v421 = vld [vmem:[%s291 + $0x30] sm:$0xf]
      %v422 = vld [vmem:[%s291 + $0x34] sm:$0xf]
      %v423 = vld [vmem:[%s291 + $0x38] sm:$0xf]
      %v424 = vld [vmem:[%s291 + $0x3c] sm:$0xf]
      %v425 = vld [vmem:[%s291 + $0x40] sm:$0xf]
      %v426 = vld [vmem:[%s291 + $0x44] sm:$0xf]
      %v427 = vld [vmem:[%s291 + $0x48] sm:$0xf]
      %v428 = vld [vmem:[%s291 + $0x4c] sm:$0xf]
      %v429 = vld [vmem:[%s291 + $0x50] sm:$0xf]
      %v430 = vld [vmem:[%s291 + $0x54] sm:$0xf]
      %v431 = vld [vmem:[%s291 + $0x58] sm:$0xf]
      %v432 = vld [vmem:[%s291 + $0x5c] sm:$0xf]
      %v433 = vld [vmem:[%s291 + $0x60] sm:$0xf]
      %v434 = vld [vmem:[%s291 + $0x64] sm:$0xf]
      %v435 = vld [vmem:[%s291 + $0x68] sm:$0xf]
      %v436 = vld [vmem:[%s291 + $0x6c] sm:$0xf]
      %v437 = vld [vmem:[%s291 + $0x70] sm:$0xf]
      %v438 = vld [vmem:[%s291 + $0x74] sm:$0xf]
      %v439 = vld [vmem:[%s291 + $0x78] sm:$0xf]
      %v440 = vld [vmem:[%s291 + $0x7c] sm:$0xf]
      %v473 = vunpack.c.l.b16 %v377
      %v474 = vunpack.c.h.b16 %v377
      %v475 = vunpack.c.l.b16 %v378
      %v476 = vunpack.c.h.b16 %v378
      %v477 = vunpack.c.l.b16 %v379
      %v478 = vunpack.c.h.b16 %v379
      %v479 = vunpack.c.l.b16 %v380
      %v480 = vunpack.c.h.b16 %v380
      %v481 = vunpack.c.l.b16 %v381
      %v482 = vunpack.c.h.b16 %v381
      %v483 = vunpack.c.l.b16 %v382
      %v484 = vunpack.c.h.b16 %v382
      %v485 = vunpack.c.l.b16 %v383
      %v486 = vunpack.c.h.b16 %v383
      %v487 = vunpack.c.l.b16 %v384
      %v488 = vunpack.c.h.b16 %v384
      %v489 = vunpack.c.l.b16 %v385
      %v490 = vunpack.c.h.b16 %v385
      %v491 = vunpack.c.l.b16 %v386
      %v492 = vunpack.c.h.b16 %v386
      %v493 = vunpack.c.l.b16 %v387
      %v494 = vunpack.c.h.b16 %v387
      %v495 = vunpack.c.l.b16 %v388
      %v496 = vunpack.c.h.b16 %v388
      %v497 = vunpack.c.l.b16 %v389
      %v498 = vunpack.c.h.b16 %v389
      %v499 = vunpack.c.l.b16 %v390
      %v500 = vunpack.c.h.b16 %v390
      %v501 = vunpack.c.l.b16 %v391
      %v502 = vunpack.c.h.b16 %v391
      %v503 = vunpack.c.l.b16 %v392
      %v504 = vunpack.c.h.b16 %v392
      %v505 = vunpack.c.l.b16 %v393
      %v506 = vunpack.c.h.b16 %v393
      %v507 = vunpack.c.l.b16 %v394
      %v508 = vunpack.c.h.b16 %v394
      %v509 = vunpack.c.l.b16 %v395
      %v510 = vunpack.c.h.b16 %v395
      %v511 = vunpack.c.l.b16 %v396
      %v512 = vunpack.c.h.b16 %v396
      %v513 = vunpack.c.l.b16 %v397
      %v514 = vunpack.c.h.b16 %v397
      %v515 = vunpack.c.l.b16 %v398
      %v516 = vunpack.c.h.b16 %v398
      %v517 = vunpack.c.l.b16 %v399
      %v518 = vunpack.c.h.b16 %v399
      %v519 = vunpack.c.l.b16 %v400
      %v520 = vunpack.c.h.b16 %v400
      %v521 = vunpack.c.l.b16 %v401
      %v522 = vunpack.c.h.b16 %v401
      %v523 = vunpack.c.l.b16 %v402
      %v524 = vunpack.c.h.b16 %v402
      %v525 = vunpack.c.l.b16 %v403
      %v526 = vunpack.c.h.b16 %v403
      %v527 = vunpack.c.l.b16 %v404
      %v528 = vunpack.c.h.b16 %v404
      %v529 = vunpack.c.l.b16 %v405
      %v530 = vunpack.c.h.b16 %v405
      %v531 = vunpack.c.l.b16 %v406
      %v532 = vunpack.c.h.b16 %v406
      %v533 = vunpack.c.l.b16 %v407
      %v534 = vunpack.c.h.b16 %v407
      %v535 = vunpack.c.l.b16 %v408
      %v536 = vunpack.c.h.b16 %v408
      %v537 = vpack.c.b16 %v475, %v473
      %v538 = vpack.c.b16 %v476, %v474
      %v539 = vpack.c.b16 %v479, %v477
      %v540 = vpack.c.b16 %v480, %v478
      %v541 = vpack.c.b16 %v483, %v481
      %v542 = vpack.c.b16 %v484, %v482
      %v543 = vpack.c.b16 %v487, %v485
      %v544 = vpack.c.b16 %v488, %v486
      %v545 = vpack.c.b16 %v491, %v489
      %v546 = vpack.c.b16 %v492, %v490
      %v547 = vpack.c.b16 %v495, %v493
      %v548 = vpack.c.b16 %v496, %v494
      %v549 = vpack.c.b16 %v499, %v497
      %v550 = vpack.c.b16 %v500, %v498
      %v551 = vpack.c.b16 %v503, %v501
      %v552 = vpack.c.b16 %v504, %v502
      %v553 = vpack.c.b16 %v507, %v505
      %v554 = vpack.c.b16 %v508, %v506
      %v555 = vpack.c.b16 %v511, %v509
      %v556 = vpack.c.b16 %v512, %v510
      %v557 = vpack.c.b16 %v515, %v513
      %v558 = vpack.c.b16 %v516, %v514
      %v559 = vpack.c.b16 %v519, %v517
      %v560 = vpack.c.b16 %v520, %v518
      %v561 = vpack.c.b16 %v523, %v521
      %v562 = vpack.c.b16 %v524, %v522
      %v563 = vpack.c.b16 %v527, %v525
      %v564 = vpack.c.b16 %v528, %v526
      %v565 = vpack.c.b16 %v531, %v529
      %v566 = vpack.c.b16 %v532, %v530
      %v567 = vpack.c.b16 %v535, %v533
      %v568 = vpack.c.b16 %v536, %v534
      %v633 = vunpack.c.l.b16 %v409
      %v634 = vunpack.c.l.b16 %v410
      %v635 = vunpack.c.l.b16 %v411
      %v636 = vunpack.c.l.b16 %v412
      %v637 = vunpack.c.l.b16 %v413
      %v638 = vunpack.c.l.b16 %v414
      %v639 = vunpack.c.l.b16 %v415
      %v640 = vunpack.c.l.b16 %v416
      %v641 = vunpack.c.l.b16 %v417
      %v642 = vunpack.c.l.b16 %v418
      %v643 = vunpack.c.l.b16 %v419
      %v644 = vunpack.c.l.b16 %v420
      %v645 = vunpack.c.l.b16 %v421
      %v646 = vunpack.c.l.b16 %v422
      %v647 = vunpack.c.l.b16 %v423
      %v648 = vunpack.c.l.b16 %v424
      %v649 = vunpack.c.l.b16 %v425
      %v650 = vunpack.c.l.b16 %v426
      %v651 = vunpack.c.l.b16 %v427
      %v652 = vunpack.c.l.b16 %v428
      %v653 = vunpack.c.l.b16 %v429
      %v654 = vunpack.c.l.b16 %v430
      %v655 = vunpack.c.l.b16 %v431
      %v656 = vunpack.c.l.b16 %v432
      %v657 = vunpack.c.l.b16 %v433
      %v658 = vunpack.c.l.b16 %v434
      %v659 = vunpack.c.l.b16 %v435
      %v660 = vunpack.c.l.b16 %v436
      %v661 = vunpack.c.l.b16 %v437
      %v662 = vunpack.c.l.b16 %v438
      %v663 = vunpack.c.l.b16 %v439
      %v664 = vunpack.c.l.b16 %v440
      %v665 = vpack.c.b16 %v634, %v633
      %v666 = vpack.c.b16 %v636, %v635
      %v667 = vpack.c.b16 %v638, %v637
      %v668 = vpack.c.b16 %v640, %v639
      %v669 = vpack.c.b16 %v642, %v641
      %v670 = vpack.c.b16 %v644, %v643
      %v671 = vpack.c.b16 %v646, %v645
      %v672 = vpack.c.b16 %v648, %v647
      %v673 = vpack.c.b16 %v650, %v649
      %v674 = vpack.c.b16 %v652, %v651
      %v675 = vpack.c.b16 %v654, %v653
      %v676 = vpack.c.b16 %v656, %v655
      %v677 = vpack.c.b16 %v658, %v657
      %v678 = vpack.c.b16 %v660, %v659
      %v679 = vpack.c.b16 %v662, %v661
      %v680 = vpack.c.b16 %v664, %v663
      %697 = vmatprep.subr.bf16.mxu0 0
      %698 = vmatpush1.bf16.msra.mxu0 %v672
      %699 = vmatprep.subr.bf16.mxu0 0
      %700 = vmatpush1.bf16.msra.mxu0 %v671
      %701 = vmatprep.subr.bf16.mxu0 0
      %702 = vmatpush1.bf16.msra.mxu0 %v670
      %703 = vmatprep.subr.bf16.mxu0 0
      %704 = vmatpush1.bf16.msra.mxu0 %v669
      %705 = vmatprep.subr.bf16.mxu0 0
      %706 = vmatpush1.bf16.msra.mxu0 %v668
      %707 = vmatprep.subr.bf16.mxu0 0
      %708 = vmatpush1.bf16.msra.mxu0 %v667
      %709 = vmatprep.subr.bf16.mxu0 0
      %710 = vmatpush1.bf16.msra.mxu0 %v666
      %711 = vmatprep.subr.bf16.mxu0 0
      %712 = vmatpush1.bf16.msra.mxu0 %v665
      %713 = vmatprep.subr.bf16.mxu0 0
      %714 = vmatpush2.bf16.msra.mxu0 %v680
      %715 = vmatprep.subr.bf16.mxu0 0
      %716 = vmatpush2.bf16.msra.mxu0 %v679
      %717 = vmatprep.subr.bf16.mxu0 0
      %718 = vmatpush2.bf16.msra.mxu0 %v678
      %719 = vmatprep.subr.bf16.mxu0 0
      %720 = vmatpush2.bf16.msra.mxu0 %v677
      %721 = vmatprep.subr.bf16.mxu0 0
      %722 = vmatpush2.bf16.msra.mxu0 %v676
      %723 = vmatprep.subr.bf16.mxu0 0
      %724 = vmatpush2.bf16.msra.mxu0 %v675
      %725 = vmatprep.subr.bf16.mxu0 0
      %726 = vmatpush2.bf16.msra.mxu0 %v674
      %727 = vmatprep.subr.bf16.mxu0 0
      %728 = vmatpush2.bf16.msra.mxu0 %v673
      %729 = vmatprep.mubr.bf16.mxu0 %v538
      %730 = vmatmul.mubr.bf16.gmra.mxu0 %v537
      %v731 = vpop.f32.mrf.mxu0
      %v732 = vadd.f32 0.0, %v731
      %v733 = vpop.f32.mrf.mxu0
      %v734 = vpop.f32.mrf.mxu0
      %v735 = vadd.f32 0.0, %v734
      %v736 = vpop.f32.mrf.mxu0
      %737 = vmatprep.mubr.bf16.mxu0 %v540
      %738 = vmatmul.mubr.bf16.gmra.mxu0 %v539
      %v739 = vpop.f32.mrf.mxu0
      %v740 = vadd.f32 0.0, %v739
      %v741 = vpop.f32.mrf.mxu0
      %v742 = vpop.f32.mrf.mxu0
      %v743 = vadd.f32 0.0, %v742
      %v744 = vpop.f32.mrf.mxu0
      %745 = vmatprep.mubr.bf16.mxu0 %v542
      %746 = vmatmul.mubr.bf16.gmra.mxu0 %v541
      %v747 = vpop.f32.mrf.mxu0
      %v748 = vadd.f32 0.0, %v747
      %v749 = vpop.f32.mrf.mxu0
      %v750 = vpop.f32.mrf.mxu0
      %v751 = vadd.f32 0.0, %v750
      %v752 = vpop.f32.mrf.mxu0
      %753 = vmatprep.mubr.bf16.mxu0 %v544
      %754 = vmatmul.mubr.bf16.gmra.mxu0 %v543
      %v755 = vpop.f32.mrf.mxu0
      %v756 = vadd.f32 0.0, %v755
      %v757 = vpop.f32.mrf.mxu0
      %v758 = vpop.f32.mrf.mxu0
      %v759 = vadd.f32 0.0, %v758
      %v760 = vpop.f32.mrf.mxu0
      %761 = vmatprep.mubr.bf16.mxu0 %v546
      %762 = vmatmul.mubr.bf16.gmra.mxu0 %v545
      %v763 = vpop.f32.mrf.mxu0
      %v764 = vadd.f32 0.0, %v763
      %v765 = vpop.f32.mrf.mxu0
      %v766 = vpop.f32.mrf.mxu0
      %v767 = vadd.f32 0.0, %v766
      %v768 = vpop.f32.mrf.mxu0
      %769 = vmatprep.mubr.bf16.mxu0 %v548
      %770 = vmatmul.mubr.bf16.gmra.mxu0 %v547
      %v771 = vpop.f32.mrf.mxu0
      %v772 = vadd.f32 0.0, %v771
      %v773 = vpop.f32.mrf.mxu0
      %v774 = vpop.f32.mrf.mxu0
      %v775 = vadd.f32 0.0, %v774
      %v776 = vpop.f32.mrf.mxu0
      %777 = vmatprep.mubr.bf16.mxu0 %v550
      %778 = vmatmul.mubr.bf16.gmra.mxu0 %v549
      %v779 = vpop.f32.mrf.mxu0
      %v780 = vadd.f32 0.0, %v779
      %v781 = vpop.f32.mrf.mxu0
      %v782 = vpop.f32.mrf.mxu0
      %v783 = vadd.f32 0.0, %v782
      %v784 = vpop.f32.mrf.mxu0
      %785 = vmatprep.mubr.bf16.mxu0 %v552
      %786 = vmatmul.mubr.bf16.gmra.mxu0 %v551
      %v787 = vpop.f32.mrf.mxu0
      %v788 = vadd.f32 0.0, %v787
      %v789 = vpop.f32.mrf.mxu0
      %v790 = vpop.f32.mrf.mxu0
      %v791 = vadd.f32 0.0, %v790
      %v792 = vpop.f32.mrf.mxu0
      %793 = vmatprep.mubr.bf16.mxu0 %v554
      %794 = vmatmul.mubr.bf16.gmra.mxu0 %v553
      %v795 = vpop.f32.mrf.mxu0
      %v796 = vadd.f32 0.0, %v795
      %v797 = vpop.f32.mrf.mxu0
      %v798 = vpop.f32.mrf.mxu0
      %v799 = vadd.f32 0.0, %v798
      %v800 = vpop.f32.mrf.mxu0
      %801 = vmatprep.mubr.bf16.mxu0 %v556
      %802 = vmatmul.mubr.bf16.gmra.mxu0 %v555
      %v803 = vpop.f32.mrf.mxu0
      %v804 = vadd.f32 0.0, %v803
      %v805 = vpop.f32.mrf.mxu0
      %v806 = vpop.f32.mrf.mxu0
      %v807 = vadd.f32 0.0, %v806
      %v808 = vpop.f32.mrf.mxu0
      %809 = vmatprep.mubr.bf16.mxu0 %v558
      %810 = vmatmul.mubr.bf16.gmra.mxu0 %v557
      %v811 = vpop.f32.mrf.mxu0
      %v812 = vadd.f32 0.0, %v811
      %v813 = vpop.f32.mrf.mxu0
      %v814 = vpop.f32.mrf.mxu0
      %v815 = vadd.f32 0.0, %v814
      %v816 = vpop.f32.mrf.mxu0
      %817 = vmatprep.mubr.bf16.mxu0 %v560
      %818 = vmatmul.mubr.bf16.gmra.mxu0 %v559
      %v819 = vpop.f32.mrf.mxu0
      %v820 = vadd.f32 0.0, %v819
      %v821 = vpop.f32.mrf.mxu0
      %v822 = vpop.f32.mrf.mxu0
      %v823 = vadd.f32 0.0, %v822
      %v824 = vpop.f32.mrf.mxu0
      %825 = vmatprep.mubr.bf16.mxu0 %v562
      %826 = vmatmul.mubr.bf16.gmra.mxu0 %v561
      %v827 = vpop.f32.mrf.mxu0
      %v828 = vadd.f32 0.0, %v827
      %v829 = vpop.f32.mrf.mxu0
      %v830 = vpop.f32.mrf.mxu0
      %v831 = vadd.f32 0.0, %v830
      %v832 = vpop.f32.mrf.mxu0
      %833 = vmatprep.mubr.bf16.mxu0 %v564
      %834 = vmatmul.mubr.bf16.gmra.mxu0 %v563
      %v835 = vpop.f32.mrf.mxu0
      %v836 = vadd.f32 0.0, %v835
      %v837 = vpop.f32.mrf.mxu0
      %v838 = vpop.f32.mrf.mxu0
      %v839 = vadd.f32 0.0, %v838
      %v840 = vpop.f32.mrf.mxu0
      %841 = vmatprep.mubr.bf16.mxu0 %v566
      %842 = vmatmul.mubr.bf16.gmra.mxu0 %v565
      %v843 = vpop.f32.mrf.mxu0
      %v844 = vadd.f32 0.0, %v843
      %v845 = vpop.f32.mrf.mxu0
      %v846 = vpop.f32.mrf.mxu0
      %v847 = vadd.f32 0.0, %v846
      %v848 = vpop.f32.mrf.mxu0
      %849 = vmatprep.mubr.bf16.mxu0 %v568
      %850 = vmatmul.mubr.bf16.gmra.mxu0 %v567
      %v851 = vpop.f32.mrf.mxu0
      %v852 = vadd.f32 0.0, %v851
      %v853 = vpop.f32.mrf.mxu0
      %v854 = vpop.f32.mrf.mxu0
      %v855 = vadd.f32 0.0, %v854
      %v856 = vpop.f32.mrf.mxu0
      %857 = vdwg.mxu0
      %v858 = vadd.f32 %v345, %v732
      %v859 = vadd.f32 %v346, %v735
      %v860 = vadd.f32 %v347, %v740
      %v861 = vadd.f32 %v348, %v743
      %v862 = vadd.f32 %v349, %v748
      %v863 = vadd.f32 %v350, %v751
      %v864 = vadd.f32 %v351, %v756
      %v865 = vadd.f32 %v352, %v759
      %v866 = vadd.f32 %v353, %v764
      %v867 = vadd.f32 %v354, %v767
      %v868 = vadd.f32 %v355, %v772
      %v869 = vadd.f32 %v356, %v775
      %v870 = vadd.f32 %v357, %v780
      %v871 = vadd.f32 %v358, %v783
      %v872 = vadd.f32 %v359, %v788
      %v873 = vadd.f32 %v360, %v791
      %v874 = vadd.f32 %v361, %v796
      %v875 = vadd.f32 %v362, %v799
      %v876 = vadd.f32 %v363, %v804
      %v877 = vadd.f32 %v364, %v807
      %v878 = vadd.f32 %v365, %v812
      %v879 = vadd.f32 %v366, %v815
      %v880 = vadd.f32 %v367, %v820
      %v881 = vadd.f32 %v368, %v823
      %v882 = vadd.f32 %v369, %v828
      %v883 = vadd.f32 %v370, %v831
      %v884 = vadd.f32 %v371, %v836
      %v885 = vadd.f32 %v372, %v839
      %v886 = vadd.f32 %v373, %v844
      %v887 = vadd.f32 %v374, %v847
      %v888 = vadd.f32 %v375, %v852
      %v889 = vadd.f32 %v376, %v855
      %890 = vst [vmem:[%s306] sm:$0xff] %v858
      %891 = vst [vmem:[%s306 + $0x8] sm:$0xff] %v859
      %892 = vst [vmem:[%s306 + $0x10] sm:$0xff] %v860
      %893 = vst [vmem:[%s306 + $0x18] sm:$0xff] %v861
      %894 = vst [vmem:[%s306 + $0x20] sm:$0xff] %v862
      %895 = vst [vmem:[%s306 + $0x28] sm:$0xff] %v863
      %896 = vst [vmem:[%s306 + $0x30] sm:$0xff] %v864
      %897 = vst [vmem:[%s306 + $0x38] sm:$0xff] %v865
      %898 = vst [vmem:[%s306 + $0x40] sm:$0xff] %v866
      %899 = vst [vmem:[%s306 + $0x48] sm:$0xff] %v867
      %900 = vst [vmem:[%s306 + $0x50] sm:$0xff] %v868
      %901 = vst [vmem:[%s306 + $0x58] sm:$0xff] %v869
      %902 = vst [vmem:[%s306 + $0x60] sm:$0xff] %v870
      %903 = vst [vmem:[%s306 + $0x68] sm:$0xff] %v871
      %904 = vst [vmem:[%s306 + $0x70] sm:$0xff] %v872
      %905 = vst [vmem:[%s306 + $0x78] sm:$0xff] %v873
      %906 = vst [vmem:[%s306 + $0x80] sm:$0xff] %v874
      %907 = vst [vmem:[%s306 + $0x88] sm:$0xff] %v875
      %908 = vst [vmem:[%s306 + $0x90] sm:$0xff] %v876
      %909 = vst [vmem:[%s306 + $0x98] sm:$0xff] %v877
      %910 = vst [vmem:[%s306 + $0xa0] sm:$0xff] %v878
      %911 = vst [vmem:[%s306 + $0xa8] sm:$0xff] %v879
      %912 = vst [vmem:[%s306 + $0xb0] sm:$0xff] %v880
      %913 = vst [vmem:[%s306 + $0xb8] sm:$0xff] %v881
      %914 = vst [vmem:[%s306 + $0xc0] sm:$0xff] %v882
      %915 = vst [vmem:[%s306 + $0xc8] sm:$0xff] %v883
      %916 = vst [vmem:[%s306 + $0xd0] sm:$0xff] %v884
      %917 = vst [vmem:[%s306 + $0xd8] sm:$0xff] %v885
      %918 = vst [vmem:[%s306 + $0xe0] sm:$0xff] %v886
      %919 = vst [vmem:[%s306 + $0xe8] sm:$0xff] %v887
      %920 = vst [vmem:[%s306 + $0xf0] sm:$0xff] %v888
      %921 = vst [vmem:[%s306 + $0xf8] sm:$0xff] %v889
      // Predicated region
      $region41: #{_lambda_.14} parent=35 // pred_check
        %p922 = pneg %p309
      $region42: #{_lambda_.14} parent=35 // pred_check_branch
        %924 = sbr.rel (%p922) target = $region44
      $region43: #{_lambda_.14} parent=35 // pred_region
        %v925 = vld [vmem:[%s306] sm:$0xff]
        %v926 = vld [vmem:[%s306 + $0x8] sm:$0xff]
        %v927 = vld [vmem:[%s306 + $0x10] sm:$0xff]
        %v928 = vld [vmem:[%s306 + $0x18] sm:$0xff]
        %v929 = vld [vmem:[%s306 + $0x20] sm:$0xff]
        %v930 = vld [vmem:[%s306 + $0x28] sm:$0xff]
        %v931 = vld [vmem:[%s306 + $0x30] sm:$0xff]
        %v932 = vld [vmem:[%s306 + $0x38] sm:$0xff]
        %v933 = vld [vmem:[%s306 + $0x40] sm:$0xff]
        %v934 = vld [vmem:[%s306 + $0x48] sm:$0xff]
        %v935 = vld [vmem:[%s306 + $0x50] sm:$0xff]
        %v936 = vld [vmem:[%s306 + $0x58] sm:$0xff]
        %v937 = vld [vmem:[%s306 + $0x60] sm:$0xff]
        %v938 = vld [vmem:[%s306 + $0x68] sm:$0xff]
        %v939 = vld [vmem:[%s306 + $0x70] sm:$0xff]
        %v940 = vld [vmem:[%s306 + $0x78] sm:$0xff]
        %v941 = vld [vmem:[%s306 + $0x80] sm:$0xff]
        %v942 = vld [vmem:[%s306 + $0x88] sm:$0xff]
        %v943 = vld [vmem:[%s306 + $0x90] sm:$0xff]
        %v944 = vld [vmem:[%s306 + $0x98] sm:$0xff]
        %v945 = vld [vmem:[%s306 + $0xa0] sm:$0xff]
        %v946 = vld [vmem:[%s306 + $0xa8] sm:$0xff]
        %v947 = vld [vmem:[%s306 + $0xb0] sm:$0xff]
        %v948 = vld [vmem:[%s306 + $0xb8] sm:$0xff]
        %v949 = vld [vmem:[%s306 + $0xc0] sm:$0xff]
        %v950 = vld [vmem:[%s306 + $0xc8] sm:$0xff]
        %v951 = vld [vmem:[%s306 + $0xd0] sm:$0xff]
        %v952 = vld [vmem:[%s306 + $0xd8] sm:$0xff]
        %v953 = vld [vmem:[%s306 + $0xe0] sm:$0xff]
        %v954 = vld [vmem:[%s306 + $0xe8] sm:$0xff]
        %v955 = vld [vmem:[%s306 + $0xf0] sm:$0xff]
        %v956 = vld [vmem:[%s306 + $0xf8] sm:$0xff]
        %v957 = vld [vmem:[%s295] sm:$0x1]
        %v959 = vlaneseq
        %v960 = vshrl.u32 %v959, 7
        %v961 = vsub.s32 0, %v960
        %v962 = vrot.slane %v957, %v961
        %v964 = vmul.f32 %v925, %v962
        %v965 = vmul.f32 %v926, %v962
        %v966 = vmul.f32 %v927, %v962
        %v967 = vmul.f32 %v928, %v962
        %v968 = vmul.f32 %v929, %v962
        %v969 = vmul.f32 %v930, %v962
        %v970 = vmul.f32 %v931, %v962
        %v971 = vmul.f32 %v932, %v962
        %v972 = vmul.f32 %v933, %v962
        %v973 = vmul.f32 %v934, %v962
        %v974 = vmul.f32 %v935, %v962
        %v975 = vmul.f32 %v936, %v962
        %v976 = vmul.f32 %v937, %v962
        %v977 = vmul.f32 %v938, %v962
        %v978 = vmul.f32 %v939, %v962
        %v979 = vmul.f32 %v940, %v962
        %v980 = vmul.f32 %v941, %v962
        %v981 = vmul.f32 %v942, %v962
        %v982 = vmul.f32 %v943, %v962
        %v983 = vmul.f32 %v944, %v962
        %v984 = vmul.f32 %v945, %v962
        %v985 = vmul.f32 %v946, %v962
        %v986 = vmul.f32 %v947, %v962
        %v987 = vmul.f32 %v948, %v962
        %v988 = vmul.f32 %v949, %v962
        %v989 = vmul.f32 %v950, %v962
        %v990 = vmul.f32 %v951, %v962
        %v991 = vmul.f32 %v952, %v962
        %v992 = vmul.f32 %v953, %v962
        %v993 = vmul.f32 %v954, %v962
        %v994 = vmul.f32 %v955, %v962
        %v995 = vmul.f32 %v956, %v962
        %v996 = vld [vmem:[%s298] sm:$0x1]
        %v998 = vlaneseq
        %v999 = vshrl.u32 %v998, 7
        %v1000 = vsub.s32 0, %v999
        %v1001 = vrot.slane %v996, %v1000
        %v1003 = vadd.f32 %v964, %v1001
        %v1004 = vadd.f32 %v965, %v1001
        %v1005 = vadd.f32 %v966, %v1001
        %v1006 = vadd.f32 %v967, %v1001
        %v1007 = vadd.f32 %v968, %v1001
        %v1008 = vadd.f32 %v969, %v1001
        %v1009 = vadd.f32 %v970, %v1001
        %v1010 = vadd.f32 %v971, %v1001
        %v1011 = vadd.f32 %v972, %v1001
        %v1012 = vadd.f32 %v973, %v1001
        %v1013 = vadd.f32 %v974, %v1001
        %v1014 = vadd.f32 %v975, %v1001
        %v1015 = vadd.f32 %v976, %v1001
        %v1016 = vadd.f32 %v977, %v1001
        %v1017 = vadd.f32 %v978, %v1001
        %v1018 = vadd.f32 %v979, %v1001
        %v1019 = vadd.f32 %v980, %v1001
        %v1020 = vadd.f32 %v981, %v1001
        %v1021 = vadd.f32 %v982, %v1001
        %v1022 = vadd.f32 %v983, %v1001
        %v1023 = vadd.f32 %v984, %v1001
        %v1024 = vadd.f32 %v985, %v1001
        %v1025 = vadd.f32 %v986, %v1001
        %v1026 = vadd.f32 %v987, %v1001
        %v1027 = vadd.f32 %v988, %v1001
        %v1028 = vadd.f32 %v989, %v1001
        %v1029 = vadd.f32 %v990, %v1001
        %v1030 = vadd.f32 %v991, %v1001
        %v1031 = vadd.f32 %v992, %v1001
        %v1032 = vadd.f32 %v993, %v1001
        %v1033 = vadd.f32 %v994, %v1001
        %v1034 = vadd.f32 %v995, %v1001
        %v1035 = vmax.f32 %v1003, 0.0
        %v1036 = vmax.f32 %v1004, 0.0
        %v1037 = vmax.f32 %v1005, 0.0
        %v1038 = vmax.f32 %v1006, 0.0
        %v1039 = vmax.f32 %v1007, 0.0
        %v1040 = vmax.f32 %v1008, 0.0
        %v1041 = vmax.f32 %v1009, 0.0
        %v1042 = vmax.f32 %v1010, 0.0
        %v1043 = vmax.f32 %v1011, 0.0
        %v1044 = vmax.f32 %v1012, 0.0
        %v1045 = vmax.f32 %v1013, 0.0
        %v1046 = vmax.f32 %v1014, 0.0
        %v1047 = vmax.f32 %v1015, 0.0
        %v1048 = vmax.f32 %v1016, 0.0
        %v1049 = vmax.f32 %v1017, 0.0
        %v1050 = vmax.f32 %v1018, 0.0
        %v1051 = vmax.f32 %v1019, 0.0
        %v1052 = vmax.f32 %v1020, 0.0
        %v1053 = vmax.f32 %v1021, 0.0
        %v1054 = vmax.f32 %v1022, 0.0
        %v1055 = vmax.f32 %v1023, 0.0
        %v1056 = vmax.f32 %v1024, 0.0
        %v1057 = vmax.f32 %v1025, 0.0
        %v1058 = vmax.f32 %v1026, 0.0
        %v1059 = vmax.f32 %v1027, 0.0
        %v1060 = vmax.f32 %v1028, 0.0
        %v1061 = vmax.f32 %v1029, 0.0
        %v1062 = vmax.f32 %v1030, 0.0
        %v1063 = vmax.f32 %v1031, 0.0
        %v1064 = vmax.f32 %v1032, 0.0
        %v1065 = vmax.f32 %v1033, 0.0
        %v1066 = vmax.f32 %v1034, 0.0
        %1067 = vst [vmem:[%s306] sm:$0xff] %v1035
        %1068 = vst [vmem:[%s306 + $0x8] sm:$0xff] %v1036
        %1069 = vst [vmem:[%s306 + $0x10] sm:$0xff] %v1037
        %1070 = vst [vmem:[%s306 + $0x18] sm:$0xff] %v1038
        %1071 = vst [vmem:[%s306 + $0x20] sm:$0xff] %v1039
        %1072 = vst [vmem:[%s306 + $0x28] sm:$0xff] %v1040
        %1073 = vst [vmem:[%s306 + $0x30] sm:$0xff] %v1041
        %1074 = vst [vmem:[%s306 + $0x38] sm:$0xff] %v1042
        %1075 = vst [vmem:[%s306 + $0x40] sm:$0xff] %v1043
        %1076 = vst [vmem:[%s306 + $0x48] sm:$0xff] %v1044
        %1077 = vst [vmem:[%s306 + $0x50] sm:$0xff] %v1045
        %1078 = vst [vmem:[%s306 + $0x58] sm:$0xff] %v1046
        %1079 = vst [vmem:[%s306 + $0x60] sm:$0xff] %v1047
        %1080 = vst [vmem:[%s306 + $0x68] sm:$0xff] %v1048
        %1081 = vst [vmem:[%s306 + $0x70] sm:$0xff] %v1049
        %1082 = vst [vmem:[%s306 + $0x78] sm:$0xff] %v1050
        %1083 = vst [vmem:[%s306 + $0x80] sm:$0xff] %v1051
        %1084 = vst [vmem:[%s306 + $0x88] sm:$0xff] %v1052
        %1085 = vst [vmem:[%s306 + $0x90] sm:$0xff] %v1053
        %1086 = vst [vmem:[%s306 + $0x98] sm:$0xff] %v1054
        %1087 = vst [vmem:[%s306 + $0xa0] sm:$0xff] %v1055
        %1088 = vst [vmem:[%s306 + $0xa8] sm:$0xff] %v1056
        %1089 = vst [vmem:[%s306 + $0xb0] sm:$0xff] %v1057
        %1090 = vst [vmem:[%s306 + $0xb8] sm:$0xff] %v1058
        %1091 = vst [vmem:[%s306 + $0xc0] sm:$0xff] %v1059
        %1092 = vst [vmem:[%s306 + $0xc8] sm:$0xff] %v1060
        %1093 = vst [vmem:[%s306 + $0xd0] sm:$0xff] %v1061
        %1094 = vst [vmem:[%s306 + $0xd8] sm:$0xff] %v1062
        %1095 = vst [vmem:[%s306 + $0xe0] sm:$0xff] %v1063
        %1096 = vst [vmem:[%s306 + $0xe8] sm:$0xff] %v1064
        %1097 = vst [vmem:[%s306 + $0xf0] sm:$0xff] %v1065
        %1098 = vst [vmem:[%s306 + $0xf8] sm:$0xff] %v1066
      $region44: #{_lambda_.14} parent=35 // pred_fallthru
        _
      %s1099 = smul.u32 32, %s20
      %p1100 = scmp.lt.s32.totalorder %s1099, 63
      %s1101 = scalar_select %p1100, %s1099, 63
      %p1102 = scmp.lt.s32.totalorder %s21, 0
      %s1103 = scalar_select %p1102, %s21, 0
      %s1104 = sadd.s32 %s1103, %s1101
      %s1105 = smul.addr %s1104, 8
      %s1106 = scalar_lea.vmem %s4, %s1105
      // Predicated region
      $region45: #{_lambda_.14} parent=35 // pred_check
        %p1107 = pneg %p162
      $region46: #{_lambda_.14} parent=35 // pred_check_branch
        %1109 = sbr.rel (%p1107) target = $region48
      $region47: #{_lambda_.14} parent=35 // pred_region
        %s1110 = smul.u32 32, %s20
      $region48: #{_lambda_.14} parent=35 // pred_fallthru
        _
    $region36: #{_lambda_.14} parent=5 // pred_fallthru
      _
    %p1111 = scmp.le.s32.totalorder 2, %s10
    // Predicated region
    $region49: #{_lambda_.14} parent=5 // pred_check
      %p1112 = pneg %p1111
    $region50: #{_lambda_.14} parent=5 // pred_check_branch
      %1114 = sbr.rel (%p1112) target = $region52
    $region51: #{_lambda_.14} parent=5 // pred_region
      %s1115 = ssub.s32 %s10, 2
      // Predicated region
      $region53: #{_lambda_.14} parent=51 // pred_check
        %p1116 = pneg %p168
      $region54: #{_lambda_.14} parent=51 // pred_check_branch
        %1118 = sbr.rel (%p1116) target = $region56
      $region55: #{_lambda_.14} parent=51 // pred_region
        %s1119 = smul.u32 32, %s23
        %p1120 = scmp.lt.s32.totalorder %s1119, 63
        %s1121 = scalar_select %p1120, %s1119, 63
        %p1122 = scmp.lt.s32.totalorder %s24, 0
        %s1123 = scalar_select %p1122, %s24, 0
        %s1124 = sadd.s32 %s1123, %s1121
        %s1125 = smul.addr %s1124, 8
        %s1126 = scalar_lea.vmem %s4, %s1125
      $region56: #{_lambda_.14} parent=51 // pred_fallthru
        _
    $region52: #{_lambda_.14} parent=5 // pred_fallthru
      _
  $region6: #{_lambda_.14} parent=0 // loop_footer
    %s14 = sadd.s32 1, %s10
  $region7: #{_lambda_.14} parent=0 // loop_footer_branch
    %9 = sbr.rel target = $region3
  $region8: #{_lambda_.14} parent=0 // loop_exit
    _

// kernel: _lambda_.15
$region0: #{_lambda_.15}
  #allocation0 [shape = 'u32[]', space=smem, size = 0x4, offset = 0x4, fixed_abs, tag = 'smem constant byte address 0x4 - core index']
  #allocation1 [shape = 'u32[144,128]{1,0:T(1,128)}', space=vmem, size = 0x12000, scoped, tag = 'internal scratch']
  %s0 = inlined_call_operand.vmem [shape: bf16[512,256], index: 0, kind: input, shape index: {}]
  %s1 = inlined_call_operand.vmem [shape: bf16[256,128], index: 1, kind: input, shape index: {}]
  %s2 = inlined_call_operand.vmem [shape: f32[1,128], index: 2, kind: input, shape index: {}]
  %s3 = inlined_call_operand.vmem [shape: f32[1,128], index: 3, kind: input, shape index: {}]
  %s4 = inlined_call_operand.vmem [shape: f32[512,128], index: 4, kind: input, shape index: {}]
  %s5 = inlined_call_operand.vmem [shape: f32[512,128], index: 5, kind: output, shape index: {}]
  %s6 = sld [smem:[#allocation0]]
  $region61: #{_lambda_.15} parent=0
    _
  %s8 = ssub.s32 1, %s6
  %s9 = scalar_select 0, %s8, %s6
  loop: start=0, step=1, limit=4
  $region2: #{_lambda_.15} parent=0 // loop_pre_header
    _
  $region3: #{_lambda_.15} parent=0 // loop_header
    %s11 = sphi 0, %s15
    %p12 = scmp.ge.s32.totalorder %s11, 4
    %s18 = sphi 0, %s37
    %s19 = sphi 0, %s33
    %s20 = sphi 0, %s29
    %s21 = sphi 0, %s18
    %s22 = sphi 0, %s19
    %s23 = sphi 0, %s20
    %s24 = sphi 0, %s21
    %s25 = sphi 0, %s22
    %s26 = sphi 0, %s23
    %s42 = sphi 0, %s44
    %s45 = sphi 0, %s42
    %s46 = sphi 0, %s45
    %s62 = sphi 0, %s46
    %s70 = sphi 0, %s72
    %s73 = sphi 0, %s70
    %s74 = sphi 0, %s73
    %s90 = sphi 0, %s74
    %s96 = sphi 0, %s98
    %s99 = sphi 0, %s96
    %s100 = sphi 0, %s99
    %s116 = sphi 0, %s100
    %s122 = sphi 0, %s124
    %s125 = sphi 0, %s122
    %s126 = sphi 0, %s125
    %s142 = sphi 0, %s126
    %s150 = sphi 0, %s152
    %s153 = sphi 0, %s150
    %s154 = sphi 0, %s153
    %s170 = sphi 0, %s154
    %s178 = sphi 0, %s180
    %s181 = sphi 0, %s178
    %s182 = sphi 0, %s181
    %s198 = sphi 0, %s182
  $region4: #{_lambda_.15} parent=0 // loop_header_branch
    %14 = sbr.rel (%p12) target = $region8
  $region5: #{_lambda_.15} parent=0 // loop_body
    %s16 = ssub.s32 %s11, 1
    %s17 = ssub.s32 %s11, 2
    %s27 = sadd.s32 1, %s20
    %p28 = scmp.ge.s32.totalorder %s27, 1
    %s29 = scalar_select %p28, 0, %s27
    %s30 = sadd.s32 1, %s19
    %s31 = scalar_select %p28, %s30, %s19
    %p32 = scmp.ge.s32.totalorder %s31, 1
    %s33 = scalar_select %p32, 0, %s31
    %s34 = sadd.s32 1, %s18
    %s35 = scalar_select %p32, %s34, %s18
    %p36 = scmp.ge.s32.totalorder %s35, 2
    %s37 = scalar_select %p36, 0, %s35
    %s38 = ssub.s32 %s18, %s37
    %s39 = ssub.s32 %s20, %s29
    %s40 = sor.u32 %s38, %s39
    %p41 = scmp.eq.s32.totalorder %s40, 0
    %s43 = sadd.s32 %s42, 1
    %s44 = scalar_select %p41, %s42, %s43
    %p47 = pneg %p41
    %p48 = scmp.eq.s32.totalorder %s11, 1
    %p49 = por %p47, %p48
    %p50 = scmp.ne.s32.totalorder %s42, %s45
    %p51 = scmp.eq.s32.totalorder %s11, 0
    %p52 = por %p50, %p51
    %p53 = scmp.ne.s32.totalorder %s42, %s45
    %p54 = scmp.eq.s32.totalorder %s16, 1
    %p55 = por %p53, %p54
    %p56 = scmp.ne.s32.totalorder %s45, %s46
    %p57 = scmp.eq.s32.totalorder %s16, 0
    %p58 = por %p56, %p57
    %p59 = scmp.ne.s32.totalorder %s45, %s46
    %p60 = scmp.eq.s32.totalorder %s17, 1
    %p61 = por %p59, %p60
    %p63 = scmp.ne.s32.totalorder %s46, %s62
    %p64 = scmp.eq.s32.totalorder %s17, 0
    %p65 = por %p63, %p64
    %s66 = ssub.s32 %s20, %s29
    %s67 = ssub.s32 %s19, %s33
    %s68 = sor.u32 %s66, %s67
    %p69 = scmp.eq.s32.totalorder %s68, 0
    %s71 = sadd.s32 %s70, 1
    %s72 = scalar_select %p69, %s70, %s71
    %p75 = pneg %p69
    %p76 = scmp.eq.s32.totalorder %s11, 1
    %p77 = por %p75, %p76
    %p78 = scmp.ne.s32.totalorder %s70, %s73
    %p79 = scmp.eq.s32.totalorder %s11, 0
    %p80 = por %p78, %p79
    %p81 = scmp.ne.s32.totalorder %s70, %s73
    %p82 = scmp.eq.s32.totalorder %s16, 1
    %p83 = por %p81, %p82
    %p84 = scmp.ne.s32.totalorder %s73, %s74
    %p85 = scmp.eq.s32.totalorder %s16, 0
    %p86 = por %p84, %p85
    %p87 = scmp.ne.s32.totalorder %s73, %s74
    %p88 = scmp.eq.s32.totalorder %s17, 1
    %p89 = por %p87, %p88
    %p91 = scmp.ne.s32.totalorder %s74, %s90
    %p92 = scmp.eq.s32.totalorder %s17, 0
    %p93 = por %p91, %p92
    %s94 = ssub.s32 %s19, %s33
    %p95 = scmp.eq.s32.totalorder %s94, 0
    %s97 = sadd.s32 %s96, 1
    %s98 = scalar_select %p95, %s96, %s97
    %p101 = pneg %p95
    %p102 = scmp.eq.s32.totalorder %s11, 1
    %p103 = por %p101, %p102
    %p104 = scmp.ne.s32.totalorder %s96, %s99
    %p105 = scmp.eq.s32.totalorder %s11, 0
    %p106 = por %p104, %p105
    %p107 = scmp.ne.s32.totalorder %s96, %s99
    %p108 = scmp.eq.s32.totalorder %s16, 1
    %p109 = por %p107, %p108
    %p110 = scmp.ne.s32.totalorder %s99, %s100
    %p111 = scmp.eq.s32.totalorder %s16, 0
    %p112 = por %p110, %p111
    %p113 = scmp.ne.s32.totalorder %s99, %s100
    %p114 = scmp.eq.s32.totalorder %s17, 1
    %p115 = por %p113, %p114
    %p117 = scmp.ne.s32.totalorder %s100, %s116
    %p118 = scmp.eq.s32.totalorder %s17, 0
    %p119 = por %p117, %p118
    %s120 = ssub.s32 %s19, %s33
    %p121 = scmp.eq.s32.totalorder %s120, 0
    %s123 = sadd.s32 %s122, 1
    %s124 = scalar_select %p121, %s122, %s123
    %p127 = pneg %p121
    %p128 = scmp.eq.s32.totalorder %s11, 1
    %p129 = por %p127, %p128
    %p130 = scmp.ne.s32.totalorder %s122, %s125
    %p131 = scmp.eq.s32.totalorder %s11, 0
    %p132 = por %p130, %p131
    %p133 = scmp.ne.s32.totalorder %s122, %s125
    %p134 = scmp.eq.s32.totalorder %s16, 1
    %p135 = por %p133, %p134
    %p136 = scmp.ne.s32.totalorder %s125, %s126
    %p137 = scmp.eq.s32.totalorder %s16, 0
    %p138 = por %p136, %p137
    %p139 = scmp.ne.s32.totalorder %s125, %s126
    %p140 = scmp.eq.s32.totalorder %s17, 1
    %p141 = por %p139, %p140
    %p143 = scmp.ne.s32.totalorder %s126, %s142
    %p144 = scmp.eq.s32.totalorder %s17, 0
    %p145 = por %p143, %p144
    %s146 = ssub.s32 %s18, %s37
    %s147 = ssub.s32 %s19, %s33
    %s148 = sor.u32 %s146, %s147
    %p149 = scmp.eq.s32.totalorder %s148, 0
    %s151 = sadd.s32 %s150, 1
    %s152 = scalar_select %p149, %s150, %s151
    %p155 = pneg %p149
    %p156 = scmp.eq.s32.totalorder %s11, 1
    %p157 = por %p155, %p156
    %p158 = scmp.ne.s32.totalorder %s150, %s153
    %p159 = scmp.eq.s32.totalorder %s11, 0
    %p160 = por %p158, %p159
    %p161 = scmp.ne.s32.totalorder %s150, %s153
    %p162 = scmp.eq.s32.totalorder %s16, 1
    %p163 = por %p161, %p162
    %p164 = scmp.ne.s32.totalorder %s153, %s154
    %p165 = scmp.eq.s32.totalorder %s16, 0
    %p166 = por %p164, %p165
    %p167 = scmp.ne.s32.totalorder %s153, %s154
    %p168 = scmp.eq.s32.totalorder %s17, 1
    %p169 = por %p167, %p168
    %p171 = scmp.ne.s32.totalorder %s154, %s170
    %p172 = scmp.eq.s32.totalorder %s17, 0
    %p173 = por %p171, %p172
    %s174 = ssub.s32 %s18, %s37
    %s175 = ssub.s32 %s19, %s33
    %s176 = sor.u32 %s174, %s175
    %p177 = scmp.eq.s32.totalorder %s176, 0
    %s179 = sadd.s32 %s178, 1
    %s180 = scalar_select %p177, %s178, %s179
    %p183 = pneg %p177
    %p184 = scmp.eq.s32.totalorder %s11, 1
    %p185 = por %p183, %p184
    %p186 = scmp.ne.s32.totalorder %s178, %s181
    %p187 = scmp.eq.s32.totalorder %s11, 0
    %p188 = por %p186, %p187
    %p189 = scmp.ne.s32.totalorder %s178, %s181
    %p190 = scmp.eq.s32.totalorder %s16, 1
    %p191 = por %p189, %p190
    %p192 = scmp.ne.s32.totalorder %s181, %s182
    %p193 = scmp.eq.s32.totalorder %s16, 0
    %p194 = por %p192, %p193
    %p195 = scmp.ne.s32.totalorder %s181, %s182
    %p196 = scmp.eq.s32.totalorder %s17, 1
    %p197 = por %p195, %p196
    %p199 = scmp.ne.s32.totalorder %s182, %s198
    %p200 = scmp.eq.s32.totalorder %s17, 0
    %p201 = por %p199, %p200
    %p202 = scmp.le.s32.totalorder 1, %s11
    %p203 = scmp.lt.s32.totalorder %s11, 3
    %p204 = pnand %p202, %p203
    %p205 = pneg %p204
    // Predicated region
    $region9: #{_lambda_.15} parent=5 // pred_check
      _
    $region10: #{_lambda_.15} parent=5 // pred_check_branch
      %207 = sbr.rel (%p204) target = $region12
    $region11: #{_lambda_.15} parent=5 // pred_region
      %s208 = ssub.s32 %s11, 1
      // Predicated region
      $region13: #{_lambda_.15} parent=11 // pred_check
        %p209 = pneg %p86
      $region14: #{_lambda_.15} parent=11 // pred_check_branch
        %211 = sbr.rel (%p209) target = $region16
      $region15: #{_lambda_.15} parent=11 // pred_region
        %s212 = smul.u32 32, %s23
        %p213 = scmp.lt.s32.totalorder %s212, 31
        %s214 = scalar_select %p213, %s212, 31
        %p215 = scmp.lt.s32.totalorder %s22, 0
        %s216 = scalar_select %p215, %s22, 0
        %s217 = sadd.s32 %s216, %s214
        %s218 = smul.addr %s217, 4
        %s219 = scalar_lea.vmem %s1, %s218
        %s220 = smul.u32 32, %s23
      $region16: #{_lambda_.15} parent=11 // pred_fallthru
        _
      // Predicated region
      $region17: #{_lambda_.15} parent=11 // pred_check
        %p221 = pneg %p112
      $region18: #{_lambda_.15} parent=11 // pred_check_branch
        %223 = sbr.rel (%p221) target = $region20
      $region19: #{_lambda_.15} parent=11 // pred_region
        %p224 = scmp.lt.s32.totalorder %s22, 0
        %s225 = scalar_select %p224, %s22, 0
        %s226 = scalar_lea.vmem %s2, %s225
      $region20: #{_lambda_.15} parent=11 // pred_fallthru
        _
      // Predicated region
      $region21: #{_lambda_.15} parent=11 // pred_check
        %p227 = pneg %p138
      $region22: #{_lambda_.15} parent=11 // pred_check_branch
        %229 = sbr.rel (%p227) target = $region24
      $region23: #{_lambda_.15} parent=11 // pred_region
        %p230 = scmp.lt.s32.totalorder %s22, 0
        %s231 = scalar_select %p230, %s22, 0
        %s232 = scalar_lea.vmem %s3, %s231
      $region24: #{_lambda_.15} parent=11 // pred_fallthru
        _
    $region12: #{_lambda_.15} parent=5 // pred_fallthru
      _
    %p233 = scmp.lt.s32.totalorder %s11, 2
    // Predicated region
    $region25: #{_lambda_.15} parent=5 // pred_check
      %p234 = pneg %p233
    $region26: #{_lambda_.15} parent=5 // pred_check_branch
      %236 = sbr.rel (%p234) target = $region28
    $region27: #{_lambda_.15} parent=5 // pred_region
      // Predicated region
      $region29: #{_lambda_.15} parent=27 // pred_check
        %p237 = pneg %p52
      $region30: #{_lambda_.15} parent=27 // pred_check_branch
        %239 = sbr.rel (%p237) target = $region32
      $region31: #{_lambda_.15} parent=27 // pred_region
        %s240 = smul.u32 32, %s18
        %s241 = smul.u32 2, %s20
        %p242 = scmp.lt.s32.totalorder %s240, 63
        %s243 = scalar_select %p242, %s240, 63
        %p244 = scmp.lt.s32.totalorder %s241, 1
        %s245 = scalar_select %p244, %s241, 1
        %s246 = smul.addr %s243, 2
        %s247 = sadd.s32 %s245, %s246
        %s248 = smul.addr %s247, 4
        %s249 = scalar_lea.vmem %s0, %s248
        %s250 = smul.u32 32, %s18
        %s251 = smul.u32 2, %s20
      $region32: #{_lambda_.15} parent=27 // pred_fallthru
        _
      // Predicated region
      $region33: #{_lambda_.15} parent=27 // pred_check
        %p252 = pneg %p160
      $region34: #{_lambda_.15} parent=27 // pred_check_branch
        %254 = sbr.rel (%p252) target = $region36
      $region35: #{_lambda_.15} parent=27 // pred_region
        %s255 = smul.u32 32, %s18
        %p256 = scmp.lt.s32.totalorder %s255, 63
        %s257 = scalar_select %p256, %s255, 63
        %p258 = scmp.lt.s32.totalorder %s19, 0
        %s259 = scalar_select %p258, %s19, 0
        %s260 = sadd.s32 %s259, %s257
        %s261 = smul.addr %s260, 8
        %s262 = scalar_lea.vmem %s4, %s261
        %s263 = smul.u32 32, %s18
      $region36: #{_lambda_.15} parent=27 // pred_fallthru
        _
    $region28: #{_lambda_.15} parent=5 // pred_fallthru
      _
    %p264 = scmp.le.s32.totalorder 1, %s11
    %p265 = scmp.lt.s32.totalorder %s11, 3
    %p266 = pnand %p264, %p265
    %p267 = pneg %p266
    // Predicated region
    $region37: #{_lambda_.15} parent=5 // pred_check
      _
    $region38: #{_lambda_.15} parent=5 // pred_check_branch
      %269 = sbr.rel (%p266) target = $region40
    $region39: #{_lambda_.15} parent=5 // pred_region
      %s270 = ssub.s32 %s11, 1
      %s271 = smul.u32 32, %s21
      %s272 = smul.u32 2, %s23
      %p273 = scmp.lt.s32.totalorder %s271, 63
      %s274 = scalar_select %p273, %s271, 63
      %p275 = scmp.lt.s32.totalorder %s272, 1
      %s276 = scalar_select %p275, %s272, 1
      %s277 = smul.addr %s274, 2
      %s278 = sadd.s32 %s276, %s277
      %s279 = smul.addr %s278, 4
      %s280 = scalar_lea.vmem %s0, %s279
      %p281 = pneg %p58
      %p282 = pneg %p55
      %s283 = smul.u32 32, %s23
      %p284 = scmp.lt.s32.totalorder %s283, 31
      %s285 = scalar_select %p284, %s283, 31
      %p286 = scmp.lt.s32.totalorder %s22, 0
      %s287 = scalar_select %p286, %s22, 0
      %s288 = sadd.s32 %s287, %s285
      %s289 = smul.addr %s288, 4
      %s290 = scalar_lea.vmem %s1, %s289
      %p291 = pneg %p86
      %p292 = pneg %p83
      %p293 = scmp.lt.s32.totalorder %s22, 0
      %s294 = scalar_select %p293, %s22, 0
      %s295 = scalar_lea.vmem %s2, %s294
      %p296 = pneg %p112
      %p297 = pneg %p109
      %p298 = scmp.lt.s32.totalorder %s22, 0
      %s299 = scalar_select %p298, %s22, 0
      %s300 = scalar_lea.vmem %s3, %s299
      %p301 = pneg %p138
      %p302 = pneg %p135
      %s303 = smul.u32 32, %s21
      %p304 = scmp.lt.s32.totalorder %s303, 63
      %s305 = scalar_select %p304, %s303, 63
      %p306 = scmp.lt.s32.totalorder %s22, 0
      %s307 = scalar_select %p306, %s22, 0
      %s308 = sadd.s32 %s307, %s305
      %s309 = smul.addr %s308, 8
      %s310 = scalar_lea.vmem %s4, %s309
      %p311 = pneg %p166
      %p312 = pneg %p163
      %p313 = pneg %p194
      %p314 = pneg %p191
      %s315 = smul.u32 32, %s21
      %p316 = scmp.lt.s32.totalorder %s315, 63
      %s317 = scalar_select %p316, %s315, 63
      %p318 = scmp.lt.s32.totalorder %s22, 0
      %s319 = scalar_select %p318, %s22, 0
      %s320 = sadd.s32 %s319, %s317
      %s321 = smul.addr %s320, 8
      %s322 = scalar_lea.vmem %s5, %s321
      %s323 = smul.u32 32, %s21
      %s324 = smul.u32 2, %s23
      %p325 = scmp.lt.s32.totalorder %s323, 63
      %s326 = scalar_select %p325, %s323, 63
      %p327 = scmp.lt.s32.totalorder %s324, 1
      %s328 = scalar_select %p327, %s324, 1
      %s329 = smul.addr %s326, 2
      %s330 = sadd.s32 %s328, %s329
      %s331 = smul.addr %s330, 4
      %s332 = scalar_lea.vmem %s0, %s331
      %s333 = smul.u32 32, %s21
      %s334 = smul.u32 2, %s23
      %s335 = smul.u32 32, %s23
      %p336 = scmp.lt.s32.totalorder %s335, 31
      %s337 = scalar_select %p336, %s335, 31
      %p338 = scmp.lt.s32.totalorder %s22, 0
      %s339 = scalar_select %p338, %s22, 0
      %s340 = sadd.s32 %s339, %s337
      %s341 = smul.addr %s340, 4
      %s342 = scalar_lea.vmem %s1, %s341
      %s343 = smul.u32 32, %s23
      %p344 = scmp.lt.s32.totalorder %s22, 0
      %s345 = scalar_select %p344, %s22, 0
      %s346 = scalar_lea.vmem %s2, %s345
      %p347 = scmp.lt.s32.totalorder %s22, 0
      %s348 = scalar_select %p347, %s22, 0
      %s349 = scalar_lea.vmem %s3, %s348
      %s350 = smul.u32 32, %s21
      %p351 = scmp.lt.s32.totalorder %s350, 63
      %s352 = scalar_select %p351, %s350, 63
      %p353 = scmp.lt.s32.totalorder %s22, 0
      %s354 = scalar_select %p353, %s22, 0
      %s355 = sadd.s32 %s354, %s352
      %s356 = smul.addr %s355, 8
      %s357 = scalar_lea.vmem %s4, %s356
      %s358 = smul.u32 32, %s21
      %s359 = smul.u32 32, %s21
      %p360 = scmp.lt.s32.totalorder %s359, 63
      %s361 = scalar_select %p360, %s359, 63
      %p362 = scmp.lt.s32.totalorder %s22, 0
      %s363 = scalar_select %p362, %s22, 0
      %s364 = sadd.s32 %s363, %s361
      %s365 = smul.addr %s364, 8
      %s366 = scalar_lea.vmem %s5, %s365
      %s367 = smul.u32 32, %s21
      %p369 = scmp.eq.s32.totalorder %s23, 0
      // Predicated region
      $region41: #{_lambda_.15} parent=39 // pred_check
        %p370 = pneg %p369
      $region42: #{_lambda_.15} parent=39 // pred_check_branch
        %372 = sbr.rel (%p370) target = $region44
      $region43: #{_lambda_.15} parent=39 // pred_region
        %373 = vst [vmem:[%s366] sm:$0xff] 0.0
        %374 = vst [vmem:[%s366 + $0x8] sm:$0xff] 0.0
        %375 = vst [vmem:[%s366 + $0x10] sm:$0xff] 0.0
        %376 = vst [vmem:[%s366 + $0x18] sm:$0xff] 0.0
        %377 = vst [vmem:[%s366 + $0x20] sm:$0xff] 0.0
        %378 = vst [vmem:[%s366 + $0x28] sm:$0xff] 0.0
        %379 = vst [vmem:[%s366 + $0x30] sm:$0xff] 0.0
        %380 = vst [vmem:[%s366 + $0x38] sm:$0xff] 0.0
        %381 = vst [vmem:[%s366 + $0x40] sm:$0xff] 0.0
        %382 = vst [vmem:[%s366 + $0x48] sm:$0xff] 0.0
        %383 = vst [vmem:[%s366 + $0x50] sm:$0xff] 0.0
        %384 = vst [vmem:[%s366 + $0x58] sm:$0xff] 0.0
        %385 = vst [vmem:[%s366 + $0x60] sm:$0xff] 0.0
        %386 = vst [vmem:[%s366 + $0x68] sm:$0xff] 0.0
        %387 = vst [vmem:[%s366 + $0x70] sm:$0xff] 0.0
        %388 = vst [vmem:[%s366 + $0x78] sm:$0xff] 0.0
        %389 = vst [vmem:[%s366 + $0x80] sm:$0xff] 0.0
        %390 = vst [vmem:[%s366 + $0x88] sm:$0xff] 0.0
        %391 = vst [vmem:[%s366 + $0x90] sm:$0xff] 0.0
        %392 = vst [vmem:[%s366 + $0x98] sm:$0xff] 0.0
        %393 = vst [vmem:[%s366 + $0xa0] sm:$0xff] 0.0
        %394 = vst [vmem:[%s366 + $0xa8] sm:$0xff] 0.0
        %395 = vst [vmem:[%s366 + $0xb0] sm:$0xff] 0.0
        %396 = vst [vmem:[%s366 + $0xb8] sm:$0xff] 0.0
        %397 = vst [vmem:[%s366 + $0xc0] sm:$0xff] 0.0
        %398 = vst [vmem:[%s366 + $0xc8] sm:$0xff] 0.0
        %399 = vst [vmem:[%s366 + $0xd0] sm:$0xff] 0.0
        %400 = vst [vmem:[%s366 + $0xd8] sm:$0xff] 0.0
        %401 = vst [vmem:[%s366 + $0xe0] sm:$0xff] 0.0
        %402 = vst [vmem:[%s366 + $0xe8] sm:$0xff] 0.0
        %403 = vst [vmem:[%s366 + $0xf0] sm:$0xff] 0.0
        %404 = vst [vmem:[%s366 + $0xf8] sm:$0xff] 0.0
      $region44: #{_lambda_.15} parent=39 // pred_fallthru
        _
      %v405 = vld [vmem:[%s366] sm:$0xff]
      %v406 = vld [vmem:[%s366 + $0x8] sm:$0xff]
      %v407 = vld [vmem:[%s366 + $0x10] sm:$0xff]
      %v408 = vld [vmem:[%s366 + $0x18] sm:$0xff]
      %v409 = vld [vmem:[%s366 + $0x20] sm:$0xff]
      %v410 = vld [vmem:[%s366 + $0x28] sm:$0xff]
      %v411 = vld [vmem:[%s366 + $0x30] sm:$0xff]
      %v412 = vld [vmem:[%s366 + $0x38] sm:$0xff]
      %v413 = vld [vmem:[%s366 + $0x40] sm:$0xff]
      %v414 = vld [vmem:[%s366 + $0x48] sm:$0xff]
      %v415 = vld [vmem:[%s366 + $0x50] sm:$0xff]
      %v416 = vld [vmem:[%s366 + $0x58] sm:$0xff]
      %v417 = vld [vmem:[%s366 + $0x60] sm:$0xff]
      %v418 = vld [vmem:[%s366 + $0x68] sm:$0xff]
      %v419 = vld [vmem:[%s366 + $0x70] sm:$0xff]
      %v420 = vld [vmem:[%s366 + $0x78] sm:$0xff]
      %v421 = vld [vmem:[%s366 + $0x80] sm:$0xff]
      %v422 = vld [vmem:[%s366 + $0x88] sm:$0xff]
      %v423 = vld [vmem:[%s366 + $0x90] sm:$0xff]
      %v424 = vld [vmem:[%s366 + $0x98] sm:$0xff]
      %v425 = vld [vmem:[%s366 + $0xa0] sm:$0xff]
      %v426 = vld [vmem:[%s366 + $0xa8] sm:$0xff]
      %v427 = vld [vmem:[%s366 + $0xb0] sm:$0xff]
      %v428 = vld [vmem:[%s366 + $0xb8] sm:$0xff]
      %v429 = vld [vmem:[%s366 + $0xc0] sm:$0xff]
      %v430 = vld [vmem:[%s366 + $0xc8] sm:$0xff]
      %v431 = vld [vmem:[%s366 + $0xd0] sm:$0xff]
      %v432 = vld [vmem:[%s366 + $0xd8] sm:$0xff]
      %v433 = vld [vmem:[%s366 + $0xe0] sm:$0xff]
      %v434 = vld [vmem:[%s366 + $0xe8] sm:$0xff]
      %v435 = vld [vmem:[%s366 + $0xf0] sm:$0xff]
      %v436 = vld [vmem:[%s366 + $0xf8] sm:$0xff]
      %v437 = vld [vmem:[%s332] sm:$0xff]
      %v438 = vld [vmem:[%s332 + $0x8] sm:$0xff]
      %v439 = vld [vmem:[%s332 + $0x10] sm:$0xff]
      %v440 = vld [vmem:[%s332 + $0x18] sm:$0xff]
      %v441 = vld [vmem:[%s332 + $0x20] sm:$0xff]
      %v442 = vld [vmem:[%s332 + $0x28] sm:$0xff]
      %v443 = vld [vmem:[%s332 + $0x30] sm:$0xff]
      %v444 = vld [vmem:[%s332 + $0x38] sm:$0xff]
      %v445 = vld [vmem:[%s332 + $0x40] sm:$0xff]
      %v446 = vld [vmem:[%s332 + $0x48] sm:$0xff]
      %v447 = vld [vmem:[%s332 + $0x50] sm:$0xff]
      %v448 = vld [vmem:[%s332 + $0x58] sm:$0xff]
      %v449 = vld [vmem:[%s332 + $0x60] sm:$0xff]
      %v450 = vld [vmem:[%s332 + $0x68] sm:$0xff]
      %v451 = vld [vmem:[%s332 + $0x70] sm:$0xff]
      %v452 = vld [vmem:[%s332 + $0x78] sm:$0xff]
      %v453 = vld [vmem:[%s332 + $0x80] sm:$0xff]
      %v454 = vld [vmem:[%s332 + $0x88] sm:$0xff]
      %v455 = vld [vmem:[%s332 + $0x90] sm:$0xff]
      %v456 = vld [vmem:[%s332 + $0x98] sm:$0xff]
      %v457 = vld [vmem:[%s332 + $0xa0] sm:$0xff]
      %v458 = vld [vmem:[%s332 + $0xa8] sm:$0xff]
      %v459 = vld [vmem:[%s332 + $0xb0] sm:$0xff]
      %v460 = vld [vmem:[%s332 + $0xb8] sm:$0xff]
      %v461 = vld [vmem:[%s332 + $0xc0] sm:$0xff]
      %v462 = vld [vmem:[%s332 + $0xc8] sm:$0xff]
      %v463 = vld [vmem:[%s332 + $0xd0] sm:$0xff]
      %v464 = vld [vmem:[%s332 + $0xd8] sm:$0xff]
      %v465 = vld [vmem:[%s332 + $0xe0] sm:$0xff]
      %v466 = vld [vmem:[%s332 + $0xe8] sm:$0xff]
      %v467 = vld [vmem:[%s332 + $0xf0] sm:$0xff]
      %v468 = vld [vmem:[%s332 + $0xf8] sm:$0xff]
      %v469 = vld [vmem:[%s342] sm:$0xf]
      %v470 = vld [vmem:[%s342 + $0x4] sm:$0xf]
      %v471 = vld [vmem:[%s342 + $0x8] sm:$0xf]
      %v472 = vld [vmem:[%s342 + $0xc] sm:$0xf]
      %v473 = vld [vmem:[%s342 + $0x10] sm:$0xf]
      %v474 = vld [vmem:[%s342 + $0x14] sm:$0xf]
      %v475 = vld [vmem:[%s342 + $0x18] sm:$0xf]
      %v476 = vld [vmem:[%s342 + $0x1c] sm:$0xf]
      %v477 = vld [vmem:[%s342 + $0x20] sm:$0xf]
      %v478 = vld [vmem:[%s342 + $0x24] sm:$0xf]
      %v479 = vld [vmem:[%s342 + $0x28] sm:$0xf]
      %v480 = vld [vmem:[%s342 + $0x2c] sm:$0xf]
      %v481 = vld [vmem:[%s342 + $0x30] sm:$0xf]
      %v482 = vld [vmem:[%s342 + $0x34] sm:$0xf]
      %v483 = vld [vmem:[%s342 + $0x38] sm:$0xf]
      %v484 = vld [vmem:[%s342 + $0x3c] sm:$0xf]
      %v485 = vld [vmem:[%s342 + $0x40] sm:$0xf]
      %v486 = vld [vmem:[%s342 + $0x44] sm:$0xf]
      %v487 = vld [vmem:[%s342 + $0x48] sm:$0xf]
      %v488 = vld [vmem:[%s342 + $0x4c] sm:$0xf]
      %v489 = vld [vmem:[%s342 + $0x50] sm:$0xf]
      %v490 = vld [vmem:[%s342 + $0x54] sm:$0xf]
      %v491 = vld [vmem:[%s342 + $0x58] sm:$0xf]
      %v492 = vld [vmem:[%s342 + $0x5c] sm:$0xf]
      %v493 = vld [vmem:[%s342 + $0x60] sm:$0xf]
      %v494 = vld [vmem:[%s342 + $0x64] sm:$0xf]
      %v495 = vld [vmem:[%s342 + $0x68] sm:$0xf]
      %v496 = vld [vmem:[%s342 + $0x6c] sm:$0xf]
      %v497 = vld [vmem:[%s342 + $0x70] sm:$0xf]
      %v498 = vld [vmem:[%s342 + $0x74] sm:$0xf]
      %v499 = vld [vmem:[%s342 + $0x78] sm:$0xf]
      %v500 = vld [vmem:[%s342 + $0x7c] sm:$0xf]
      %v533 = vunpack.c.l.b16 %v437
      %v534 = vunpack.c.h.b16 %v437
      %v535 = vunpack.c.l.b16 %v438
      %v536 = vunpack.c.h.b16 %v438
      %v537 = vunpack.c.l.b16 %v439
      %v538 = vunpack.c.h.b16 %v439
      %v539 = vunpack.c.l.b16 %v440
      %v540 = vunpack.c.h.b16 %v440
      %v541 = vunpack.c.l.b16 %v441
      %v542 = vunpack.c.h.b16 %v441
      %v543 = vunpack.c.l.b16 %v442
      %v544 = vunpack.c.h.b16 %v442
      %v545 = vunpack.c.l.b16 %v443
      %v546 = vunpack.c.h.b16 %v443
      %v547 = vunpack.c.l.b16 %v444
      %v548 = vunpack.c.h.b16 %v444
      %v549 = vunpack.c.l.b16 %v445
      %v550 = vunpack.c.h.b16 %v445
      %v551 = vunpack.c.l.b16 %v446
      %v552 = vunpack.c.h.b16 %v446
      %v553 = vunpack.c.l.b16 %v447
      %v554 = vunpack.c.h.b16 %v447
      %v555 = vunpack.c.l.b16 %v448
      %v556 = vunpack.c.h.b16 %v448
      %v557 = vunpack.c.l.b16 %v449
      %v558 = vunpack.c.h.b16 %v449
      %v559 = vunpack.c.l.b16 %v450
      %v560 = vunpack.c.h.b16 %v450
      %v561 = vunpack.c.l.b16 %v451
      %v562 = vunpack.c.h.b16 %v451
      %v563 = vunpack.c.l.b16 %v452
      %v564 = vunpack.c.h.b16 %v452
      %v565 = vunpack.c.l.b16 %v453
      %v566 = vunpack.c.h.b16 %v453
      %v567 = vunpack.c.l.b16 %v454
      %v568 = vunpack.c.h.b16 %v454
      %v569 = vunpack.c.l.b16 %v455
      %v570 = vunpack.c.h.b16 %v455
      %v571 = vunpack.c.l.b16 %v456
      %v572 = vunpack.c.h.b16 %v456
      %v573 = vunpack.c.l.b16 %v457
      %v574 = vunpack.c.h.b16 %v457
      %v575 = vunpack.c.l.b16 %v458
      %v576 = vunpack.c.h.b16 %v458
      %v577 = vunpack.c.l.b16 %v459
      %v578 = vunpack.c.h.b16 %v459
      %v579 = vunpack.c.l.b16 %v460
      %v580 = vunpack.c.h.b16 %v460
      %v581 = vunpack.c.l.b16 %v461
      %v582 = vunpack.c.h.b16 %v461
      %v583 = vunpack.c.l.b16 %v462
      %v584 = vunpack.c.h.b16 %v462
      %v585 = vunpack.c.l.b16 %v463
      %v586 = vunpack.c.h.b16 %v463
      %v587 = vunpack.c.l.b16 %v464
      %v588 = vunpack.c.h.b16 %v464
      %v589 = vunpack.c.l.b16 %v465
      %v590 = vunpack.c.h.b16 %v465
      %v591 = vunpack.c.l.b16 %v466
      %v592 = vunpack.c.h.b16 %v466
      %v593 = vunpack.c.l.b16 %v467
      %v594 = vunpack.c.h.b16 %v467
      %v595 = vunpack.c.l.b16 %v468
      %v596 = vunpack.c.h.b16 %v468
      %v597 = vpack.c.b16 %v535, %v533
      %v598 = vpack.c.b16 %v536, %v534
      %v599 = vpack.c.b16 %v539, %v537
      %v600 = vpack.c.b16 %v540, %v538
      %v601 = vpack.c.b16 %v543, %v541
      %v602 = vpack.c.b16 %v544, %v542
      %v603 = vpack.c.b16 %v547, %v545
      %v604 = vpack.c.b16 %v548, %v546
      %v605 = vpack.c.b16 %v551, %v549
      %v606 = vpack.c.b16 %v552, %v550
      %v607 = vpack.c.b16 %v555, %v553
      %v608 = vpack.c.b16 %v556, %v554
      %v609 = vpack.c.b16 %v559, %v557
      %v610 = vpack.c.b16 %v560, %v558
      %v611 = vpack.c.b16 %v563, %v561
      %v612 = vpack.c.b16 %v564, %v562
      %v613 = vpack.c.b16 %v567, %v565
      %v614 = vpack.c.b16 %v568, %v566
      %v615 = vpack.c.b16 %v571, %v569
      %v616 = vpack.c.b16 %v572, %v570
      %v617 = vpack.c.b16 %v575, %v573
      %v618 = vpack.c.b16 %v576, %v574
      %v619 = vpack.c.b16 %v579, %v577
      %v620 = vpack.c.b16 %v580, %v578
      %v621 = vpack.c.b16 %v583, %v581
      %v622 = vpack.c.b16 %v584, %v582
      %v623 = vpack.c.b16 %v587, %v585
      %v624 = vpack.c.b16 %v588, %v586
      %v625 = vpack.c.b16 %v591, %v589
      %v626 = vpack.c.b16 %v592, %v590
      %v627 = vpack.c.b16 %v595, %v593
      %v628 = vpack.c.b16 %v596, %v594
      %v693 = vunpack.c.l.b16 %v469
      %v694 = vunpack.c.l.b16 %v470
      %v695 = vunpack.c.l.b16 %v471
      %v696 = vunpack.c.l.b16 %v472
      %v697 = vunpack.c.l.b16 %v473
      %v698 = vunpack.c.l.b16 %v474
      %v699 = vunpack.c.l.b16 %v475
      %v700 = vunpack.c.l.b16 %v476
      %v701 = vunpack.c.l.b16 %v477
      %v702 = vunpack.c.l.b16 %v478
      %v703 = vunpack.c.l.b16 %v479
      %v704 = vunpack.c.l.b16 %v480
      %v705 = vunpack.c.l.b16 %v481
      %v706 = vunpack.c.l.b16 %v482
      %v707 = vunpack.c.l.b16 %v483
      %v708 = vunpack.c.l.b16 %v484
      %v709 = vunpack.c.l.b16 %v485
      %v710 = vunpack.c.l.b16 %v486
      %v711 = vunpack.c.l.b16 %v487
      %v712 = vunpack.c.l.b16 %v488
      %v713 = vunpack.c.l.b16 %v489
      %v714 = vunpack.c.l.b16 %v490
      %v715 = vunpack.c.l.b16 %v491
      %v716 = vunpack.c.l.b16 %v492
      %v717 = vunpack.c.l.b16 %v493
      %v718 = vunpack.c.l.b16 %v494
      %v719 = vunpack.c.l.b16 %v495
      %v720 = vunpack.c.l.b16 %v496
      %v721 = vunpack.c.l.b16 %v497
      %v722 = vunpack.c.l.b16 %v498
      %v723 = vunpack.c.l.b16 %v499
      %v724 = vunpack.c.l.b16 %v500
      %v725 = vpack.c.b16 %v694, %v693
      %v726 = vpack.c.b16 %v696, %v695
      %v727 = vpack.c.b16 %v698, %v697
      %v728 = vpack.c.b16 %v700, %v699
      %v729 = vpack.c.b16 %v702, %v701
      %v730 = vpack.c.b16 %v704, %v703
      %v731 = vpack.c.b16 %v706, %v705
      %v732 = vpack.c.b16 %v708, %v707
      %v733 = vpack.c.b16 %v710, %v709
      %v734 = vpack.c.b16 %v712, %v711
      %v735 = vpack.c.b16 %v714, %v713
      %v736 = vpack.c.b16 %v716, %v715
      %v737 = vpack.c.b16 %v718, %v717
      %v738 = vpack.c.b16 %v720, %v719
      %v739 = vpack.c.b16 %v722, %v721
      %v740 = vpack.c.b16 %v724, %v723
      %757 = vmatprep.subr.bf16.mxu0 0
      %758 = vmatpush1.bf16.msra.mxu0 %v732
      %759 = vmatprep.subr.bf16.mxu0 0
      %760 = vmatpush1.bf16.msra.mxu0 %v731
      %761 = vmatprep.subr.bf16.mxu0 0
      %762 = vmatpush1.bf16.msra.mxu0 %v730
      %763 = vmatprep.subr.bf16.mxu0 0
      %764 = vmatpush1.bf16.msra.mxu0 %v729
      %765 = vmatprep.subr.bf16.mxu0 0
      %766 = vmatpush1.bf16.msra.mxu0 %v728
      %767 = vmatprep.subr.bf16.mxu0 0
      %768 = vmatpush1.bf16.msra.mxu0 %v727
      %769 = vmatprep.subr.bf16.mxu0 0
      %770 = vmatpush1.bf16.msra.mxu0 %v726
      %771 = vmatprep.subr.bf16.mxu0 0
      %772 = vmatpush1.bf16.msra.mxu0 %v725
      %773 = vmatprep.subr.bf16.mxu0 0
      %774 = vmatpush2.bf16.msra.mxu0 %v740
      %775 = vmatprep.subr.bf16.mxu0 0
      %776 = vmatpush2.bf16.msra.mxu0 %v739
      %777 = vmatprep.subr.bf16.mxu0 0
      %778 = vmatpush2.bf16.msra.mxu0 %v738
      %779 = vmatprep.subr.bf16.mxu0 0
      %780 = vmatpush2.bf16.msra.mxu0 %v737
      %781 = vmatprep.subr.bf16.mxu0 0
      %782 = vmatpush2.bf16.msra.mxu0 %v736
      %783 = vmatprep.subr.bf16.mxu0 0
      %784 = vmatpush2.bf16.msra.mxu0 %v735
      %785 = vmatprep.subr.bf16.mxu0 0
      %786 = vmatpush2.bf16.msra.mxu0 %v734
      %787 = vmatprep.subr.bf16.mxu0 0
      %788 = vmatpush2.bf16.msra.mxu0 %v733
      %789 = vmatprep.mubr.bf16.mxu0 %v598
      %790 = vmatmul.mubr.bf16.gmra.mxu0 %v597
      %v791 = vpop.f32.mrf.mxu0
      %v792 = vadd.f32 0.0, %v791
      %v793 = vpop.f32.mrf.mxu0
      %v794 = vpop.f32.mrf.mxu0
      %v795 = vadd.f32 0.0, %v794
      %v796 = vpop.f32.mrf.mxu0
      %797 = vmatprep.mubr.bf16.mxu0 %v600
      %798 = vmatmul.mubr.bf16.gmra.mxu0 %v599
      %v799 = vpop.f32.mrf.mxu0
      %v800 = vadd.f32 0.0, %v799
      %v801 = vpop.f32.mrf.mxu0
      %v802 = vpop.f32.mrf.mxu0
      %v803 = vadd.f32 0.0, %v802
      %v804 = vpop.f32.mrf.mxu0
      %805 = vmatprep.mubr.bf16.mxu0 %v602
      %806 = vmatmul.mubr.bf16.gmra.mxu0 %v601
      %v807 = vpop.f32.mrf.mxu0
      %v808 = vadd.f32 0.0, %v807
      %v809 = vpop.f32.mrf.mxu0
      %v810 = vpop.f32.mrf.mxu0
      %v811 = vadd.f32 0.0, %v810
      %v812 = vpop.f32.mrf.mxu0
      %813 = vmatprep.mubr.bf16.mxu0 %v604
      %814 = vmatmul.mubr.bf16.gmra.mxu0 %v603
      %v815 = vpop.f32.mrf.mxu0
      %v816 = vadd.f32 0.0, %v815
      %v817 = vpop.f32.mrf.mxu0
      %v818 = vpop.f32.mrf.mxu0
      %v819 = vadd.f32 0.0, %v818
      %v820 = vpop.f32.mrf.mxu0
      %821 = vmatprep.mubr.bf16.mxu0 %v606
      %822 = vmatmul.mubr.bf16.gmra.mxu0 %v605
      %v823 = vpop.f32.mrf.mxu0
      %v824 = vadd.f32 0.0, %v823
      %v825 = vpop.f32.mrf.mxu0
      %v826 = vpop.f32.mrf.mxu0
      %v827 = vadd.f32 0.0, %v826
      %v828 = vpop.f32.mrf.mxu0
      %829 = vmatprep.mubr.bf16.mxu0 %v608
      %830 = vmatmul.mubr.bf16.gmra.mxu0 %v607
      %v831 = vpop.f32.mrf.mxu0
      %v832 = vadd.f32 0.0, %v831
      %v833 = vpop.f32.mrf.mxu0
      %v834 = vpop.f32.mrf.mxu0
      %v835 = vadd.f32 0.0, %v834
      %v836 = vpop.f32.mrf.mxu0
      %837 = vmatprep.mubr.bf16.mxu0 %v610
      %838 = vmatmul.mubr.bf16.gmra.mxu0 %v609
      %v839 = vpop.f32.mrf.mxu0
      %v840 = vadd.f32 0.0, %v839
      %v841 = vpop.f32.mrf.mxu0
      %v842 = vpop.f32.mrf.mxu0
      %v843 = vadd.f32 0.0, %v842
      %v844 = vpop.f32.mrf.mxu0
      %845 = vmatprep.mubr.bf16.mxu0 %v612
      %846 = vmatmul.mubr.bf16.gmra.mxu0 %v611
      %v847 = vpop.f32.mrf.mxu0
      %v848 = vadd.f32 0.0, %v847
      %v849 = vpop.f32.mrf.mxu0
      %v850 = vpop.f32.mrf.mxu0
      %v851 = vadd.f32 0.0, %v850
      %v852 = vpop.f32.mrf.mxu0
      %853 = vmatprep.mubr.bf16.mxu0 %v614
      %854 = vmatmul.mubr.bf16.gmra.mxu0 %v613
      %v855 = vpop.f32.mrf.mxu0
      %v856 = vadd.f32 0.0, %v855
      %v857 = vpop.f32.mrf.mxu0
      %v858 = vpop.f32.mrf.mxu0
      %v859 = vadd.f32 0.0, %v858
      %v860 = vpop.f32.mrf.mxu0
      %861 = vmatprep.mubr.bf16.mxu0 %v616
      %862 = vmatmul.mubr.bf16.gmra.mxu0 %v615
      %v863 = vpop.f32.mrf.mxu0
      %v864 = vadd.f32 0.0, %v863
      %v865 = vpop.f32.mrf.mxu0
      %v866 = vpop.f32.mrf.mxu0
      %v867 = vadd.f32 0.0, %v866
      %v868 = vpop.f32.mrf.mxu0
      %869 = vmatprep.mubr.bf16.mxu0 %v618
      %870 = vmatmul.mubr.bf16.gmra.mxu0 %v617
      %v871 = vpop.f32.mrf.mxu0
      %v872 = vadd.f32 0.0, %v871
      %v873 = vpop.f32.mrf.mxu0
      %v874 = vpop.f32.mrf.mxu0
      %v875 = vadd.f32 0.0, %v874
      %v876 = vpop.f32.mrf.mxu0
      %877 = vmatprep.mubr.bf16.mxu0 %v620
      %878 = vmatmul.mubr.bf16.gmra.mxu0 %v619
      %v879 = vpop.f32.mrf.mxu0
      %v880 = vadd.f32 0.0, %v879
      %v881 = vpop.f32.mrf.mxu0
      %v882 = vpop.f32.mrf.mxu0
      %v883 = vadd.f32 0.0, %v882
      %v884 = vpop.f32.mrf.mxu0
      %885 = vmatprep.mubr.bf16.mxu0 %v622
      %886 = vmatmul.mubr.bf16.gmra.mxu0 %v621
      %v887 = vpop.f32.mrf.mxu0
      %v888 = vadd.f32 0.0, %v887
      %v889 = vpop.f32.mrf.mxu0
      %v890 = vpop.f32.mrf.mxu0
      %v891 = vadd.f32 0.0, %v890
      %v892 = vpop.f32.mrf.mxu0
      %893 = vmatprep.mubr.bf16.mxu0 %v624
      %894 = vmatmul.mubr.bf16.gmra.mxu0 %v623
      %v895 = vpop.f32.mrf.mxu0
      %v896 = vadd.f32 0.0, %v895
      %v897 = vpop.f32.mrf.mxu0
      %v898 = vpop.f32.mrf.mxu0
      %v899 = vadd.f32 0.0, %v898
      %v900 = vpop.f32.mrf.mxu0
      %901 = vmatprep.mubr.bf16.mxu0 %v626
      %902 = vmatmul.mubr.bf16.gmra.mxu0 %v625
      %v903 = vpop.f32.mrf.mxu0
      %v904 = vadd.f32 0.0, %v903
      %v905 = vpop.f32.mrf.mxu0
      %v906 = vpop.f32.mrf.mxu0
      %v907 = vadd.f32 0.0, %v906
      %v908 = vpop.f32.mrf.mxu0
      %909 = vmatprep.mubr.bf16.mxu0 %v628
      %910 = vmatmul.mubr.bf16.gmra.mxu0 %v627
      %v911 = vpop.f32.mrf.mxu0
      %v912 = vadd.f32 0.0, %v911
      %v913 = vpop.f32.mrf.mxu0
      %v914 = vpop.f32.mrf.mxu0
      %v915 = vadd.f32 0.0, %v914
      %v916 = vpop.f32.mrf.mxu0
      %917 = vdwg.mxu0
      %v918 = vadd.f32 %v405, %v792
      %v919 = vadd.f32 %v406, %v795
      %v920 = vadd.f32 %v407, %v800
      %v921 = vadd.f32 %v408, %v803
      %v922 = vadd.f32 %v409, %v808
      %v923 = vadd.f32 %v410, %v811
      %v924 = vadd.f32 %v411, %v816
      %v925 = vadd.f32 %v412, %v819
      %v926 = vadd.f32 %v413, %v824
      %v927 = vadd.f32 %v414, %v827
      %v928 = vadd.f32 %v415, %v832
      %v929 = vadd.f32 %v416, %v835
      %v930 = vadd.f32 %v417, %v840
      %v931 = vadd.f32 %v418, %v843
      %v932 = vadd.f32 %v419, %v848
      %v933 = vadd.f32 %v420, %v851
      %v934 = vadd.f32 %v421, %v856
      %v935 = vadd.f32 %v422, %v859
      %v936 = vadd.f32 %v423, %v864
      %v937 = vadd.f32 %v424, %v867
      %v938 = vadd.f32 %v425, %v872
      %v939 = vadd.f32 %v426, %v875
      %v940 = vadd.f32 %v427, %v880
      %v941 = vadd.f32 %v428, %v883
      %v942 = vadd.f32 %v429, %v888
      %v943 = vadd.f32 %v430, %v891
      %v944 = vadd.f32 %v431, %v896
      %v945 = vadd.f32 %v432, %v899
      %v946 = vadd.f32 %v433, %v904
      %v947 = vadd.f32 %v434, %v907
      %v948 = vadd.f32 %v435, %v912
      %v949 = vadd.f32 %v436, %v915
      %950 = vst [vmem:[%s366] sm:$0xff] %v918
      %951 = vst [vmem:[%s366 + $0x8] sm:$0xff] %v919
      %952 = vst [vmem:[%s366 + $0x10] sm:$0xff] %v920
      %953 = vst [vmem:[%s366 + $0x18] sm:$0xff] %v921
      %954 = vst [vmem:[%s366 + $0x20] sm:$0xff] %v922
      %955 = vst [vmem:[%s366 + $0x28] sm:$0xff] %v923
      %956 = vst [vmem:[%s366 + $0x30] sm:$0xff] %v924
      %957 = vst [vmem:[%s366 + $0x38] sm:$0xff] %v925
      %958 = vst [vmem:[%s366 + $0x40] sm:$0xff] %v926
      %959 = vst [vmem:[%s366 + $0x48] sm:$0xff] %v927
      %960 = vst [vmem:[%s366 + $0x50] sm:$0xff] %v928
      %961 = vst [vmem:[%s366 + $0x58] sm:$0xff] %v929
      %962 = vst [vmem:[%s366 + $0x60] sm:$0xff] %v930
      %963 = vst [vmem:[%s366 + $0x68] sm:$0xff] %v931
      %964 = vst [vmem:[%s366 + $0x70] sm:$0xff] %v932
      %965 = vst [vmem:[%s366 + $0x78] sm:$0xff] %v933
      %966 = vst [vmem:[%s366 + $0x80] sm:$0xff] %v934
      %967 = vst [vmem:[%s366 + $0x88] sm:$0xff] %v935
      %968 = vst [vmem:[%s366 + $0x90] sm:$0xff] %v936
      %969 = vst [vmem:[%s366 + $0x98] sm:$0xff] %v937
      %970 = vst [vmem:[%s366 + $0xa0] sm:$0xff] %v938
      %971 = vst [vmem:[%s366 + $0xa8] sm:$0xff] %v939
      %972 = vst [vmem:[%s366 + $0xb0] sm:$0xff] %v940
      %973 = vst [vmem:[%s366 + $0xb8] sm:$0xff] %v941
      %974 = vst [vmem:[%s366 + $0xc0] sm:$0xff] %v942
      %975 = vst [vmem:[%s366 + $0xc8] sm:$0xff] %v943
      %976 = vst [vmem:[%s366 + $0xd0] sm:$0xff] %v944
      %977 = vst [vmem:[%s366 + $0xd8] sm:$0xff] %v945
      %978 = vst [vmem:[%s366 + $0xe0] sm:$0xff] %v946
      %979 = vst [vmem:[%s366 + $0xe8] sm:$0xff] %v947
      %980 = vst [vmem:[%s366 + $0xf0] sm:$0xff] %v948
      %981 = vst [vmem:[%s366 + $0xf8] sm:$0xff] %v949
      // Predicated region
      $region45: #{_lambda_.15} parent=39 // pred_check
        %p982 = pneg %p369
      $region46: #{_lambda_.15} parent=39 // pred_check_branch
        %984 = sbr.rel (%p982) target = $region48
      $region47: #{_lambda_.15} parent=39 // pred_region
        %v985 = vld [vmem:[%s366] sm:$0xff]
        %v986 = vld [vmem:[%s366 + $0x8] sm:$0xff]
        %v987 = vld [vmem:[%s366 + $0x10] sm:$0xff]
        %v988 = vld [vmem:[%s366 + $0x18] sm:$0xff]
        %v989 = vld [vmem:[%s366 + $0x20] sm:$0xff]
        %v990 = vld [vmem:[%s366 + $0x28] sm:$0xff]
        %v991 = vld [vmem:[%s366 + $0x30] sm:$0xff]
        %v992 = vld [vmem:[%s366 + $0x38] sm:$0xff]
        %v993 = vld [vmem:[%s366 + $0x40] sm:$0xff]
        %v994 = vld [vmem:[%s366 + $0x48] sm:$0xff]
        %v995 = vld [vmem:[%s366 + $0x50] sm:$0xff]
        %v996 = vld [vmem:[%s366 + $0x58] sm:$0xff]
        %v997 = vld [vmem:[%s366 + $0x60] sm:$0xff]
        %v998 = vld [vmem:[%s366 + $0x68] sm:$0xff]
        %v999 = vld [vmem:[%s366 + $0x70] sm:$0xff]
        %v1000 = vld [vmem:[%s366 + $0x78] sm:$0xff]
        %v1001 = vld [vmem:[%s366 + $0x80] sm:$0xff]
        %v1002 = vld [vmem:[%s366 + $0x88] sm:$0xff]
        %v1003 = vld [vmem:[%s366 + $0x90] sm:$0xff]
        %v1004 = vld [vmem:[%s366 + $0x98] sm:$0xff]
        %v1005 = vld [vmem:[%s366 + $0xa0] sm:$0xff]
        %v1006 = vld [vmem:[%s366 + $0xa8] sm:$0xff]
        %v1007 = vld [vmem:[%s366 + $0xb0] sm:$0xff]
        %v1008 = vld [vmem:[%s366 + $0xb8] sm:$0xff]
        %v1009 = vld [vmem:[%s366 + $0xc0] sm:$0xff]
        %v1010 = vld [vmem:[%s366 + $0xc8] sm:$0xff]
        %v1011 = vld [vmem:[%s366 + $0xd0] sm:$0xff]
        %v1012 = vld [vmem:[%s366 + $0xd8] sm:$0xff]
        %v1013 = vld [vmem:[%s366 + $0xe0] sm:$0xff]
        %v1014 = vld [vmem:[%s366 + $0xe8] sm:$0xff]
        %v1015 = vld [vmem:[%s366 + $0xf0] sm:$0xff]
        %v1016 = vld [vmem:[%s366 + $0xf8] sm:$0xff]
        %v1017 = vld [vmem:[%s346] sm:$0x1]
        %v1019 = vlaneseq
        %v1020 = vshrl.u32 %v1019, 7
        %v1021 = vsub.s32 0, %v1020
        %v1022 = vrot.slane %v1017, %v1021
        %v1024 = vmul.f32 %v985, %v1022
        %v1025 = vmul.f32 %v986, %v1022
        %v1026 = vmul.f32 %v987, %v1022
        %v1027 = vmul.f32 %v988, %v1022
        %v1028 = vmul.f32 %v989, %v1022
        %v1029 = vmul.f32 %v990, %v1022
        %v1030 = vmul.f32 %v991, %v1022
        %v1031 = vmul.f32 %v992, %v1022
        %v1032 = vmul.f32 %v993, %v1022
        %v1033 = vmul.f32 %v994, %v1022
        %v1034 = vmul.f32 %v995, %v1022
        %v1035 = vmul.f32 %v996, %v1022
        %v1036 = vmul.f32 %v997, %v1022
        %v1037 = vmul.f32 %v998, %v1022
        %v1038 = vmul.f32 %v999, %v1022
        %v1039 = vmul.f32 %v1000, %v1022
        %v1040 = vmul.f32 %v1001, %v1022
        %v1041 = vmul.f32 %v1002, %v1022
        %v1042 = vmul.f32 %v1003, %v1022
        %v1043 = vmul.f32 %v1004, %v1022
        %v1044 = vmul.f32 %v1005, %v1022
        %v1045 = vmul.f32 %v1006, %v1022
        %v1046 = vmul.f32 %v1007, %v1022
        %v1047 = vmul.f32 %v1008, %v1022
        %v1048 = vmul.f32 %v1009, %v1022
        %v1049 = vmul.f32 %v1010, %v1022
        %v1050 = vmul.f32 %v1011, %v1022
        %v1051 = vmul.f32 %v1012, %v1022
        %v1052 = vmul.f32 %v1013, %v1022
        %v1053 = vmul.f32 %v1014, %v1022
        %v1054 = vmul.f32 %v1015, %v1022
        %v1055 = vmul.f32 %v1016, %v1022
        %v1056 = vld [vmem:[%s349] sm:$0x1]
        %v1058 = vlaneseq
        %v1059 = vshrl.u32 %v1058, 7
        %v1060 = vsub.s32 0, %v1059
        %v1061 = vrot.slane %v1056, %v1060
        %v1063 = vadd.f32 %v1024, %v1061
        %v1064 = vadd.f32 %v1025, %v1061
        %v1065 = vadd.f32 %v1026, %v1061
        %v1066 = vadd.f32 %v1027, %v1061
        %v1067 = vadd.f32 %v1028, %v1061
        %v1068 = vadd.f32 %v1029, %v1061
        %v1069 = vadd.f32 %v1030, %v1061
        %v1070 = vadd.f32 %v1031, %v1061
        %v1071 = vadd.f32 %v1032, %v1061
        %v1072 = vadd.f32 %v1033, %v1061
        %v1073 = vadd.f32 %v1034, %v1061
        %v1074 = vadd.f32 %v1035, %v1061
        %v1075 = vadd.f32 %v1036, %v1061
        %v1076 = vadd.f32 %v1037, %v1061
        %v1077 = vadd.f32 %v1038, %v1061
        %v1078 = vadd.f32 %v1039, %v1061
        %v1079 = vadd.f32 %v1040, %v1061
        %v1080 = vadd.f32 %v1041, %v1061
        %v1081 = vadd.f32 %v1042, %v1061
        %v1082 = vadd.f32 %v1043, %v1061
        %v1083 = vadd.f32 %v1044, %v1061
        %v1084 = vadd.f32 %v1045, %v1061
        %v1085 = vadd.f32 %v1046, %v1061
        %v1086 = vadd.f32 %v1047, %v1061
        %v1087 = vadd.f32 %v1048, %v1061
        %v1088 = vadd.f32 %v1049, %v1061
        %v1089 = vadd.f32 %v1050, %v1061
        %v1090 = vadd.f32 %v1051, %v1061
        %v1091 = vadd.f32 %v1052, %v1061
        %v1092 = vadd.f32 %v1053, %v1061
        %v1093 = vadd.f32 %v1054, %v1061
        %v1094 = vadd.f32 %v1055, %v1061
        %v1095 = vld [vmem:[%s357] sm:$0xff]
        %v1096 = vld [vmem:[%s357 + $0x8] sm:$0xff]
        %v1097 = vld [vmem:[%s357 + $0x10] sm:$0xff]
        %v1098 = vld [vmem:[%s357 + $0x18] sm:$0xff]
        %v1099 = vld [vmem:[%s357 + $0x20] sm:$0xff]
        %v1100 = vld [vmem:[%s357 + $0x28] sm:$0xff]
        %v1101 = vld [vmem:[%s357 + $0x30] sm:$0xff]
        %v1102 = vld [vmem:[%s357 + $0x38] sm:$0xff]
        %v1103 = vld [vmem:[%s357 + $0x40] sm:$0xff]
        %v1104 = vld [vmem:[%s357 + $0x48] sm:$0xff]
        %v1105 = vld [vmem:[%s357 + $0x50] sm:$0xff]
        %v1106 = vld [vmem:[%s357 + $0x58] sm:$0xff]
        %v1107 = vld [vmem:[%s357 + $0x60] sm:$0xff]
        %v1108 = vld [vmem:[%s357 + $0x68] sm:$0xff]
        %v1109 = vld [vmem:[%s357 + $0x70] sm:$0xff]
        %v1110 = vld [vmem:[%s357 + $0x78] sm:$0xff]
        %v1111 = vld [vmem:[%s357 + $0x80] sm:$0xff]
        %v1112 = vld [vmem:[%s357 + $0x88] sm:$0xff]
        %v1113 = vld [vmem:[%s357 + $0x90] sm:$0xff]
        %v1114 = vld [vmem:[%s357 + $0x98] sm:$0xff]
        %v1115 = vld [vmem:[%s357 + $0xa0] sm:$0xff]
        %v1116 = vld [vmem:[%s357 + $0xa8] sm:$0xff]
        %v1117 = vld [vmem:[%s357 + $0xb0] sm:$0xff]
        %v1118 = vld [vmem:[%s357 + $0xb8] sm:$0xff]
        %v1119 = vld [vmem:[%s357 + $0xc0] sm:$0xff]
        %v1120 = vld [vmem:[%s357 + $0xc8] sm:$0xff]
        %v1121 = vld [vmem:[%s357 + $0xd0] sm:$0xff]
        %v1122 = vld [vmem:[%s357 + $0xd8] sm:$0xff]
        %v1123 = vld [vmem:[%s357 + $0xe0] sm:$0xff]
        %v1124 = vld [vmem:[%s357 + $0xe8] sm:$0xff]
        %v1125 = vld [vmem:[%s357 + $0xf0] sm:$0xff]
        %v1126 = vld [vmem:[%s357 + $0xf8] sm:$0xff]
        %v1127 = vadd.f32 %v1063, %v1095
        %v1128 = vadd.f32 %v1064, %v1096
        %v1129 = vadd.f32 %v1065, %v1097
        %v1130 = vadd.f32 %v1066, %v1098
        %v1131 = vadd.f32 %v1067, %v1099
        %v1132 = vadd.f32 %v1068, %v1100
        %v1133 = vadd.f32 %v1069, %v1101
        %v1134 = vadd.f32 %v1070, %v1102
        %v1135 = vadd.f32 %v1071, %v1103
        %v1136 = vadd.f32 %v1072, %v1104
        %v1137 = vadd.f32 %v1073, %v1105
        %v1138 = vadd.f32 %v1074, %v1106
        %v1139 = vadd.f32 %v1075, %v1107
        %v1140 = vadd.f32 %v1076, %v1108
        %v1141 = vadd.f32 %v1077, %v1109
        %v1142 = vadd.f32 %v1078, %v1110
        %v1143 = vadd.f32 %v1079, %v1111
        %v1144 = vadd.f32 %v1080, %v1112
        %v1145 = vadd.f32 %v1081, %v1113
        %v1146 = vadd.f32 %v1082, %v1114
        %v1147 = vadd.f32 %v1083, %v1115
        %v1148 = vadd.f32 %v1084, %v1116
        %v1149 = vadd.f32 %v1085, %v1117
        %v1150 = vadd.f32 %v1086, %v1118
        %v1151 = vadd.f32 %v1087, %v1119
        %v1152 = vadd.f32 %v1088, %v1120
        %v1153 = vadd.f32 %v1089, %v1121
        %v1154 = vadd.f32 %v1090, %v1122
        %v1155 = vadd.f32 %v1091, %v1123
        %v1156 = vadd.f32 %v1092, %v1124
        %v1157 = vadd.f32 %v1093, %v1125
        %v1158 = vadd.f32 %v1094, %v1126
        %v1159 = vmax.f32 %v1127, 0.0
        %v1160 = vmax.f32 %v1128, 0.0
        %v1161 = vmax.f32 %v1129, 0.0
        %v1162 = vmax.f32 %v1130, 0.0
        %v1163 = vmax.f32 %v1131, 0.0
        %v1164 = vmax.f32 %v1132, 0.0
        %v1165 = vmax.f32 %v1133, 0.0
        %v1166 = vmax.f32 %v1134, 0.0
        %v1167 = vmax.f32 %v1135, 0.0
        %v1168 = vmax.f32 %v1136, 0.0
        %v1169 = vmax.f32 %v1137, 0.0
        %v1170 = vmax.f32 %v1138, 0.0
        %v1171 = vmax.f32 %v1139, 0.0
        %v1172 = vmax.f32 %v1140, 0.0
        %v1173 = vmax.f32 %v1141, 0.0
        %v1174 = vmax.f32 %v1142, 0.0
        %v1175 = vmax.f32 %v1143, 0.0
        %v1176 = vmax.f32 %v1144, 0.0
        %v1177 = vmax.f32 %v1145, 0.0
        %v1178 = vmax.f32 %v1146, 0.0
        %v1179 = vmax.f32 %v1147, 0.0
        %v1180 = vmax.f32 %v1148, 0.0
        %v1181 = vmax.f32 %v1149, 0.0
        %v1182 = vmax.f32 %v1150, 0.0
        %v1183 = vmax.f32 %v1151, 0.0
        %v1184 = vmax.f32 %v1152, 0.0
        %v1185 = vmax.f32 %v1153, 0.0
        %v1186 = vmax.f32 %v1154, 0.0
        %v1187 = vmax.f32 %v1155, 0.0
        %v1188 = vmax.f32 %v1156, 0.0
        %v1189 = vmax.f32 %v1157, 0.0
        %v1190 = vmax.f32 %v1158, 0.0
        %1191 = vst [vmem:[%s366] sm:$0xff] %v1159
        %1192 = vst [vmem:[%s366 + $0x8] sm:$0xff] %v1160
        %1193 = vst [vmem:[%s366 + $0x10] sm:$0xff] %v1161
        %1194 = vst [vmem:[%s366 + $0x18] sm:$0xff] %v1162
        %1195 = vst [vmem:[%s366 + $0x20] sm:$0xff] %v1163
        %1196 = vst [vmem:[%s366 + $0x28] sm:$0xff] %v1164
        %1197 = vst [vmem:[%s366 + $0x30] sm:$0xff] %v1165
        %1198 = vst [vmem:[%s366 + $0x38] sm:$0xff] %v1166
        %1199 = vst [vmem:[%s366 + $0x40] sm:$0xff] %v1167
        %1200 = vst [vmem:[%s366 + $0x48] sm:$0xff] %v1168
        %1201 = vst [vmem:[%s366 + $0x50] sm:$0xff] %v1169
        %1202 = vst [vmem:[%s366 + $0x58] sm:$0xff] %v1170
        %1203 = vst [vmem:[%s366 + $0x60] sm:$0xff] %v1171
        %1204 = vst [vmem:[%s366 + $0x68] sm:$0xff] %v1172
        %1205 = vst [vmem:[%s366 + $0x70] sm:$0xff] %v1173
        %1206 = vst [vmem:[%s366 + $0x78] sm:$0xff] %v1174
        %1207 = vst [vmem:[%s366 + $0x80] sm:$0xff] %v1175
        %1208 = vst [vmem:[%s366 + $0x88] sm:$0xff] %v1176
        %1209 = vst [vmem:[%s366 + $0x90] sm:$0xff] %v1177
        %1210 = vst [vmem:[%s366 + $0x98] sm:$0xff] %v1178
        %1211 = vst [vmem:[%s366 + $0xa0] sm:$0xff] %v1179
        %1212 = vst [vmem:[%s366 + $0xa8] sm:$0xff] %v1180
        %1213 = vst [vmem:[%s366 + $0xb0] sm:$0xff] %v1181
        %1214 = vst [vmem:[%s366 + $0xb8] sm:$0xff] %v1182
        %1215 = vst [vmem:[%s366 + $0xc0] sm:$0xff] %v1183
        %1216 = vst [vmem:[%s366 + $0xc8] sm:$0xff] %v1184
        %1217 = vst [vmem:[%s366 + $0xd0] sm:$0xff] %v1185
        %1218 = vst [vmem:[%s366 + $0xd8] sm:$0xff] %v1186
        %1219 = vst [vmem:[%s366 + $0xe0] sm:$0xff] %v1187
        %1220 = vst [vmem:[%s366 + $0xe8] sm:$0xff] %v1188
        %1221 = vst [vmem:[%s366 + $0xf0] sm:$0xff] %v1189
        %1222 = vst [vmem:[%s366 + $0xf8] sm:$0xff] %v1190
      $region48: #{_lambda_.15} parent=39 // pred_fallthru
        _
      %s1223 = smul.u32 32, %s21
      %p1224 = scmp.lt.s32.totalorder %s1223, 63
      %s1225 = scalar_select %p1224, %s1223, 63
      %p1226 = scmp.lt.s32.totalorder %s22, 0
      %s1227 = scalar_select %p1226, %s22, 0
      %s1228 = sadd.s32 %s1227, %s1225
      %s1229 = smul.addr %s1228, 8
      %s1230 = scalar_lea.vmem %s5, %s1229
      // Predicated region
      $region49: #{_lambda_.15} parent=39 // pred_check
        %p1231 = pneg %p191
      $region50: #{_lambda_.15} parent=39 // pred_check_branch
        %1233 = sbr.rel (%p1231) target = $region52
      $region51: #{_lambda_.15} parent=39 // pred_region
        %s1234 = smul.u32 32, %s21
      $region52: #{_lambda_.15} parent=39 // pred_fallthru
        _
    $region40: #{_lambda_.15} parent=5 // pred_fallthru
      _
    %p1235 = scmp.le.s32.totalorder 2, %s11
    // Predicated region
    $region53: #{_lambda_.15} parent=5 // pred_check
      %p1236 = pneg %p1235
    $region54: #{_lambda_.15} parent=5 // pred_check_branch
      %1238 = sbr.rel (%p1236) target = $region56
    $region55: #{_lambda_.15} parent=5 // pred_region
      %s1239 = ssub.s32 %s11, 2
      // Predicated region
      $region57: #{_lambda_.15} parent=55 // pred_check
        %p1240 = pneg %p197
      $region58: #{_lambda_.15} parent=55 // pred_check_branch
        %1242 = sbr.rel (%p1240) target = $region60
      $region59: #{_lambda_.15} parent=55 // pred_region
        %s1243 = smul.u32 32, %s24
        %p1244 = scmp.lt.s32.totalorder %s1243, 63
        %s1245 = scalar_select %p1244, %s1243, 63
        %p1246 = scmp.lt.s32.totalorder %s25, 0
        %s1247 = scalar_select %p1246, %s25, 0
        %s1248 = sadd.s32 %s1247, %s1245
        %s1249 = smul.addr %s1248, 8
        %s1250 = scalar_lea.vmem %s5, %s1249
      $region60: #{_lambda_.15} parent=55 // pred_fallthru
        _
    $region56: #{_lambda_.15} parent=5 // pred_fallthru
      _
  $region6: #{_lambda_.15} parent=0 // loop_footer
    %s15 = sadd.s32 1, %s11
  $region7: #{_lambda_.15} parent=0 // loop_footer_branch
    %10 = sbr.rel target = $region3
  $region8: #{_lambda_.15} parent=0 // loop_exit
    _

// kernel: _lambda_.16
$region0: #{_lambda_.16}
  #allocation0 [shape = 'u32[]', space=smem, size = 0x4, offset = 0x4, fixed_abs, tag = 'smem constant byte address 0x4 - core index']
  #allocation1 [shape = 'u32[144,128]{1,0:T(1,128)}', space=vmem, size = 0x12000, scoped, tag = 'internal scratch']
  %s0 = inlined_call_operand.vmem [shape: bf16[128,256], index: 0, kind: input, shape index: {}]
  %s1 = inlined_call_operand.vmem [shape: bf16[256,128], index: 1, kind: input, shape index: {}]
  %s2 = inlined_call_operand.vmem [shape: f32[1,128], index: 2, kind: input, shape index: {}]
  %s3 = inlined_call_operand.vmem [shape: f32[1,128], index: 3, kind: input, shape index: {}]
  %s4 = inlined_call_operand.vmem [shape: f32[128,128], index: 4, kind: output, shape index: {}]
  %s5 = sld [smem:[#allocation0]]
  $region34: #{_lambda_.16} parent=0
    _
  %s7 = ssub.s32 1, %s5
  %s8 = scalar_select 0, %s7, %s5
  // Predicated region
  $region2: #{_lambda_.16} parent=0 // pred_check
    _
  $region3: #{_lambda_.16} parent=0 // pred_check_branch
    %10 = sbr.rel (0) target = $region5
  $region4: #{_lambda_.16} parent=0 // pred_region
    _
  $region5: #{_lambda_.16} parent=0 // pred_fallthru
    _
  // Predicated region
  $region6: #{_lambda_.16} parent=0 // pred_check
    _
  $region7: #{_lambda_.16} parent=0 // pred_check_branch
    %12 = sbr.rel (0) target = $region9
  $region8: #{_lambda_.16} parent=0 // pred_region
    _
  $region9: #{_lambda_.16} parent=0 // pred_fallthru
    _
  // Predicated region
  $region10: #{_lambda_.16} parent=0 // pred_check
    _
  $region11: #{_lambda_.16} parent=0 // pred_check_branch
    %14 = sbr.rel (0) target = $region13
  $region12: #{_lambda_.16} parent=0 // pred_region
    _
  $region13: #{_lambda_.16} parent=0 // pred_fallthru
    _
  // Predicated region
  $region14: #{_lambda_.16} parent=0 // pred_check
    _
  $region15: #{_lambda_.16} parent=0 // pred_check_branch
    %16 = sbr.rel (0) target = $region17
  $region16: #{_lambda_.16} parent=0 // pred_region
    _
  $region17: #{_lambda_.16} parent=0 // pred_fallthru
    _
  %p18 = scmp.eq.s32.totalorder 0, 0
  // Predicated region
  $region18: #{_lambda_.16} parent=0 // pred_check
    %p19 = pneg %p18
  $region19: #{_lambda_.16} parent=0 // pred_check_branch
    %21 = sbr.rel (%p19) target = $region21
  $region20: #{_lambda_.16} parent=0 // pred_region
    %22 = vst [vmem:[%s4] sm:$0xff] 0.0
    %23 = vst [vmem:[%s4 + $0x8] sm:$0xff] 0.0
    %24 = vst [vmem:[%s4 + $0x10] sm:$0xff] 0.0
    %25 = vst [vmem:[%s4 + $0x18] sm:$0xff] 0.0
    %26 = vst [vmem:[%s4 + $0x20] sm:$0xff] 0.0
    %27 = vst [vmem:[%s4 + $0x28] sm:$0xff] 0.0
    %28 = vst [vmem:[%s4 + $0x30] sm:$0xff] 0.0
    %29 = vst [vmem:[%s4 + $0x38] sm:$0xff] 0.0
    %30 = vst [vmem:[%s4 + $0x40] sm:$0xff] 0.0
    %31 = vst [vmem:[%s4 + $0x48] sm:$0xff] 0.0
    %32 = vst [vmem:[%s4 + $0x50] sm:$0xff] 0.0
    %33 = vst [vmem:[%s4 + $0x58] sm:$0xff] 0.0
    %34 = vst [vmem:[%s4 + $0x60] sm:$0xff] 0.0
    %35 = vst [vmem:[%s4 + $0x68] sm:$0xff] 0.0
    %36 = vst [vmem:[%s4 + $0x70] sm:$0xff] 0.0
    %37 = vst [vmem:[%s4 + $0x78] sm:$0xff] 0.0
  $region21: #{_lambda_.16} parent=0 // pred_fallthru
    _
  %v38 = vld [vmem:[%s4] sm:$0xff]
  %v39 = vld [vmem:[%s4 + $0x8] sm:$0xff]
  %v40 = vld [vmem:[%s4 + $0x10] sm:$0xff]
  %v41 = vld [vmem:[%s4 + $0x18] sm:$0xff]
  %v42 = vld [vmem:[%s4 + $0x20] sm:$0xff]
  %v43 = vld [vmem:[%s4 + $0x28] sm:$0xff]
  %v44 = vld [vmem:[%s4 + $0x30] sm:$0xff]
  %v45 = vld [vmem:[%s4 + $0x38] sm:$0xff]
  %v46 = vld [vmem:[%s4 + $0x40] sm:$0xff]
  %v47 = vld [vmem:[%s4 + $0x48] sm:$0xff]
  %v48 = vld [vmem:[%s4 + $0x50] sm:$0xff]
  %v49 = vld [vmem:[%s4 + $0x58] sm:$0xff]
  %v50 = vld [vmem:[%s4 + $0x60] sm:$0xff]
  %v51 = vld [vmem:[%s4 + $0x68] sm:$0xff]
  %v52 = vld [vmem:[%s4 + $0x70] sm:$0xff]
  %v53 = vld [vmem:[%s4 + $0x78] sm:$0xff]
  %v54 = vld [vmem:[%s0] sm:$0xff]
  %v55 = vld [vmem:[%s0 + $0x8] sm:$0xff]
  %v56 = vld [vmem:[%s0 + $0x10] sm:$0xff]
  %v57 = vld [vmem:[%s0 + $0x18] sm:$0xff]
  %v58 = vld [vmem:[%s0 + $0x20] sm:$0xff]
  %v59 = vld [vmem:[%s0 + $0x28] sm:$0xff]
  %v60 = vld [vmem:[%s0 + $0x30] sm:$0xff]
  %v61 = vld [vmem:[%s0 + $0x38] sm:$0xff]
  %v62 = vld [vmem:[%s0 + $0x40] sm:$0xff]
  %v63 = vld [vmem:[%s0 + $0x48] sm:$0xff]
  %v64 = vld [vmem:[%s0 + $0x50] sm:$0xff]
  %v65 = vld [vmem:[%s0 + $0x58] sm:$0xff]
  %v66 = vld [vmem:[%s0 + $0x60] sm:$0xff]
  %v67 = vld [vmem:[%s0 + $0x68] sm:$0xff]
  %v68 = vld [vmem:[%s0 + $0x70] sm:$0xff]
  %v69 = vld [vmem:[%s0 + $0x78] sm:$0xff]
  %v70 = vld [vmem:[%s1] sm:$0xf]
  %v71 = vld [vmem:[%s1 + $0x4] sm:$0xf]
  %v72 = vld [vmem:[%s1 + $0x8] sm:$0xf]
  %v73 = vld [vmem:[%s1 + $0xc] sm:$0xf]
  %v74 = vld [vmem:[%s1 + $0x10] sm:$0xf]
  %v75 = vld [vmem:[%s1 + $0x14] sm:$0xf]
  %v76 = vld [vmem:[%s1 + $0x18] sm:$0xf]
  %v77 = vld [vmem:[%s1 + $0x1c] sm:$0xf]
  %v78 = vld [vmem:[%s1 + $0x20] sm:$0xf]
  %v79 = vld [vmem:[%s1 + $0x24] sm:$0xf]
  %v80 = vld [vmem:[%s1 + $0x28] sm:$0xf]
  %v81 = vld [vmem:[%s1 + $0x2c] sm:$0xf]
  %v82 = vld [vmem:[%s1 + $0x30] sm:$0xf]
  %v83 = vld [vmem:[%s1 + $0x34] sm:$0xf]
  %v84 = vld [vmem:[%s1 + $0x38] sm:$0xf]
  %v85 = vld [vmem:[%s1 + $0x3c] sm:$0xf]
  %v86 = vld [vmem:[%s1 + $0x40] sm:$0xf]
  %v87 = vld [vmem:[%s1 + $0x44] sm:$0xf]
  %v88 = vld [vmem:[%s1 + $0x48] sm:$0xf]
  %v89 = vld [vmem:[%s1 + $0x4c] sm:$0xf]
  %v90 = vld [vmem:[%s1 + $0x50] sm:$0xf]
  %v91 = vld [vmem:[%s1 + $0x54] sm:$0xf]
  %v92 = vld [vmem:[%s1 + $0x58] sm:$0xf]
  %v93 = vld [vmem:[%s1 + $0x5c] sm:$0xf]
  %v94 = vld [vmem:[%s1 + $0x60] sm:$0xf]
  %v95 = vld [vmem:[%s1 + $0x64] sm:$0xf]
  %v96 = vld [vmem:[%s1 + $0x68] sm:$0xf]
  %v97 = vld [vmem:[%s1 + $0x6c] sm:$0xf]
  %v98 = vld [vmem:[%s1 + $0x70] sm:$0xf]
  %v99 = vld [vmem:[%s1 + $0x74] sm:$0xf]
  %v100 = vld [vmem:[%s1 + $0x78] sm:$0xf]
  %v101 = vld [vmem:[%s1 + $0x7c] sm:$0xf]
  %v118 = vunpack.c.l.b16 %v54
  %v119 = vunpack.c.h.b16 %v54
  %v120 = vunpack.c.l.b16 %v55
  %v121 = vunpack.c.h.b16 %v55
  %v122 = vunpack.c.l.b16 %v56
  %v123 = vunpack.c.h.b16 %v56
  %v124 = vunpack.c.l.b16 %v57
  %v125 = vunpack.c.h.b16 %v57
  %v126 = vunpack.c.l.b16 %v58
  %v127 = vunpack.c.h.b16 %v58
  %v128 = vunpack.c.l.b16 %v59
  %v129 = vunpack.c.h.b16 %v59
  %v130 = vunpack.c.l.b16 %v60
  %v131 = vunpack.c.h.b16 %v60
  %v132 = vunpack.c.l.b16 %v61
  %v133 = vunpack.c.h.b16 %v61
  %v134 = vunpack.c.l.b16 %v62
  %v135 = vunpack.c.h.b16 %v62
  %v136 = vunpack.c.l.b16 %v63
  %v137 = vunpack.c.h.b16 %v63
  %v138 = vunpack.c.l.b16 %v64
  %v139 = vunpack.c.h.b16 %v64
  %v140 = vunpack.c.l.b16 %v65
  %v141 = vunpack.c.h.b16 %v65
  %v142 = vunpack.c.l.b16 %v66
  %v143 = vunpack.c.h.b16 %v66
  %v144 = vunpack.c.l.b16 %v67
  %v145 = vunpack.c.h.b16 %v67
  %v146 = vunpack.c.l.b16 %v68
  %v147 = vunpack.c.h.b16 %v68
  %v148 = vunpack.c.l.b16 %v69
  %v149 = vunpack.c.h.b16 %v69
  %v150 = vpack.c.b16 %v120, %v118
  %v151 = vpack.c.b16 %v121, %v119
  %v152 = vpack.c.b16 %v124, %v122
  %v153 = vpack.c.b16 %v125, %v123
  %v154 = vpack.c.b16 %v128, %v126
  %v155 = vpack.c.b16 %v129, %v127
  %v156 = vpack.c.b16 %v132, %v130
  %v157 = vpack.c.b16 %v133, %v131
  %v158 = vpack.c.b16 %v136, %v134
  %v159 = vpack.c.b16 %v137, %v135
  %v160 = vpack.c.b16 %v140, %v138
  %v161 = vpack.c.b16 %v141, %v139
  %v162 = vpack.c.b16 %v144, %v142
  %v163 = vpack.c.b16 %v145, %v143
  %v164 = vpack.c.b16 %v148, %v146
  %v165 = vpack.c.b16 %v149, %v147
  %v214 = vunpack.c.l.b16 %v70
  %v215 = vunpack.c.l.b16 %v71
  %v216 = vunpack.c.l.b16 %v72
  %v217 = vunpack.c.l.b16 %v73
  %v218 = vunpack.c.l.b16 %v74
  %v219 = vunpack.c.l.b16 %v75
  %v220 = vunpack.c.l.b16 %v76
  %v221 = vunpack.c.l.b16 %v77
  %v222 = vunpack.c.l.b16 %v78
  %v223 = vunpack.c.l.b16 %v79
  %v224 = vunpack.c.l.b16 %v80
  %v225 = vunpack.c.l.b16 %v81
  %v226 = vunpack.c.l.b16 %v82
  %v227 = vunpack.c.l.b16 %v83
  %v228 = vunpack.c.l.b16 %v84
  %v229 = vunpack.c.l.b16 %v85
  %v230 = vunpack.c.l.b16 %v86
  %v231 = vunpack.c.l.b16 %v87
  %v232 = vunpack.c.l.b16 %v88
  %v233 = vunpack.c.l.b16 %v89
  %v234 = vunpack.c.l.b16 %v90
  %v235 = vunpack.c.l.b16 %v91
  %v236 = vunpack.c.l.b16 %v92
  %v237 = vunpack.c.l.b16 %v93
  %v238 = vunpack.c.l.b16 %v94
  %v239 = vunpack.c.l.b16 %v95
  %v240 = vunpack.c.l.b16 %v96
  %v241 = vunpack.c.l.b16 %v97
  %v242 = vunpack.c.l.b16 %v98
  %v243 = vunpack.c.l.b16 %v99
  %v244 = vunpack.c.l.b16 %v100
  %v245 = vunpack.c.l.b16 %v101
  %v246 = vpack.c.b16 %v215, %v214
  %v247 = vpack.c.b16 %v217, %v216
  %v248 = vpack.c.b16 %v219, %v218
  %v249 = vpack.c.b16 %v221, %v220
  %v250 = vpack.c.b16 %v223, %v222
  %v251 = vpack.c.b16 %v225, %v224
  %v252 = vpack.c.b16 %v227, %v226
  %v253 = vpack.c.b16 %v229, %v228
  %v254 = vpack.c.b16 %v231, %v230
  %v255 = vpack.c.b16 %v233, %v232
  %v256 = vpack.c.b16 %v235, %v234
  %v257 = vpack.c.b16 %v237, %v236
  %v258 = vpack.c.b16 %v239, %v238
  %v259 = vpack.c.b16 %v241, %v240
  %v260 = vpack.c.b16 %v243, %v242
  %v261 = vpack.c.b16 %v245, %v244
  %278 = vmatprep.subr.bf16.mxu0 0
  %279 = vmatpush1.bf16.msra.mxu0 %v253
  %280 = vmatprep.subr.bf16.mxu0 0
  %281 = vmatpush1.bf16.msra.mxu0 %v252
  %282 = vmatprep.subr.bf16.mxu0 0
  %283 = vmatpush1.bf16.msra.mxu0 %v251
  %284 = vmatprep.subr.bf16.mxu0 0
  %285 = vmatpush1.bf16.msra.mxu0 %v250
  %286 = vmatprep.subr.bf16.mxu0 0
  %287 = vmatpush1.bf16.msra.mxu0 %v249
  %288 = vmatprep.subr.bf16.mxu0 0
  %289 = vmatpush1.bf16.msra.mxu0 %v248
  %290 = vmatprep.subr.bf16.mxu0 0
  %291 = vmatpush1.bf16.msra.mxu0 %v247
  %292 = vmatprep.subr.bf16.mxu0 0
  %293 = vmatpush1.bf16.msra.mxu0 %v246
  %294 = vmatprep.subr.bf16.mxu0 0
  %295 = vmatpush2.bf16.msra.mxu0 %v261
  %296 = vmatprep.subr.bf16.mxu0 0
  %297 = vmatpush2.bf16.msra.mxu0 %v260
  %298 = vmatprep.subr.bf16.mxu0 0
  %299 = vmatpush2.bf16.msra.mxu0 %v259
  %300 = vmatprep.subr.bf16.mxu0 0
  %301 = vmatpush2.bf16.msra.mxu0 %v258
  %302 = vmatprep.subr.bf16.mxu0 0
  %303 = vmatpush2.bf16.msra.mxu0 %v257
  %304 = vmatprep.subr.bf16.mxu0 0
  %305 = vmatpush2.bf16.msra.mxu0 %v256
  %306 = vmatprep.subr.bf16.mxu0 0
  %307 = vmatpush2.bf16.msra.mxu0 %v255
  %308 = vmatprep.subr.bf16.mxu0 0
  %309 = vmatpush2.bf16.msra.mxu0 %v254
  %310 = vmatprep.mubr.bf16.mxu0 %v151
  %311 = vmatmul.mubr.bf16.gmra.mxu0 %v150
  %v312 = vpop.f32.mrf.mxu0
  %v313 = vadd.f32 0.0, %v312
  %v314 = vpop.f32.mrf.mxu0
  %v315 = vpop.f32.mrf.mxu0
  %v316 = vadd.f32 0.0, %v315
  %v317 = vpop.f32.mrf.mxu0
  %318 = vmatprep.mubr.bf16.mxu0 %v153
  %319 = vmatmul.mubr.bf16.gmra.mxu0 %v152
  %v320 = vpop.f32.mrf.mxu0
  %v321 = vadd.f32 0.0, %v320
  %v322 = vpop.f32.mrf.mxu0
  %v323 = vpop.f32.mrf.mxu0
  %v324 = vadd.f32 0.0, %v323
  %v325 = vpop.f32.mrf.mxu0
  %326 = vmatprep.mubr.bf16.mxu0 %v155
  %327 = vmatmul.mubr.bf16.gmra.mxu0 %v154
  %v328 = vpop.f32.mrf.mxu0
  %v329 = vadd.f32 0.0, %v328
  %v330 = vpop.f32.mrf.mxu0
  %v331 = vpop.f32.mrf.mxu0
  %v332 = vadd.f32 0.0, %v331
  %v333 = vpop.f32.mrf.mxu0
  %334 = vmatprep.mubr.bf16.mxu0 %v157
  %335 = vmatmul.mubr.bf16.gmra.mxu0 %v156
  %v336 = vpop.f32.mrf.mxu0
  %v337 = vadd.f32 0.0, %v336
  %v338 = vpop.f32.mrf.mxu0
  %v339 = vpop.f32.mrf.mxu0
  %v340 = vadd.f32 0.0, %v339
  %v341 = vpop.f32.mrf.mxu0
  %342 = vmatprep.mubr.bf16.mxu0 %v159
  %343 = vmatmul.mubr.bf16.gmra.mxu0 %v158
  %v344 = vpop.f32.mrf.mxu0
  %v345 = vadd.f32 0.0, %v344
  %v346 = vpop.f32.mrf.mxu0
  %v347 = vpop.f32.mrf.mxu0
  %v348 = vadd.f32 0.0, %v347
  %v349 = vpop.f32.mrf.mxu0
  %350 = vmatprep.mubr.bf16.mxu0 %v161
  %351 = vmatmul.mubr.bf16.gmra.mxu0 %v160
  %v352 = vpop.f32.mrf.mxu0
  %v353 = vadd.f32 0.0, %v352
  %v354 = vpop.f32.mrf.mxu0
  %v355 = vpop.f32.mrf.mxu0
  %v356 = vadd.f32 0.0, %v355
  %v357 = vpop.f32.mrf.mxu0
  %358 = vmatprep.mubr.bf16.mxu0 %v163
  %359 = vmatmul.mubr.bf16.gmra.mxu0 %v162
  %v360 = vpop.f32.mrf.mxu0
  %v361 = vadd.f32 0.0, %v360
  %v362 = vpop.f32.mrf.mxu0
  %v363 = vpop.f32.mrf.mxu0
  %v364 = vadd.f32 0.0, %v363
  %v365 = vpop.f32.mrf.mxu0
  %366 = vmatprep.mubr.bf16.mxu0 %v165
  %367 = vmatmul.mubr.bf16.gmra.mxu0 %v164
  %v368 = vpop.f32.mrf.mxu0
  %v369 = vadd.f32 0.0, %v368
  %v370 = vpop.f32.mrf.mxu0
  %v371 = vpop.f32.mrf.mxu0
  %v372 = vadd.f32 0.0, %v371
  %v373 = vpop.f32.mrf.mxu0
  %374 = vdwg.mxu0
  %v375 = vadd.f32 %v38, %v313
  %v376 = vadd.f32 %v39, %v316
  %v377 = vadd.f32 %v40, %v321
  %v378 = vadd.f32 %v41, %v324
  %v379 = vadd.f32 %v42, %v329
  %v380 = vadd.f32 %v43, %v332
  %v381 = vadd.f32 %v44, %v337
  %v382 = vadd.f32 %v45, %v340
  %v383 = vadd.f32 %v46, %v345
  %v384 = vadd.f32 %v47, %v348
  %v385 = vadd.f32 %v48, %v353
  %v386 = vadd.f32 %v49, %v356
  %v387 = vadd.f32 %v50, %v361
  %v388 = vadd.f32 %v51, %v364
  %v389 = vadd.f32 %v52, %v369
  %v390 = vadd.f32 %v53, %v372
  %391 = vst [vmem:[%s4] sm:$0xff] %v375
  %392 = vst [vmem:[%s4 + $0x8] sm:$0xff] %v376
  %393 = vst [vmem:[%s4 + $0x10] sm:$0xff] %v377
  %394 = vst [vmem:[%s4 + $0x18] sm:$0xff] %v378
  %395 = vst [vmem:[%s4 + $0x20] sm:$0xff] %v379
  %396 = vst [vmem:[%s4 + $0x28] sm:$0xff] %v380
  %397 = vst [vmem:[%s4 + $0x30] sm:$0xff] %v381
  %398 = vst [vmem:[%s4 + $0x38] sm:$0xff] %v382
  %399 = vst [vmem:[%s4 + $0x40] sm:$0xff] %v383
  %400 = vst [vmem:[%s4 + $0x48] sm:$0xff] %v384
  %401 = vst [vmem:[%s4 + $0x50] sm:$0xff] %v385
  %402 = vst [vmem:[%s4 + $0x58] sm:$0xff] %v386
  %403 = vst [vmem:[%s4 + $0x60] sm:$0xff] %v387
  %404 = vst [vmem:[%s4 + $0x68] sm:$0xff] %v388
  %405 = vst [vmem:[%s4 + $0x70] sm:$0xff] %v389
  %406 = vst [vmem:[%s4 + $0x78] sm:$0xff] %v390
  // Predicated region
  $region22: #{_lambda_.16} parent=0 // pred_check
    %p407 = pneg %p18
  $region23: #{_lambda_.16} parent=0 // pred_check_branch
    %409 = sbr.rel (%p407) target = $region25
  $region24: #{_lambda_.16} parent=0 // pred_region
    %v410 = vld [vmem:[%s4] sm:$0xff]
    %v411 = vld [vmem:[%s4 + $0x8] sm:$0xff]
    %v412 = vld [vmem:[%s4 + $0x10] sm:$0xff]
    %v413 = vld [vmem:[%s4 + $0x18] sm:$0xff]
    %v414 = vld [vmem:[%s4 + $0x20] sm:$0xff]
    %v415 = vld [vmem:[%s4 + $0x28] sm:$0xff]
    %v416 = vld [vmem:[%s4 + $0x30] sm:$0xff]
    %v417 = vld [vmem:[%s4 + $0x38] sm:$0xff]
    %v418 = vld [vmem:[%s4 + $0x40] sm:$0xff]
    %v419 = vld [vmem:[%s4 + $0x48] sm:$0xff]
    %v420 = vld [vmem:[%s4 + $0x50] sm:$0xff]
    %v421 = vld [vmem:[%s4 + $0x58] sm:$0xff]
    %v422 = vld [vmem:[%s4 + $0x60] sm:$0xff]
    %v423 = vld [vmem:[%s4 + $0x68] sm:$0xff]
    %v424 = vld [vmem:[%s4 + $0x70] sm:$0xff]
    %v425 = vld [vmem:[%s4 + $0x78] sm:$0xff]
    %v426 = vld [vmem:[%s2] sm:$0x1]
    %v428 = vlaneseq
    %v429 = vshrl.u32 %v428, 7
    %v430 = vsub.s32 0, %v429
    %v431 = vrot.slane %v426, %v430
    %v433 = vmul.f32 %v410, %v431
    %v434 = vmul.f32 %v411, %v431
    %v435 = vmul.f32 %v412, %v431
    %v436 = vmul.f32 %v413, %v431
    %v437 = vmul.f32 %v414, %v431
    %v438 = vmul.f32 %v415, %v431
    %v439 = vmul.f32 %v416, %v431
    %v440 = vmul.f32 %v417, %v431
    %v441 = vmul.f32 %v418, %v431
    %v442 = vmul.f32 %v419, %v431
    %v443 = vmul.f32 %v420, %v431
    %v444 = vmul.f32 %v421, %v431
    %v445 = vmul.f32 %v422, %v431
    %v446 = vmul.f32 %v423, %v431
    %v447 = vmul.f32 %v424, %v431
    %v448 = vmul.f32 %v425, %v431
    %v449 = vld [vmem:[%s3] sm:$0x1]
    %v451 = vlaneseq
    %v452 = vshrl.u32 %v451, 7
    %v453 = vsub.s32 0, %v452
    %v454 = vrot.slane %v449, %v453
    %v456 = vadd.f32 %v433, %v454
    %v457 = vadd.f32 %v434, %v454
    %v458 = vadd.f32 %v435, %v454
    %v459 = vadd.f32 %v436, %v454
    %v460 = vadd.f32 %v437, %v454
    %v461 = vadd.f32 %v438, %v454
    %v462 = vadd.f32 %v439, %v454
    %v463 = vadd.f32 %v440, %v454
    %v464 = vadd.f32 %v441, %v454
    %v465 = vadd.f32 %v442, %v454
    %v466 = vadd.f32 %v443, %v454
    %v467 = vadd.f32 %v444, %v454
    %v468 = vadd.f32 %v445, %v454
    %v469 = vadd.f32 %v446, %v454
    %v470 = vadd.f32 %v447, %v454
    %v471 = vadd.f32 %v448, %v454
    %v472 = vmax.f32 %v456, 0.0
    %v473 = vmax.f32 %v457, 0.0
    %v474 = vmax.f32 %v458, 0.0
    %v475 = vmax.f32 %v459, 0.0
    %v476 = vmax.f32 %v460, 0.0
    %v477 = vmax.f32 %v461, 0.0
    %v478 = vmax.f32 %v462, 0.0
    %v479 = vmax.f32 %v463, 0.0
    %v480 = vmax.f32 %v464, 0.0
    %v481 = vmax.f32 %v465, 0.0
    %v482 = vmax.f32 %v466, 0.0
    %v483 = vmax.f32 %v467, 0.0
    %v484 = vmax.f32 %v468, 0.0
    %v485 = vmax.f32 %v469, 0.0
    %v486 = vmax.f32 %v470, 0.0
    %v487 = vmax.f32 %v471, 0.0
    %488 = vst [vmem:[%s4] sm:$0xff] %v472
    %489 = vst [vmem:[%s4 + $0x8] sm:$0xff] %v473
    %490 = vst [vmem:[%s4 + $0x10] sm:$0xff] %v474
    %491 = vst [vmem:[%s4 + $0x18] sm:$0xff] %v475
    %492 = vst [vmem:[%s4 + $0x20] sm:$0xff] %v476
    %493 = vst [vmem:[%s4 + $0x28] sm:$0xff] %v477
    %494 = vst [vmem:[%s4 + $0x30] sm:$0xff] %v478
    %495 = vst [vmem:[%s4 + $0x38] sm:$0xff] %v479
    %496 = vst [vmem:[%s4 + $0x40] sm:$0xff] %v480
    %497 = vst [vmem:[%s4 + $0x48] sm:$0xff] %v481
    %498 = vst [vmem:[%s4 + $0x50] sm:$0xff] %v482
    %499 = vst [vmem:[%s4 + $0x58] sm:$0xff] %v483
    %500 = vst [vmem:[%s4 + $0x60] sm:$0xff] %v484
    %501 = vst [vmem:[%s4 + $0x68] sm:$0xff] %v485
    %502 = vst [vmem:[%s4 + $0x70] sm:$0xff] %v486
    %503 = vst [vmem:[%s4 + $0x78] sm:$0xff] %v487
  $region25: #{_lambda_.16} parent=0 // pred_fallthru
    _
  // Predicated region
  $region26: #{_lambda_.16} parent=0 // pred_check
    _
  $region27: #{_lambda_.16} parent=0 // pred_check_branch
    %505 = sbr.rel (0) target = $region29
  $region28: #{_lambda_.16} parent=0 // pred_region
    _
  $region29: #{_lambda_.16} parent=0 // pred_fallthru
    _
  // Predicated region
  $region30: #{_lambda_.16} parent=0 // pred_check
    _
  $region31: #{_lambda_.16} parent=0 // pred_check_branch
    %507 = sbr.rel (0) target = $region33
  $region32: #{_lambda_.16} parent=0 // pred_region
    _
  $region33: #{_lambda_.16} parent=0 // pred_fallthru
    _

// kernel: _lambda_.18
$region0: #{_lambda_.18}
  #allocation0 [shape = 'u32[]', space=smem, size = 0x4, offset = 0x4, fixed_abs, tag = 'smem constant byte address 0x4 - core index']
  #allocation1 [shape = 'u32[144,128]{1,0:T(1,128)}', space=vmem, size = 0x12000, scoped, tag = 'internal scratch']
  %s0 = inlined_call_operand.vmem [shape: bf16[128,512], index: 0, kind: input, shape index: {}]
  %s1 = inlined_call_operand.vmem [shape: bf16[512,128], index: 1, kind: input, shape index: {}]
  %s2 = inlined_call_operand.vmem [shape: f32[1,128], index: 2, kind: input, shape index: {}]
  %s3 = inlined_call_operand.vmem [shape: f32[1,128], index: 3, kind: input, shape index: {}]
  %s4 = inlined_call_operand.vmem [shape: f32[128,128], index: 4, kind: input, shape index: {}]
  %s5 = inlined_call_operand.vmem [shape: f32[128,128], index: 5, kind: output, shape index: {}]
  %s6 = sld [smem:[#allocation0]]
  $region99: #{_lambda_.18} parent=0
    _
  %s8 = ssub.s32 1, %s6
  %s9 = scalar_select 0, %s8, %s6
  $region1: #{_lambda_.18} parent=0
    #allocation2 [shape = 'u8[131072]{0}', space=vmem, size = 0x20000, scoped, tag = 'input window, operand 0']
    loop: start=0, step=1, limit=4
    $region2: #{_lambda_.18} parent=1 // loop_pre_header
      _
    $region3: #{_lambda_.18} parent=1 // loop_header
      %s11 = sphi 0, %s15
      %p12 = scmp.ge.s32.totalorder %s11, 4
      %s18 = sphi 0, %s37
      %s19 = sphi 0, %s33
      %s20 = sphi 0, %s29
      %s21 = sphi 0, %s18
      %s22 = sphi 0, %s19
      %s23 = sphi 0, %s20
      %s24 = sphi 0, %s21
      %s25 = sphi 0, %s22
      %s26 = sphi 0, %s23
      %s42 = sphi 0, %s44
      %s45 = sphi 0, %s42
      %s46 = sphi 0, %s45
      %s62 = sphi 0, %s46
      %s70 = sphi 0, %s72
      %s73 = sphi 0, %s70
      %s74 = sphi 0, %s73
      %s90 = sphi 0, %s74
      %s96 = sphi 0, %s98
      %s99 = sphi 0, %s96
      %s100 = sphi 0, %s99
      %s116 = sphi 0, %s100
      %s122 = sphi 0, %s124
      %s125 = sphi 0, %s122
      %s126 = sphi 0, %s125
      %s142 = sphi 0, %s126
      %s150 = sphi 0, %s152
      %s153 = sphi 0, %s150
      %s154 = sphi 0, %s153
      %s170 = sphi 0, %s154
      %s178 = sphi 0, %s180
      %s181 = sphi 0, %s178
      %s182 = sphi 0, %s181
      %s198 = sphi 0, %s182
    $region4: #{_lambda_.18} parent=1 // loop_header_branch
      %14 = sbr.rel (%p12) target = $region8
    $region5: #{_lambda_.18} parent=1 // loop_body
      %s16 = ssub.s32 %s11, 1
      %s17 = ssub.s32 %s11, 2
      %s27 = sadd.s32 1, %s20
      %p28 = scmp.ge.s32.totalorder %s27, 2
      %s29 = scalar_select %p28, 0, %s27
      %s30 = sadd.s32 1, %s19
      %s31 = scalar_select %p28, %s30, %s19
      %p32 = scmp.ge.s32.totalorder %s31, 1
      %s33 = scalar_select %p32, 0, %s31
      %s34 = sadd.s32 1, %s18
      %s35 = scalar_select %p32, %s34, %s18
      %p36 = scmp.ge.s32.totalorder %s35, 1
      %s37 = scalar_select %p36, 0, %s35
      %s38 = ssub.s32 %s18, %s37
      %s39 = ssub.s32 %s20, %s29
      %s40 = sor.u32 %s38, %s39
      %p41 = scmp.eq.s32.totalorder %s40, 0
      %s43 = sadd.s32 %s42, 1
      %s44 = scalar_select %p41, %s42, %s43
      %p47 = pneg %p41
      %p48 = scmp.eq.s32.totalorder %s11, 1
      %p49 = por %p47, %p48
      %p50 = scmp.ne.s32.totalorder %s42, %s45
      %p51 = scmp.eq.s32.totalorder %s11, 0
      %p52 = por %p50, %p51
      %p53 = scmp.ne.s32.totalorder %s42, %s45
      %p54 = scmp.eq.s32.totalorder %s16, 1
      %p55 = por %p53, %p54
      %p56 = scmp.ne.s32.totalorder %s45, %s46
      %p57 = scmp.eq.s32.totalorder %s16, 0
      %p58 = por %p56, %p57
      %p59 = scmp.ne.s32.totalorder %s45, %s46
      %p60 = scmp.eq.s32.totalorder %s17, 1
      %p61 = por %p59, %p60
      %p63 = scmp.ne.s32.totalorder %s46, %s62
      %p64 = scmp.eq.s32.totalorder %s17, 0
      %p65 = por %p63, %p64
      %s66 = ssub.s32 %s20, %s29
      %s67 = ssub.s32 %s19, %s33
      %s68 = sor.u32 %s66, %s67
      %p69 = scmp.eq.s32.totalorder %s68, 0
      %s71 = sadd.s32 %s70, 1
      %s72 = scalar_select %p69, %s70, %s71
      %p75 = pneg %p69
      %p76 = scmp.eq.s32.totalorder %s11, 1
      %p77 = por %p75, %p76
      %p78 = scmp.ne.s32.totalorder %s70, %s73
      %p79 = scmp.eq.s32.totalorder %s11, 0
      %p80 = por %p78, %p79
      %p81 = scmp.ne.s32.totalorder %s70, %s73
      %p82 = scmp.eq.s32.totalorder %s16, 1
      %p83 = por %p81, %p82
      %p84 = scmp.ne.s32.totalorder %s73, %s74
      %p85 = scmp.eq.s32.totalorder %s16, 0
      %p86 = por %p84, %p85
      %p87 = scmp.ne.s32.totalorder %s73, %s74
      %p88 = scmp.eq.s32.totalorder %s17, 1
      %p89 = por %p87, %p88
      %p91 = scmp.ne.s32.totalorder %s74, %s90
      %p92 = scmp.eq.s32.totalorder %s17, 0
      %p93 = por %p91, %p92
      %s94 = ssub.s32 %s19, %s33
      %p95 = scmp.eq.s32.totalorder %s94, 0
      %s97 = sadd.s32 %s96, 1
      %s98 = scalar_select %p95, %s96, %s97
      %p101 = pneg %p95
      %p102 = scmp.eq.s32.totalorder %s11, 1
      %p103 = por %p101, %p102
      %p104 = scmp.ne.s32.totalorder %s96, %s99
      %p105 = scmp.eq.s32.totalorder %s11, 0
      %p106 = por %p104, %p105
      %p107 = scmp.ne.s32.totalorder %s96, %s99
      %p108 = scmp.eq.s32.totalorder %s16, 1
      %p109 = por %p107, %p108
      %p110 = scmp.ne.s32.totalorder %s99, %s100
      %p111 = scmp.eq.s32.totalorder %s16, 0
      %p112 = por %p110, %p111
      %p113 = scmp.ne.s32.totalorder %s99, %s100
      %p114 = scmp.eq.s32.totalorder %s17, 1
      %p115 = por %p113, %p114
      %p117 = scmp.ne.s32.totalorder %s100, %s116
      %p118 = scmp.eq.s32.totalorder %s17, 0
      %p119 = por %p117, %p118
      %s120 = ssub.s32 %s19, %s33
      %p121 = scmp.eq.s32.totalorder %s120, 0
      %s123 = sadd.s32 %s122, 1
      %s124 = scalar_select %p121, %s122, %s123
      %p127 = pneg %p121
      %p128 = scmp.eq.s32.totalorder %s11, 1
      %p129 = por %p127, %p128
      %p130 = scmp.ne.s32.totalorder %s122, %s125
      %p131 = scmp.eq.s32.totalorder %s11, 0
      %p132 = por %p130, %p131
      %p133 = scmp.ne.s32.totalorder %s122, %s125
      %p134 = scmp.eq.s32.totalorder %s16, 1
      %p135 = por %p133, %p134
      %p136 = scmp.ne.s32.totalorder %s125, %s126
      %p137 = scmp.eq.s32.totalorder %s16, 0
      %p138 = por %p136, %p137
      %p139 = scmp.ne.s32.totalorder %s125, %s126
      %p140 = scmp.eq.s32.totalorder %s17, 1
      %p141 = por %p139, %p140
      %p143 = scmp.ne.s32.totalorder %s126, %s142
      %p144 = scmp.eq.s32.totalorder %s17, 0
      %p145 = por %p143, %p144
      %s146 = ssub.s32 %s18, %s37
      %s147 = ssub.s32 %s19, %s33
      %s148 = sor.u32 %s146, %s147
      %p149 = scmp.eq.s32.totalorder %s148, 0
      %s151 = sadd.s32 %s150, 1
      %s152 = scalar_select %p149, %s150, %s151
      %p155 = pneg %p149
      %p156 = scmp.eq.s32.totalorder %s11, 1
      %p157 = por %p155, %p156
      %p158 = scmp.ne.s32.totalorder %s150, %s153
      %p159 = scmp.eq.s32.totalorder %s11, 0
      %p160 = por %p158, %p159
      %p161 = scmp.ne.s32.totalorder %s150, %s153
      %p162 = scmp.eq.s32.totalorder %s16, 1
      %p163 = por %p161, %p162
      %p164 = scmp.ne.s32.totalorder %s153, %s154
      %p165 = scmp.eq.s32.totalorder %s16, 0
      %p166 = por %p164, %p165
      %p167 = scmp.ne.s32.totalorder %s153, %s154
      %p168 = scmp.eq.s32.totalorder %s17, 1
      %p169 = por %p167, %p168
      %p171 = scmp.ne.s32.totalorder %s154, %s170
      %p172 = scmp.eq.s32.totalorder %s17, 0
      %p173 = por %p171, %p172
      %s174 = ssub.s32 %s18, %s37
      %s175 = ssub.s32 %s19, %s33
      %s176 = sor.u32 %s174, %s175
      %p177 = scmp.eq.s32.totalorder %s176, 0
      %s179 = sadd.s32 %s178, 1
      %s180 = scalar_select %p177, %s178, %s179
      %p183 = pneg %p177
      %p184 = scmp.eq.s32.totalorder %s11, 1
      %p185 = por %p183, %p184
      %p186 = scmp.ne.s32.totalorder %s178, %s181
      %p187 = scmp.eq.s32.totalorder %s11, 0
      %p188 = por %p186, %p187
      %p189 = scmp.ne.s32.totalorder %s178, %s181
      %p190 = scmp.eq.s32.totalorder %s16, 1
      %p191 = por %p189, %p190
      %p192 = scmp.ne.s32.totalorder %s181, %s182
      %p193 = scmp.eq.s32.totalorder %s16, 0
      %p194 = por %p192, %p193
      %p195 = scmp.ne.s32.totalorder %s181, %s182
      %p196 = scmp.eq.s32.totalorder %s17, 1
      %p197 = por %p195, %p196
      %p199 = scmp.ne.s32.totalorder %s182, %s198
      %p200 = scmp.eq.s32.totalorder %s17, 0
      %p201 = por %p199, %p200
      %p202 = scmp.le.s32.totalorder 1, %s11
      %p203 = scmp.lt.s32.totalorder %s11, 3
      %p204 = pnand %p202, %p203
      %p205 = pneg %p204
      // Predicated region
      $region9: #{_lambda_.18} parent=5 // pred_check
        _
      $region10: #{_lambda_.18} parent=5 // pred_check_branch
        %207 = sbr.rel (%p204) target = $region12
      $region11: #{_lambda_.18} parent=5 // pred_region
        %s208 = ssub.s32 %s11, 1
        // Predicated region
        $region13: #{_lambda_.18} parent=11 // pred_check
          %p209 = pneg %p112
        $region14: #{_lambda_.18} parent=11 // pred_check_branch
          %211 = sbr.rel (%p209) target = $region16
        $region15: #{_lambda_.18} parent=11 // pred_region
          %p212 = scmp.lt.s32.totalorder %s22, 0
          %s213 = scalar_select %p212, %s22, 0
          %s214 = scalar_lea.vmem %s2, %s213
        $region16: #{_lambda_.18} parent=11 // pred_fallthru
          _
        // Predicated region
        $region17: #{_lambda_.18} parent=11 // pred_check
          %p215 = pneg %p138
        $region18: #{_lambda_.18} parent=11 // pred_check_branch
          %217 = sbr.rel (%p215) target = $region20
        $region19: #{_lambda_.18} parent=11 // pred_region
          %p218 = scmp.lt.s32.totalorder %s22, 0
          %s219 = scalar_select %p218, %s22, 0
          %s220 = scalar_lea.vmem %s3, %s219
        $region20: #{_lambda_.18} parent=11 // pred_fallthru
          _
        // Predicated region
        $region21: #{_lambda_.18} parent=11 // pred_check
          %p221 = pneg %p166
        $region22: #{_lambda_.18} parent=11 // pred_check_branch
          %223 = sbr.rel (%p221) target = $region24
        $region23: #{_lambda_.18} parent=11 // pred_region
          %s224 = smul.u32 16, %s21
          %p225 = scmp.lt.s32.totalorder %s224, 15
          %s226 = scalar_select %p225, %s224, 15
          %p227 = scmp.lt.s32.totalorder %s22, 0
          %s228 = scalar_select %p227, %s22, 0
          %s229 = sadd.s32 %s228, %s226
          %s230 = smul.addr %s229, 8
          %s231 = scalar_lea.vmem %s4, %s230
          %s232 = smul.u32 16, %s21
        $region24: #{_lambda_.18} parent=11 // pred_fallthru
          _
      $region12: #{_lambda_.18} parent=5 // pred_fallthru
        _
      %p233 = scmp.lt.s32.totalorder %s11, 2
      // Predicated region
      $region25: #{_lambda_.18} parent=5 // pred_check
        %p234 = pneg %p233
      $region26: #{_lambda_.18} parent=5 // pred_check_branch
        %236 = sbr.rel (%p234) target = $region28
      $region27: #{_lambda_.18} parent=5 // pred_region
        // Predicated region
        $region29: #{_lambda_.18} parent=27 // pred_check
          %p237 = pneg %p52
        $region30: #{_lambda_.18} parent=27 // pred_check_branch
          %239 = sbr.rel (%p237) target = $region32
        $region31: #{_lambda_.18} parent=27 // pred_region
          %s240 = sand.u32 %s42, 1
          %s241 = sand.u32 %s42, 1
          %s242 = smul.addr %s241, 128
          %s243 = scalar_lea.vmem [#allocation2], %s242
          %s244 = smul.u32 16, %s18
          %s245 = smul.u32 2, %s20
          %s246 = smul.addr %s244, 4
          %s247 = sadd.s32 %s245, %s246
          %s248 = smul.addr %s247, 4
          %s249 = scalar_lea.vmem %s0, %s248
          // Predicated region
          $region33: #{_lambda_.18} parent=31 // pred_check
            _
          $region34: #{_lambda_.18} parent=31 // pred_check_branch
            %251 = sbr.rel (0) target = $region36
          $region35: #{_lambda_.18} parent=31 // pred_region
            // Predicated region
            $region37: #{_lambda_.18} parent=35 // pred_check
              _
            $region38: #{_lambda_.18} parent=35 // pred_check_branch
              %253 = sbr.rel (0) target = $region40
            $region39: #{_lambda_.18} parent=35 // pred_region
              // Predicated region
              $region52: #{_lambda_.18} parent=39 // pred_check
                _
              $region53: #{_lambda_.18} parent=39 // pred_check_branch
                %299 = sbr.rel (0) target = $region55
              $region54: #{_lambda_.18} parent=39 // pred_region
                loop: start=0, step=1, limit=1
                $region56: #{_lambda_.18} parent=54 // loop_pre_header
                  _
                $region57: #{_lambda_.18} parent=54 // loop_header
                  %s301 = sphi 0, %s305
                  %p302 = scmp.ge.s32.totalorder %s301, 1
                  %s306 = sphi %s249, %s249
                  %s307 = sphi %s243, %s243
                $region58: #{_lambda_.18} parent=54 // loop_header_branch
                  %304 = sbr.rel (%p302) target = $region62
                $region59: #{_lambda_.18} parent=54 // loop_body
                  %v308 = vld [vmem:[%s306] sm:$0xff]
                  %309 = vst [vmem:[%s307] sm:$0xff] %v308
                  %v310 = vld [vmem:[%s306 + $0x10] sm:$0xff]
                  %311 = vst [vmem:[%s307 + $0x8] sm:$0xff] %v310
                  %v312 = vld [vmem:[%s306 + $0x20] sm:$0xff]
                  %313 = vst [vmem:[%s307 + $0x10] sm:$0xff] %v312
                  %v314 = vld [vmem:[%s306 + $0x30] sm:$0xff]
                  %315 = vst [vmem:[%s307 + $0x18] sm:$0xff] %v314
                  %v316 = vld [vmem:[%s306 + $0x40] sm:$0xff]
                  %317 = vst [vmem:[%s307 + $0x20] sm:$0xff] %v316
                  %v318 = vld [vmem:[%s306 + $0x50] sm:$0xff]
                  %319 = vst [vmem:[%s307 + $0x28] sm:$0xff] %v318
                  %v320 = vld [vmem:[%s306 + $0x60] sm:$0xff]
                  %321 = vst [vmem:[%s307 + $0x30] sm:$0xff] %v320
                  %v322 = vld [vmem:[%s306 + $0x70] sm:$0xff]
                  %323 = vst [vmem:[%s307 + $0x38] sm:$0xff] %v322
                  %v324 = vld [vmem:[%s306 + $0x80] sm:$0xff]
                  %325 = vst [vmem:[%s307 + $0x40] sm:$0xff] %v324
                  %v326 = vld [vmem:[%s306 + $0x90] sm:$0xff]
                  %327 = vst [vmem:[%s307 + $0x48] sm:$0xff] %v326
                  %v328 = vld [vmem:[%s306 + $0xa0] sm:$0xff]
                  %329 = vst [vmem:[%s307 + $0x50] sm:$0xff] %v328
                  %v330 = vld [vmem:[%s306 + $0xb0] sm:$0xff]
                  %331 = vst [vmem:[%s307 + $0x58] sm:$0xff] %v330
                  %v332 = vld [vmem:[%s306 + $0xc0] sm:$0xff]
                  %333 = vst [vmem:[%s307 + $0x60] sm:$0xff] %v332
                  %v334 = vld [vmem:[%s306 + $0xd0] sm:$0xff]
                  %335 = vst [vmem:[%s307 + $0x68] sm:$0xff] %v334
                  %v336 = vld [vmem:[%s306 + $0xe0] sm:$0xff]
                  %337 = vst [vmem:[%s307 + $0x70] sm:$0xff] %v336
                  %v338 = vld [vmem:[%s306 + $0xf0] sm:$0xff]
                  %339 = vst [vmem:[%s307 + $0x78] sm:$0xff] %v338
                $region60: #{_lambda_.18} parent=54 // loop_footer
                  %s305 = sadd.s32 1, %s301
                $region61: #{_lambda_.18} parent=54 // loop_footer_branch
                  %300 = sbr.rel target = $region57
                $region62: #{_lambda_.18} parent=54 // loop_exit
                  _
              $region55: #{_lambda_.18} parent=39 // pred_fallthru
                _
              // Predicated region
              $region63: #{_lambda_.18} parent=39 // pred_check
                _
              $region64: #{_lambda_.18} parent=39 // pred_check_branch
                %341 = sbr.rel target = $region66
              $region65: #{_lambda_.18} parent=39 // pred_region
                _
              $region66: #{_lambda_.18} parent=39 // pred_fallthru
                _
            $region40: #{_lambda_.18} parent=35 // pred_fallthru
              _
            // Predicated region
            $region41: #{_lambda_.18} parent=35 // pred_check
              _
            $region42: #{_lambda_.18} parent=35 // pred_check_branch
              %255 = sbr.rel target = $region44
            $region43: #{_lambda_.18} parent=35 // pred_region
              %s257 = ssub.s32 256, 1
              loop: start=0, step=1, limit=1
              $region45: #{_lambda_.18} parent=43 // loop_pre_header
                _
              $region46: #{_lambda_.18} parent=43 // loop_header
                %s259 = sphi 0, %s263
                %p260 = scmp.ge.s32.totalorder %s259, 1
                %s264 = sphi %s249, %s249
                %s265 = sphi %s243, %s243
              $region47: #{_lambda_.18} parent=43 // loop_header_branch
                %262 = sbr.rel (%p260) target = $region51
              $region48: #{_lambda_.18} parent=43 // loop_body
                %v266 = vld [vmem:[%s264] sm:%s257]
                %267 = vst [vmem:[%s265] sm:%s257] %v266
                %v268 = vld [vmem:[%s264 + $0x10] sm:%s257]
                %269 = vst [vmem:[%s265 + $0x8] sm:%s257] %v268
                %v270 = vld [vmem:[%s264 + $0x20] sm:%s257]
                %271 = vst [vmem:[%s265 + $0x10] sm:%s257] %v270
                %v272 = vld [vmem:[%s264 + $0x30] sm:%s257]
                %273 = vst [vmem:[%s265 + $0x18] sm:%s257] %v272
                %v274 = vld [vmem:[%s264 + $0x40] sm:%s257]
                %275 = vst [vmem:[%s265 + $0x20] sm:%s257] %v274
                %v276 = vld [vmem:[%s264 + $0x50] sm:%s257]
                %277 = vst [vmem:[%s265 + $0x28] sm:%s257] %v276
                %v278 = vld [vmem:[%s264 + $0x60] sm:%s257]
                %279 = vst [vmem:[%s265 + $0x30] sm:%s257] %v278
                %v280 = vld [vmem:[%s264 + $0x70] sm:%s257]
                %281 = vst [vmem:[%s265 + $0x38] sm:%s257] %v280
                %v282 = vld [vmem:[%s264 + $0x80] sm:%s257]
                %283 = vst [vmem:[%s265 + $0x40] sm:%s257] %v282
                %v284 = vld [vmem:[%s264 + $0x90] sm:%s257]
                %285 = vst [vmem:[%s265 + $0x48] sm:%s257] %v284
                %v286 = vld [vmem:[%s264 + $0xa0] sm:%s257]
                %287 = vst [vmem:[%s265 + $0x50] sm:%s257] %v286
                %v288 = vld [vmem:[%s264 + $0xb0] sm:%s257]
                %289 = vst [vmem:[%s265 + $0x58] sm:%s257] %v288
                %v290 = vld [vmem:[%s264 + $0xc0] sm:%s257]
                %291 = vst [vmem:[%s265 + $0x60] sm:%s257] %v290
                %v292 = vld [vmem:[%s264 + $0xd0] sm:%s257]
                %293 = vst [vmem:[%s265 + $0x68] sm:%s257] %v292
                %v294 = vld [vmem:[%s264 + $0xe0] sm:%s257]
                %295 = vst [vmem:[%s265 + $0x70] sm:%s257] %v294
                %v296 = vld [vmem:[%s264 + $0xf0] sm:%s257]
                %297 = vst [vmem:[%s265 + $0x78] sm:%s257] %v296
              $region49: #{_lambda_.18} parent=43 // loop_footer
                %s263 = sadd.s32 1, %s259
              $region50: #{_lambda_.18} parent=43 // loop_footer_branch
                %258 = sbr.rel target = $region46
              $region51: #{_lambda_.18} parent=43 // loop_exit
                _
            $region44: #{_lambda_.18} parent=35 // pred_fallthru
              _
          $region36: #{_lambda_.18} parent=31 // pred_fallthru
            _
          %342 = vnop
        $region32: #{_lambda_.18} parent=27 // pred_fallthru
          _
        // Predicated region
        $region67: #{_lambda_.18} parent=27 // pred_check
          %p343 = pneg %p80
        $region68: #{_lambda_.18} parent=27 // pred_check_branch
          %345 = sbr.rel (%p343) target = $region70
        $region69: #{_lambda_.18} parent=27 // pred_region
          %s346 = smul.u32 32, %s20
          %p347 = scmp.lt.s32.totalorder %s346, 63
          %s348 = scalar_select %p347, %s346, 63
          %p349 = scmp.lt.s32.totalorder %s19, 0
          %s350 = scalar_select %p349, %s19, 0
          %s351 = sadd.s32 %s350, %s348
          %s352 = smul.addr %s351, 4
          %s353 = scalar_lea.vmem %s1, %s352
          %s354 = smul.u32 32, %s20
        $region70: #{_lambda_.18} parent=27 // pred_fallthru
          _
      $region28: #{_lambda_.18} parent=5 // pred_fallthru
        _
      %p355 = scmp.le.s32.totalorder 1, %s11
      %p356 = scmp.lt.s32.totalorder %s11, 3
      %p357 = pnand %p355, %p356
      %p358 = pneg %p357
      // Predicated region
      $region71: #{_lambda_.18} parent=5 // pred_check
        _
      $region72: #{_lambda_.18} parent=5 // pred_check_branch
        %360 = sbr.rel (%p357) target = $region74
      $region73: #{_lambda_.18} parent=5 // pred_region
        %s361 = ssub.s32 %s11, 1
        %s362 = sand.u32 %s45, 1
        %s363 = sand.u32 %s45, 1
        %s364 = smul.addr %s363, 128
        %s365 = scalar_lea.vmem [#allocation2], %s364
        // Predicated region
        $region75: #{_lambda_.18} parent=73 // pred_check
          %p366 = pneg %p58
        $region76: #{_lambda_.18} parent=73 // pred_check_branch
          %368 = sbr.rel (%p366) target = $region78
        $region77: #{_lambda_.18} parent=73 // pred_region
          _
        $region78: #{_lambda_.18} parent=73 // pred_fallthru
          _
        %s369 = sand.u32 %s45, 1
        %s370 = sand.u32 %s45, 1
        %s371 = smul.addr %s370, 128
        %s372 = scalar_lea.vmem [#allocation2], %s371
        %p373 = pneg %p58
        %p374 = pneg %p55
        %s375 = smul.u32 32, %s23
        %p376 = scmp.lt.s32.totalorder %s375, 63
        %s377 = scalar_select %p376, %s375, 63
        %p378 = scmp.lt.s32.totalorder %s22, 0
        %s379 = scalar_select %p378, %s22, 0
        %s380 = sadd.s32 %s379, %s377
        %s381 = smul.addr %s380, 4
        %s382 = scalar_lea.vmem %s1, %s381
        %p383 = pneg %p86
        %p384 = pneg %p83
        %p385 = scmp.lt.s32.totalorder %s22, 0
        %s386 = scalar_select %p385, %s22, 0
        %s387 = scalar_lea.vmem %s2, %s386
        %p388 = pneg %p112
        %p389 = pneg %p109
        %p390 = scmp.lt.s32.totalorder %s22, 0
        %s391 = scalar_select %p390, %s22, 0
        %s392 = scalar_lea.vmem %s3, %s391
        %p393 = pneg %p138
        %p394 = pneg %p135
        %s395 = smul.u32 16, %s21
        %p396 = scmp.lt.s32.totalorder %s395, 15
        %s397 = scalar_select %p396, %s395, 15
        %p398 = scmp.lt.s32.totalorder %s22, 0
        %s399 = scalar_select %p398, %s22, 0
        %s400 = sadd.s32 %s399, %s397
        %s401 = smul.addr %s400, 8
        %s402 = scalar_lea.vmem %s4, %s401
        %p403 = pneg %p166
        %p404 = pneg %p163
        %p405 = pneg %p194
        %p406 = pneg %p191
        %s407 = smul.u32 16, %s21
        %p408 = scmp.lt.s32.totalorder %s407, 15
        %s409 = scalar_select %p408, %s407, 15
        %p410 = scmp.lt.s32.totalorder %s22, 0
        %s411 = scalar_select %p410, %s22, 0
        %s412 = sadd.s32 %s411, %s409
        %s413 = smul.addr %s412, 8
        %s414 = scalar_lea.vmem %s5, %s413
        %s415 = smul.u32 16, %s21
        %s416 = smul.u32 2, %s23
        %s417 = smul.u32 32, %s23
        %p418 = scmp.lt.s32.totalorder %s417, 63
        %s419 = scalar_select %p418, %s417, 63
        %p420 = scmp.lt.s32.totalorder %s22, 0
        %s421 = scalar_select %p420, %s22, 0
        %s422 = sadd.s32 %s421, %s419
        %s423 = smul.addr %s422, 4
        %s424 = scalar_lea.vmem %s1, %s423
        %s425 = smul.u32 32, %s23
        %p426 = scmp.lt.s32.totalorder %s22, 0
        %s427 = scalar_select %p426, %s22, 0
        %s428 = scalar_lea.vmem %s2, %s427
        %p429 = scmp.lt.s32.totalorder %s22, 0
        %s430 = scalar_select %p429, %s22, 0
        %s431 = scalar_lea.vmem %s3, %s430
        %s432 = smul.u32 16, %s21
        %p433 = scmp.lt.s32.totalorder %s432, 15
        %s434 = scalar_select %p433, %s432, 15
        %p435 = scmp.lt.s32.totalorder %s22, 0
        %s436 = scalar_select %p435, %s22, 0
        %s437 = sadd.s32 %s436, %s434
        %s438 = smul.addr %s437, 8
        %s439 = scalar_lea.vmem %s4, %s438
        %s440 = smul.u32 16, %s21
        %s441 = smul.u32 16, %s21
        %p442 = scmp.lt.s32.totalorder %s441, 15
        %s443 = scalar_select %p442, %s441, 15
        %p444 = scmp.lt.s32.totalorder %s22, 0
        %s445 = scalar_select %p444, %s22, 0
        %s446 = sadd.s32 %s445, %s443
        %s447 = smul.addr %s446, 8
        %s448 = scalar_lea.vmem %s5, %s447
        %s449 = smul.u32 16, %s21
        %p451 = scmp.eq.s32.totalorder %s23, 0
        // Predicated region
        $region79: #{_lambda_.18} parent=73 // pred_check
          %p452 = pneg %p451
        $region80: #{_lambda_.18} parent=73 // pred_check_branch
          %454 = sbr.rel (%p452) target = $region82
        $region81: #{_lambda_.18} parent=73 // pred_region
          %455 = vst [vmem:[%s448] sm:$0xff] 0.0
          %456 = vst [vmem:[%s448 + $0x8] sm:$0xff] 0.0
          %457 = vst [vmem:[%s448 + $0x10] sm:$0xff] 0.0
          %458 = vst [vmem:[%s448 + $0x18] sm:$0xff] 0.0
          %459 = vst [vmem:[%s448 + $0x20] sm:$0xff] 0.0
          %460 = vst [vmem:[%s448 + $0x28] sm:$0xff] 0.0
          %461 = vst [vmem:[%s448 + $0x30] sm:$0xff] 0.0
          %462 = vst [vmem:[%s448 + $0x38] sm:$0xff] 0.0
          %463 = vst [vmem:[%s448 + $0x40] sm:$0xff] 0.0
          %464 = vst [vmem:[%s448 + $0x48] sm:$0xff] 0.0
          %465 = vst [vmem:[%s448 + $0x50] sm:$0xff] 0.0
          %466 = vst [vmem:[%s448 + $0x58] sm:$0xff] 0.0
          %467 = vst [vmem:[%s448 + $0x60] sm:$0xff] 0.0
          %468 = vst [vmem:[%s448 + $0x68] sm:$0xff] 0.0
          %469 = vst [vmem:[%s448 + $0x70] sm:$0xff] 0.0
          %470 = vst [vmem:[%s448 + $0x78] sm:$0xff] 0.0
        $region82: #{_lambda_.18} parent=73 // pred_fallthru
          _
        %v471 = vld [vmem:[%s448] sm:$0xff]
        %v472 = vld [vmem:[%s448 + $0x8] sm:$0xff]
        %v473 = vld [vmem:[%s448 + $0x10] sm:$0xff]
        %v474 = vld [vmem:[%s448 + $0x18] sm:$0xff]
        %v475 = vld [vmem:[%s448 + $0x20] sm:$0xff]
        %v476 = vld [vmem:[%s448 + $0x28] sm:$0xff]
        %v477 = vld [vmem:[%s448 + $0x30] sm:$0xff]
        %v478 = vld [vmem:[%s448 + $0x38] sm:$0xff]
        %v479 = vld [vmem:[%s448 + $0x40] sm:$0xff]
        %v480 = vld [vmem:[%s448 + $0x48] sm:$0xff]
        %v481 = vld [vmem:[%s448 + $0x50] sm:$0xff]
        %v482 = vld [vmem:[%s448 + $0x58] sm:$0xff]
        %v483 = vld [vmem:[%s448 + $0x60] sm:$0xff]
        %v484 = vld [vmem:[%s448 + $0x68] sm:$0xff]
        %v485 = vld [vmem:[%s448 + $0x70] sm:$0xff]
        %v486 = vld [vmem:[%s448 + $0x78] sm:$0xff]
        %v487 = vld [vmem:[%s365] sm:$0xff]
        %v488 = vld [vmem:[%s365 + $0x8] sm:$0xff]
        %v489 = vld [vmem:[%s365 + $0x10] sm:$0xff]
        %v490 = vld [vmem:[%s365 + $0x18] sm:$0xff]
        %v491 = vld [vmem:[%s365 + $0x20] sm:$0xff]
        %v492 = vld [vmem:[%s365 + $0x28] sm:$0xff]
        %v493 = vld [vmem:[%s365 + $0x30] sm:$0xff]
        %v494 = vld [vmem:[%s365 + $0x38] sm:$0xff]
        %v495 = vld [vmem:[%s365 + $0x40] sm:$0xff]
        %v496 = vld [vmem:[%s365 + $0x48] sm:$0xff]
        %v497 = vld [vmem:[%s365 + $0x50] sm:$0xff]
        %v498 = vld [vmem:[%s365 + $0x58] sm:$0xff]
        %v499 = vld [vmem:[%s365 + $0x60] sm:$0xff]
        %v500 = vld [vmem:[%s365 + $0x68] sm:$0xff]
        %v501 = vld [vmem:[%s365 + $0x70] sm:$0xff]
        %v502 = vld [vmem:[%s365 + $0x78] sm:$0xff]
        %v503 = vld [vmem:[%s424] sm:$0xf]
        %v504 = vld [vmem:[%s424 + $0x4] sm:$0xf]
        %v505 = vld [vmem:[%s424 + $0x8] sm:$0xf]
        %v506 = vld [vmem:[%s424 + $0xc] sm:$0xf]
        %v507 = vld [vmem:[%s424 + $0x10] sm:$0xf]
        %v508 = vld [vmem:[%s424 + $0x14] sm:$0xf]
        %v509 = vld [vmem:[%s424 + $0x18] sm:$0xf]
        %v510 = vld [vmem:[%s424 + $0x1c] sm:$0xf]
        %v511 = vld [vmem:[%s424 + $0x20] sm:$0xf]
        %v512 = vld [vmem:[%s424 + $0x24] sm:$0xf]
        %v513 = vld [vmem:[%s424 + $0x28] sm:$0xf]
        %v514 = vld [vmem:[%s424 + $0x2c] sm:$0xf]
        %v515 = vld [vmem:[%s424 + $0x30] sm:$0xf]
        %v516 = vld [vmem:[%s424 + $0x34] sm:$0xf]
        %v517 = vld [vmem:[%s424 + $0x38] sm:$0xf]
        %v518 = vld [vmem:[%s424 + $0x3c] sm:$0xf]
        %v519 = vld [vmem:[%s424 + $0x40] sm:$0xf]
        %v520 = vld [vmem:[%s424 + $0x44] sm:$0xf]
        %v521 = vld [vmem:[%s424 + $0x48] sm:$0xf]
        %v522 = vld [vmem:[%s424 + $0x4c] sm:$0xf]
        %v523 = vld [vmem:[%s424 + $0x50] sm:$0xf]
        %v524 = vld [vmem:[%s424 + $0x54] sm:$0xf]
        %v525 = vld [vmem:[%s424 + $0x58] sm:$0xf]
        %v526 = vld [vmem:[%s424 + $0x5c] sm:$0xf]
        %v527 = vld [vmem:[%s424 + $0x60] sm:$0xf]
        %v528 = vld [vmem:[%s424 + $0x64] sm:$0xf]
        %v529 = vld [vmem:[%s424 + $0x68] sm:$0xf]
        %v530 = vld [vmem:[%s424 + $0x6c] sm:$0xf]
        %v531 = vld [vmem:[%s424 + $0x70] sm:$0xf]
        %v532 = vld [vmem:[%s424 + $0x74] sm:$0xf]
        %v533 = vld [vmem:[%s424 + $0x78] sm:$0xf]
        %v534 = vld [vmem:[%s424 + $0x7c] sm:$0xf]
        %v551 = vunpack.c.l.b16 %v487
        %v552 = vunpack.c.h.b16 %v487
        %v553 = vunpack.c.l.b16 %v488
        %v554 = vunpack.c.h.b16 %v488
        %v555 = vunpack.c.l.b16 %v489
        %v556 = vunpack.c.h.b16 %v489
        %v557 = vunpack.c.l.b16 %v490
        %v558 = vunpack.c.h.b16 %v490
        %v559 = vunpack.c.l.b16 %v491
        %v560 = vunpack.c.h.b16 %v491
        %v561 = vunpack.c.l.b16 %v492
        %v562 = vunpack.c.h.b16 %v492
        %v563 = vunpack.c.l.b16 %v493
        %v564 = vunpack.c.h.b16 %v493
        %v565 = vunpack.c.l.b16 %v494
        %v566 = vunpack.c.h.b16 %v494
        %v567 = vunpack.c.l.b16 %v495
        %v568 = vunpack.c.h.b16 %v495
        %v569 = vunpack.c.l.b16 %v496
        %v570 = vunpack.c.h.b16 %v496
        %v571 = vunpack.c.l.b16 %v497
        %v572 = vunpack.c.h.b16 %v497
        %v573 = vunpack.c.l.b16 %v498
        %v574 = vunpack.c.h.b16 %v498
        %v575 = vunpack.c.l.b16 %v499
        %v576 = vunpack.c.h.b16 %v499
        %v577 = vunpack.c.l.b16 %v500
        %v578 = vunpack.c.h.b16 %v500
        %v579 = vunpack.c.l.b16 %v501
        %v580 = vunpack.c.h.b16 %v501
        %v581 = vunpack.c.l.b16 %v502
        %v582 = vunpack.c.h.b16 %v502
        %v583 = vpack.c.b16 %v553, %v551
        %v584 = vpack.c.b16 %v554, %v552
        %v585 = vpack.c.b16 %v557, %v555
        %v586 = vpack.c.b16 %v558, %v556
        %v587 = vpack.c.b16 %v561, %v559
        %v588 = vpack.c.b16 %v562, %v560
        %v589 = vpack.c.b16 %v565, %v563
        %v590 = vpack.c.b16 %v566, %v564
        %v591 = vpack.c.b16 %v569, %v567
        %v592 = vpack.c.b16 %v570, %v568
        %v593 = vpack.c.b16 %v573, %v571
        %v594 = vpack.c.b16 %v574, %v572
        %v595 = vpack.c.b16 %v577, %v575
        %v596 = vpack.c.b16 %v578, %v576
        %v597 = vpack.c.b16 %v581, %v579
        %v598 = vpack.c.b16 %v582, %v580
        %v647 = vunpack.c.l.b16 %v503
        %v648 = vunpack.c.l.b16 %v504
        %v649 = vunpack.c.l.b16 %v505
        %v650 = vunpack.c.l.b16 %v506
        %v651 = vunpack.c.l.b16 %v507
        %v652 = vunpack.c.l.b16 %v508
        %v653 = vunpack.c.l.b16 %v509
        %v654 = vunpack.c.l.b16 %v510
        %v655 = vunpack.c.l.b16 %v511
        %v656 = vunpack.c.l.b16 %v512
        %v657 = vunpack.c.l.b16 %v513
        %v658 = vunpack.c.l.b16 %v514
        %v659 = vunpack.c.l.b16 %v515
        %v660 = vunpack.c.l.b16 %v516
        %v661 = vunpack.c.l.b16 %v517
        %v662 = vunpack.c.l.b16 %v518
        %v663 = vunpack.c.l.b16 %v519
        %v664 = vunpack.c.l.b16 %v520
        %v665 = vunpack.c.l.b16 %v521
        %v666 = vunpack.c.l.b16 %v522
        %v667 = vunpack.c.l.b16 %v523
        %v668 = vunpack.c.l.b16 %v524
        %v669 = vunpack.c.l.b16 %v525
        %v670 = vunpack.c.l.b16 %v526
        %v671 = vunpack.c.l.b16 %v527
        %v672 = vunpack.c.l.b16 %v528
        %v673 = vunpack.c.l.b16 %v529
        %v674 = vunpack.c.l.b16 %v530
        %v675 = vunpack.c.l.b16 %v531
        %v676 = vunpack.c.l.b16 %v532
        %v677 = vunpack.c.l.b16 %v533
        %v678 = vunpack.c.l.b16 %v534
        %v679 = vpack.c.b16 %v648, %v647
        %v680 = vpack.c.b16 %v650, %v649
        %v681 = vpack.c.b16 %v652, %v651
        %v682 = vpack.c.b16 %v654, %v653
        %v683 = vpack.c.b16 %v656, %v655
        %v684 = vpack.c.b16 %v658, %v657
        %v685 = vpack.c.b16 %v660, %v659
        %v686 = vpack.c.b16 %v662, %v661
        %v687 = vpack.c.b16 %v664, %v663
        %v688 = vpack.c.b16 %v666, %v665
        %v689 = vpack.c.b16 %v668, %v667
        %v690 = vpack.c.b16 %v670, %v669
        %v691 = vpack.c.b16 %v672, %v671
        %v692 = vpack.c.b16 %v674, %v673
        %v693 = vpack.c.b16 %v676, %v675
        %v694 = vpack.c.b16 %v678, %v677
        %711 = vmatprep.subr.bf16.mxu0 0
        %712 = vmatpush1.bf16.msra.mxu0 %v686
        %713 = vmatprep.subr.bf16.mxu0 0
        %714 = vmatpush1.bf16.msra.mxu0 %v685
        %715 = vmatprep.subr.bf16.mxu0 0
        %716 = vmatpush1.bf16.msra.mxu0 %v684
        %717 = vmatprep.subr.bf16.mxu0 0
        %718 = vmatpush1.bf16.msra.mxu0 %v683
        %719 = vmatprep.subr.bf16.mxu0 0
        %720 = vmatpush1.bf16.msra.mxu0 %v682
        %721 = vmatprep.subr.bf16.mxu0 0
        %722 = vmatpush1.bf16.msra.mxu0 %v681
        %723 = vmatprep.subr.bf16.mxu0 0
        %724 = vmatpush1.bf16.msra.mxu0 %v680
        %725 = vmatprep.subr.bf16.mxu0 0
        %726 = vmatpush1.bf16.msra.mxu0 %v679
        %727 = vmatprep.subr.bf16.mxu0 0
        %728 = vmatpush2.bf16.msra.mxu0 %v694
        %729 = vmatprep.subr.bf16.mxu0 0
        %730 = vmatpush2.bf16.msra.mxu0 %v693
        %731 = vmatprep.subr.bf16.mxu0 0
        %732 = vmatpush2.bf16.msra.mxu0 %v692
        %733 = vmatprep.subr.bf16.mxu0 0
        %734 = vmatpush2.bf16.msra.mxu0 %v691
        %735 = vmatprep.subr.bf16.mxu0 0
        %736 = vmatpush2.bf16.msra.mxu0 %v690
        %737 = vmatprep.subr.bf16.mxu0 0
        %738 = vmatpush2.bf16.msra.mxu0 %v689
        %739 = vmatprep.subr.bf16.mxu0 0
        %740 = vmatpush2.bf16.msra.mxu0 %v688
        %741 = vmatprep.subr.bf16.mxu0 0
        %742 = vmatpush2.bf16.msra.mxu0 %v687
        %743 = vmatprep.mubr.bf16.mxu0 %v584
        %744 = vmatmul.mubr.bf16.gmra.mxu0 %v583
        %v745 = vpop.f32.mrf.mxu0
        %v746 = vadd.f32 0.0, %v745
        %v747 = vpop.f32.mrf.mxu0
        %v748 = vpop.f32.mrf.mxu0
        %v749 = vadd.f32 0.0, %v748
        %v750 = vpop.f32.mrf.mxu0
        %751 = vmatprep.mubr.bf16.mxu0 %v586
        %752 = vmatmul.mubr.bf16.gmra.mxu0 %v585
        %v753 = vpop.f32.mrf.mxu0
        %v754 = vadd.f32 0.0, %v753
        %v755 = vpop.f32.mrf.mxu0
        %v756 = vpop.f32.mrf.mxu0
        %v757 = vadd.f32 0.0, %v756
        %v758 = vpop.f32.mrf.mxu0
        %759 = vmatprep.mubr.bf16.mxu0 %v588
        %760 = vmatmul.mubr.bf16.gmra.mxu0 %v587
        %v761 = vpop.f32.mrf.mxu0
        %v762 = vadd.f32 0.0, %v761
        %v763 = vpop.f32.mrf.mxu0
        %v764 = vpop.f32.mrf.mxu0
        %v765 = vadd.f32 0.0, %v764
        %v766 = vpop.f32.mrf.mxu0
        %767 = vmatprep.mubr.bf16.mxu0 %v590
        %768 = vmatmul.mubr.bf16.gmra.mxu0 %v589
        %v769 = vpop.f32.mrf.mxu0
        %v770 = vadd.f32 0.0, %v769
        %v771 = vpop.f32.mrf.mxu0
        %v772 = vpop.f32.mrf.mxu0
        %v773 = vadd.f32 0.0, %v772
        %v774 = vpop.f32.mrf.mxu0
        %775 = vmatprep.mubr.bf16.mxu0 %v592
        %776 = vmatmul.mubr.bf16.gmra.mxu0 %v591
        %v777 = vpop.f32.mrf.mxu0
        %v778 = vadd.f32 0.0, %v777
        %v779 = vpop.f32.mrf.mxu0
        %v780 = vpop.f32.mrf.mxu0
        %v781 = vadd.f32 0.0, %v780
        %v782 = vpop.f32.mrf.mxu0
        %783 = vmatprep.mubr.bf16.mxu0 %v594
        %784 = vmatmul.mubr.bf16.gmra.mxu0 %v593
        %v785 = vpop.f32.mrf.mxu0
        %v786 = vadd.f32 0.0, %v785
        %v787 = vpop.f32.mrf.mxu0
        %v788 = vpop.f32.mrf.mxu0
        %v789 = vadd.f32 0.0, %v788
        %v790 = vpop.f32.mrf.mxu0
        %791 = vmatprep.mubr.bf16.mxu0 %v596
        %792 = vmatmul.mubr.bf16.gmra.mxu0 %v595
        %v793 = vpop.f32.mrf.mxu0
        %v794 = vadd.f32 0.0, %v793
        %v795 = vpop.f32.mrf.mxu0
        %v796 = vpop.f32.mrf.mxu0
        %v797 = vadd.f32 0.0, %v796
        %v798 = vpop.f32.mrf.mxu0
        %799 = vmatprep.mubr.bf16.mxu0 %v598
        %800 = vmatmul.mubr.bf16.gmra.mxu0 %v597
        %v801 = vpop.f32.mrf.mxu0
        %v802 = vadd.f32 0.0, %v801
        %v803 = vpop.f32.mrf.mxu0
        %v804 = vpop.f32.mrf.mxu0
        %v805 = vadd.f32 0.0, %v804
        %v806 = vpop.f32.mrf.mxu0
        %807 = vdwg.mxu0
        %v808 = vadd.f32 %v471, %v746
        %v809 = vadd.f32 %v472, %v749
        %v810 = vadd.f32 %v473, %v754
        %v811 = vadd.f32 %v474, %v757
        %v812 = vadd.f32 %v475, %v762
        %v813 = vadd.f32 %v476, %v765
        %v814 = vadd.f32 %v477, %v770
        %v815 = vadd.f32 %v478, %v773
        %v816 = vadd.f32 %v479, %v778
        %v817 = vadd.f32 %v480, %v781
        %v818 = vadd.f32 %v481, %v786
        %v819 = vadd.f32 %v482, %v789
        %v820 = vadd.f32 %v483, %v794
        %v821 = vadd.f32 %v484, %v797
        %v822 = vadd.f32 %v485, %v802
        %v823 = vadd.f32 %v486, %v805
        %824 = vst [vmem:[%s448] sm:$0xff] %v808
        %825 = vst [vmem:[%s448 + $0x8] sm:$0xff] %v809
        %826 = vst [vmem:[%s448 + $0x10] sm:$0xff] %v810
        %827 = vst [vmem:[%s448 + $0x18] sm:$0xff] %v811
        %828 = vst [vmem:[%s448 + $0x20] sm:$0xff] %v812
        %829 = vst [vmem:[%s448 + $0x28] sm:$0xff] %v813
        %830 = vst [vmem:[%s448 + $0x30] sm:$0xff] %v814
        %831 = vst [vmem:[%s448 + $0x38] sm:$0xff] %v815
        %832 = vst [vmem:[%s448 + $0x40] sm:$0xff] %v816
        %833 = vst [vmem:[%s448 + $0x48] sm:$0xff] %v817
        %834 = vst [vmem:[%s448 + $0x50] sm:$0xff] %v818
        %835 = vst [vmem:[%s448 + $0x58] sm:$0xff] %v819
        %836 = vst [vmem:[%s448 + $0x60] sm:$0xff] %v820
        %837 = vst [vmem:[%s448 + $0x68] sm:$0xff] %v821
        %838 = vst [vmem:[%s448 + $0x70] sm:$0xff] %v822
        %839 = vst [vmem:[%s448 + $0x78] sm:$0xff] %v823
        %p840 = scmp.eq.s32.totalorder %s23, 1
        // Predicated region
        $region83: #{_lambda_.18} parent=73 // pred_check
          %p841 = pneg %p840
        $region84: #{_lambda_.18} parent=73 // pred_check_branch
          %843 = sbr.rel (%p841) target = $region86
        $region85: #{_lambda_.18} parent=73 // pred_region
          %v844 = vld [vmem:[%s448] sm:$0xff]
          %v845 = vld [vmem:[%s448 + $0x8] sm:$0xff]
          %v846 = vld [vmem:[%s448 + $0x10] sm:$0xff]
          %v847 = vld [vmem:[%s448 + $0x18] sm:$0xff]
          %v848 = vld [vmem:[%s448 + $0x20] sm:$0xff]
          %v849 = vld [vmem:[%s448 + $0x28] sm:$0xff]
          %v850 = vld [vmem:[%s448 + $0x30] sm:$0xff]
          %v851 = vld [vmem:[%s448 + $0x38] sm:$0xff]
          %v852 = vld [vmem:[%s448 + $0x40] sm:$0xff]
          %v853 = vld [vmem:[%s448 + $0x48] sm:$0xff]
          %v854 = vld [vmem:[%s448 + $0x50] sm:$0xff]
          %v855 = vld [vmem:[%s448 + $0x58] sm:$0xff]
          %v856 = vld [vmem:[%s448 + $0x60] sm:$0xff]
          %v857 = vld [vmem:[%s448 + $0x68] sm:$0xff]
          %v858 = vld [vmem:[%s448 + $0x70] sm:$0xff]
          %v859 = vld [vmem:[%s448 + $0x78] sm:$0xff]
          %v860 = vld [vmem:[%s428] sm:$0x1]
          %v862 = vlaneseq
          %v863 = vshrl.u32 %v862, 7
          %v864 = vsub.s32 0, %v863
          %v865 = vrot.slane %v860, %v864
          %v867 = vmul.f32 %v844, %v865
          %v868 = vmul.f32 %v845, %v865
          %v869 = vmul.f32 %v846, %v865
          %v870 = vmul.f32 %v847, %v865
          %v871 = vmul.f32 %v848, %v865
          %v872 = vmul.f32 %v849, %v865
          %v873 = vmul.f32 %v850, %v865
          %v874 = vmul.f32 %v851, %v865
          %v875 = vmul.f32 %v852, %v865
          %v876 = vmul.f32 %v853, %v865
          %v877 = vmul.f32 %v854, %v865
          %v878 = vmul.f32 %v855, %v865
          %v879 = vmul.f32 %v856, %v865
          %v880 = vmul.f32 %v857, %v865
          %v881 = vmul.f32 %v858, %v865
          %v882 = vmul.f32 %v859, %v865
          %v883 = vld [vmem:[%s431] sm:$0x1]
          %v885 = vlaneseq
          %v886 = vshrl.u32 %v885, 7
          %v887 = vsub.s32 0, %v886
          %v888 = vrot.slane %v883, %v887
          %v890 = vadd.f32 %v867, %v888
          %v891 = vadd.f32 %v868, %v888
          %v892 = vadd.f32 %v869, %v888
          %v893 = vadd.f32 %v870, %v888
          %v894 = vadd.f32 %v871, %v888
          %v895 = vadd.f32 %v872, %v888
          %v896 = vadd.f32 %v873, %v888
          %v897 = vadd.f32 %v874, %v888
          %v898 = vadd.f32 %v875, %v888
          %v899 = vadd.f32 %v876, %v888
          %v900 = vadd.f32 %v877, %v888
          %v901 = vadd.f32 %v878, %v888
          %v902 = vadd.f32 %v879, %v888
          %v903 = vadd.f32 %v880, %v888
          %v904 = vadd.f32 %v881, %v888
          %v905 = vadd.f32 %v882, %v888
          %v906 = vld [vmem:[%s439] sm:$0xff]
          %v907 = vld [vmem:[%s439 + $0x8] sm:$0xff]
          %v908 = vld [vmem:[%s439 + $0x10] sm:$0xff]
          %v909 = vld [vmem:[%s439 + $0x18] sm:$0xff]
          %v910 = vld [vmem:[%s439 + $0x20] sm:$0xff]
          %v911 = vld [vmem:[%s439 + $0x28] sm:$0xff]
          %v912 = vld [vmem:[%s439 + $0x30] sm:$0xff]
          %v913 = vld [vmem:[%s439 + $0x38] sm:$0xff]
          %v914 = vld [vmem:[%s439 + $0x40] sm:$0xff]
          %v915 = vld [vmem:[%s439 + $0x48] sm:$0xff]
          %v916 = vld [vmem:[%s439 + $0x50] sm:$0xff]
          %v917 = vld [vmem:[%s439 + $0x58] sm:$0xff]
          %v918 = vld [vmem:[%s439 + $0x60] sm:$0xff]
          %v919 = vld [vmem:[%s439 + $0x68] sm:$0xff]
          %v920 = vld [vmem:[%s439 + $0x70] sm:$0xff]
          %v921 = vld [vmem:[%s439 + $0x78] sm:$0xff]
          %v922 = vadd.f32 %v890, %v906
          %v923 = vadd.f32 %v891, %v907
          %v924 = vadd.f32 %v892, %v908
          %v925 = vadd.f32 %v893, %v909
          %v926 = vadd.f32 %v894, %v910
          %v927 = vadd.f32 %v895, %v911
          %v928 = vadd.f32 %v896, %v912
          %v929 = vadd.f32 %v897, %v913
          %v930 = vadd.f32 %v898, %v914
          %v931 = vadd.f32 %v899, %v915
          %v932 = vadd.f32 %v900, %v916
          %v933 = vadd.f32 %v901, %v917
          %v934 = vadd.f32 %v902, %v918
          %v935 = vadd.f32 %v903, %v919
          %v936 = vadd.f32 %v904, %v920
          %v937 = vadd.f32 %v905, %v921
          %v938 = vmax.f32 %v922, 0.0
          %v939 = vmax.f32 %v923, 0.0
          %v940 = vmax.f32 %v924, 0.0
          %v941 = vmax.f32 %v925, 0.0
          %v942 = vmax.f32 %v926, 0.0
          %v943 = vmax.f32 %v927, 0.0
          %v944 = vmax.f32 %v928, 0.0
          %v945 = vmax.f32 %v929, 0.0
          %v946 = vmax.f32 %v930, 0.0
          %v947 = vmax.f32 %v931, 0.0
          %v948 = vmax.f32 %v932, 0.0
          %v949 = vmax.f32 %v933, 0.0
          %v950 = vmax.f32 %v934, 0.0
          %v951 = vmax.f32 %v935, 0.0
          %v952 = vmax.f32 %v936, 0.0
          %v953 = vmax.f32 %v937, 0.0
          %954 = vst [vmem:[%s448] sm:$0xff] %v938
          %955 = vst [vmem:[%s448 + $0x8] sm:$0xff] %v939
          %956 = vst [vmem:[%s448 + $0x10] sm:$0xff] %v940
          %957 = vst [vmem:[%s448 + $0x18] sm:$0xff] %v941
          %958 = vst [vmem:[%s448 + $0x20] sm:$0xff] %v942
          %959 = vst [vmem:[%s448 + $0x28] sm:$0xff] %v943
          %960 = vst [vmem:[%s448 + $0x30] sm:$0xff] %v944
          %961 = vst [vmem:[%s448 + $0x38] sm:$0xff] %v945
          %962 = vst [vmem:[%s448 + $0x40] sm:$0xff] %v946
          %963 = vst [vmem:[%s448 + $0x48] sm:$0xff] %v947
          %964 = vst [vmem:[%s448 + $0x50] sm:$0xff] %v948
          %965 = vst [vmem:[%s448 + $0x58] sm:$0xff] %v949
          %966 = vst [vmem:[%s448 + $0x60] sm:$0xff] %v950
          %967 = vst [vmem:[%s448 + $0x68] sm:$0xff] %v951
          %968 = vst [vmem:[%s448 + $0x70] sm:$0xff] %v952
          %969 = vst [vmem:[%s448 + $0x78] sm:$0xff] %v953
        $region86: #{_lambda_.18} parent=73 // pred_fallthru
          _
        %s970 = smul.u32 16, %s21
        %p971 = scmp.lt.s32.totalorder %s970, 15
        %s972 = scalar_select %p971, %s970, 15
        %p973 = scmp.lt.s32.totalorder %s22, 0
        %s974 = scalar_select %p973, %s22, 0
        %s975 = sadd.s32 %s974, %s972
        %s976 = smul.addr %s975, 8
        %s977 = scalar_lea.vmem %s5, %s976
        // Predicated region
        $region87: #{_lambda_.18} parent=73 // pred_check
          %p978 = pneg %p191
        $region88: #{_lambda_.18} parent=73 // pred_check_branch
          %980 = sbr.rel (%p978) target = $region90
        $region89: #{_lambda_.18} parent=73 // pred_region
          %s981 = smul.u32 16, %s21
        $region90: #{_lambda_.18} parent=73 // pred_fallthru
          _
        // Predicated region
        $region91: #{_lambda_.18} parent=73 // pred_check
          %p982 = pneg %p191
        $region92: #{_lambda_.18} parent=73 // pred_check_branch
          %984 = sbr.rel (%p982) target = $region94
        $region93: #{_lambda_.18} parent=73 // pred_region
          %s985 = smul.u32 16, %s21
          %p986 = scmp.lt.s32.totalorder %s985, 15
          %s987 = scalar_select %p986, %s985, 15
          %p988 = scmp.lt.s32.totalorder %s22, 0
          %s989 = scalar_select %p988, %s22, 0
          %s990 = sadd.s32 %s989, %s987
          %s991 = smul.addr %s990, 8
          %s992 = scalar_lea.vmem %s5, %s991
        $region94: #{_lambda_.18} parent=73 // pred_fallthru
          _
      $region74: #{_lambda_.18} parent=5 // pred_fallthru
        _
      %p993 = scmp.le.s32.totalorder 2, %s11
      // Predicated region
      $region95: #{_lambda_.18} parent=5 // pred_check
        %p994 = pneg %p993
      $region96: #{_lambda_.18} parent=5 // pred_check_branch
        %996 = sbr.rel (%p994) target = $region98
      $region97: #{_lambda_.18} parent=5 // pred_region
        %s997 = ssub.s32 %s11, 2
      $region98: #{_lambda_.18} parent=5 // pred_fallthru
        _
    $region6: #{_lambda_.18} parent=1 // loop_footer
      %s15 = sadd.s32 1, %s11
    $region7: #{_lambda_.18} parent=1 // loop_footer_branch
      %10 = sbr.rel target = $region3
    $region8: #{_lambda_.18} parent=1 // loop_exit
      _

// kernel: _lambda_.17
$region0: #{_lambda_.17}
  #allocation0 [shape = 'u32[]', space=smem, size = 0x4, offset = 0x4, fixed_abs, tag = 'smem constant byte address 0x4 - core index']
  #allocation1 [shape = 'u32[144,128]{1,0:T(1,128)}', space=vmem, size = 0x12000, scoped, tag = 'internal scratch']
  %s0 = inlined_call_operand.vmem [shape: bf16[128,256], index: 0, kind: input, shape index: {}]
  %s1 = inlined_call_operand.vmem [shape: bf16[256,128], index: 1, kind: input, shape index: {}]
  %s2 = inlined_call_operand.vmem [shape: f32[1,128], index: 2, kind: input, shape index: {}]
  %s3 = inlined_call_operand.vmem [shape: f32[1,128], index: 3, kind: input, shape index: {}]
  %s4 = inlined_call_operand.vmem [shape: f32[128,128], index: 4, kind: output, shape index: {}]
  %s5 = sld [smem:[#allocation0]]
  $region34: #{_lambda_.17} parent=0
    _
  %s7 = ssub.s32 1, %s5
  %s8 = scalar_select 0, %s7, %s5
  // Predicated region
  $region2: #{_lambda_.17} parent=0 // pred_check
    _
  $region3: #{_lambda_.17} parent=0 // pred_check_branch
    %10 = sbr.rel (0) target = $region5
  $region4: #{_lambda_.17} parent=0 // pred_region
    _
  $region5: #{_lambda_.17} parent=0 // pred_fallthru
    _
  // Predicated region
  $region6: #{_lambda_.17} parent=0 // pred_check
    _
  $region7: #{_lambda_.17} parent=0 // pred_check_branch
    %12 = sbr.rel (0) target = $region9
  $region8: #{_lambda_.17} parent=0 // pred_region
    _
  $region9: #{_lambda_.17} parent=0 // pred_fallthru
    _
  // Predicated region
  $region10: #{_lambda_.17} parent=0 // pred_check
    _
  $region11: #{_lambda_.17} parent=0 // pred_check_branch
    %14 = sbr.rel (0) target = $region13
  $region12: #{_lambda_.17} parent=0 // pred_region
    _
  $region13: #{_lambda_.17} parent=0 // pred_fallthru
    _
  // Predicated region
  $region14: #{_lambda_.17} parent=0 // pred_check
    _
  $region15: #{_lambda_.17} parent=0 // pred_check_branch
    %16 = sbr.rel (0) target = $region17
  $region16: #{_lambda_.17} parent=0 // pred_region
    _
  $region17: #{_lambda_.17} parent=0 // pred_fallthru
    _
  %p18 = scmp.eq.s32.totalorder 0, 0
  // Predicated region
  $region18: #{_lambda_.17} parent=0 // pred_check
    %p19 = pneg %p18
  $region19: #{_lambda_.17} parent=0 // pred_check_branch
    %21 = sbr.rel (%p19) target = $region21
  $region20: #{_lambda_.17} parent=0 // pred_region
    %22 = vst [vmem:[%s4] sm:$0xff] 0.0
    %23 = vst [vmem:[%s4 + $0x8] sm:$0xff] 0.0
    %24 = vst [vmem:[%s4 + $0x10] sm:$0xff] 0.0
    %25 = vst [vmem:[%s4 + $0x18] sm:$0xff] 0.0
    %26 = vst [vmem:[%s4 + $0x20] sm:$0xff] 0.0
    %27 = vst [vmem:[%s4 + $0x28] sm:$0xff] 0.0
    %28 = vst [vmem:[%s4 + $0x30] sm:$0xff] 0.0
    %29 = vst [vmem:[%s4 + $0x38] sm:$0xff] 0.0
    %30 = vst [vmem:[%s4 + $0x40] sm:$0xff] 0.0
    %31 = vst [vmem:[%s4 + $0x48] sm:$0xff] 0.0
    %32 = vst [vmem:[%s4 + $0x50] sm:$0xff] 0.0
    %33 = vst [vmem:[%s4 + $0x58] sm:$0xff] 0.0
    %34 = vst [vmem:[%s4 + $0x60] sm:$0xff] 0.0
    %35 = vst [vmem:[%s4 + $0x68] sm:$0xff] 0.0
    %36 = vst [vmem:[%s4 + $0x70] sm:$0xff] 0.0
    %37 = vst [vmem:[%s4 + $0x78] sm:$0xff] 0.0
  $region21: #{_lambda_.17} parent=0 // pred_fallthru
    _
  %v38 = vld [vmem:[%s4] sm:$0xff]
  %v39 = vld [vmem:[%s4 + $0x8] sm:$0xff]
  %v40 = vld [vmem:[%s4 + $0x10] sm:$0xff]
  %v41 = vld [vmem:[%s4 + $0x18] sm:$0xff]
  %v42 = vld [vmem:[%s4 + $0x20] sm:$0xff]
  %v43 = vld [vmem:[%s4 + $0x28] sm:$0xff]
  %v44 = vld [vmem:[%s4 + $0x30] sm:$0xff]
  %v45 = vld [vmem:[%s4 + $0x38] sm:$0xff]
  %v46 = vld [vmem:[%s4 + $0x40] sm:$0xff]
  %v47 = vld [vmem:[%s4 + $0x48] sm:$0xff]
  %v48 = vld [vmem:[%s4 + $0x50] sm:$0xff]
  %v49 = vld [vmem:[%s4 + $0x58] sm:$0xff]
  %v50 = vld [vmem:[%s4 + $0x60] sm:$0xff]
  %v51 = vld [vmem:[%s4 + $0x68] sm:$0xff]
  %v52 = vld [vmem:[%s4 + $0x70] sm:$0xff]
  %v53 = vld [vmem:[%s4 + $0x78] sm:$0xff]
  %v54 = vld [vmem:[%s0] sm:$0xff]
  %v55 = vld [vmem:[%s0 + $0x8] sm:$0xff]
  %v56 = vld [vmem:[%s0 + $0x10] sm:$0xff]
  %v57 = vld [vmem:[%s0 + $0x18] sm:$0xff]
  %v58 = vld [vmem:[%s0 + $0x20] sm:$0xff]
  %v59 = vld [vmem:[%s0 + $0x28] sm:$0xff]
  %v60 = vld [vmem:[%s0 + $0x30] sm:$0xff]
  %v61 = vld [vmem:[%s0 + $0x38] sm:$0xff]
  %v62 = vld [vmem:[%s0 + $0x40] sm:$0xff]
  %v63 = vld [vmem:[%s0 + $0x48] sm:$0xff]
  %v64 = vld [vmem:[%s0 + $0x50] sm:$0xff]
  %v65 = vld [vmem:[%s0 + $0x58] sm:$0xff]
  %v66 = vld [vmem:[%s0 + $0x60] sm:$0xff]
  %v67 = vld [vmem:[%s0 + $0x68] sm:$0xff]
  %v68 = vld [vmem:[%s0 + $0x70] sm:$0xff]
  %v69 = vld [vmem:[%s0 + $0x78] sm:$0xff]
  %v70 = vld [vmem:[%s1] sm:$0xf]
  %v71 = vld [vmem:[%s1 + $0x4] sm:$0xf]
  %v72 = vld [vmem:[%s1 + $0x8] sm:$0xf]
  %v73 = vld [vmem:[%s1 + $0xc] sm:$0xf]
  %v74 = vld [vmem:[%s1 + $0x10] sm:$0xf]
  %v75 = vld [vmem:[%s1 + $0x14] sm:$0xf]
  %v76 = vld [vmem:[%s1 + $0x18] sm:$0xf]
  %v77 = vld [vmem:[%s1 + $0x1c] sm:$0xf]
  %v78 = vld [vmem:[%s1 + $0x20] sm:$0xf]
  %v79 = vld [vmem:[%s1 + $0x24] sm:$0xf]
  %v80 = vld [vmem:[%s1 + $0x28] sm:$0xf]
  %v81 = vld [vmem:[%s1 + $0x2c] sm:$0xf]
  %v82 = vld [vmem:[%s1 + $0x30] sm:$0xf]
  %v83 = vld [vmem:[%s1 + $0x34] sm:$0xf]
  %v84 = vld [vmem:[%s1 + $0x38] sm:$0xf]
  %v85 = vld [vmem:[%s1 + $0x3c] sm:$0xf]
  %v86 = vld [vmem:[%s1 + $0x40] sm:$0xf]
  %v87 = vld [vmem:[%s1 + $0x44] sm:$0xf]
  %v88 = vld [vmem:[%s1 + $0x48] sm:$0xf]
  %v89 = vld [vmem:[%s1 + $0x4c] sm:$0xf]
  %v90 = vld [vmem:[%s1 + $0x50] sm:$0xf]
  %v91 = vld [vmem:[%s1 + $0x54] sm:$0xf]
  %v92 = vld [vmem:[%s1 + $0x58] sm:$0xf]
  %v93 = vld [vmem:[%s1 + $0x5c] sm:$0xf]
  %v94 = vld [vmem:[%s1 + $0x60] sm:$0xf]
  %v95 = vld [vmem:[%s1 + $0x64] sm:$0xf]
  %v96 = vld [vmem:[%s1 + $0x68] sm:$0xf]
  %v97 = vld [vmem:[%s1 + $0x6c] sm:$0xf]
  %v98 = vld [vmem:[%s1 + $0x70] sm:$0xf]
  %v99 = vld [vmem:[%s1 + $0x74] sm:$0xf]
  %v100 = vld [vmem:[%s1 + $0x78] sm:$0xf]
  %v101 = vld [vmem:[%s1 + $0x7c] sm:$0xf]
  %v118 = vunpack.c.l.b16 %v54
  %v119 = vunpack.c.h.b16 %v54
  %v120 = vunpack.c.l.b16 %v55
  %v121 = vunpack.c.h.b16 %v55
  %v122 = vunpack.c.l.b16 %v56
  %v123 = vunpack.c.h.b16 %v56
  %v124 = vunpack.c.l.b16 %v57
  %v125 = vunpack.c.h.b16 %v57
  %v126 = vunpack.c.l.b16 %v58
  %v127 = vunpack.c.h.b16 %v58
  %v128 = vunpack.c.l.b16 %v59
  %v129 = vunpack.c.h.b16 %v59
  %v130 = vunpack.c.l.b16 %v60
  %v131 = vunpack.c.h.b16 %v60
  %v132 = vunpack.c.l.b16 %v61
  %v133 = vunpack.c.h.b16 %v61
  %v134 = vunpack.c.l.b16 %v62
  %v135 = vunpack.c.h.b16 %v62
  %v136 = vunpack.c.l.b16 %v63
  %v137 = vunpack.c.h.b16 %v63
  %v138 = vunpack.c.l.b16 %v64
  %v139 = vunpack.c.h.b16 %v64
  %v140 = vunpack.c.l.b16 %v65
  %v141 = vunpack.c.h.b16 %v65
  %v142 = vunpack.c.l.b16 %v66
  %v143 = vunpack.c.h.b16 %v66
  %v144 = vunpack.c.l.b16 %v67
  %v145 = vunpack.c.h.b16 %v67
  %v146 = vunpack.c.l.b16 %v68
  %v147 = vunpack.c.h.b16 %v68
  %v148 = vunpack.c.l.b16 %v69
  %v149 = vunpack.c.h.b16 %v69
  %v150 = vpack.c.b16 %v120, %v118
  %v151 = vpack.c.b16 %v121, %v119
  %v152 = vpack.c.b16 %v124, %v122
  %v153 = vpack.c.b16 %v125, %v123
  %v154 = vpack.c.b16 %v128, %v126
  %v155 = vpack.c.b16 %v129, %v127
  %v156 = vpack.c.b16 %v132, %v130
  %v157 = vpack.c.b16 %v133, %v131
  %v158 = vpack.c.b16 %v136, %v134
  %v159 = vpack.c.b16 %v137, %v135
  %v160 = vpack.c.b16 %v140, %v138
  %v161 = vpack.c.b16 %v141, %v139
  %v162 = vpack.c.b16 %v144, %v142
  %v163 = vpack.c.b16 %v145, %v143
  %v164 = vpack.c.b16 %v148, %v146
  %v165 = vpack.c.b16 %v149, %v147
  %v214 = vunpack.c.l.b16 %v70
  %v215 = vunpack.c.l.b16 %v71
  %v216 = vunpack.c.l.b16 %v72
  %v217 = vunpack.c.l.b16 %v73
  %v218 = vunpack.c.l.b16 %v74
  %v219 = vunpack.c.l.b16 %v75
  %v220 = vunpack.c.l.b16 %v76
  %v221 = vunpack.c.l.b16 %v77
  %v222 = vunpack.c.l.b16 %v78
  %v223 = vunpack.c.l.b16 %v79
  %v224 = vunpack.c.l.b16 %v80
  %v225 = vunpack.c.l.b16 %v81
  %v226 = vunpack.c.l.b16 %v82
  %v227 = vunpack.c.l.b16 %v83
  %v228 = vunpack.c.l.b16 %v84
  %v229 = vunpack.c.l.b16 %v85
  %v230 = vunpack.c.l.b16 %v86
  %v231 = vunpack.c.l.b16 %v87
  %v232 = vunpack.c.l.b16 %v88
  %v233 = vunpack.c.l.b16 %v89
  %v234 = vunpack.c.l.b16 %v90
  %v235 = vunpack.c.l.b16 %v91
  %v236 = vunpack.c.l.b16 %v92
  %v237 = vunpack.c.l.b16 %v93
  %v238 = vunpack.c.l.b16 %v94
  %v239 = vunpack.c.l.b16 %v95
  %v240 = vunpack.c.l.b16 %v96
  %v241 = vunpack.c.l.b16 %v97
  %v242 = vunpack.c.l.b16 %v98
  %v243 = vunpack.c.l.b16 %v99
  %v244 = vunpack.c.l.b16 %v100
  %v245 = vunpack.c.l.b16 %v101
  %v246 = vpack.c.b16 %v215, %v214
  %v247 = vpack.c.b16 %v217, %v216
  %v248 = vpack.c.b16 %v219, %v218
  %v249 = vpack.c.b16 %v221, %v220
  %v250 = vpack.c.b16 %v223, %v222
  %v251 = vpack.c.b16 %v225, %v224
  %v252 = vpack.c.b16 %v227, %v226
  %v253 = vpack.c.b16 %v229, %v228
  %v254 = vpack.c.b16 %v231, %v230
  %v255 = vpack.c.b16 %v233, %v232
  %v256 = vpack.c.b16 %v235, %v234
  %v257 = vpack.c.b16 %v237, %v236
  %v258 = vpack.c.b16 %v239, %v238
  %v259 = vpack.c.b16 %v241, %v240
  %v260 = vpack.c.b16 %v243, %v242
  %v261 = vpack.c.b16 %v245, %v244
  %278 = vmatprep.subr.bf16.mxu0 0
  %279 = vmatpush1.bf16.msra.mxu0 %v253
  %280 = vmatprep.subr.bf16.mxu0 0
  %281 = vmatpush1.bf16.msra.mxu0 %v252
  %282 = vmatprep.subr.bf16.mxu0 0
  %283 = vmatpush1.bf16.msra.mxu0 %v251
  %284 = vmatprep.subr.bf16.mxu0 0
  %285 = vmatpush1.bf16.msra.mxu0 %v250
  %286 = vmatprep.subr.bf16.mxu0 0
  %287 = vmatpush1.bf16.msra.mxu0 %v249
  %288 = vmatprep.subr.bf16.mxu0 0
  %289 = vmatpush1.bf16.msra.mxu0 %v248
  %290 = vmatprep.subr.bf16.mxu0 0
  %291 = vmatpush1.bf16.msra.mxu0 %v247
  %292 = vmatprep.subr.bf16.mxu0 0
  %293 = vmatpush1.bf16.msra.mxu0 %v246
  %294 = vmatprep.subr.bf16.mxu0 0
  %295 = vmatpush2.bf16.msra.mxu0 %v261
  %296 = vmatprep.subr.bf16.mxu0 0
  %297 = vmatpush2.bf16.msra.mxu0 %v260
  %298 = vmatprep.subr.bf16.mxu0 0
  %299 = vmatpush2.bf16.msra.mxu0 %v259
  %300 = vmatprep.subr.bf16.mxu0 0
  %301 = vmatpush2.bf16.msra.mxu0 %v258
  %302 = vmatprep.subr.bf16.mxu0 0
  %303 = vmatpush2.bf16.msra.mxu0 %v257
  %304 = vmatprep.subr.bf16.mxu0 0
  %305 = vmatpush2.bf16.msra.mxu0 %v256
  %306 = vmatprep.subr.bf16.mxu0 0
  %307 = vmatpush2.bf16.msra.mxu0 %v255
  %308 = vmatprep.subr.bf16.mxu0 0
  %309 = vmatpush2.bf16.msra.mxu0 %v254
  %310 = vmatprep.mubr.bf16.mxu0 %v151
  %311 = vmatmul.mubr.bf16.gmra.mxu0 %v150
  %v312 = vpop.f32.mrf.mxu0
  %v313 = vadd.f32 0.0, %v312
  %v314 = vpop.f32.mrf.mxu0
  %v315 = vpop.f32.mrf.mxu0
  %v316 = vadd.f32 0.0, %v315
  %v317 = vpop.f32.mrf.mxu0
  %318 = vmatprep.mubr.bf16.mxu0 %v153
  %319 = vmatmul.mubr.bf16.gmra.mxu0 %v152
  %v320 = vpop.f32.mrf.mxu0
  %v321 = vadd.f32 0.0, %v320
  %v322 = vpop.f32.mrf.mxu0
  %v323 = vpop.f32.mrf.mxu0
  %v324 = vadd.f32 0.0, %v323
  %v325 = vpop.f32.mrf.mxu0
  %326 = vmatprep.mubr.bf16.mxu0 %v155
  %327 = vmatmul.mubr.bf16.gmra.mxu0 %v154
  %v328 = vpop.f32.mrf.mxu0
  %v329 = vadd.f32 0.0, %v328
  %v330 = vpop.f32.mrf.mxu0
  %v331 = vpop.f32.mrf.mxu0
  %v332 = vadd.f32 0.0, %v331
  %v333 = vpop.f32.mrf.mxu0
  %334 = vmatprep.mubr.bf16.mxu0 %v157
  %335 = vmatmul.mubr.bf16.gmra.mxu0 %v156
  %v336 = vpop.f32.mrf.mxu0
  %v337 = vadd.f32 0.0, %v336
  %v338 = vpop.f32.mrf.mxu0
  %v339 = vpop.f32.mrf.mxu0
  %v340 = vadd.f32 0.0, %v339
  %v341 = vpop.f32.mrf.mxu0
  %342 = vmatprep.mubr.bf16.mxu0 %v159
  %343 = vmatmul.mubr.bf16.gmra.mxu0 %v158
  %v344 = vpop.f32.mrf.mxu0
  %v345 = vadd.f32 0.0, %v344
  %v346 = vpop.f32.mrf.mxu0
  %v347 = vpop.f32.mrf.mxu0
  %v348 = vadd.f32 0.0, %v347
  %v349 = vpop.f32.mrf.mxu0
  %350 = vmatprep.mubr.bf16.mxu0 %v161
  %351 = vmatmul.mubr.bf16.gmra.mxu0 %v160
  %v352 = vpop.f32.mrf.mxu0
  %v353 = vadd.f32 0.0, %v352
  %v354 = vpop.f32.mrf.mxu0
  %v355 = vpop.f32.mrf.mxu0
  %v356 = vadd.f32 0.0, %v355
  %v357 = vpop.f32.mrf.mxu0
  %358 = vmatprep.mubr.bf16.mxu0 %v163
  %359 = vmatmul.mubr.bf16.gmra.mxu0 %v162
  %v360 = vpop.f32.mrf.mxu0
  %v361 = vadd.f32 0.0, %v360
  %v362 = vpop.f32.mrf.mxu0
  %v363 = vpop.f32.mrf.mxu0
  %v364 = vadd.f32 0.0, %v363
  %v365 = vpop.f32.mrf.mxu0
  %366 = vmatprep.mubr.bf16.mxu0 %v165
  %367 = vmatmul.mubr.bf16.gmra.mxu0 %v164
  %v368 = vpop.f32.mrf.mxu0
  %v369 = vadd.f32 0.0, %v368
  %v370 = vpop.f32.mrf.mxu0
  %v371 = vpop.f32.mrf.mxu0
  %v372 = vadd.f32 0.0, %v371
  %v373 = vpop.f32.mrf.mxu0
  %374 = vdwg.mxu0
  %v375 = vadd.f32 %v38, %v313
  %v376 = vadd.f32 %v39, %v316
  %v377 = vadd.f32 %v40, %v321
  %v378 = vadd.f32 %v41, %v324
  %v379 = vadd.f32 %v42, %v329
  %v380 = vadd.f32 %v43, %v332
  %v381 = vadd.f32 %v44, %v337
  %v382 = vadd.f32 %v45, %v340
  %v383 = vadd.f32 %v46, %v345
  %v384 = vadd.f32 %v47, %v348
  %v385 = vadd.f32 %v48, %v353
  %v386 = vadd.f32 %v49, %v356
  %v387 = vadd.f32 %v50, %v361
  %v388 = vadd.f32 %v51, %v364
  %v389 = vadd.f32 %v52, %v369
  %v390 = vadd.f32 %v53, %v372
  %391 = vst [vmem:[%s4] sm:$0xff] %v375
  %392 = vst [vmem:[%s4 + $0x8] sm:$0xff] %v376
  %393 = vst [vmem:[%s4 + $0x10] sm:$0xff] %v377
  %394 = vst [vmem:[%s4 + $0x18] sm:$0xff] %v378
  %395 = vst [vmem:[%s4 + $0x20] sm:$0xff] %v379
  %396 = vst [vmem:[%s4 + $0x28] sm:$0xff] %v380
  %397 = vst [vmem:[%s4 + $0x30] sm:$0xff] %v381
  %398 = vst [vmem:[%s4 + $0x38] sm:$0xff] %v382
  %399 = vst [vmem:[%s4 + $0x40] sm:$0xff] %v383
  %400 = vst [vmem:[%s4 + $0x48] sm:$0xff] %v384
  %401 = vst [vmem:[%s4 + $0x50] sm:$0xff] %v385
  %402 = vst [vmem:[%s4 + $0x58] sm:$0xff] %v386
  %403 = vst [vmem:[%s4 + $0x60] sm:$0xff] %v387
  %404 = vst [vmem:[%s4 + $0x68] sm:$0xff] %v388
  %405 = vst [vmem:[%s4 + $0x70] sm:$0xff] %v389
  %406 = vst [vmem:[%s4 + $0x78] sm:$0xff] %v390
  // Predicated region
  $region22: #{_lambda_.17} parent=0 // pred_check
    %p407 = pneg %p18
  $region23: #{_lambda_.17} parent=0 // pred_check_branch
    %409 = sbr.rel (%p407) target = $region25
  $region24: #{_lambda_.17} parent=0 // pred_region
    %v410 = vld [vmem:[%s4] sm:$0xff]
    %v411 = vld [vmem:[%s4 + $0x8] sm:$0xff]
    %v412 = vld [vmem:[%s4 + $0x10] sm:$0xff]
    %v413 = vld [vmem:[%s4 + $0x18] sm:$0xff]
    %v414 = vld [vmem:[%s4 + $0x20] sm:$0xff]
    %v415 = vld [vmem:[%s4 + $0x28] sm:$0xff]
    %v416 = vld [vmem:[%s4 + $0x30] sm:$0xff]
    %v417 = vld [vmem:[%s4 + $0x38] sm:$0xff]
    %v418 = vld [vmem:[%s4 + $0x40] sm:$0xff]
    %v419 = vld [vmem:[%s4 + $0x48] sm:$0xff]
    %v420 = vld [vmem:[%s4 + $0x50] sm:$0xff]
    %v421 = vld [vmem:[%s4 + $0x58] sm:$0xff]
    %v422 = vld [vmem:[%s4 + $0x60] sm:$0xff]
    %v423 = vld [vmem:[%s4 + $0x68] sm:$0xff]
    %v424 = vld [vmem:[%s4 + $0x70] sm:$0xff]
    %v425 = vld [vmem:[%s4 + $0x78] sm:$0xff]
    %v426 = vld [vmem:[%s2] sm:$0x1]
    %v428 = vlaneseq
    %v429 = vshrl.u32 %v428, 7
    %v430 = vsub.s32 0, %v429
    %v431 = vrot.slane %v426, %v430
    %v433 = vmul.f32 %v410, %v431
    %v434 = vmul.f32 %v411, %v431
    %v435 = vmul.f32 %v412, %v431
    %v436 = vmul.f32 %v413, %v431
    %v437 = vmul.f32 %v414, %v431
    %v438 = vmul.f32 %v415, %v431
    %v439 = vmul.f32 %v416, %v431
    %v440 = vmul.f32 %v417, %v431
    %v441 = vmul.f32 %v418, %v431
    %v442 = vmul.f32 %v419, %v431
    %v443 = vmul.f32 %v420, %v431
    %v444 = vmul.f32 %v421, %v431
    %v445 = vmul.f32 %v422, %v431
    %v446 = vmul.f32 %v423, %v431
    %v447 = vmul.f32 %v424, %v431
    %v448 = vmul.f32 %v425, %v431
    %v449 = vld [vmem:[%s3] sm:$0x1]
    %v451 = vlaneseq
    %v452 = vshrl.u32 %v451, 7
    %v453 = vsub.s32 0, %v452
    %v454 = vrot.slane %v449, %v453
    %v456 = vadd.f32 %v433, %v454
    %v457 = vadd.f32 %v434, %v454
    %v458 = vadd.f32 %v435, %v454
    %v459 = vadd.f32 %v436, %v454
    %v460 = vadd.f32 %v437, %v454
    %v461 = vadd.f32 %v438, %v454
    %v462 = vadd.f32 %v439, %v454
    %v463 = vadd.f32 %v440, %v454
    %v464 = vadd.f32 %v441, %v454
    %v465 = vadd.f32 %v442, %v454
    %v466 = vadd.f32 %v443, %v454
    %v467 = vadd.f32 %v444, %v454
    %v468 = vadd.f32 %v445, %v454
    %v469 = vadd.f32 %v446, %v454
    %v470 = vadd.f32 %v447, %v454
    %v471 = vadd.f32 %v448, %v454
    %472 = vst [vmem:[%s4] sm:$0xff] %v456
    %473 = vst [vmem:[%s4 + $0x8] sm:$0xff] %v457
    %474 = vst [vmem:[%s4 + $0x10] sm:$0xff] %v458
    %475 = vst [vmem:[%s4 + $0x18] sm:$0xff] %v459
    %476 = vst [vmem:[%s4 + $0x20] sm:$0xff] %v460
    %477 = vst [vmem:[%s4 + $0x28] sm:$0xff] %v461
    %478 = vst [vmem:[%s4 + $0x30] sm:$0xff] %v462
    %479 = vst [vmem:[%s4 + $0x38] sm:$0xff] %v463
    %480 = vst [vmem:[%s4 + $0x40] sm:$0xff] %v464
    %481 = vst [vmem:[%s4 + $0x48] sm:$0xff] %v465
    %482 = vst [vmem:[%s4 + $0x50] sm:$0xff] %v466
    %483 = vst [vmem:[%s4 + $0x58] sm:$0xff] %v467
    %484 = vst [vmem:[%s4 + $0x60] sm:$0xff] %v468
    %485 = vst [vmem:[%s4 + $0x68] sm:$0xff] %v469
    %486 = vst [vmem:[%s4 + $0x70] sm:$0xff] %v470
    %487 = vst [vmem:[%s4 + $0x78] sm:$0xff] %v471
  $region25: #{_lambda_.17} parent=0 // pred_fallthru
    _
  // Predicated region
  $region26: #{_lambda_.17} parent=0 // pred_check
    _
  $region27: #{_lambda_.17} parent=0 // pred_check_branch
    %489 = sbr.rel (0) target = $region29
  $region28: #{_lambda_.17} parent=0 // pred_region
    _
  $region29: #{_lambda_.17} parent=0 // pred_fallthru
    _
  // Predicated region
  $region30: #{_lambda_.17} parent=0 // pred_check
    _
  $region31: #{_lambda_.17} parent=0 // pred_check_branch
    %491 = sbr.rel (0) target = $region33
  $region32: #{_lambda_.17} parent=0 // pred_region
    _
  $region33: #{_lambda_.17} parent=0 // pred_fallthru
    _

// kernel: _lambda_.19
$region0: #{_lambda_.19}
  #allocation0 [shape = 'u32[]', space=smem, size = 0x4, offset = 0x4, fixed_abs, tag = 'smem constant byte address 0x4 - core index']
  #allocation1 [shape = 'u32[144,128]{1,0:T(1,128)}', space=vmem, size = 0x12000, scoped, tag = 'internal scratch']
  %s0 = inlined_call_operand.vmem [shape: bf16[32,512], index: 0, kind: input, shape index: {}]
  %s1 = inlined_call_operand.vmem [shape: bf16[512,128], index: 1, kind: input, shape index: {}]
  %s2 = inlined_call_operand.vmem [shape: f32[1,128], index: 2, kind: input, shape index: {}]
  %s3 = inlined_call_operand.vmem [shape: f32[1,128], index: 3, kind: input, shape index: {}]
  %s4 = inlined_call_operand.vmem [shape: f32[32,128], index: 4, kind: output, shape index: {}]
  %s5 = sld [smem:[#allocation0]]
  $region95: #{_lambda_.19} parent=0
    _
  %s7 = ssub.s32 1, %s5
  %s8 = scalar_select 0, %s7, %s5
  $region1: #{_lambda_.19} parent=0
    #allocation2 [shape = 'u8[32768]{0}', space=vmem, size = 0x8000, scoped, tag = 'input window, operand 0']
    loop: start=0, step=1, limit=4
    $region2: #{_lambda_.19} parent=1 // loop_pre_header
      _
    $region3: #{_lambda_.19} parent=1 // loop_header
      %s10 = sphi 0, %s14
      %p11 = scmp.ge.s32.totalorder %s10, 4
      %s17 = sphi 0, %s36
      %s18 = sphi 0, %s32
      %s19 = sphi 0, %s28
      %s20 = sphi 0, %s17
      %s21 = sphi 0, %s18
      %s22 = sphi 0, %s19
      %s23 = sphi 0, %s20
      %s24 = sphi 0, %s21
      %s25 = sphi 0, %s22
      %s41 = sphi 0, %s43
      %s44 = sphi 0, %s41
      %s45 = sphi 0, %s44
      %s61 = sphi 0, %s45
      %s69 = sphi 0, %s71
      %s72 = sphi 0, %s69
      %s73 = sphi 0, %s72
      %s89 = sphi 0, %s73
      %s95 = sphi 0, %s97
      %s98 = sphi 0, %s95
      %s99 = sphi 0, %s98
      %s115 = sphi 0, %s99
      %s121 = sphi 0, %s123
      %s124 = sphi 0, %s121
      %s125 = sphi 0, %s124
      %s141 = sphi 0, %s125
      %s149 = sphi 0, %s151
      %s152 = sphi 0, %s149
      %s153 = sphi 0, %s152
      %s169 = sphi 0, %s153
    $region4: #{_lambda_.19} parent=1 // loop_header_branch
      %13 = sbr.rel (%p11) target = $region8
    $region5: #{_lambda_.19} parent=1 // loop_body
      %s15 = ssub.s32 %s10, 1
      %s16 = ssub.s32 %s10, 2
      %s26 = sadd.s32 1, %s19
      %p27 = scmp.ge.s32.totalorder %s26, 2
      %s28 = scalar_select %p27, 0, %s26
      %s29 = sadd.s32 1, %s18
      %s30 = scalar_select %p27, %s29, %s18
      %p31 = scmp.ge.s32.totalorder %s30, 1
      %s32 = scalar_select %p31, 0, %s30
      %s33 = sadd.s32 1, %s17
      %s34 = scalar_select %p31, %s33, %s17
      %p35 = scmp.ge.s32.totalorder %s34, 1
      %s36 = scalar_select %p35, 0, %s34
      %s37 = ssub.s32 %s17, %s36
      %s38 = ssub.s32 %s19, %s28
      %s39 = sor.u32 %s37, %s38
      %p40 = scmp.eq.s32.totalorder %s39, 0
      %s42 = sadd.s32 %s41, 1
      %s43 = scalar_select %p40, %s41, %s42
      %p46 = pneg %p40
      %p47 = scmp.eq.s32.totalorder %s10, 1
      %p48 = por %p46, %p47
      %p49 = scmp.ne.s32.totalorder %s41, %s44
      %p50 = scmp.eq.s32.totalorder %s10, 0
      %p51 = por %p49, %p50
      %p52 = scmp.ne.s32.totalorder %s41, %s44
      %p53 = scmp.eq.s32.totalorder %s15, 1
      %p54 = por %p52, %p53
      %p55 = scmp.ne.s32.totalorder %s44, %s45
      %p56 = scmp.eq.s32.totalorder %s15, 0
      %p57 = por %p55, %p56
      %p58 = scmp.ne.s32.totalorder %s44, %s45
      %p59 = scmp.eq.s32.totalorder %s16, 1
      %p60 = por %p58, %p59
      %p62 = scmp.ne.s32.totalorder %s45, %s61
      %p63 = scmp.eq.s32.totalorder %s16, 0
      %p64 = por %p62, %p63
      %s65 = ssub.s32 %s19, %s28
      %s66 = ssub.s32 %s18, %s32
      %s67 = sor.u32 %s65, %s66
      %p68 = scmp.eq.s32.totalorder %s67, 0
      %s70 = sadd.s32 %s69, 1
      %s71 = scalar_select %p68, %s69, %s70
      %p74 = pneg %p68
      %p75 = scmp.eq.s32.totalorder %s10, 1
      %p76 = por %p74, %p75
      %p77 = scmp.ne.s32.totalorder %s69, %s72
      %p78 = scmp.eq.s32.totalorder %s10, 0
      %p79 = por %p77, %p78
      %p80 = scmp.ne.s32.totalorder %s69, %s72
      %p81 = scmp.eq.s32.totalorder %s15, 1
      %p82 = por %p80, %p81
      %p83 = scmp.ne.s32.totalorder %s72, %s73
      %p84 = scmp.eq.s32.totalorder %s15, 0
      %p85 = por %p83, %p84
      %p86 = scmp.ne.s32.totalorder %s72, %s73
      %p87 = scmp.eq.s32.totalorder %s16, 1
      %p88 = por %p86, %p87
      %p90 = scmp.ne.s32.totalorder %s73, %s89
      %p91 = scmp.eq.s32.totalorder %s16, 0
      %p92 = por %p90, %p91
      %s93 = ssub.s32 %s18, %s32
      %p94 = scmp.eq.s32.totalorder %s93, 0
      %s96 = sadd.s32 %s95, 1
      %s97 = scalar_select %p94, %s95, %s96
      %p100 = pneg %p94
      %p101 = scmp.eq.s32.totalorder %s10, 1
      %p102 = por %p100, %p101
      %p103 = scmp.ne.s32.totalorder %s95, %s98
      %p104 = scmp.eq.s32.totalorder %s10, 0
      %p105 = por %p103, %p104
      %p106 = scmp.ne.s32.totalorder %s95, %s98
      %p107 = scmp.eq.s32.totalorder %s15, 1
      %p108 = por %p106, %p107
      %p109 = scmp.ne.s32.totalorder %s98, %s99
      %p110 = scmp.eq.s32.totalorder %s15, 0
      %p111 = por %p109, %p110
      %p112 = scmp.ne.s32.totalorder %s98, %s99
      %p113 = scmp.eq.s32.totalorder %s16, 1
      %p114 = por %p112, %p113
      %p116 = scmp.ne.s32.totalorder %s99, %s115
      %p117 = scmp.eq.s32.totalorder %s16, 0
      %p118 = por %p116, %p117
      %s119 = ssub.s32 %s18, %s32
      %p120 = scmp.eq.s32.totalorder %s119, 0
      %s122 = sadd.s32 %s121, 1
      %s123 = scalar_select %p120, %s121, %s122
      %p126 = pneg %p120
      %p127 = scmp.eq.s32.totalorder %s10, 1
      %p128 = por %p126, %p127
      %p129 = scmp.ne.s32.totalorder %s121, %s124
      %p130 = scmp.eq.s32.totalorder %s10, 0
      %p131 = por %p129, %p130
      %p132 = scmp.ne.s32.totalorder %s121, %s124
      %p133 = scmp.eq.s32.totalorder %s15, 1
      %p134 = por %p132, %p133
      %p135 = scmp.ne.s32.totalorder %s124, %s125
      %p136 = scmp.eq.s32.totalorder %s15, 0
      %p137 = por %p135, %p136
      %p138 = scmp.ne.s32.totalorder %s124, %s125
      %p139 = scmp.eq.s32.totalorder %s16, 1
      %p140 = por %p138, %p139
      %p142 = scmp.ne.s32.totalorder %s125, %s141
      %p143 = scmp.eq.s32.totalorder %s16, 0
      %p144 = por %p142, %p143
      %s145 = ssub.s32 %s17, %s36
      %s146 = ssub.s32 %s18, %s32
      %s147 = sor.u32 %s145, %s146
      %p148 = scmp.eq.s32.totalorder %s147, 0
      %s150 = sadd.s32 %s149, 1
      %s151 = scalar_select %p148, %s149, %s150
      %p154 = pneg %p148
      %p155 = scmp.eq.s32.totalorder %s10, 1
      %p156 = por %p154, %p155
      %p157 = scmp.ne.s32.totalorder %s149, %s152
      %p158 = scmp.eq.s32.totalorder %s10, 0
      %p159 = por %p157, %p158
      %p160 = scmp.ne.s32.totalorder %s149, %s152
      %p161 = scmp.eq.s32.totalorder %s15, 1
      %p162 = por %p160, %p161
      %p163 = scmp.ne.s32.totalorder %s152, %s153
      %p164 = scmp.eq.s32.totalorder %s15, 0
      %p165 = por %p163, %p164
      %p166 = scmp.ne.s32.totalorder %s152, %s153
      %p167 = scmp.eq.s32.totalorder %s16, 1
      %p168 = por %p166, %p167
      %p170 = scmp.ne.s32.totalorder %s153, %s169
      %p171 = scmp.eq.s32.totalorder %s16, 0
      %p172 = por %p170, %p171
      %p173 = scmp.le.s32.totalorder 1, %s10
      %p174 = scmp.lt.s32.totalorder %s10, 3
      %p175 = pnand %p173, %p174
      %p176 = pneg %p175
      // Predicated region
      $region9: #{_lambda_.19} parent=5 // pred_check
        _
      $region10: #{_lambda_.19} parent=5 // pred_check_branch
        %178 = sbr.rel (%p175) target = $region12
      $region11: #{_lambda_.19} parent=5 // pred_region
        %s179 = ssub.s32 %s10, 1
        // Predicated region
        $region13: #{_lambda_.19} parent=11 // pred_check
          %p180 = pneg %p111
        $region14: #{_lambda_.19} parent=11 // pred_check_branch
          %182 = sbr.rel (%p180) target = $region16
        $region15: #{_lambda_.19} parent=11 // pred_region
          %p183 = scmp.lt.s32.totalorder %s21, 0
          %s184 = scalar_select %p183, %s21, 0
          %s185 = scalar_lea.vmem %s2, %s184
        $region16: #{_lambda_.19} parent=11 // pred_fallthru
          _
        // Predicated region
        $region17: #{_lambda_.19} parent=11 // pred_check
          %p186 = pneg %p137
        $region18: #{_lambda_.19} parent=11 // pred_check_branch
          %188 = sbr.rel (%p186) target = $region20
        $region19: #{_lambda_.19} parent=11 // pred_region
          %p189 = scmp.lt.s32.totalorder %s21, 0
          %s190 = scalar_select %p189, %s21, 0
          %s191 = scalar_lea.vmem %s3, %s190
        $region20: #{_lambda_.19} parent=11 // pred_fallthru
          _
      $region12: #{_lambda_.19} parent=5 // pred_fallthru
        _
      %p192 = scmp.lt.s32.totalorder %s10, 2
      // Predicated region
      $region21: #{_lambda_.19} parent=5 // pred_check
        %p193 = pneg %p192
      $region22: #{_lambda_.19} parent=5 // pred_check_branch
        %195 = sbr.rel (%p193) target = $region24
      $region23: #{_lambda_.19} parent=5 // pred_region
        // Predicated region
        $region25: #{_lambda_.19} parent=23 // pred_check
          %p196 = pneg %p51
        $region26: #{_lambda_.19} parent=23 // pred_check_branch
          %198 = sbr.rel (%p196) target = $region28
        $region27: #{_lambda_.19} parent=23 // pred_region
          %s199 = sand.u32 %s41, 1
          %s200 = sand.u32 %s41, 1
          %s201 = smul.addr %s200, 32
          %s202 = scalar_lea.vmem [#allocation2], %s201
          %s203 = smul.u32 4, %s17
          %s204 = smul.u32 2, %s19
          %s205 = smul.addr %s203, 4
          %s206 = sadd.s32 %s204, %s205
          %s207 = smul.addr %s206, 4
          %s208 = scalar_lea.vmem %s0, %s207
          // Predicated region
          $region29: #{_lambda_.19} parent=27 // pred_check
            _
          $region30: #{_lambda_.19} parent=27 // pred_check_branch
            %210 = sbr.rel (0) target = $region32
          $region31: #{_lambda_.19} parent=27 // pred_region
            // Predicated region
            $region33: #{_lambda_.19} parent=31 // pred_check
              _
            $region34: #{_lambda_.19} parent=31 // pred_check_branch
              %212 = sbr.rel (0) target = $region36
            $region35: #{_lambda_.19} parent=31 // pred_region
              // Predicated region
              $region48: #{_lambda_.19} parent=35 // pred_check
                _
              $region49: #{_lambda_.19} parent=35 // pred_check_branch
                %234 = sbr.rel (0) target = $region51
              $region50: #{_lambda_.19} parent=35 // pred_region
                loop: start=0, step=1, limit=1
                $region52: #{_lambda_.19} parent=50 // loop_pre_header
                  _
                $region53: #{_lambda_.19} parent=50 // loop_header
                  %s236 = sphi 0, %s240
                  %p237 = scmp.ge.s32.totalorder %s236, 1
                  %s241 = sphi %s208, %s208
                  %s242 = sphi %s202, %s202
                $region54: #{_lambda_.19} parent=50 // loop_header_branch
                  %239 = sbr.rel (%p237) target = $region58
                $region55: #{_lambda_.19} parent=50 // loop_body
                  %v243 = vld [vmem:[%s241] sm:$0xff]
                  %244 = vst [vmem:[%s242] sm:$0xff] %v243
                  %v245 = vld [vmem:[%s241 + $0x10] sm:$0xff]
                  %246 = vst [vmem:[%s242 + $0x8] sm:$0xff] %v245
                  %v247 = vld [vmem:[%s241 + $0x20] sm:$0xff]
                  %248 = vst [vmem:[%s242 + $0x10] sm:$0xff] %v247
                  %v249 = vld [vmem:[%s241 + $0x30] sm:$0xff]
                  %250 = vst [vmem:[%s242 + $0x18] sm:$0xff] %v249
                $region56: #{_lambda_.19} parent=50 // loop_footer
                  %s240 = sadd.s32 1, %s236
                $region57: #{_lambda_.19} parent=50 // loop_footer_branch
                  %235 = sbr.rel target = $region53
                $region58: #{_lambda_.19} parent=50 // loop_exit
                  _
              $region51: #{_lambda_.19} parent=35 // pred_fallthru
                _
              // Predicated region
              $region59: #{_lambda_.19} parent=35 // pred_check
                _
              $region60: #{_lambda_.19} parent=35 // pred_check_branch
                %252 = sbr.rel target = $region62
              $region61: #{_lambda_.19} parent=35 // pred_region
                _
              $region62: #{_lambda_.19} parent=35 // pred_fallthru
                _
            $region36: #{_lambda_.19} parent=31 // pred_fallthru
              _
            // Predicated region
            $region37: #{_lambda_.19} parent=31 // pred_check
              _
            $region38: #{_lambda_.19} parent=31 // pred_check_branch
              %214 = sbr.rel target = $region40
            $region39: #{_lambda_.19} parent=31 // pred_region
              %s216 = ssub.s32 256, 1
              loop: start=0, step=1, limit=1
              $region41: #{_lambda_.19} parent=39 // loop_pre_header
                _
              $region42: #{_lambda_.19} parent=39 // loop_header
                %s218 = sphi 0, %s222
                %p219 = scmp.ge.s32.totalorder %s218, 1
                %s223 = sphi %s208, %s208
                %s224 = sphi %s202, %s202
              $region43: #{_lambda_.19} parent=39 // loop_header_branch
                %221 = sbr.rel (%p219) target = $region47
              $region44: #{_lambda_.19} parent=39 // loop_body
                %v225 = vld [vmem:[%s223] sm:%s216]
                %226 = vst [vmem:[%s224] sm:%s216] %v225
                %v227 = vld [vmem:[%s223 + $0x10] sm:%s216]
                %228 = vst [vmem:[%s224 + $0x8] sm:%s216] %v227
                %v229 = vld [vmem:[%s223 + $0x20] sm:%s216]
                %230 = vst [vmem:[%s224 + $0x10] sm:%s216] %v229
                %v231 = vld [vmem:[%s223 + $0x30] sm:%s216]
                %232 = vst [vmem:[%s224 + $0x18] sm:%s216] %v231
              $region45: #{_lambda_.19} parent=39 // loop_footer
                %s222 = sadd.s32 1, %s218
              $region46: #{_lambda_.19} parent=39 // loop_footer_branch
                %217 = sbr.rel target = $region42
              $region47: #{_lambda_.19} parent=39 // loop_exit
                _
            $region40: #{_lambda_.19} parent=31 // pred_fallthru
              _
          $region32: #{_lambda_.19} parent=27 // pred_fallthru
            _
          %253 = vnop
        $region28: #{_lambda_.19} parent=23 // pred_fallthru
          _
        // Predicated region
        $region63: #{_lambda_.19} parent=23 // pred_check
          %p254 = pneg %p79
        $region64: #{_lambda_.19} parent=23 // pred_check_branch
          %256 = sbr.rel (%p254) target = $region66
        $region65: #{_lambda_.19} parent=23 // pred_region
          %s257 = smul.u32 32, %s19
          %p258 = scmp.lt.s32.totalorder %s257, 63
          %s259 = scalar_select %p258, %s257, 63
          %p260 = scmp.lt.s32.totalorder %s18, 0
          %s261 = scalar_select %p260, %s18, 0
          %s262 = sadd.s32 %s261, %s259
          %s263 = smul.addr %s262, 4
          %s264 = scalar_lea.vmem %s1, %s263
          %s265 = smul.u32 32, %s19
        $region66: #{_lambda_.19} parent=23 // pred_fallthru
          _
      $region24: #{_lambda_.19} parent=5 // pred_fallthru
        _
      %p266 = scmp.le.s32.totalorder 1, %s10
      %p267 = scmp.lt.s32.totalorder %s10, 3
      %p268 = pnand %p266, %p267
      %p269 = pneg %p268
      // Predicated region
      $region67: #{_lambda_.19} parent=5 // pred_check
        _
      $region68: #{_lambda_.19} parent=5 // pred_check_branch
        %271 = sbr.rel (%p268) target = $region70
      $region69: #{_lambda_.19} parent=5 // pred_region
        %s272 = ssub.s32 %s10, 1
        %s273 = sand.u32 %s44, 1
        %s274 = sand.u32 %s44, 1
        %s275 = smul.addr %s274, 32
        %s276 = scalar_lea.vmem [#allocation2], %s275
        // Predicated region
        $region71: #{_lambda_.19} parent=69 // pred_check
          %p277 = pneg %p57
        $region72: #{_lambda_.19} parent=69 // pred_check_branch
          %279 = sbr.rel (%p277) target = $region74
        $region73: #{_lambda_.19} parent=69 // pred_region
          _
        $region74: #{_lambda_.19} parent=69 // pred_fallthru
          _
        %s280 = sand.u32 %s44, 1
        %s281 = sand.u32 %s44, 1
        %s282 = smul.addr %s281, 32
        %s283 = scalar_lea.vmem [#allocation2], %s282
        %p284 = pneg %p57
        %p285 = pneg %p54
        %s286 = smul.u32 32, %s22
        %p287 = scmp.lt.s32.totalorder %s286, 63
        %s288 = scalar_select %p287, %s286, 63
        %p289 = scmp.lt.s32.totalorder %s21, 0
        %s290 = scalar_select %p289, %s21, 0
        %s291 = sadd.s32 %s290, %s288
        %s292 = smul.addr %s291, 4
        %s293 = scalar_lea.vmem %s1, %s292
        %p294 = pneg %p85
        %p295 = pneg %p82
        %p296 = scmp.lt.s32.totalorder %s21, 0
        %s297 = scalar_select %p296, %s21, 0
        %s298 = scalar_lea.vmem %s2, %s297
        %p299 = pneg %p111
        %p300 = pneg %p108
        %p301 = scmp.lt.s32.totalorder %s21, 0
        %s302 = scalar_select %p301, %s21, 0
        %s303 = scalar_lea.vmem %s3, %s302
        %p304 = pneg %p137
        %p305 = pneg %p134
        %p306 = pneg %p165
        %p307 = pneg %p162
        %s308 = smul.u32 4, %s20
        %p309 = scmp.lt.s32.totalorder %s308, 3
        %s310 = scalar_select %p309, %s308, 3
        %p311 = scmp.lt.s32.totalorder %s21, 0
        %s312 = scalar_select %p311, %s21, 0
        %s313 = sadd.s32 %s312, %s310
        %s314 = smul.addr %s313, 8
        %s315 = scalar_lea.vmem %s4, %s314
        %s316 = smul.u32 4, %s20
        %s317 = smul.u32 2, %s22
        %s318 = smul.u32 32, %s22
        %p319 = scmp.lt.s32.totalorder %s318, 63
        %s320 = scalar_select %p319, %s318, 63
        %p321 = scmp.lt.s32.totalorder %s21, 0
        %s322 = scalar_select %p321, %s21, 0
        %s323 = sadd.s32 %s322, %s320
        %s324 = smul.addr %s323, 4
        %s325 = scalar_lea.vmem %s1, %s324
        %s326 = smul.u32 32, %s22
        %p327 = scmp.lt.s32.totalorder %s21, 0
        %s328 = scalar_select %p327, %s21, 0
        %s329 = scalar_lea.vmem %s2, %s328
        %p330 = scmp.lt.s32.totalorder %s21, 0
        %s331 = scalar_select %p330, %s21, 0
        %s332 = scalar_lea.vmem %s3, %s331
        %s333 = smul.u32 4, %s20
        %p334 = scmp.lt.s32.totalorder %s333, 3
        %s335 = scalar_select %p334, %s333, 3
        %p336 = scmp.lt.s32.totalorder %s21, 0
        %s337 = scalar_select %p336, %s21, 0
        %s338 = sadd.s32 %s337, %s335
        %s339 = smul.addr %s338, 8
        %s340 = scalar_lea.vmem %s4, %s339
        %s341 = smul.u32 4, %s20
        %p343 = scmp.eq.s32.totalorder %s22, 0
        // Predicated region
        $region75: #{_lambda_.19} parent=69 // pred_check
          %p344 = pneg %p343
        $region76: #{_lambda_.19} parent=69 // pred_check_branch
          %346 = sbr.rel (%p344) target = $region78
        $region77: #{_lambda_.19} parent=69 // pred_region
          %347 = vst [vmem:[%s340] sm:$0xff] 0.0
          %348 = vst [vmem:[%s340 + $0x8] sm:$0xff] 0.0
          %349 = vst [vmem:[%s340 + $0x10] sm:$0xff] 0.0
          %350 = vst [vmem:[%s340 + $0x18] sm:$0xff] 0.0
        $region78: #{_lambda_.19} parent=69 // pred_fallthru
          _
        %v351 = vld [vmem:[%s340] sm:$0xff]
        %v352 = vld [vmem:[%s340 + $0x8] sm:$0xff]
        %v353 = vld [vmem:[%s340 + $0x10] sm:$0xff]
        %v354 = vld [vmem:[%s340 + $0x18] sm:$0xff]
        %v355 = vld [vmem:[%s276] sm:$0xff]
        %v356 = vld [vmem:[%s276 + $0x8] sm:$0xff]
        %v357 = vld [vmem:[%s276 + $0x10] sm:$0xff]
        %v358 = vld [vmem:[%s276 + $0x18] sm:$0xff]
        %v359 = vld [vmem:[%s325] sm:$0xf]
        %v360 = vld [vmem:[%s325 + $0x4] sm:$0xf]
        %v361 = vld [vmem:[%s325 + $0x8] sm:$0xf]
        %v362 = vld [vmem:[%s325 + $0xc] sm:$0xf]
        %v363 = vld [vmem:[%s325 + $0x10] sm:$0xf]
        %v364 = vld [vmem:[%s325 + $0x14] sm:$0xf]
        %v365 = vld [vmem:[%s325 + $0x18] sm:$0xf]
        %v366 = vld [vmem:[%s325 + $0x1c] sm:$0xf]
        %v367 = vld [vmem:[%s325 + $0x20] sm:$0xf]
        %v368 = vld [vmem:[%s325 + $0x24] sm:$0xf]
        %v369 = vld [vmem:[%s325 + $0x28] sm:$0xf]
        %v370 = vld [vmem:[%s325 + $0x2c] sm:$0xf]
        %v371 = vld [vmem:[%s325 + $0x30] sm:$0xf]
        %v372 = vld [vmem:[%s325 + $0x34] sm:$0xf]
        %v373 = vld [vmem:[%s325 + $0x38] sm:$0xf]
        %v374 = vld [vmem:[%s325 + $0x3c] sm:$0xf]
        %v375 = vld [vmem:[%s325 + $0x40] sm:$0xf]
        %v376 = vld [vmem:[%s325 + $0x44] sm:$0xf]
        %v377 = vld [vmem:[%s325 + $0x48] sm:$0xf]
        %v378 = vld [vmem:[%s325 + $0x4c] sm:$0xf]
        %v379 = vld [vmem:[%s325 + $0x50] sm:$0xf]
        %v380 = vld [vmem:[%s325 + $0x54] sm:$0xf]
        %v381 = vld [vmem:[%s325 + $0x58] sm:$0xf]
        %v382 = vld [vmem:[%s325 + $0x5c] sm:$0xf]
        %v383 = vld [vmem:[%s325 + $0x60] sm:$0xf]
        %v384 = vld [vmem:[%s325 + $0x64] sm:$0xf]
        %v385 = vld [vmem:[%s325 + $0x68] sm:$0xf]
        %v386 = vld [vmem:[%s325 + $0x6c] sm:$0xf]
        %v387 = vld [vmem:[%s325 + $0x70] sm:$0xf]
        %v388 = vld [vmem:[%s325 + $0x74] sm:$0xf]
        %v389 = vld [vmem:[%s325 + $0x78] sm:$0xf]
        %v390 = vld [vmem:[%s325 + $0x7c] sm:$0xf]
        %v395 = vunpack.c.l.b16 %v355
        %v396 = vunpack.c.h.b16 %v355
        %v397 = vunpack.c.l.b16 %v356
        %v398 = vunpack.c.h.b16 %v356
        %v399 = vunpack.c.l.b16 %v357
        %v400 = vunpack.c.h.b16 %v357
        %v401 = vunpack.c.l.b16 %v358
        %v402 = vunpack.c.h.b16 %v358
        %v403 = vpack.c.b16 %v397, %v395
        %v404 = vpack.c.b16 %v398, %v396
        %v405 = vpack.c.b16 %v401, %v399
        %v406 = vpack.c.b16 %v402, %v400
        %v443 = vunpack.c.l.b16 %v359
        %v444 = vunpack.c.l.b16 %v360
        %v445 = vunpack.c.l.b16 %v361
        %v446 = vunpack.c.l.b16 %v362
        %v447 = vunpack.c.l.b16 %v363
        %v448 = vunpack.c.l.b16 %v364
        %v449 = vunpack.c.l.b16 %v365
        %v450 = vunpack.c.l.b16 %v366
        %v451 = vunpack.c.l.b16 %v367
        %v452 = vunpack.c.l.b16 %v368
        %v453 = vunpack.c.l.b16 %v369
        %v454 = vunpack.c.l.b16 %v370
        %v455 = vunpack.c.l.b16 %v371
        %v456 = vunpack.c.l.b16 %v372
        %v457 = vunpack.c.l.b16 %v373
        %v458 = vunpack.c.l.b16 %v374
        %v459 = vunpack.c.l.b16 %v375
        %v460 = vunpack.c.l.b16 %v376
        %v461 = vunpack.c.l.b16 %v377
        %v462 = vunpack.c.l.b16 %v378
        %v463 = vunpack.c.l.b16 %v379
        %v464 = vunpack.c.l.b16 %v380
        %v465 = vunpack.c.l.b16 %v381
        %v466 = vunpack.c.l.b16 %v382
        %v467 = vunpack.c.l.b16 %v383
        %v468 = vunpack.c.l.b16 %v384
        %v469 = vunpack.c.l.b16 %v385
        %v470 = vunpack.c.l.b16 %v386
        %v471 = vunpack.c.l.b16 %v387
        %v472 = vunpack.c.l.b16 %v388
        %v473 = vunpack.c.l.b16 %v389
        %v474 = vunpack.c.l.b16 %v390
        %v475 = vpack.c.b16 %v444, %v443
        %v476 = vpack.c.b16 %v446, %v445
        %v477 = vpack.c.b16 %v448, %v447
        %v478 = vpack.c.b16 %v450, %v449
        %v479 = vpack.c.b16 %v452, %v451
        %v480 = vpack.c.b16 %v454, %v453
        %v481 = vpack.c.b16 %v456, %v455
        %v482 = vpack.c.b16 %v458, %v457
        %v483 = vpack.c.b16 %v460, %v459
        %v484 = vpack.c.b16 %v462, %v461
        %v485 = vpack.c.b16 %v464, %v463
        %v486 = vpack.c.b16 %v466, %v465
        %v487 = vpack.c.b16 %v468, %v467
        %v488 = vpack.c.b16 %v470, %v469
        %v489 = vpack.c.b16 %v472, %v471
        %v490 = vpack.c.b16 %v474, %v473
        %507 = vmatprep.subr.bf16.mxu0 0
        %508 = vmatpush1.bf16.msra.mxu0 %v482
        %509 = vmatprep.subr.bf16.mxu0 0
        %510 = vmatpush1.bf16.msra.mxu0 %v481
        %511 = vmatprep.subr.bf16.mxu0 0
        %512 = vmatpush1.bf16.msra.mxu0 %v480
        %513 = vmatprep.subr.bf16.mxu0 0
        %514 = vmatpush1.bf16.msra.mxu0 %v479
        %515 = vmatprep.subr.bf16.mxu0 0
        %516 = vmatpush1.bf16.msra.mxu0 %v478
        %517 = vmatprep.subr.bf16.mxu0 0
        %518 = vmatpush1.bf16.msra.mxu0 %v477
        %519 = vmatprep.subr.bf16.mxu0 0
        %520 = vmatpush1.bf16.msra.mxu0 %v476
        %521 = vmatprep.subr.bf16.mxu0 0
        %522 = vmatpush1.bf16.msra.mxu0 %v475
        %523 = vmatprep.subr.bf16.mxu0 0
        %524 = vmatpush2.bf16.msra.mxu0 %v490
        %525 = vmatprep.subr.bf16.mxu0 0
        %526 = vmatpush2.bf16.msra.mxu0 %v489
        %527 = vmatprep.subr.bf16.mxu0 0
        %528 = vmatpush2.bf16.msra.mxu0 %v488
        %529 = vmatprep.subr.bf16.mxu0 0
        %530 = vmatpush2.bf16.msra.mxu0 %v487
        %531 = vmatprep.subr.bf16.mxu0 0
        %532 = vmatpush2.bf16.msra.mxu0 %v486
        %533 = vmatprep.subr.bf16.mxu0 0
        %534 = vmatpush2.bf16.msra.mxu0 %v485
        %535 = vmatprep.subr.bf16.mxu0 0
        %536 = vmatpush2.bf16.msra.mxu0 %v484
        %537 = vmatprep.subr.bf16.mxu0 0
        %538 = vmatpush2.bf16.msra.mxu0 %v483
        %539 = vmatprep.mubr.bf16.mxu0 %v404
        %540 = vmatmul.mubr.bf16.gmra.mxu0 %v403
        %v541 = vpop.f32.mrf.mxu0
        %v542 = vadd.f32 0.0, %v541
        %v543 = vpop.f32.mrf.mxu0
        %v544 = vpop.f32.mrf.mxu0
        %v545 = vadd.f32 0.0, %v544
        %v546 = vpop.f32.mrf.mxu0
        %547 = vmatprep.mubr.bf16.mxu0 %v406
        %548 = vmatmul.mubr.bf16.gmra.mxu0 %v405
        %v549 = vpop.f32.mrf.mxu0
        %v550 = vadd.f32 0.0, %v549
        %v551 = vpop.f32.mrf.mxu0
        %v552 = vpop.f32.mrf.mxu0
        %v553 = vadd.f32 0.0, %v552
        %v554 = vpop.f32.mrf.mxu0
        %555 = vdwg.mxu0
        %v556 = vadd.f32 %v351, %v542
        %v557 = vadd.f32 %v352, %v545
        %v558 = vadd.f32 %v353, %v550
        %v559 = vadd.f32 %v354, %v553
        %560 = vst [vmem:[%s340] sm:$0xff] %v556
        %561 = vst [vmem:[%s340 + $0x8] sm:$0xff] %v557
        %562 = vst [vmem:[%s340 + $0x10] sm:$0xff] %v558
        %563 = vst [vmem:[%s340 + $0x18] sm:$0xff] %v559
        %p564 = scmp.eq.s32.totalorder %s22, 1
        // Predicated region
        $region79: #{_lambda_.19} parent=69 // pred_check
          %p565 = pneg %p564
        $region80: #{_lambda_.19} parent=69 // pred_check_branch
          %567 = sbr.rel (%p565) target = $region82
        $region81: #{_lambda_.19} parent=69 // pred_region
          %v568 = vld [vmem:[%s340] sm:$0xff]
          %v569 = vld [vmem:[%s340 + $0x8] sm:$0xff]
          %v570 = vld [vmem:[%s340 + $0x10] sm:$0xff]
          %v571 = vld [vmem:[%s340 + $0x18] sm:$0xff]
          %v572 = vld [vmem:[%s329] sm:$0x1]
          %v574 = vlaneseq
          %v575 = vshrl.u32 %v574, 7
          %v576 = vsub.s32 0, %v575
          %v577 = vrot.slane %v572, %v576
          %v579 = vmul.f32 %v568, %v577
          %v580 = vmul.f32 %v569, %v577
          %v581 = vmul.f32 %v570, %v577
          %v582 = vmul.f32 %v571, %v577
          %v583 = vld [vmem:[%s332] sm:$0x1]
          %v585 = vlaneseq
          %v586 = vshrl.u32 %v585, 7
          %v587 = vsub.s32 0, %v586
          %v588 = vrot.slane %v583, %v587
          %v590 = vadd.f32 %v579, %v588
          %v591 = vadd.f32 %v580, %v588
          %v592 = vadd.f32 %v581, %v588
          %v593 = vadd.f32 %v582, %v588
          %v594 = vmax.f32 %v590, 0.0
          %v595 = vmax.f32 %v591, 0.0
          %v596 = vmax.f32 %v592, 0.0
          %v597 = vmax.f32 %v593, 0.0
          %598 = vst [vmem:[%s340] sm:$0xff] %v594
          %599 = vst [vmem:[%s340 + $0x8] sm:$0xff] %v595
          %600 = vst [vmem:[%s340 + $0x10] sm:$0xff] %v596
          %601 = vst [vmem:[%s340 + $0x18] sm:$0xff] %v597
        $region82: #{_lambda_.19} parent=69 // pred_fallthru
          _
        %s602 = smul.u32 4, %s20
        %p603 = scmp.lt.s32.totalorder %s602, 3
        %s604 = scalar_select %p603, %s602, 3
        %p605 = scmp.lt.s32.totalorder %s21, 0
        %s606 = scalar_select %p605, %s21, 0
        %s607 = sadd.s32 %s606, %s604
        %s608 = smul.addr %s607, 8
        %s609 = scalar_lea.vmem %s4, %s608
        // Predicated region
        $region83: #{_lambda_.19} parent=69 // pred_check
          %p610 = pneg %p162
        $region84: #{_lambda_.19} parent=69 // pred_check_branch
          %612 = sbr.rel (%p610) target = $region86
        $region85: #{_lambda_.19} parent=69 // pred_region
          %s613 = smul.u32 4, %s20
        $region86: #{_lambda_.19} parent=69 // pred_fallthru
          _
        // Predicated region
        $region87: #{_lambda_.19} parent=69 // pred_check
          %p614 = pneg %p162
        $region88: #{_lambda_.19} parent=69 // pred_check_branch
          %616 = sbr.rel (%p614) target = $region90
        $region89: #{_lambda_.19} parent=69 // pred_region
          %s617 = smul.u32 4, %s20
          %p618 = scmp.lt.s32.totalorder %s617, 3
          %s619 = scalar_select %p618, %s617, 3
          %p620 = scmp.lt.s32.totalorder %s21, 0
          %s621 = scalar_select %p620, %s21, 0
          %s622 = sadd.s32 %s621, %s619
          %s623 = smul.addr %s622, 8
          %s624 = scalar_lea.vmem %s4, %s623
        $region90: #{_lambda_.19} parent=69 // pred_fallthru
          _
      $region70: #{_lambda_.19} parent=5 // pred_fallthru
        _
      %p625 = scmp.le.s32.totalorder 2, %s10
      // Predicated region
      $region91: #{_lambda_.19} parent=5 // pred_check
        %p626 = pneg %p625
      $region92: #{_lambda_.19} parent=5 // pred_check_branch
        %628 = sbr.rel (%p626) target = $region94
      $region93: #{_lambda_.19} parent=5 // pred_region
        %s629 = ssub.s32 %s10, 2
      $region94: #{_lambda_.19} parent=5 // pred_fallthru
        _
    $region6: #{_lambda_.19} parent=1 // loop_footer
      %s14 = sadd.s32 1, %s10
    $region7: #{_lambda_.19} parent=1 // loop_footer_branch
      %9 = sbr.rel target = $region3
    $region8: #{_lambda_.19} parent=1 // loop_exit
      _

// kernel: _lambda_.20
$region0: #{_lambda_.20}
  #allocation0 [shape = 'u32[]', space=smem, size = 0x4, offset = 0x4, fixed_abs, tag = 'smem constant byte address 0x4 - core index']
  #allocation1 [shape = 'u32[144,128]{1,0:T(1,128)}', space=vmem, size = 0x12000, scoped, tag = 'internal scratch']
  %s0 = inlined_call_operand.vmem [shape: bf16[32,512], index: 0, kind: input, shape index: {}]
  %s1 = inlined_call_operand.vmem [shape: bf16[512,128], index: 1, kind: input, shape index: {}]
  %s2 = inlined_call_operand.vmem [shape: f32[1,128], index: 2, kind: input, shape index: {}]
  %s3 = inlined_call_operand.vmem [shape: f32[1,128], index: 3, kind: input, shape index: {}]
  %s4 = inlined_call_operand.vmem [shape: f32[32,128], index: 4, kind: output, shape index: {}]
  %s5 = sld [smem:[#allocation0]]
  $region95: #{_lambda_.20} parent=0
    _
  %s7 = ssub.s32 1, %s5
  %s8 = scalar_select 0, %s7, %s5
  $region1: #{_lambda_.20} parent=0
    #allocation2 [shape = 'u8[32768]{0}', space=vmem, size = 0x8000, scoped, tag = 'input window, operand 0']
    loop: start=0, step=1, limit=4
    $region2: #{_lambda_.20} parent=1 // loop_pre_header
      _
    $region3: #{_lambda_.20} parent=1 // loop_header
      %s10 = sphi 0, %s14
      %p11 = scmp.ge.s32.totalorder %s10, 4
      %s17 = sphi 0, %s36
      %s18 = sphi 0, %s32
      %s19 = sphi 0, %s28
      %s20 = sphi 0, %s17
      %s21 = sphi 0, %s18
      %s22 = sphi 0, %s19
      %s23 = sphi 0, %s20
      %s24 = sphi 0, %s21
      %s25 = sphi 0, %s22
      %s41 = sphi 0, %s43
      %s44 = sphi 0, %s41
      %s45 = sphi 0, %s44
      %s61 = sphi 0, %s45
      %s69 = sphi 0, %s71
      %s72 = sphi 0, %s69
      %s73 = sphi 0, %s72
      %s89 = sphi 0, %s73
      %s95 = sphi 0, %s97
      %s98 = sphi 0, %s95
      %s99 = sphi 0, %s98
      %s115 = sphi 0, %s99
      %s121 = sphi 0, %s123
      %s124 = sphi 0, %s121
      %s125 = sphi 0, %s124
      %s141 = sphi 0, %s125
      %s149 = sphi 0, %s151
      %s152 = sphi 0, %s149
      %s153 = sphi 0, %s152
      %s169 = sphi 0, %s153
    $region4: #{_lambda_.20} parent=1 // loop_header_branch
      %13 = sbr.rel (%p11) target = $region8
    $region5: #{_lambda_.20} parent=1 // loop_body
      %s15 = ssub.s32 %s10, 1
      %s16 = ssub.s32 %s10, 2
      %s26 = sadd.s32 1, %s19
      %p27 = scmp.ge.s32.totalorder %s26, 2
      %s28 = scalar_select %p27, 0, %s26
      %s29 = sadd.s32 1, %s18
      %s30 = scalar_select %p27, %s29, %s18
      %p31 = scmp.ge.s32.totalorder %s30, 1
      %s32 = scalar_select %p31, 0, %s30
      %s33 = sadd.s32 1, %s17
      %s34 = scalar_select %p31, %s33, %s17
      %p35 = scmp.ge.s32.totalorder %s34, 1
      %s36 = scalar_select %p35, 0, %s34
      %s37 = ssub.s32 %s17, %s36
      %s38 = ssub.s32 %s19, %s28
      %s39 = sor.u32 %s37, %s38
      %p40 = scmp.eq.s32.totalorder %s39, 0
      %s42 = sadd.s32 %s41, 1
      %s43 = scalar_select %p40, %s41, %s42
      %p46 = pneg %p40
      %p47 = scmp.eq.s32.totalorder %s10, 1
      %p48 = por %p46, %p47
      %p49 = scmp.ne.s32.totalorder %s41, %s44
      %p50 = scmp.eq.s32.totalorder %s10, 0
      %p51 = por %p49, %p50
      %p52 = scmp.ne.s32.totalorder %s41, %s44
      %p53 = scmp.eq.s32.totalorder %s15, 1
      %p54 = por %p52, %p53
      %p55 = scmp.ne.s32.totalorder %s44, %s45
      %p56 = scmp.eq.s32.totalorder %s15, 0
      %p57 = por %p55, %p56
      %p58 = scmp.ne.s32.totalorder %s44, %s45
      %p59 = scmp.eq.s32.totalorder %s16, 1
      %p60 = por %p58, %p59
      %p62 = scmp.ne.s32.totalorder %s45, %s61
      %p63 = scmp.eq.s32.totalorder %s16, 0
      %p64 = por %p62, %p63
      %s65 = ssub.s32 %s19, %s28
      %s66 = ssub.s32 %s18, %s32
      %s67 = sor.u32 %s65, %s66
      %p68 = scmp.eq.s32.totalorder %s67, 0
      %s70 = sadd.s32 %s69, 1
      %s71 = scalar_select %p68, %s69, %s70
      %p74 = pneg %p68
      %p75 = scmp.eq.s32.totalorder %s10, 1
      %p76 = por %p74, %p75
      %p77 = scmp.ne.s32.totalorder %s69, %s72
      %p78 = scmp.eq.s32.totalorder %s10, 0
      %p79 = por %p77, %p78
      %p80 = scmp.ne.s32.totalorder %s69, %s72
      %p81 = scmp.eq.s32.totalorder %s15, 1
      %p82 = por %p80, %p81
      %p83 = scmp.ne.s32.totalorder %s72, %s73
      %p84 = scmp.eq.s32.totalorder %s15, 0
      %p85 = por %p83, %p84
      %p86 = scmp.ne.s32.totalorder %s72, %s73
      %p87 = scmp.eq.s32.totalorder %s16, 1
      %p88 = por %p86, %p87
      %p90 = scmp.ne.s32.totalorder %s73, %s89
      %p91 = scmp.eq.s32.totalorder %s16, 0
      %p92 = por %p90, %p91
      %s93 = ssub.s32 %s18, %s32
      %p94 = scmp.eq.s32.totalorder %s93, 0
      %s96 = sadd.s32 %s95, 1
      %s97 = scalar_select %p94, %s95, %s96
      %p100 = pneg %p94
      %p101 = scmp.eq.s32.totalorder %s10, 1
      %p102 = por %p100, %p101
      %p103 = scmp.ne.s32.totalorder %s95, %s98
      %p104 = scmp.eq.s32.totalorder %s10, 0
      %p105 = por %p103, %p104
      %p106 = scmp.ne.s32.totalorder %s95, %s98
      %p107 = scmp.eq.s32.totalorder %s15, 1
      %p108 = por %p106, %p107
      %p109 = scmp.ne.s32.totalorder %s98, %s99
      %p110 = scmp.eq.s32.totalorder %s15, 0
      %p111 = por %p109, %p110
      %p112 = scmp.ne.s32.totalorder %s98, %s99
      %p113 = scmp.eq.s32.totalorder %s16, 1
      %p114 = por %p112, %p113
      %p116 = scmp.ne.s32.totalorder %s99, %s115
      %p117 = scmp.eq.s32.totalorder %s16, 0
      %p118 = por %p116, %p117
      %s119 = ssub.s32 %s18, %s32
      %p120 = scmp.eq.s32.totalorder %s119, 0
      %s122 = sadd.s32 %s121, 1
      %s123 = scalar_select %p120, %s121, %s122
      %p126 = pneg %p120
      %p127 = scmp.eq.s32.totalorder %s10, 1
      %p128 = por %p126, %p127
      %p129 = scmp.ne.s32.totalorder %s121, %s124
      %p130 = scmp.eq.s32.totalorder %s10, 0
      %p131 = por %p129, %p130
      %p132 = scmp.ne.s32.totalorder %s121, %s124
      %p133 = scmp.eq.s32.totalorder %s15, 1
      %p134 = por %p132, %p133
      %p135 = scmp.ne.s32.totalorder %s124, %s125
      %p136 = scmp.eq.s32.totalorder %s15, 0
      %p137 = por %p135, %p136
      %p138 = scmp.ne.s32.totalorder %s124, %s125
      %p139 = scmp.eq.s32.totalorder %s16, 1
      %p140 = por %p138, %p139
      %p142 = scmp.ne.s32.totalorder %s125, %s141
      %p143 = scmp.eq.s32.totalorder %s16, 0
      %p144 = por %p142, %p143
      %s145 = ssub.s32 %s17, %s36
      %s146 = ssub.s32 %s18, %s32
      %s147 = sor.u32 %s145, %s146
      %p148 = scmp.eq.s32.totalorder %s147, 0
      %s150 = sadd.s32 %s149, 1
      %s151 = scalar_select %p148, %s149, %s150
      %p154 = pneg %p148
      %p155 = scmp.eq.s32.totalorder %s10, 1
      %p156 = por %p154, %p155
      %p157 = scmp.ne.s32.totalorder %s149, %s152
      %p158 = scmp.eq.s32.totalorder %s10, 0
      %p159 = por %p157, %p158
      %p160 = scmp.ne.s32.totalorder %s149, %s152
      %p161 = scmp.eq.s32.totalorder %s15, 1
      %p162 = por %p160, %p161
      %p163 = scmp.ne.s32.totalorder %s152, %s153
      %p164 = scmp.eq.s32.totalorder %s15, 0
      %p165 = por %p163, %p164
      %p166 = scmp.ne.s32.totalorder %s152, %s153
      %p167 = scmp.eq.s32.totalorder %s16, 1
      %p168 = por %p166, %p167
      %p170 = scmp.ne.s32.totalorder %s153, %s169
      %p171 = scmp.eq.s32.totalorder %s16, 0
      %p172 = por %p170, %p171
      %p173 = scmp.le.s32.totalorder 1, %s10
      %p174 = scmp.lt.s32.totalorder %s10, 3
      %p175 = pnand %p173, %p174
      %p176 = pneg %p175
      // Predicated region
      $region9: #{_lambda_.20} parent=5 // pred_check
        _
      $region10: #{_lambda_.20} parent=5 // pred_check_branch
        %178 = sbr.rel (%p175) target = $region12
      $region11: #{_lambda_.20} parent=5 // pred_region
        %s179 = ssub.s32 %s10, 1
        // Predicated region
        $region13: #{_lambda_.20} parent=11 // pred_check
          %p180 = pneg %p111
        $region14: #{_lambda_.20} parent=11 // pred_check_branch
          %182 = sbr.rel (%p180) target = $region16
        $region15: #{_lambda_.20} parent=11 // pred_region
          %p183 = scmp.lt.s32.totalorder %s21, 0
          %s184 = scalar_select %p183, %s21, 0
          %s185 = scalar_lea.vmem %s2, %s184
        $region16: #{_lambda_.20} parent=11 // pred_fallthru
          _
        // Predicated region
        $region17: #{_lambda_.20} parent=11 // pred_check
          %p186 = pneg %p137
        $region18: #{_lambda_.20} parent=11 // pred_check_branch
          %188 = sbr.rel (%p186) target = $region20
        $region19: #{_lambda_.20} parent=11 // pred_region
          %p189 = scmp.lt.s32.totalorder %s21, 0
          %s190 = scalar_select %p189, %s21, 0
          %s191 = scalar_lea.vmem %s3, %s190
        $region20: #{_lambda_.20} parent=11 // pred_fallthru
          _
      $region12: #{_lambda_.20} parent=5 // pred_fallthru
        _
      %p192 = scmp.lt.s32.totalorder %s10, 2
      // Predicated region
      $region21: #{_lambda_.20} parent=5 // pred_check
        %p193 = pneg %p192
      $region22: #{_lambda_.20} parent=5 // pred_check_branch
        %195 = sbr.rel (%p193) target = $region24
      $region23: #{_lambda_.20} parent=5 // pred_region
        // Predicated region
        $region25: #{_lambda_.20} parent=23 // pred_check
          %p196 = pneg %p51
        $region26: #{_lambda_.20} parent=23 // pred_check_branch
          %198 = sbr.rel (%p196) target = $region28
        $region27: #{_lambda_.20} parent=23 // pred_region
          %s199 = sand.u32 %s41, 1
          %s200 = sand.u32 %s41, 1
          %s201 = smul.addr %s200, 32
          %s202 = scalar_lea.vmem [#allocation2], %s201
          %s203 = smul.u32 4, %s17
          %s204 = smul.u32 2, %s19
          %s205 = smul.addr %s203, 4
          %s206 = sadd.s32 %s204, %s205
          %s207 = smul.addr %s206, 4
          %s208 = scalar_lea.vmem %s0, %s207
          // Predicated region
          $region29: #{_lambda_.20} parent=27 // pred_check
            _
          $region30: #{_lambda_.20} parent=27 // pred_check_branch
            %210 = sbr.rel (0) target = $region32
          $region31: #{_lambda_.20} parent=27 // pred_region
            // Predicated region
            $region33: #{_lambda_.20} parent=31 // pred_check
              _
            $region34: #{_lambda_.20} parent=31 // pred_check_branch
              %212 = sbr.rel (0) target = $region36
            $region35: #{_lambda_.20} parent=31 // pred_region
              // Predicated region
              $region48: #{_lambda_.20} parent=35 // pred_check
                _
              $region49: #{_lambda_.20} parent=35 // pred_check_branch
                %234 = sbr.rel (0) target = $region51
              $region50: #{_lambda_.20} parent=35 // pred_region
                loop: start=0, step=1, limit=1
                $region52: #{_lambda_.20} parent=50 // loop_pre_header
                  _
                $region53: #{_lambda_.20} parent=50 // loop_header
                  %s236 = sphi 0, %s240
                  %p237 = scmp.ge.s32.totalorder %s236, 1
                  %s241 = sphi %s208, %s208
                  %s242 = sphi %s202, %s202
                $region54: #{_lambda_.20} parent=50 // loop_header_branch
                  %239 = sbr.rel (%p237) target = $region58
                $region55: #{_lambda_.20} parent=50 // loop_body
                  %v243 = vld [vmem:[%s241] sm:$0xff]
                  %244 = vst [vmem:[%s242] sm:$0xff] %v243
                  %v245 = vld [vmem:[%s241 + $0x10] sm:$0xff]
                  %246 = vst [vmem:[%s242 + $0x8] sm:$0xff] %v245
                  %v247 = vld [vmem:[%s241 + $0x20] sm:$0xff]
                  %248 = vst [vmem:[%s242 + $0x10] sm:$0xff] %v247
                  %v249 = vld [vmem:[%s241 + $0x30] sm:$0xff]
                  %250 = vst [vmem:[%s242 + $0x18] sm:$0xff] %v249
                $region56: #{_lambda_.20} parent=50 // loop_footer
                  %s240 = sadd.s32 1, %s236
                $region57: #{_lambda_.20} parent=50 // loop_footer_branch
                  %235 = sbr.rel target = $region53
                $region58: #{_lambda_.20} parent=50 // loop_exit
                  _
              $region51: #{_lambda_.20} parent=35 // pred_fallthru
                _
              // Predicated region
              $region59: #{_lambda_.20} parent=35 // pred_check
                _
              $region60: #{_lambda_.20} parent=35 // pred_check_branch
                %252 = sbr.rel target = $region62
              $region61: #{_lambda_.20} parent=35 // pred_region
                _
              $region62: #{_lambda_.20} parent=35 // pred_fallthru
                _
            $region36: #{_lambda_.20} parent=31 // pred_fallthru
              _
            // Predicated region
            $region37: #{_lambda_.20} parent=31 // pred_check
              _
            $region38: #{_lambda_.20} parent=31 // pred_check_branch
              %214 = sbr.rel target = $region40
            $region39: #{_lambda_.20} parent=31 // pred_region
              %s216 = ssub.s32 256, 1
              loop: start=0, step=1, limit=1
              $region41: #{_lambda_.20} parent=39 // loop_pre_header
                _
              $region42: #{_lambda_.20} parent=39 // loop_header
                %s218 = sphi 0, %s222
                %p219 = scmp.ge.s32.totalorder %s218, 1
                %s223 = sphi %s208, %s208
                %s224 = sphi %s202, %s202
              $region43: #{_lambda_.20} parent=39 // loop_header_branch
                %221 = sbr.rel (%p219) target = $region47
              $region44: #{_lambda_.20} parent=39 // loop_body
                %v225 = vld [vmem:[%s223] sm:%s216]
                %226 = vst [vmem:[%s224] sm:%s216] %v225
                %v227 = vld [vmem:[%s223 + $0x10] sm:%s216]
                %228 = vst [vmem:[%s224 + $0x8] sm:%s216] %v227
                %v229 = vld [vmem:[%s223 + $0x20] sm:%s216]
                %230 = vst [vmem:[%s224 + $0x10] sm:%s216] %v229
                %v231 = vld [vmem:[%s223 + $0x30] sm:%s216]
                %232 = vst [vmem:[%s224 + $0x18] sm:%s216] %v231
              $region45: #{_lambda_.20} parent=39 // loop_footer
                %s222 = sadd.s32 1, %s218
              $region46: #{_lambda_.20} parent=39 // loop_footer_branch
                %217 = sbr.rel target = $region42
              $region47: #{_lambda_.20} parent=39 // loop_exit
                _
            $region40: #{_lambda_.20} parent=31 // pred_fallthru
              _
          $region32: #{_lambda_.20} parent=27 // pred_fallthru
            _
          %253 = vnop
        $region28: #{_lambda_.20} parent=23 // pred_fallthru
          _
        // Predicated region
        $region63: #{_lambda_.20} parent=23 // pred_check
          %p254 = pneg %p79
        $region64: #{_lambda_.20} parent=23 // pred_check_branch
          %256 = sbr.rel (%p254) target = $region66
        $region65: #{_lambda_.20} parent=23 // pred_region
          %s257 = smul.u32 32, %s19
          %p258 = scmp.lt.s32.totalorder %s257, 63
          %s259 = scalar_select %p258, %s257, 63
          %p260 = scmp.lt.s32.totalorder %s18, 0
          %s261 = scalar_select %p260, %s18, 0
          %s262 = sadd.s32 %s261, %s259
          %s263 = smul.addr %s262, 4
          %s264 = scalar_lea.vmem %s1, %s263
          %s265 = smul.u32 32, %s19
        $region66: #{_lambda_.20} parent=23 // pred_fallthru
          _
      $region24: #{_lambda_.20} parent=5 // pred_fallthru
        _
      %p266 = scmp.le.s32.totalorder 1, %s10
      %p267 = scmp.lt.s32.totalorder %s10, 3
      %p268 = pnand %p266, %p267
      %p269 = pneg %p268
      // Predicated region
      $region67: #{_lambda_.20} parent=5 // pred_check
        _
      $region68: #{_lambda_.20} parent=5 // pred_check_branch
        %271 = sbr.rel (%p268) target = $region70
      $region69: #{_lambda_.20} parent=5 // pred_region
        %s272 = ssub.s32 %s10, 1
        %s273 = sand.u32 %s44, 1
        %s274 = sand.u32 %s44, 1
        %s275 = smul.addr %s274, 32
        %s276 = scalar_lea.vmem [#allocation2], %s275
        // Predicated region
        $region71: #{_lambda_.20} parent=69 // pred_check
          %p277 = pneg %p57
        $region72: #{_lambda_.20} parent=69 // pred_check_branch
          %279 = sbr.rel (%p277) target = $region74
        $region73: #{_lambda_.20} parent=69 // pred_region
          _
        $region74: #{_lambda_.20} parent=69 // pred_fallthru
          _
        %s280 = sand.u32 %s44, 1
        %s281 = sand.u32 %s44, 1
        %s282 = smul.addr %s281, 32
        %s283 = scalar_lea.vmem [#allocation2], %s282
        %p284 = pneg %p57
        %p285 = pneg %p54
        %s286 = smul.u32 32, %s22
        %p287 = scmp.lt.s32.totalorder %s286, 63
        %s288 = scalar_select %p287, %s286, 63
        %p289 = scmp.lt.s32.totalorder %s21, 0
        %s290 = scalar_select %p289, %s21, 0
        %s291 = sadd.s32 %s290, %s288
        %s292 = smul.addr %s291, 4
        %s293 = scalar_lea.vmem %s1, %s292
        %p294 = pneg %p85
        %p295 = pneg %p82
        %p296 = scmp.lt.s32.totalorder %s21, 0
        %s297 = scalar_select %p296, %s21, 0
        %s298 = scalar_lea.vmem %s2, %s297
        %p299 = pneg %p111
        %p300 = pneg %p108
        %p301 = scmp.lt.s32.totalorder %s21, 0
        %s302 = scalar_select %p301, %s21, 0
        %s303 = scalar_lea.vmem %s3, %s302
        %p304 = pneg %p137
        %p305 = pneg %p134
        %p306 = pneg %p165
        %p307 = pneg %p162
        %s308 = smul.u32 4, %s20
        %p309 = scmp.lt.s32.totalorder %s308, 3
        %s310 = scalar_select %p309, %s308, 3
        %p311 = scmp.lt.s32.totalorder %s21, 0
        %s312 = scalar_select %p311, %s21, 0
        %s313 = sadd.s32 %s312, %s310
        %s314 = smul.addr %s313, 8
        %s315 = scalar_lea.vmem %s4, %s314
        %s316 = smul.u32 4, %s20
        %s317 = smul.u32 2, %s22
        %s318 = smul.u32 32, %s22
        %p319 = scmp.lt.s32.totalorder %s318, 63
        %s320 = scalar_select %p319, %s318, 63
        %p321 = scmp.lt.s32.totalorder %s21, 0
        %s322 = scalar_select %p321, %s21, 0
        %s323 = sadd.s32 %s322, %s320
        %s324 = smul.addr %s323, 4
        %s325 = scalar_lea.vmem %s1, %s324
        %s326 = smul.u32 32, %s22
        %p327 = scmp.lt.s32.totalorder %s21, 0
        %s328 = scalar_select %p327, %s21, 0
        %s329 = scalar_lea.vmem %s2, %s328
        %p330 = scmp.lt.s32.totalorder %s21, 0
        %s331 = scalar_select %p330, %s21, 0
        %s332 = scalar_lea.vmem %s3, %s331
        %s333 = smul.u32 4, %s20
        %p334 = scmp.lt.s32.totalorder %s333, 3
        %s335 = scalar_select %p334, %s333, 3
        %p336 = scmp.lt.s32.totalorder %s21, 0
        %s337 = scalar_select %p336, %s21, 0
        %s338 = sadd.s32 %s337, %s335
        %s339 = smul.addr %s338, 8
        %s340 = scalar_lea.vmem %s4, %s339
        %s341 = smul.u32 4, %s20
        %p343 = scmp.eq.s32.totalorder %s22, 0
        // Predicated region
        $region75: #{_lambda_.20} parent=69 // pred_check
          %p344 = pneg %p343
        $region76: #{_lambda_.20} parent=69 // pred_check_branch
          %346 = sbr.rel (%p344) target = $region78
        $region77: #{_lambda_.20} parent=69 // pred_region
          %347 = vst [vmem:[%s340] sm:$0xff] 0.0
          %348 = vst [vmem:[%s340 + $0x8] sm:$0xff] 0.0
          %349 = vst [vmem:[%s340 + $0x10] sm:$0xff] 0.0
          %350 = vst [vmem:[%s340 + $0x18] sm:$0xff] 0.0
        $region78: #{_lambda_.20} parent=69 // pred_fallthru
          _
        %v351 = vld [vmem:[%s340] sm:$0xff]
        %v352 = vld [vmem:[%s340 + $0x8] sm:$0xff]
        %v353 = vld [vmem:[%s340 + $0x10] sm:$0xff]
        %v354 = vld [vmem:[%s340 + $0x18] sm:$0xff]
        %v355 = vld [vmem:[%s276] sm:$0xff]
        %v356 = vld [vmem:[%s276 + $0x8] sm:$0xff]
        %v357 = vld [vmem:[%s276 + $0x10] sm:$0xff]
        %v358 = vld [vmem:[%s276 + $0x18] sm:$0xff]
        %v359 = vld [vmem:[%s325] sm:$0xf]
        %v360 = vld [vmem:[%s325 + $0x4] sm:$0xf]
        %v361 = vld [vmem:[%s325 + $0x8] sm:$0xf]
        %v362 = vld [vmem:[%s325 + $0xc] sm:$0xf]
        %v363 = vld [vmem:[%s325 + $0x10] sm:$0xf]
        %v364 = vld [vmem:[%s325 + $0x14] sm:$0xf]
        %v365 = vld [vmem:[%s325 + $0x18] sm:$0xf]
        %v366 = vld [vmem:[%s325 + $0x1c] sm:$0xf]
        %v367 = vld [vmem:[%s325 + $0x20] sm:$0xf]
        %v368 = vld [vmem:[%s325 + $0x24] sm:$0xf]
        %v369 = vld [vmem:[%s325 + $0x28] sm:$0xf]
        %v370 = vld [vmem:[%s325 + $0x2c] sm:$0xf]
        %v371 = vld [vmem:[%s325 + $0x30] sm:$0xf]
        %v372 = vld [vmem:[%s325 + $0x34] sm:$0xf]
        %v373 = vld [vmem:[%s325 + $0x38] sm:$0xf]
        %v374 = vld [vmem:[%s325 + $0x3c] sm:$0xf]
        %v375 = vld [vmem:[%s325 + $0x40] sm:$0xf]
        %v376 = vld [vmem:[%s325 + $0x44] sm:$0xf]
        %v377 = vld [vmem:[%s325 + $0x48] sm:$0xf]
        %v378 = vld [vmem:[%s325 + $0x4c] sm:$0xf]
        %v379 = vld [vmem:[%s325 + $0x50] sm:$0xf]
        %v380 = vld [vmem:[%s325 + $0x54] sm:$0xf]
        %v381 = vld [vmem:[%s325 + $0x58] sm:$0xf]
        %v382 = vld [vmem:[%s325 + $0x5c] sm:$0xf]
        %v383 = vld [vmem:[%s325 + $0x60] sm:$0xf]
        %v384 = vld [vmem:[%s325 + $0x64] sm:$0xf]
        %v385 = vld [vmem:[%s325 + $0x68] sm:$0xf]
        %v386 = vld [vmem:[%s325 + $0x6c] sm:$0xf]
        %v387 = vld [vmem:[%s325 + $0x70] sm:$0xf]
        %v388 = vld [vmem:[%s325 + $0x74] sm:$0xf]
        %v389 = vld [vmem:[%s325 + $0x78] sm:$0xf]
        %v390 = vld [vmem:[%s325 + $0x7c] sm:$0xf]
        %v395 = vunpack.c.l.b16 %v355
        %v396 = vunpack.c.h.b16 %v355
        %v397 = vunpack.c.l.b16 %v356
        %v398 = vunpack.c.h.b16 %v356
        %v399 = vunpack.c.l.b16 %v357
        %v400 = vunpack.c.h.b16 %v357
        %v401 = vunpack.c.l.b16 %v358
        %v402 = vunpack.c.h.b16 %v358
        %v403 = vpack.c.b16 %v397, %v395
        %v404 = vpack.c.b16 %v398, %v396
        %v405 = vpack.c.b16 %v401, %v399
        %v406 = vpack.c.b16 %v402, %v400
        %v443 = vunpack.c.l.b16 %v359
        %v444 = vunpack.c.l.b16 %v360
        %v445 = vunpack.c.l.b16 %v361
        %v446 = vunpack.c.l.b16 %v362
        %v447 = vunpack.c.l.b16 %v363
        %v448 = vunpack.c.l.b16 %v364
        %v449 = vunpack.c.l.b16 %v365
        %v450 = vunpack.c.l.b16 %v366
        %v451 = vunpack.c.l.b16 %v367
        %v452 = vunpack.c.l.b16 %v368
        %v453 = vunpack.c.l.b16 %v369
        %v454 = vunpack.c.l.b16 %v370
        %v455 = vunpack.c.l.b16 %v371
        %v456 = vunpack.c.l.b16 %v372
        %v457 = vunpack.c.l.b16 %v373
        %v458 = vunpack.c.l.b16 %v374
        %v459 = vunpack.c.l.b16 %v375
        %v460 = vunpack.c.l.b16 %v376
        %v461 = vunpack.c.l.b16 %v377
        %v462 = vunpack.c.l.b16 %v378
        %v463 = vunpack.c.l.b16 %v379
        %v464 = vunpack.c.l.b16 %v380
        %v465 = vunpack.c.l.b16 %v381
        %v466 = vunpack.c.l.b16 %v382
        %v467 = vunpack.c.l.b16 %v383
        %v468 = vunpack.c.l.b16 %v384
        %v469 = vunpack.c.l.b16 %v385
        %v470 = vunpack.c.l.b16 %v386
        %v471 = vunpack.c.l.b16 %v387
        %v472 = vunpack.c.l.b16 %v388
        %v473 = vunpack.c.l.b16 %v389
        %v474 = vunpack.c.l.b16 %v390
        %v475 = vpack.c.b16 %v444, %v443
        %v476 = vpack.c.b16 %v446, %v445
        %v477 = vpack.c.b16 %v448, %v447
        %v478 = vpack.c.b16 %v450, %v449
        %v479 = vpack.c.b16 %v452, %v451
        %v480 = vpack.c.b16 %v454, %v453
        %v481 = vpack.c.b16 %v456, %v455
        %v482 = vpack.c.b16 %v458, %v457
        %v483 = vpack.c.b16 %v460, %v459
        %v484 = vpack.c.b16 %v462, %v461
        %v485 = vpack.c.b16 %v464, %v463
        %v486 = vpack.c.b16 %v466, %v465
        %v487 = vpack.c.b16 %v468, %v467
        %v488 = vpack.c.b16 %v470, %v469
        %v489 = vpack.c.b16 %v472, %v471
        %v490 = vpack.c.b16 %v474, %v473
        %507 = vmatprep.subr.bf16.mxu0 0
        %508 = vmatpush1.bf16.msra.mxu0 %v482
        %509 = vmatprep.subr.bf16.mxu0 0
        %510 = vmatpush1.bf16.msra.mxu0 %v481
        %511 = vmatprep.subr.bf16.mxu0 0
        %512 = vmatpush1.bf16.msra.mxu0 %v480
        %513 = vmatprep.subr.bf16.mxu0 0
        %514 = vmatpush1.bf16.msra.mxu0 %v479
        %515 = vmatprep.subr.bf16.mxu0 0
        %516 = vmatpush1.bf16.msra.mxu0 %v478
        %517 = vmatprep.subr.bf16.mxu0 0
        %518 = vmatpush1.bf16.msra.mxu0 %v477
        %519 = vmatprep.subr.bf16.mxu0 0
        %520 = vmatpush1.bf16.msra.mxu0 %v476
        %521 = vmatprep.subr.bf16.mxu0 0
        %522 = vmatpush1.bf16.msra.mxu0 %v475
        %523 = vmatprep.subr.bf16.mxu0 0
        %524 = vmatpush2.bf16.msra.mxu0 %v490
        %525 = vmatprep.subr.bf16.mxu0 0
        %526 = vmatpush2.bf16.msra.mxu0 %v489
        %527 = vmatprep.subr.bf16.mxu0 0
        %528 = vmatpush2.bf16.msra.mxu0 %v488
        %529 = vmatprep.subr.bf16.mxu0 0
        %530 = vmatpush2.bf16.msra.mxu0 %v487
        %531 = vmatprep.subr.bf16.mxu0 0
        %532 = vmatpush2.bf16.msra.mxu0 %v486
        %533 = vmatprep.subr.bf16.mxu0 0
        %534 = vmatpush2.bf16.msra.mxu0 %v485
        %535 = vmatprep.subr.bf16.mxu0 0
        %536 = vmatpush2.bf16.msra.mxu0 %v484
        %537 = vmatprep.subr.bf16.mxu0 0
        %538 = vmatpush2.bf16.msra.mxu0 %v483
        %539 = vmatprep.mubr.bf16.mxu0 %v404
        %540 = vmatmul.mubr.bf16.gmra.mxu0 %v403
        %v541 = vpop.f32.mrf.mxu0
        %v542 = vadd.f32 0.0, %v541
        %v543 = vpop.f32.mrf.mxu0
        %v544 = vpop.f32.mrf.mxu0
        %v545 = vadd.f32 0.0, %v544
        %v546 = vpop.f32.mrf.mxu0
        %547 = vmatprep.mubr.bf16.mxu0 %v406
        %548 = vmatmul.mubr.bf16.gmra.mxu0 %v405
        %v549 = vpop.f32.mrf.mxu0
        %v550 = vadd.f32 0.0, %v549
        %v551 = vpop.f32.mrf.mxu0
        %v552 = vpop.f32.mrf.mxu0
        %v553 = vadd.f32 0.0, %v552
        %v554 = vpop.f32.mrf.mxu0
        %555 = vdwg.mxu0
        %v556 = vadd.f32 %v351, %v542
        %v557 = vadd.f32 %v352, %v545
        %v558 = vadd.f32 %v353, %v550
        %v559 = vadd.f32 %v354, %v553
        %560 = vst [vmem:[%s340] sm:$0xff] %v556
        %561 = vst [vmem:[%s340 + $0x8] sm:$0xff] %v557
        %562 = vst [vmem:[%s340 + $0x10] sm:$0xff] %v558
        %563 = vst [vmem:[%s340 + $0x18] sm:$0xff] %v559
        %p564 = scmp.eq.s32.totalorder %s22, 1
        // Predicated region
        $region79: #{_lambda_.20} parent=69 // pred_check
          %p565 = pneg %p564
        $region80: #{_lambda_.20} parent=69 // pred_check_branch
          %567 = sbr.rel (%p565) target = $region82
        $region81: #{_lambda_.20} parent=69 // pred_region
          %v568 = vld [vmem:[%s340] sm:$0xff]
          %v569 = vld [vmem:[%s340 + $0x8] sm:$0xff]
          %v570 = vld [vmem:[%s340 + $0x10] sm:$0xff]
          %v571 = vld [vmem:[%s340 + $0x18] sm:$0xff]
          %v572 = vld [vmem:[%s329] sm:$0x1]
          %v574 = vlaneseq
          %v575 = vshrl.u32 %v574, 7
          %v576 = vsub.s32 0, %v575
          %v577 = vrot.slane %v572, %v576
          %v579 = vmul.f32 %v568, %v577
          %v580 = vmul.f32 %v569, %v577
          %v581 = vmul.f32 %v570, %v577
          %v582 = vmul.f32 %v571, %v577
          %v583 = vld [vmem:[%s332] sm:$0x1]
          %v585 = vlaneseq
          %v586 = vshrl.u32 %v585, 7
          %v587 = vsub.s32 0, %v586
          %v588 = vrot.slane %v583, %v587
          %v590 = vadd.f32 %v579, %v588
          %v591 = vadd.f32 %v580, %v588
          %v592 = vadd.f32 %v581, %v588
          %v593 = vadd.f32 %v582, %v588
          %594 = vst [vmem:[%s340] sm:$0xff] %v590
          %595 = vst [vmem:[%s340 + $0x8] sm:$0xff] %v591
          %596 = vst [vmem:[%s340 + $0x10] sm:$0xff] %v592
          %597 = vst [vmem:[%s340 + $0x18] sm:$0xff] %v593
        $region82: #{_lambda_.20} parent=69 // pred_fallthru
          _
        %s598 = smul.u32 4, %s20
        %p599 = scmp.lt.s32.totalorder %s598, 3
        %s600 = scalar_select %p599, %s598, 3
        %p601 = scmp.lt.s32.totalorder %s21, 0
        %s602 = scalar_select %p601, %s21, 0
        %s603 = sadd.s32 %s602, %s600
        %s604 = smul.addr %s603, 8
        %s605 = scalar_lea.vmem %s4, %s604
        // Predicated region
        $region83: #{_lambda_.20} parent=69 // pred_check
          %p606 = pneg %p162
        $region84: #{_lambda_.20} parent=69 // pred_check_branch
          %608 = sbr.rel (%p606) target = $region86
        $region85: #{_lambda_.20} parent=69 // pred_region
          %s609 = smul.u32 4, %s20
        $region86: #{_lambda_.20} parent=69 // pred_fallthru
          _
        // Predicated region
        $region87: #{_lambda_.20} parent=69 // pred_check
          %p610 = pneg %p162
        $region88: #{_lambda_.20} parent=69 // pred_check_branch
          %612 = sbr.rel (%p610) target = $region90
        $region89: #{_lambda_.20} parent=69 // pred_region
          %s613 = smul.u32 4, %s20
          %p614 = scmp.lt.s32.totalorder %s613, 3
          %s615 = scalar_select %p614, %s613, 3
          %p616 = scmp.lt.s32.totalorder %s21, 0
          %s617 = scalar_select %p616, %s21, 0
          %s618 = sadd.s32 %s617, %s615
          %s619 = smul.addr %s618, 8
          %s620 = scalar_lea.vmem %s4, %s619
        $region90: #{_lambda_.20} parent=69 // pred_fallthru
          _
      $region70: #{_lambda_.20} parent=5 // pred_fallthru
        _
      %p621 = scmp.le.s32.totalorder 2, %s10
      // Predicated region
      $region91: #{_lambda_.20} parent=5 // pred_check
        %p622 = pneg %p621
      $region92: #{_lambda_.20} parent=5 // pred_check_branch
        %624 = sbr.rel (%p622) target = $region94
      $region93: #{_lambda_.20} parent=5 // pred_region
        %s625 = ssub.s32 %s10, 2
      $region94: #{_lambda_.20} parent=5 // pred_fallthru
        _
    $region6: #{_lambda_.20} parent=1 // loop_footer
      %s14 = sadd.s32 1, %s10
    $region7: #{_lambda_.20} parent=1 // loop_footer_branch
      %9 = sbr.rel target = $region3
    $region8: #{_lambda_.20} parent=1 // loop_exit
      _

// kernel: _lambda_.21
$region0: #{_lambda_.21}
  #allocation0 [shape = 'u32[]', space=smem, size = 0x4, offset = 0x4, fixed_abs, tag = 'smem constant byte address 0x4 - core index']
  #allocation1 [shape = 'u32[144,128]{1,0:T(1,128)}', space=vmem, size = 0x12000, scoped, tag = 'internal scratch']
  %s0 = inlined_call_operand.vmem [shape: bf16[32,768], index: 0, kind: input, shape index: {}]
  %s1 = inlined_call_operand.vmem [shape: bf16[768,128], index: 1, kind: input, shape index: {}]
  %s2 = inlined_call_operand.vmem [shape: f32[1,128], index: 2, kind: input, shape index: {}]
  %s3 = inlined_call_operand.vmem [shape: f32[1,128], index: 3, kind: input, shape index: {}]
  %s4 = inlined_call_operand.vmem [shape: f32[32,128], index: 4, kind: input, shape index: {}]
  %s5 = inlined_call_operand.vmem [shape: f32[32,128], index: 5, kind: output, shape index: {}]
  %s6 = sld [smem:[#allocation0]]
  $region99: #{_lambda_.21} parent=0
    _
  %s8 = ssub.s32 1, %s6
  %s9 = scalar_select 0, %s8, %s6
  $region1: #{_lambda_.21} parent=0
    #allocation2 [shape = 'u8[32768]{0}', space=vmem, size = 0x8000, scoped, tag = 'input window, operand 0']
    loop: start=0, step=1, limit=5
    $region2: #{_lambda_.21} parent=1 // loop_pre_header
      _
    $region3: #{_lambda_.21} parent=1 // loop_header
      %s11 = sphi 0, %s15
      %p12 = scmp.ge.s32.totalorder %s11, 5
      %s18 = sphi 0, %s37
      %s19 = sphi 0, %s33
      %s20 = sphi 0, %s29
      %s21 = sphi 0, %s18
      %s22 = sphi 0, %s19
      %s23 = sphi 0, %s20
      %s24 = sphi 0, %s21
      %s25 = sphi 0, %s22
      %s26 = sphi 0, %s23
      %s42 = sphi 0, %s44
      %s45 = sphi 0, %s42
      %s46 = sphi 0, %s45
      %s62 = sphi 0, %s46
      %s70 = sphi 0, %s72
      %s73 = sphi 0, %s70
      %s74 = sphi 0, %s73
      %s90 = sphi 0, %s74
      %s96 = sphi 0, %s98
      %s99 = sphi 0, %s96
      %s100 = sphi 0, %s99
      %s116 = sphi 0, %s100
      %s122 = sphi 0, %s124
      %s125 = sphi 0, %s122
      %s126 = sphi 0, %s125
      %s142 = sphi 0, %s126
      %s150 = sphi 0, %s152
      %s153 = sphi 0, %s150
      %s154 = sphi 0, %s153
      %s170 = sphi 0, %s154
      %s178 = sphi 0, %s180
      %s181 = sphi 0, %s178
      %s182 = sphi 0, %s181
      %s198 = sphi 0, %s182
    $region4: #{_lambda_.21} parent=1 // loop_header_branch
      %14 = sbr.rel (%p12) target = $region8
    $region5: #{_lambda_.21} parent=1 // loop_body
      %s16 = ssub.s32 %s11, 1
      %s17 = ssub.s32 %s11, 2
      %s27 = sadd.s32 1, %s20
      %p28 = scmp.ge.s32.totalorder %s27, 3
      %s29 = scalar_select %p28, 0, %s27
      %s30 = sadd.s32 1, %s19
      %s31 = scalar_select %p28, %s30, %s19
      %p32 = scmp.ge.s32.totalorder %s31, 1
      %s33 = scalar_select %p32, 0, %s31
      %s34 = sadd.s32 1, %s18
      %s35 = scalar_select %p32, %s34, %s18
      %p36 = scmp.ge.s32.totalorder %s35, 1
      %s37 = scalar_select %p36, 0, %s35
      %s38 = ssub.s32 %s18, %s37
      %s39 = ssub.s32 %s20, %s29
      %s40 = sor.u32 %s38, %s39
      %p41 = scmp.eq.s32.totalorder %s40, 0
      %s43 = sadd.s32 %s42, 1
      %s44 = scalar_select %p41, %s42, %s43
      %p47 = pneg %p41
      %p48 = scmp.eq.s32.totalorder %s11, 2
      %p49 = por %p47, %p48
      %p50 = scmp.ne.s32.totalorder %s42, %s45
      %p51 = scmp.eq.s32.totalorder %s11, 0
      %p52 = por %p50, %p51
      %p53 = scmp.ne.s32.totalorder %s42, %s45
      %p54 = scmp.eq.s32.totalorder %s16, 2
      %p55 = por %p53, %p54
      %p56 = scmp.ne.s32.totalorder %s45, %s46
      %p57 = scmp.eq.s32.totalorder %s16, 0
      %p58 = por %p56, %p57
      %p59 = scmp.ne.s32.totalorder %s45, %s46
      %p60 = scmp.eq.s32.totalorder %s17, 2
      %p61 = por %p59, %p60
      %p63 = scmp.ne.s32.totalorder %s46, %s62
      %p64 = scmp.eq.s32.totalorder %s17, 0
      %p65 = por %p63, %p64
      %s66 = ssub.s32 %s20, %s29
      %s67 = ssub.s32 %s19, %s33
      %s68 = sor.u32 %s66, %s67
      %p69 = scmp.eq.s32.totalorder %s68, 0
      %s71 = sadd.s32 %s70, 1
      %s72 = scalar_select %p69, %s70, %s71
      %p75 = pneg %p69
      %p76 = scmp.eq.s32.totalorder %s11, 2
      %p77 = por %p75, %p76
      %p78 = scmp.ne.s32.totalorder %s70, %s73
      %p79 = scmp.eq.s32.totalorder %s11, 0
      %p80 = por %p78, %p79
      %p81 = scmp.ne.s32.totalorder %s70, %s73
      %p82 = scmp.eq.s32.totalorder %s16, 2
      %p83 = por %p81, %p82
      %p84 = scmp.ne.s32.totalorder %s73, %s74
      %p85 = scmp.eq.s32.totalorder %s16, 0
      %p86 = por %p84, %p85
      %p87 = scmp.ne.s32.totalorder %s73, %s74
      %p88 = scmp.eq.s32.totalorder %s17, 2
      %p89 = por %p87, %p88
      %p91 = scmp.ne.s32.totalorder %s74, %s90
      %p92 = scmp.eq.s32.totalorder %s17, 0
      %p93 = por %p91, %p92
      %s94 = ssub.s32 %s19, %s33
      %p95 = scmp.eq.s32.totalorder %s94, 0
      %s97 = sadd.s32 %s96, 1
      %s98 = scalar_select %p95, %s96, %s97
      %p101 = pneg %p95
      %p102 = scmp.eq.s32.totalorder %s11, 2
      %p103 = por %p101, %p102
      %p104 = scmp.ne.s32.totalorder %s96, %s99
      %p105 = scmp.eq.s32.totalorder %s11, 0
      %p106 = por %p104, %p105
      %p107 = scmp.ne.s32.totalorder %s96, %s99
      %p108 = scmp.eq.s32.totalorder %s16, 2
      %p109 = por %p107, %p108
      %p110 = scmp.ne.s32.totalorder %s99, %s100
      %p111 = scmp.eq.s32.totalorder %s16, 0
      %p112 = por %p110, %p111
      %p113 = scmp.ne.s32.totalorder %s99, %s100
      %p114 = scmp.eq.s32.totalorder %s17, 2
      %p115 = por %p113, %p114
      %p117 = scmp.ne.s32.totalorder %s100, %s116
      %p118 = scmp.eq.s32.totalorder %s17, 0
      %p119 = por %p117, %p118
      %s120 = ssub.s32 %s19, %s33
      %p121 = scmp.eq.s32.totalorder %s120, 0
      %s123 = sadd.s32 %s122, 1
      %s124 = scalar_select %p121, %s122, %s123
      %p127 = pneg %p121
      %p128 = scmp.eq.s32.totalorder %s11, 2
      %p129 = por %p127, %p128
      %p130 = scmp.ne.s32.totalorder %s122, %s125
      %p131 = scmp.eq.s32.totalorder %s11, 0
      %p132 = por %p130, %p131
      %p133 = scmp.ne.s32.totalorder %s122, %s125
      %p134 = scmp.eq.s32.totalorder %s16, 2
      %p135 = por %p133, %p134
      %p136 = scmp.ne.s32.totalorder %s125, %s126
      %p137 = scmp.eq.s32.totalorder %s16, 0
      %p138 = por %p136, %p137
      %p139 = scmp.ne.s32.totalorder %s125, %s126
      %p140 = scmp.eq.s32.totalorder %s17, 2
      %p141 = por %p139, %p140
      %p143 = scmp.ne.s32.totalorder %s126, %s142
      %p144 = scmp.eq.s32.totalorder %s17, 0
      %p145 = por %p143, %p144
      %s146 = ssub.s32 %s18, %s37
      %s147 = ssub.s32 %s19, %s33
      %s148 = sor.u32 %s146, %s147
      %p149 = scmp.eq.s32.totalorder %s148, 0
      %s151 = sadd.s32 %s150, 1
      %s152 = scalar_select %p149, %s150, %s151
      %p155 = pneg %p149
      %p156 = scmp.eq.s32.totalorder %s11, 2
      %p157 = por %p155, %p156
      %p158 = scmp.ne.s32.totalorder %s150, %s153
      %p159 = scmp.eq.s32.totalorder %s11, 0
      %p160 = por %p158, %p159
      %p161 = scmp.ne.s32.totalorder %s150, %s153
      %p162 = scmp.eq.s32.totalorder %s16, 2
      %p163 = por %p161, %p162
      %p164 = scmp.ne.s32.totalorder %s153, %s154
      %p165 = scmp.eq.s32.totalorder %s16, 0
      %p166 = por %p164, %p165
      %p167 = scmp.ne.s32.totalorder %s153, %s154
      %p168 = scmp.eq.s32.totalorder %s17, 2
      %p169 = por %p167, %p168
      %p171 = scmp.ne.s32.totalorder %s154, %s170
      %p172 = scmp.eq.s32.totalorder %s17, 0
      %p173 = por %p171, %p172
      %s174 = ssub.s32 %s18, %s37
      %s175 = ssub.s32 %s19, %s33
      %s176 = sor.u32 %s174, %s175
      %p177 = scmp.eq.s32.totalorder %s176, 0
      %s179 = sadd.s32 %s178, 1
      %s180 = scalar_select %p177, %s178, %s179
      %p183 = pneg %p177
      %p184 = scmp.eq.s32.totalorder %s11, 2
      %p185 = por %p183, %p184
      %p186 = scmp.ne.s32.totalorder %s178, %s181
      %p187 = scmp.eq.s32.totalorder %s11, 0
      %p188 = por %p186, %p187
      %p189 = scmp.ne.s32.totalorder %s178, %s181
      %p190 = scmp.eq.s32.totalorder %s16, 2
      %p191 = por %p189, %p190
      %p192 = scmp.ne.s32.totalorder %s181, %s182
      %p193 = scmp.eq.s32.totalorder %s16, 0
      %p194 = por %p192, %p193
      %p195 = scmp.ne.s32.totalorder %s181, %s182
      %p196 = scmp.eq.s32.totalorder %s17, 2
      %p197 = por %p195, %p196
      %p199 = scmp.ne.s32.totalorder %s182, %s198
      %p200 = scmp.eq.s32.totalorder %s17, 0
      %p201 = por %p199, %p200
      %p202 = scmp.le.s32.totalorder 1, %s11
      %p203 = scmp.lt.s32.totalorder %s11, 4
      %p204 = pnand %p202, %p203
      %p205 = pneg %p204
      // Predicated region
      $region9: #{_lambda_.21} parent=5 // pred_check
        _
      $region10: #{_lambda_.21} parent=5 // pred_check_branch
        %207 = sbr.rel (%p204) target = $region12
      $region11: #{_lambda_.21} parent=5 // pred_region
        %s208 = ssub.s32 %s11, 1
        // Predicated region
        $region13: #{_lambda_.21} parent=11 // pred_check
          %p209 = pneg %p112
        $region14: #{_lambda_.21} parent=11 // pred_check_branch
          %211 = sbr.rel (%p209) target = $region16
        $region15: #{_lambda_.21} parent=11 // pred_region
          %p212 = scmp.lt.s32.totalorder %s22, 0
          %s213 = scalar_select %p212, %s22, 0
          %s214 = scalar_lea.vmem %s2, %s213
        $region16: #{_lambda_.21} parent=11 // pred_fallthru
          _
        // Predicated region
        $region17: #{_lambda_.21} parent=11 // pred_check
          %p215 = pneg %p138
        $region18: #{_lambda_.21} parent=11 // pred_check_branch
          %217 = sbr.rel (%p215) target = $region20
        $region19: #{_lambda_.21} parent=11 // pred_region
          %p218 = scmp.lt.s32.totalorder %s22, 0
          %s219 = scalar_select %p218, %s22, 0
          %s220 = scalar_lea.vmem %s3, %s219
        $region20: #{_lambda_.21} parent=11 // pred_fallthru
          _
        // Predicated region
        $region21: #{_lambda_.21} parent=11 // pred_check
          %p221 = pneg %p166
        $region22: #{_lambda_.21} parent=11 // pred_check_branch
          %223 = sbr.rel (%p221) target = $region24
        $region23: #{_lambda_.21} parent=11 // pred_region
          %s224 = smul.u32 4, %s21
          %p225 = scmp.lt.s32.totalorder %s224, 3
          %s226 = scalar_select %p225, %s224, 3
          %p227 = scmp.lt.s32.totalorder %s22, 0
          %s228 = scalar_select %p227, %s22, 0
          %s229 = sadd.s32 %s228, %s226
          %s230 = smul.addr %s229, 8
          %s231 = scalar_lea.vmem %s4, %s230
          %s232 = smul.u32 4, %s21
        $region24: #{_lambda_.21} parent=11 // pred_fallthru
          _
      $region12: #{_lambda_.21} parent=5 // pred_fallthru
        _
      %p233 = scmp.lt.s32.totalorder %s11, 3
      // Predicated region
      $region25: #{_lambda_.21} parent=5 // pred_check
        %p234 = pneg %p233
      $region26: #{_lambda_.21} parent=5 // pred_check_branch
        %236 = sbr.rel (%p234) target = $region28
      $region27: #{_lambda_.21} parent=5 // pred_region
        // Predicated region
        $region29: #{_lambda_.21} parent=27 // pred_check
          %p237 = pneg %p52
        $region30: #{_lambda_.21} parent=27 // pred_check_branch
          %239 = sbr.rel (%p237) target = $region32
        $region31: #{_lambda_.21} parent=27 // pred_region
          %s240 = sand.u32 %s42, 1
          %s241 = sand.u32 %s42, 1
          %s242 = smul.addr %s241, 32
          %s243 = scalar_lea.vmem [#allocation2], %s242
          %s244 = smul.u32 4, %s18
          %s245 = smul.u32 2, %s20
          %s246 = smul.addr %s244, 6
          %s247 = sadd.s32 %s245, %s246
          %s248 = smul.addr %s247, 4
          %s249 = scalar_lea.vmem %s0, %s248
          // Predicated region
          $region33: #{_lambda_.21} parent=31 // pred_check
            _
          $region34: #{_lambda_.21} parent=31 // pred_check_branch
            %251 = sbr.rel (0) target = $region36
          $region35: #{_lambda_.21} parent=31 // pred_region
            // Predicated region
            $region37: #{_lambda_.21} parent=35 // pred_check
              _
            $region38: #{_lambda_.21} parent=35 // pred_check_branch
              %253 = sbr.rel (0) target = $region40
            $region39: #{_lambda_.21} parent=35 // pred_region
              // Predicated region
              $region52: #{_lambda_.21} parent=39 // pred_check
                _
              $region53: #{_lambda_.21} parent=39 // pred_check_branch
                %275 = sbr.rel (0) target = $region55
              $region54: #{_lambda_.21} parent=39 // pred_region
                loop: start=0, step=1, limit=1
                $region56: #{_lambda_.21} parent=54 // loop_pre_header
                  _
                $region57: #{_lambda_.21} parent=54 // loop_header
                  %s277 = sphi 0, %s281
                  %p278 = scmp.ge.s32.totalorder %s277, 1
                  %s282 = sphi %s249, %s249
                  %s283 = sphi %s243, %s243
                $region58: #{_lambda_.21} parent=54 // loop_header_branch
                  %280 = sbr.rel (%p278) target = $region62
                $region59: #{_lambda_.21} parent=54 // loop_body
                  %v284 = vld [vmem:[%s282] sm:$0xff]
                  %285 = vst [vmem:[%s283] sm:$0xff] %v284
                  %v286 = vld [vmem:[%s282 + $0x18] sm:$0xff]
                  %287 = vst [vmem:[%s283 + $0x8] sm:$0xff] %v286
                  %v288 = vld [vmem:[%s282 + $0x30] sm:$0xff]
                  %289 = vst [vmem:[%s283 + $0x10] sm:$0xff] %v288
                  %v290 = vld [vmem:[%s282 + $0x48] sm:$0xff]
                  %291 = vst [vmem:[%s283 + $0x18] sm:$0xff] %v290
                $region60: #{_lambda_.21} parent=54 // loop_footer
                  %s281 = sadd.s32 1, %s277
                $region61: #{_lambda_.21} parent=54 // loop_footer_branch
                  %276 = sbr.rel target = $region57
                $region62: #{_lambda_.21} parent=54 // loop_exit
                  _
              $region55: #{_lambda_.21} parent=39 // pred_fallthru
                _
              // Predicated region
              $region63: #{_lambda_.21} parent=39 // pred_check
                _
              $region64: #{_lambda_.21} parent=39 // pred_check_branch
                %293 = sbr.rel target = $region66
              $region65: #{_lambda_.21} parent=39 // pred_region
                _
              $region66: #{_lambda_.21} parent=39 // pred_fallthru
                _
            $region40: #{_lambda_.21} parent=35 // pred_fallthru
              _
            // Predicated region
            $region41: #{_lambda_.21} parent=35 // pred_check
              _
            $region42: #{_lambda_.21} parent=35 // pred_check_branch
              %255 = sbr.rel target = $region44
            $region43: #{_lambda_.21} parent=35 // pred_region
              %s257 = ssub.s32 256, 1
              loop: start=0, step=1, limit=1
              $region45: #{_lambda_.21} parent=43 // loop_pre_header
                _
              $region46: #{_lambda_.21} parent=43 // loop_header
                %s259 = sphi 0, %s263
                %p260 = scmp.ge.s32.totalorder %s259, 1
                %s264 = sphi %s249, %s249
                %s265 = sphi %s243, %s243
              $region47: #{_lambda_.21} parent=43 // loop_header_branch
                %262 = sbr.rel (%p260) target = $region51
              $region48: #{_lambda_.21} parent=43 // loop_body
                %v266 = vld [vmem:[%s264] sm:%s257]
                %267 = vst [vmem:[%s265] sm:%s257] %v266
                %v268 = vld [vmem:[%s264 + $0x18] sm:%s257]
                %269 = vst [vmem:[%s265 + $0x8] sm:%s257] %v268
                %v270 = vld [vmem:[%s264 + $0x30] sm:%s257]
                %271 = vst [vmem:[%s265 + $0x10] sm:%s257] %v270
                %v272 = vld [vmem:[%s264 + $0x48] sm:%s257]
                %273 = vst [vmem:[%s265 + $0x18] sm:%s257] %v272
              $region49: #{_lambda_.21} parent=43 // loop_footer
                %s263 = sadd.s32 1, %s259
              $region50: #{_lambda_.21} parent=43 // loop_footer_branch
                %258 = sbr.rel target = $region46
              $region51: #{_lambda_.21} parent=43 // loop_exit
                _
            $region44: #{_lambda_.21} parent=35 // pred_fallthru
              _
          $region36: #{_lambda_.21} parent=31 // pred_fallthru
            _
          %294 = vnop
        $region32: #{_lambda_.21} parent=27 // pred_fallthru
          _
        // Predicated region
        $region67: #{_lambda_.21} parent=27 // pred_check
          %p295 = pneg %p80
        $region68: #{_lambda_.21} parent=27 // pred_check_branch
          %297 = sbr.rel (%p295) target = $region70
        $region69: #{_lambda_.21} parent=27 // pred_region
          %s298 = smul.u32 32, %s20
          %p299 = scmp.lt.s32.totalorder %s298, 95
          %s300 = scalar_select %p299, %s298, 95
          %p301 = scmp.lt.s32.totalorder %s19, 0
          %s302 = scalar_select %p301, %s19, 0
          %s303 = sadd.s32 %s302, %s300
          %s304 = smul.addr %s303, 4
          %s305 = scalar_lea.vmem %s1, %s304
          %s306 = smul.u32 32, %s20
        $region70: #{_lambda_.21} parent=27 // pred_fallthru
          _
      $region28: #{_lambda_.21} parent=5 // pred_fallthru
        _
      %p307 = scmp.le.s32.totalorder 1, %s11
      %p308 = scmp.lt.s32.totalorder %s11, 4
      %p309 = pnand %p307, %p308
      %p310 = pneg %p309
      // Predicated region
      $region71: #{_lambda_.21} parent=5 // pred_check
        _
      $region72: #{_lambda_.21} parent=5 // pred_check_branch
        %312 = sbr.rel (%p309) target = $region74
      $region73: #{_lambda_.21} parent=5 // pred_region
        %s313 = ssub.s32 %s11, 1
        %s314 = sand.u32 %s45, 1
        %s315 = sand.u32 %s45, 1
        %s316 = smul.addr %s315, 32
        %s317 = scalar_lea.vmem [#allocation2], %s316
        // Predicated region
        $region75: #{_lambda_.21} parent=73 // pred_check
          %p318 = pneg %p58
        $region76: #{_lambda_.21} parent=73 // pred_check_branch
          %320 = sbr.rel (%p318) target = $region78
        $region77: #{_lambda_.21} parent=73 // pred_region
          _
        $region78: #{_lambda_.21} parent=73 // pred_fallthru
          _
        %s321 = sand.u32 %s45, 1
        %s322 = sand.u32 %s45, 1
        %s323 = smul.addr %s322, 32
        %s324 = scalar_lea.vmem [#allocation2], %s323
        %p325 = pneg %p58
        %p326 = pneg %p55
        %s327 = smul.u32 32, %s23
        %p328 = scmp.lt.s32.totalorder %s327, 95
        %s329 = scalar_select %p328, %s327, 95
        %p330 = scmp.lt.s32.totalorder %s22, 0
        %s331 = scalar_select %p330, %s22, 0
        %s332 = sadd.s32 %s331, %s329
        %s333 = smul.addr %s332, 4
        %s334 = scalar_lea.vmem %s1, %s333
        %p335 = pneg %p86
        %p336 = pneg %p83
        %p337 = scmp.lt.s32.totalorder %s22, 0
        %s338 = scalar_select %p337, %s22, 0
        %s339 = scalar_lea.vmem %s2, %s338
        %p340 = pneg %p112
        %p341 = pneg %p109
        %p342 = scmp.lt.s32.totalorder %s22, 0
        %s343 = scalar_select %p342, %s22, 0
        %s344 = scalar_lea.vmem %s3, %s343
        %p345 = pneg %p138
        %p346 = pneg %p135
        %s347 = smul.u32 4, %s21
        %p348 = scmp.lt.s32.totalorder %s347, 3
        %s349 = scalar_select %p348, %s347, 3
        %p350 = scmp.lt.s32.totalorder %s22, 0
        %s351 = scalar_select %p350, %s22, 0
        %s352 = sadd.s32 %s351, %s349
        %s353 = smul.addr %s352, 8
        %s354 = scalar_lea.vmem %s4, %s353
        %p355 = pneg %p166
        %p356 = pneg %p163
        %p357 = pneg %p194
        %p358 = pneg %p191
        %s359 = smul.u32 4, %s21
        %p360 = scmp.lt.s32.totalorder %s359, 3
        %s361 = scalar_select %p360, %s359, 3
        %p362 = scmp.lt.s32.totalorder %s22, 0
        %s363 = scalar_select %p362, %s22, 0
        %s364 = sadd.s32 %s363, %s361
        %s365 = smul.addr %s364, 8
        %s366 = scalar_lea.vmem %s5, %s365
        %s367 = smul.u32 4, %s21
        %s368 = smul.u32 2, %s23
        %s369 = smul.u32 32, %s23
        %p370 = scmp.lt.s32.totalorder %s369, 95
        %s371 = scalar_select %p370, %s369, 95
        %p372 = scmp.lt.s32.totalorder %s22, 0
        %s373 = scalar_select %p372, %s22, 0
        %s374 = sadd.s32 %s373, %s371
        %s375 = smul.addr %s374, 4
        %s376 = scalar_lea.vmem %s1, %s375
        %s377 = smul.u32 32, %s23
        %p378 = scmp.lt.s32.totalorder %s22, 0
        %s379 = scalar_select %p378, %s22, 0
        %s380 = scalar_lea.vmem %s2, %s379
        %p381 = scmp.lt.s32.totalorder %s22, 0
        %s382 = scalar_select %p381, %s22, 0
        %s383 = scalar_lea.vmem %s3, %s382
        %s384 = smul.u32 4, %s21
        %p385 = scmp.lt.s32.totalorder %s384, 3
        %s386 = scalar_select %p385, %s384, 3
        %p387 = scmp.lt.s32.totalorder %s22, 0
        %s388 = scalar_select %p387, %s22, 0
        %s389 = sadd.s32 %s388, %s386
        %s390 = smul.addr %s389, 8
        %s391 = scalar_lea.vmem %s4, %s390
        %s392 = smul.u32 4, %s21
        %s393 = smul.u32 4, %s21
        %p394 = scmp.lt.s32.totalorder %s393, 3
        %s395 = scalar_select %p394, %s393, 3
        %p396 = scmp.lt.s32.totalorder %s22, 0
        %s397 = scalar_select %p396, %s22, 0
        %s398 = sadd.s32 %s397, %s395
        %s399 = smul.addr %s398, 8
        %s400 = scalar_lea.vmem %s5, %s399
        %s401 = smul.u32 4, %s21
        %p403 = scmp.eq.s32.totalorder %s23, 0
        // Predicated region
        $region79: #{_lambda_.21} parent=73 // pred_check
          %p404 = pneg %p403
        $region80: #{_lambda_.21} parent=73 // pred_check_branch
          %406 = sbr.rel (%p404) target = $region82
        $region81: #{_lambda_.21} parent=73 // pred_region
          %407 = vst [vmem:[%s400] sm:$0xff] 0.0
          %408 = vst [vmem:[%s400 + $0x8] sm:$0xff] 0.0
          %409 = vst [vmem:[%s400 + $0x10] sm:$0xff] 0.0
          %410 = vst [vmem:[%s400 + $0x18] sm:$0xff] 0.0
        $region82: #{_lambda_.21} parent=73 // pred_fallthru
          _
        %v411 = vld [vmem:[%s400] sm:$0xff]
        %v412 = vld [vmem:[%s400 + $0x8] sm:$0xff]
        %v413 = vld [vmem:[%s400 + $0x10] sm:$0xff]
        %v414 = vld [vmem:[%s400 + $0x18] sm:$0xff]
        %v415 = vld [vmem:[%s317] sm:$0xff]
        %v416 = vld [vmem:[%s317 + $0x8] sm:$0xff]
        %v417 = vld [vmem:[%s317 + $0x10] sm:$0xff]
        %v418 = vld [vmem:[%s317 + $0x18] sm:$0xff]
        %v419 = vld [vmem:[%s376] sm:$0xf]
        %v420 = vld [vmem:[%s376 + $0x4] sm:$0xf]
        %v421 = vld [vmem:[%s376 + $0x8] sm:$0xf]
        %v422 = vld [vmem:[%s376 + $0xc] sm:$0xf]
        %v423 = vld [vmem:[%s376 + $0x10] sm:$0xf]
        %v424 = vld [vmem:[%s376 + $0x14] sm:$0xf]
        %v425 = vld [vmem:[%s376 + $0x18] sm:$0xf]
        %v426 = vld [vmem:[%s376 + $0x1c] sm:$0xf]
        %v427 = vld [vmem:[%s376 + $0x20] sm:$0xf]
        %v428 = vld [vmem:[%s376 + $0x24] sm:$0xf]
        %v429 = vld [vmem:[%s376 + $0x28] sm:$0xf]
        %v430 = vld [vmem:[%s376 + $0x2c] sm:$0xf]
        %v431 = vld [vmem:[%s376 + $0x30] sm:$0xf]
        %v432 = vld [vmem:[%s376 + $0x34] sm:$0xf]
        %v433 = vld [vmem:[%s376 + $0x38] sm:$0xf]
        %v434 = vld [vmem:[%s376 + $0x3c] sm:$0xf]
        %v435 = vld [vmem:[%s376 + $0x40] sm:$0xf]
        %v436 = vld [vmem:[%s376 + $0x44] sm:$0xf]
        %v437 = vld [vmem:[%s376 + $0x48] sm:$0xf]
        %v438 = vld [vmem:[%s376 + $0x4c] sm:$0xf]
        %v439 = vld [vmem:[%s376 + $0x50] sm:$0xf]
        %v440 = vld [vmem:[%s376 + $0x54] sm:$0xf]
        %v441 = vld [vmem:[%s376 + $0x58] sm:$0xf]
        %v442 = vld [vmem:[%s376 + $0x5c] sm:$0xf]
        %v443 = vld [vmem:[%s376 + $0x60] sm:$0xf]
        %v444 = vld [vmem:[%s376 + $0x64] sm:$0xf]
        %v445 = vld [vmem:[%s376 + $0x68] sm:$0xf]
        %v446 = vld [vmem:[%s376 + $0x6c] sm:$0xf]
        %v447 = vld [vmem:[%s376 + $0x70] sm:$0xf]
        %v448 = vld [vmem:[%s376 + $0x74] sm:$0xf]
        %v449 = vld [vmem:[%s376 + $0x78] sm:$0xf]
        %v450 = vld [vmem:[%s376 + $0x7c] sm:$0xf]
        %v455 = vunpack.c.l.b16 %v415
        %v456 = vunpack.c.h.b16 %v415
        %v457 = vunpack.c.l.b16 %v416
        %v458 = vunpack.c.h.b16 %v416
        %v459 = vunpack.c.l.b16 %v417
        %v460 = vunpack.c.h.b16 %v417
        %v461 = vunpack.c.l.b16 %v418
        %v462 = vunpack.c.h.b16 %v418
        %v463 = vpack.c.b16 %v457, %v455
        %v464 = vpack.c.b16 %v458, %v456
        %v465 = vpack.c.b16 %v461, %v459
        %v466 = vpack.c.b16 %v462, %v460
        %v503 = vunpack.c.l.b16 %v419
        %v504 = vunpack.c.l.b16 %v420
        %v505 = vunpack.c.l.b16 %v421
        %v506 = vunpack.c.l.b16 %v422
        %v507 = vunpack.c.l.b16 %v423
        %v508 = vunpack.c.l.b16 %v424
        %v509 = vunpack.c.l.b16 %v425
        %v510 = vunpack.c.l.b16 %v426
        %v511 = vunpack.c.l.b16 %v427
        %v512 = vunpack.c.l.b16 %v428
        %v513 = vunpack.c.l.b16 %v429
        %v514 = vunpack.c.l.b16 %v430
        %v515 = vunpack.c.l.b16 %v431
        %v516 = vunpack.c.l.b16 %v432
        %v517 = vunpack.c.l.b16 %v433
        %v518 = vunpack.c.l.b16 %v434
        %v519 = vunpack.c.l.b16 %v435
        %v520 = vunpack.c.l.b16 %v436
        %v521 = vunpack.c.l.b16 %v437
        %v522 = vunpack.c.l.b16 %v438
        %v523 = vunpack.c.l.b16 %v439
        %v524 = vunpack.c.l.b16 %v440
        %v525 = vunpack.c.l.b16 %v441
        %v526 = vunpack.c.l.b16 %v442
        %v527 = vunpack.c.l.b16 %v443
        %v528 = vunpack.c.l.b16 %v444
        %v529 = vunpack.c.l.b16 %v445
        %v530 = vunpack.c.l.b16 %v446
        %v531 = vunpack.c.l.b16 %v447
        %v532 = vunpack.c.l.b16 %v448
        %v533 = vunpack.c.l.b16 %v449
        %v534 = vunpack.c.l.b16 %v450
        %v535 = vpack.c.b16 %v504, %v503
        %v536 = vpack.c.b16 %v506, %v505
        %v537 = vpack.c.b16 %v508, %v507
        %v538 = vpack.c.b16 %v510, %v509
        %v539 = vpack.c.b16 %v512, %v511
        %v540 = vpack.c.b16 %v514, %v513
        %v541 = vpack.c.b16 %v516, %v515
        %v542 = vpack.c.b16 %v518, %v517
        %v543 = vpack.c.b16 %v520, %v519
        %v544 = vpack.c.b16 %v522, %v521
        %v545 = vpack.c.b16 %v524, %v523
        %v546 = vpack.c.b16 %v526, %v525
        %v547 = vpack.c.b16 %v528, %v527
        %v548 = vpack.c.b16 %v530, %v529
        %v549 = vpack.c.b16 %v532, %v531
        %v550 = vpack.c.b16 %v534, %v533
        %567 = vmatprep.subr.bf16.mxu0 0
        %568 = vmatpush1.bf16.msra.mxu0 %v542
        %569 = vmatprep.subr.bf16.mxu0 0
        %570 = vmatpush1.bf16.msra.mxu0 %v541
        %571 = vmatprep.subr.bf16.mxu0 0
        %572 = vmatpush1.bf16.msra.mxu0 %v540
        %573 = vmatprep.subr.bf16.mxu0 0
        %574 = vmatpush1.bf16.msra.mxu0 %v539
        %575 = vmatprep.subr.bf16.mxu0 0
        %576 = vmatpush1.bf16.msra.mxu0 %v538
        %577 = vmatprep.subr.bf16.mxu0 0
        %578 = vmatpush1.bf16.msra.mxu0 %v537
        %579 = vmatprep.subr.bf16.mxu0 0
        %580 = vmatpush1.bf16.msra.mxu0 %v536
        %581 = vmatprep.subr.bf16.mxu0 0
        %582 = vmatpush1.bf16.msra.mxu0 %v535
        %583 = vmatprep.subr.bf16.mxu0 0
        %584 = vmatpush2.bf16.msra.mxu0 %v550
        %585 = vmatprep.subr.bf16.mxu0 0
        %586 = vmatpush2.bf16.msra.mxu0 %v549
        %587 = vmatprep.subr.bf16.mxu0 0
        %588 = vmatpush2.bf16.msra.mxu0 %v548
        %589 = vmatprep.subr.bf16.mxu0 0
        %590 = vmatpush2.bf16.msra.mxu0 %v547
        %591 = vmatprep.subr.bf16.mxu0 0
        %592 = vmatpush2.bf16.msra.mxu0 %v546
        %593 = vmatprep.subr.bf16.mxu0 0
        %594 = vmatpush2.bf16.msra.mxu0 %v545
        %595 = vmatprep.subr.bf16.mxu0 0
        %596 = vmatpush2.bf16.msra.mxu0 %v544
        %597 = vmatprep.subr.bf16.mxu0 0
        %598 = vmatpush2.bf16.msra.mxu0 %v543
        %599 = vmatprep.mubr.bf16.mxu0 %v464
        %600 = vmatmul.mubr.bf16.gmra.mxu0 %v463
        %v601 = vpop.f32.mrf.mxu0
        %v602 = vadd.f32 0.0, %v601
        %v603 = vpop.f32.mrf.mxu0
        %v604 = vpop.f32.mrf.mxu0
        %v605 = vadd.f32 0.0, %v604
        %v606 = vpop.f32.mrf.mxu0
        %607 = vmatprep.mubr.bf16.mxu0 %v466
        %608 = vmatmul.mubr.bf16.gmra.mxu0 %v465
        %v609 = vpop.f32.mrf.mxu0
        %v610 = vadd.f32 0.0, %v609
        %v611 = vpop.f32.mrf.mxu0
        %v612 = vpop.f32.mrf.mxu0
        %v613 = vadd.f32 0.0, %v612
        %v614 = vpop.f32.mrf.mxu0
        %615 = vdwg.mxu0
        %v616 = vadd.f32 %v411, %v602
        %v617 = vadd.f32 %v412, %v605
        %v618 = vadd.f32 %v413, %v610
        %v619 = vadd.f32 %v414, %v613
        %620 = vst [vmem:[%s400] sm:$0xff] %v616
        %621 = vst [vmem:[%s400 + $0x8] sm:$0xff] %v617
        %622 = vst [vmem:[%s400 + $0x10] sm:$0xff] %v618
        %623 = vst [vmem:[%s400 + $0x18] sm:$0xff] %v619
        %p624 = scmp.eq.s32.totalorder %s23, 2
        // Predicated region
        $region83: #{_lambda_.21} parent=73 // pred_check
          %p625 = pneg %p624
        $region84: #{_lambda_.21} parent=73 // pred_check_branch
          %627 = sbr.rel (%p625) target = $region86
        $region85: #{_lambda_.21} parent=73 // pred_region
          %v628 = vld [vmem:[%s400] sm:$0xff]
          %v629 = vld [vmem:[%s400 + $0x8] sm:$0xff]
          %v630 = vld [vmem:[%s400 + $0x10] sm:$0xff]
          %v631 = vld [vmem:[%s400 + $0x18] sm:$0xff]
          %v632 = vld [vmem:[%s380] sm:$0x1]
          %v634 = vlaneseq
          %v635 = vshrl.u32 %v634, 7
          %v636 = vsub.s32 0, %v635
          %v637 = vrot.slane %v632, %v636
          %v639 = vmul.f32 %v628, %v637
          %v640 = vmul.f32 %v629, %v637
          %v641 = vmul.f32 %v630, %v637
          %v642 = vmul.f32 %v631, %v637
          %v643 = vld [vmem:[%s383] sm:$0x1]
          %v645 = vlaneseq
          %v646 = vshrl.u32 %v645, 7
          %v647 = vsub.s32 0, %v646
          %v648 = vrot.slane %v643, %v647
          %v650 = vadd.f32 %v639, %v648
          %v651 = vadd.f32 %v640, %v648
          %v652 = vadd.f32 %v641, %v648
          %v653 = vadd.f32 %v642, %v648
          %v654 = vld [vmem:[%s391] sm:$0xff]
          %v655 = vld [vmem:[%s391 + $0x8] sm:$0xff]
          %v656 = vld [vmem:[%s391 + $0x10] sm:$0xff]
          %v657 = vld [vmem:[%s391 + $0x18] sm:$0xff]
          %v658 = vadd.f32 %v650, %v654
          %v659 = vadd.f32 %v651, %v655
          %v660 = vadd.f32 %v652, %v656
          %v661 = vadd.f32 %v653, %v657
          %v662 = vmax.f32 %v658, 0.0
          %v663 = vmax.f32 %v659, 0.0
          %v664 = vmax.f32 %v660, 0.0
          %v665 = vmax.f32 %v661, 0.0
          %666 = vst [vmem:[%s400] sm:$0xff] %v662
          %667 = vst [vmem:[%s400 + $0x8] sm:$0xff] %v663
          %668 = vst [vmem:[%s400 + $0x10] sm:$0xff] %v664
          %669 = vst [vmem:[%s400 + $0x18] sm:$0xff] %v665
        $region86: #{_lambda_.21} parent=73 // pred_fallthru
          _
        %s670 = smul.u32 4, %s21
        %p671 = scmp.lt.s32.totalorder %s670, 3
        %s672 = scalar_select %p671, %s670, 3
        %p673 = scmp.lt.s32.totalorder %s22, 0
        %s674 = scalar_select %p673, %s22, 0
        %s675 = sadd.s32 %s674, %s672
        %s676 = smul.addr %s675, 8
        %s677 = scalar_lea.vmem %s5, %s676
        // Predicated region
        $region87: #{_lambda_.21} parent=73 // pred_check
          %p678 = pneg %p191
        $region88: #{_lambda_.21} parent=73 // pred_check_branch
          %680 = sbr.rel (%p678) target = $region90
        $region89: #{_lambda_.21} parent=73 // pred_region
          %s681 = smul.u32 4, %s21
        $region90: #{_lambda_.21} parent=73 // pred_fallthru
          _
        // Predicated region
        $region91: #{_lambda_.21} parent=73 // pred_check
          %p682 = pneg %p191
        $region92: #{_lambda_.21} parent=73 // pred_check_branch
          %684 = sbr.rel (%p682) target = $region94
        $region93: #{_lambda_.21} parent=73 // pred_region
          %s685 = smul.u32 4, %s21
          %p686 = scmp.lt.s32.totalorder %s685, 3
          %s687 = scalar_select %p686, %s685, 3
          %p688 = scmp.lt.s32.totalorder %s22, 0
          %s689 = scalar_select %p688, %s22, 0
          %s690 = sadd.s32 %s689, %s687
          %s691 = smul.addr %s690, 8
          %s692 = scalar_lea.vmem %s5, %s691
        $region94: #{_lambda_.21} parent=73 // pred_fallthru
          _
      $region74: #{_lambda_.21} parent=5 // pred_fallthru
        _
      %p693 = scmp.le.s32.totalorder 2, %s11
      // Predicated region
      $region95: #{_lambda_.21} parent=5 // pred_check
        %p694 = pneg %p693
      $region96: #{_lambda_.21} parent=5 // pred_check_branch
        %696 = sbr.rel (%p694) target = $region98
      $region97: #{_lambda_.21} parent=5 // pred_region
        %s697 = ssub.s32 %s11, 2
      $region98: #{_lambda_.21} parent=5 // pred_fallthru
        _
    $region6: #{_lambda_.21} parent=1 // loop_footer
      %s15 = sadd.s32 1, %s11
    $region7: #{_lambda_.21} parent=1 // loop_footer_branch
      %10 = sbr.rel target = $region3
    $region8: #{_lambda_.21} parent=1 // loop_exit
      _

// kernel: _lambda_.22
$region0: #{_lambda_.22}
  #allocation0 [shape = 'u32[]', space=smem, size = 0x4, offset = 0x4, fixed_abs, tag = 'smem constant byte address 0x4 - core index']
  #allocation1 [shape = 'u32[144,128]{1,0:T(1,128)}', space=vmem, size = 0x12000, scoped, tag = 'internal scratch']
  %s0 = inlined_call_operand.vmem [shape: bf16[8,768], index: 0, kind: input, shape index: {}]
  %s1 = inlined_call_operand.vmem [shape: bf16[768,128], index: 1, kind: input, shape index: {}]
  %s2 = inlined_call_operand.vmem [shape: f32[1,128], index: 2, kind: input, shape index: {}]
  %s3 = inlined_call_operand.vmem [shape: f32[1,128], index: 3, kind: input, shape index: {}]
  %s4 = inlined_call_operand.vmem [shape: f32[8,128], index: 4, kind: output, shape index: {}]
  %s5 = sld [smem:[#allocation0]]
  $region57: #{_lambda_.22} parent=0
    _
  %s7 = ssub.s32 1, %s5
  %s8 = scalar_select 0, %s7, %s5
  loop: start=0, step=1, limit=5
  $region2: #{_lambda_.22} parent=0 // loop_pre_header
    _
  $region3: #{_lambda_.22} parent=0 // loop_header
    %s10 = sphi 0, %s14
    %p11 = scmp.ge.s32.totalorder %s10, 5
    %s17 = sphi 0, %s36
    %s18 = sphi 0, %s32
    %s19 = sphi 0, %s28
    %s20 = sphi 0, %s17
    %s21 = sphi 0, %s18
    %s22 = sphi 0, %s19
    %s23 = sphi 0, %s20
    %s24 = sphi 0, %s21
    %s25 = sphi 0, %s22
    %s41 = sphi 0, %s43
    %s44 = sphi 0, %s41
    %s45 = sphi 0, %s44
    %s61 = sphi 0, %s45
    %s69 = sphi 0, %s71
    %s72 = sphi 0, %s69
    %s73 = sphi 0, %s72
    %s89 = sphi 0, %s73
    %s95 = sphi 0, %s97
    %s98 = sphi 0, %s95
    %s99 = sphi 0, %s98
    %s115 = sphi 0, %s99
    %s121 = sphi 0, %s123
    %s124 = sphi 0, %s121
    %s125 = sphi 0, %s124
    %s141 = sphi 0, %s125
    %s149 = sphi 0, %s151
    %s152 = sphi 0, %s149
    %s153 = sphi 0, %s152
    %s169 = sphi 0, %s153
  $region4: #{_lambda_.22} parent=0 // loop_header_branch
    %13 = sbr.rel (%p11) target = $region8
  $region5: #{_lambda_.22} parent=0 // loop_body
    %s15 = ssub.s32 %s10, 1
    %s16 = ssub.s32 %s10, 2
    %s26 = sadd.s32 1, %s19
    %p27 = scmp.ge.s32.totalorder %s26, 3
    %s28 = scalar_select %p27, 0, %s26
    %s29 = sadd.s32 1, %s18
    %s30 = scalar_select %p27, %s29, %s18
    %p31 = scmp.ge.s32.totalorder %s30, 1
    %s32 = scalar_select %p31, 0, %s30
    %s33 = sadd.s32 1, %s17
    %s34 = scalar_select %p31, %s33, %s17
    %p35 = scmp.ge.s32.totalorder %s34, 1
    %s36 = scalar_select %p35, 0, %s34
    %s37 = ssub.s32 %s17, %s36
    %s38 = ssub.s32 %s19, %s28
    %s39 = sor.u32 %s37, %s38
    %p40 = scmp.eq.s32.totalorder %s39, 0
    %s42 = sadd.s32 %s41, 1
    %s43 = scalar_select %p40, %s41, %s42
    %p46 = pneg %p40
    %p47 = scmp.eq.s32.totalorder %s10, 2
    %p48 = por %p46, %p47
    %p49 = scmp.ne.s32.totalorder %s41, %s44
    %p50 = scmp.eq.s32.totalorder %s10, 0
    %p51 = por %p49, %p50
    %p52 = scmp.ne.s32.totalorder %s41, %s44
    %p53 = scmp.eq.s32.totalorder %s15, 2
    %p54 = por %p52, %p53
    %p55 = scmp.ne.s32.totalorder %s44, %s45
    %p56 = scmp.eq.s32.totalorder %s15, 0
    %p57 = por %p55, %p56
    %p58 = scmp.ne.s32.totalorder %s44, %s45
    %p59 = scmp.eq.s32.totalorder %s16, 2
    %p60 = por %p58, %p59
    %p62 = scmp.ne.s32.totalorder %s45, %s61
    %p63 = scmp.eq.s32.totalorder %s16, 0
    %p64 = por %p62, %p63
    %s65 = ssub.s32 %s19, %s28
    %s66 = ssub.s32 %s18, %s32
    %s67 = sor.u32 %s65, %s66
    %p68 = scmp.eq.s32.totalorder %s67, 0
    %s70 = sadd.s32 %s69, 1
    %s71 = scalar_select %p68, %s69, %s70
    %p74 = pneg %p68
    %p75 = scmp.eq.s32.totalorder %s10, 2
    %p76 = por %p74, %p75
    %p77 = scmp.ne.s32.totalorder %s69, %s72
    %p78 = scmp.eq.s32.totalorder %s10, 0
    %p79 = por %p77, %p78
    %p80 = scmp.ne.s32.totalorder %s69, %s72
    %p81 = scmp.eq.s32.totalorder %s15, 2
    %p82 = por %p80, %p81
    %p83 = scmp.ne.s32.totalorder %s72, %s73
    %p84 = scmp.eq.s32.totalorder %s15, 0
    %p85 = por %p83, %p84
    %p86 = scmp.ne.s32.totalorder %s72, %s73
    %p87 = scmp.eq.s32.totalorder %s16, 2
    %p88 = por %p86, %p87
    %p90 = scmp.ne.s32.totalorder %s73, %s89
    %p91 = scmp.eq.s32.totalorder %s16, 0
    %p92 = por %p90, %p91
    %s93 = ssub.s32 %s18, %s32
    %p94 = scmp.eq.s32.totalorder %s93, 0
    %s96 = sadd.s32 %s95, 1
    %s97 = scalar_select %p94, %s95, %s96
    %p100 = pneg %p94
    %p101 = scmp.eq.s32.totalorder %s10, 2
    %p102 = por %p100, %p101
    %p103 = scmp.ne.s32.totalorder %s95, %s98
    %p104 = scmp.eq.s32.totalorder %s10, 0
    %p105 = por %p103, %p104
    %p106 = scmp.ne.s32.totalorder %s95, %s98
    %p107 = scmp.eq.s32.totalorder %s15, 2
    %p108 = por %p106, %p107
    %p109 = scmp.ne.s32.totalorder %s98, %s99
    %p110 = scmp.eq.s32.totalorder %s15, 0
    %p111 = por %p109, %p110
    %p112 = scmp.ne.s32.totalorder %s98, %s99
    %p113 = scmp.eq.s32.totalorder %s16, 2
    %p114 = por %p112, %p113
    %p116 = scmp.ne.s32.totalorder %s99, %s115
    %p117 = scmp.eq.s32.totalorder %s16, 0
    %p118 = por %p116, %p117
    %s119 = ssub.s32 %s18, %s32
    %p120 = scmp.eq.s32.totalorder %s119, 0
    %s122 = sadd.s32 %s121, 1
    %s123 = scalar_select %p120, %s121, %s122
    %p126 = pneg %p120
    %p127 = scmp.eq.s32.totalorder %s10, 2
    %p128 = por %p126, %p127
    %p129 = scmp.ne.s32.totalorder %s121, %s124
    %p130 = scmp.eq.s32.totalorder %s10, 0
    %p131 = por %p129, %p130
    %p132 = scmp.ne.s32.totalorder %s121, %s124
    %p133 = scmp.eq.s32.totalorder %s15, 2
    %p134 = por %p132, %p133
    %p135 = scmp.ne.s32.totalorder %s124, %s125
    %p136 = scmp.eq.s32.totalorder %s15, 0
    %p137 = por %p135, %p136
    %p138 = scmp.ne.s32.totalorder %s124, %s125
    %p139 = scmp.eq.s32.totalorder %s16, 2
    %p140 = por %p138, %p139
    %p142 = scmp.ne.s32.totalorder %s125, %s141
    %p143 = scmp.eq.s32.totalorder %s16, 0
    %p144 = por %p142, %p143
    %s145 = ssub.s32 %s17, %s36
    %s146 = ssub.s32 %s18, %s32
    %s147 = sor.u32 %s145, %s146
    %p148 = scmp.eq.s32.totalorder %s147, 0
    %s150 = sadd.s32 %s149, 1
    %s151 = scalar_select %p148, %s149, %s150
    %p154 = pneg %p148
    %p155 = scmp.eq.s32.totalorder %s10, 2
    %p156 = por %p154, %p155
    %p157 = scmp.ne.s32.totalorder %s149, %s152
    %p158 = scmp.eq.s32.totalorder %s10, 0
    %p159 = por %p157, %p158
    %p160 = scmp.ne.s32.totalorder %s149, %s152
    %p161 = scmp.eq.s32.totalorder %s15, 2
    %p162 = por %p160, %p161
    %p163 = scmp.ne.s32.totalorder %s152, %s153
    %p164 = scmp.eq.s32.totalorder %s15, 0
    %p165 = por %p163, %p164
    %p166 = scmp.ne.s32.totalorder %s152, %s153
    %p167 = scmp.eq.s32.totalorder %s16, 2
    %p168 = por %p166, %p167
    %p170 = scmp.ne.s32.totalorder %s153, %s169
    %p171 = scmp.eq.s32.totalorder %s16, 0
    %p172 = por %p170, %p171
    %p173 = scmp.le.s32.totalorder 1, %s10
    %p174 = scmp.lt.s32.totalorder %s10, 4
    %p175 = pnand %p173, %p174
    %p176 = pneg %p175
    // Predicated region
    $region9: #{_lambda_.22} parent=5 // pred_check
      _
    $region10: #{_lambda_.22} parent=5 // pred_check_branch
      %178 = sbr.rel (%p175) target = $region12
    $region11: #{_lambda_.22} parent=5 // pred_region
      %s179 = ssub.s32 %s10, 1
      // Predicated region
      $region13: #{_lambda_.22} parent=11 // pred_check
        %p180 = pneg %p111
      $region14: #{_lambda_.22} parent=11 // pred_check_branch
        %182 = sbr.rel (%p180) target = $region16
      $region15: #{_lambda_.22} parent=11 // pred_region
        %p183 = scmp.lt.s32.totalorder %s21, 0
        %s184 = scalar_select %p183, %s21, 0
        %s185 = scalar_lea.vmem %s2, %s184
      $region16: #{_lambda_.22} parent=11 // pred_fallthru
        _
      // Predicated region
      $region17: #{_lambda_.22} parent=11 // pred_check
        %p186 = pneg %p137
      $region18: #{_lambda_.22} parent=11 // pred_check_branch
        %188 = sbr.rel (%p186) target = $region20
      $region19: #{_lambda_.22} parent=11 // pred_region
        %p189 = scmp.lt.s32.totalorder %s21, 0
        %s190 = scalar_select %p189, %s21, 0
        %s191 = scalar_lea.vmem %s3, %s190
      $region20: #{_lambda_.22} parent=11 // pred_fallthru
        _
    $region12: #{_lambda_.22} parent=5 // pred_fallthru
      _
    %p192 = scmp.lt.s32.totalorder %s10, 3
    // Predicated region
    $region21: #{_lambda_.22} parent=5 // pred_check
      %p193 = pneg %p192
    $region22: #{_lambda_.22} parent=5 // pred_check_branch
      %195 = sbr.rel (%p193) target = $region24
    $region23: #{_lambda_.22} parent=5 // pred_region
      // Predicated region
      $region25: #{_lambda_.22} parent=23 // pred_check
        %p196 = pneg %p51
      $region26: #{_lambda_.22} parent=23 // pred_check_branch
        %198 = sbr.rel (%p196) target = $region28
      $region27: #{_lambda_.22} parent=23 // pred_region
        %s199 = smul.u32 2, %s19
        %p200 = scmp.lt.s32.totalorder %s17, 0
        %s201 = scalar_select %p200, %s17, 0
        %p202 = scmp.lt.s32.totalorder %s199, 5
        %s203 = scalar_select %p202, %s199, 5
        %s204 = smul.addr %s201, 6
        %s205 = sadd.s32 %s203, %s204
        %s206 = smul.addr %s205, 4
        %s207 = scalar_lea.vmem %s0, %s206
        %s208 = smul.u32 2, %s19
      $region28: #{_lambda_.22} parent=23 // pred_fallthru
        _
      // Predicated region
      $region29: #{_lambda_.22} parent=23 // pred_check
        %p209 = pneg %p79
      $region30: #{_lambda_.22} parent=23 // pred_check_branch
        %211 = sbr.rel (%p209) target = $region32
      $region31: #{_lambda_.22} parent=23 // pred_region
        %s212 = smul.u32 32, %s19
        %p213 = scmp.lt.s32.totalorder %s212, 95
        %s214 = scalar_select %p213, %s212, 95
        %p215 = scmp.lt.s32.totalorder %s18, 0
        %s216 = scalar_select %p215, %s18, 0
        %s217 = sadd.s32 %s216, %s214
        %s218 = smul.addr %s217, 4
        %s219 = scalar_lea.vmem %s1, %s218
        %s220 = smul.u32 32, %s19
      $region32: #{_lambda_.22} parent=23 // pred_fallthru
        _
    $region24: #{_lambda_.22} parent=5 // pred_fallthru
      _
    %p221 = scmp.le.s32.totalorder 1, %s10
    %p222 = scmp.lt.s32.totalorder %s10, 4
    %p223 = pnand %p221, %p222
    %p224 = pneg %p223
    // Predicated region
    $region33: #{_lambda_.22} parent=5 // pred_check
      _
    $region34: #{_lambda_.22} parent=5 // pred_check_branch
      %226 = sbr.rel (%p223) target = $region36
    $region35: #{_lambda_.22} parent=5 // pred_region
      %s227 = ssub.s32 %s10, 1
      %s228 = smul.u32 2, %s22
      %p229 = scmp.lt.s32.totalorder %s20, 0
      %s230 = scalar_select %p229, %s20, 0
      %p231 = scmp.lt.s32.totalorder %s228, 5
      %s232 = scalar_select %p231, %s228, 5
      %s233 = smul.addr %s230, 6
      %s234 = sadd.s32 %s232, %s233
      %s235 = smul.addr %s234, 4
      %s236 = scalar_lea.vmem %s0, %s235
      %p237 = pneg %p57
      %p238 = pneg %p54
      %s239 = smul.u32 32, %s22
      %p240 = scmp.lt.s32.totalorder %s239, 95
      %s241 = scalar_select %p240, %s239, 95
      %p242 = scmp.lt.s32.totalorder %s21, 0
      %s243 = scalar_select %p242, %s21, 0
      %s244 = sadd.s32 %s243, %s241
      %s245 = smul.addr %s244, 4
      %s246 = scalar_lea.vmem %s1, %s245
      %p247 = pneg %p85
      %p248 = pneg %p82
      %p249 = scmp.lt.s32.totalorder %s21, 0
      %s250 = scalar_select %p249, %s21, 0
      %s251 = scalar_lea.vmem %s2, %s250
      %p252 = pneg %p111
      %p253 = pneg %p108
      %p254 = scmp.lt.s32.totalorder %s21, 0
      %s255 = scalar_select %p254, %s21, 0
      %s256 = scalar_lea.vmem %s3, %s255
      %p257 = pneg %p137
      %p258 = pneg %p134
      %p259 = pneg %p165
      %p260 = pneg %p162
      %p261 = scmp.lt.s32.totalorder %s20, 0
      %s262 = scalar_select %p261, %s20, 0
      %p263 = scmp.lt.s32.totalorder %s21, 0
      %s264 = scalar_select %p263, %s21, 0
      %s265 = sadd.s32 %s264, %s262
      %s266 = smul.addr %s265, 8
      %s267 = scalar_lea.vmem %s4, %s266
      %s268 = smul.u32 2, %s22
      %p269 = scmp.lt.s32.totalorder %s20, 0
      %s270 = scalar_select %p269, %s20, 0
      %p271 = scmp.lt.s32.totalorder %s268, 5
      %s272 = scalar_select %p271, %s268, 5
      %s273 = smul.addr %s270, 6
      %s274 = sadd.s32 %s272, %s273
      %s275 = smul.addr %s274, 4
      %s276 = scalar_lea.vmem %s0, %s275
      %s277 = smul.u32 2, %s22
      %s278 = smul.u32 32, %s22
      %p279 = scmp.lt.s32.totalorder %s278, 95
      %s280 = scalar_select %p279, %s278, 95
      %p281 = scmp.lt.s32.totalorder %s21, 0
      %s282 = scalar_select %p281, %s21, 0
      %s283 = sadd.s32 %s282, %s280
      %s284 = smul.addr %s283, 4
      %s285 = scalar_lea.vmem %s1, %s284
      %s286 = smul.u32 32, %s22
      %p287 = scmp.lt.s32.totalorder %s21, 0
      %s288 = scalar_select %p287, %s21, 0
      %s289 = scalar_lea.vmem %s2, %s288
      %p290 = scmp.lt.s32.totalorder %s21, 0
      %s291 = scalar_select %p290, %s21, 0
      %s292 = scalar_lea.vmem %s3, %s291
      %p293 = scmp.lt.s32.totalorder %s20, 0
      %s294 = scalar_select %p293, %s20, 0
      %p295 = scmp.lt.s32.totalorder %s21, 0
      %s296 = scalar_select %p295, %s21, 0
      %s297 = sadd.s32 %s296, %s294
      %s298 = smul.addr %s297, 8
      %s299 = scalar_lea.vmem %s4, %s298
      %p301 = scmp.eq.s32.totalorder %s22, 0
      // Predicated region
      $region37: #{_lambda_.22} parent=35 // pred_check
        %p302 = pneg %p301
      $region38: #{_lambda_.22} parent=35 // pred_check_branch
        %304 = sbr.rel (%p302) target = $region40
      $region39: #{_lambda_.22} parent=35 // pred_region
        %305 = vst [vmem:[%s299] sm:$0xff] 0.0
      $region40: #{_lambda_.22} parent=35 // pred_fallthru
        _
      %v306 = vld [vmem:[%s299] sm:$0xff]
      %v307 = vld [vmem:[%s276] sm:$0xff]
      %v308 = vld [vmem:[%s285] sm:$0xf]
      %v309 = vld [vmem:[%s285 + $0x4] sm:$0xf]
      %v310 = vld [vmem:[%s285 + $0x8] sm:$0xf]
      %v311 = vld [vmem:[%s285 + $0xc] sm:$0xf]
      %v312 = vld [vmem:[%s285 + $0x10] sm:$0xf]
      %v313 = vld [vmem:[%s285 + $0x14] sm:$0xf]
      %v314 = vld [vmem:[%s285 + $0x18] sm:$0xf]
      %v315 = vld [vmem:[%s285 + $0x1c] sm:$0xf]
      %v316 = vld [vmem:[%s285 + $0x20] sm:$0xf]
      %v317 = vld [vmem:[%s285 + $0x24] sm:$0xf]
      %v318 = vld [vmem:[%s285 + $0x28] sm:$0xf]
      %v319 = vld [vmem:[%s285 + $0x2c] sm:$0xf]
      %v320 = vld [vmem:[%s285 + $0x30] sm:$0xf]
      %v321 = vld [vmem:[%s285 + $0x34] sm:$0xf]
      %v322 = vld [vmem:[%s285 + $0x38] sm:$0xf]
      %v323 = vld [vmem:[%s285 + $0x3c] sm:$0xf]
      %v324 = vld [vmem:[%s285 + $0x40] sm:$0xf]
      %v325 = vld [vmem:[%s285 + $0x44] sm:$0xf]
      %v326 = vld [vmem:[%s285 + $0x48] sm:$0xf]
      %v327 = vld [vmem:[%s285 + $0x4c] sm:$0xf]
      %v328 = vld [vmem:[%s285 + $0x50] sm:$0xf]
      %v329 = vld [vmem:[%s285 + $0x54] sm:$0xf]
      %v330 = vld [vmem:[%s285 + $0x58] sm:$0xf]
      %v331 = vld [vmem:[%s285 + $0x5c] sm:$0xf]
      %v332 = vld [vmem:[%s285 + $0x60] sm:$0xf]
      %v333 = vld [vmem:[%s285 + $0x64] sm:$0xf]
      %v334 = vld [vmem:[%s285 + $0x68] sm:$0xf]
      %v335 = vld [vmem:[%s285 + $0x6c] sm:$0xf]
      %v336 = vld [vmem:[%s285 + $0x70] sm:$0xf]
      %v337 = vld [vmem:[%s285 + $0x74] sm:$0xf]
      %v338 = vld [vmem:[%s285 + $0x78] sm:$0xf]
      %v339 = vld [vmem:[%s285 + $0x7c] sm:$0xf]
      %v341 = vunpack.c.l.b16 %v307
      %v342 = vunpack.c.h.b16 %v307
      %v343 = vpack.c.b16 %v341, %v341
      %v344 = vpack.c.b16 %v342, %v342
      %v379 = vunpack.c.l.b16 %v308
      %v380 = vunpack.c.l.b16 %v309
      %v381 = vunpack.c.l.b16 %v310
      %v382 = vunpack.c.l.b16 %v311
      %v383 = vunpack.c.l.b16 %v312
      %v384 = vunpack.c.l.b16 %v313
      %v385 = vunpack.c.l.b16 %v314
      %v386 = vunpack.c.l.b16 %v315
      %v387 = vunpack.c.l.b16 %v316
      %v388 = vunpack.c.l.b16 %v317
      %v389 = vunpack.c.l.b16 %v318
      %v390 = vunpack.c.l.b16 %v319
      %v391 = vunpack.c.l.b16 %v320
      %v392 = vunpack.c.l.b16 %v321
      %v393 = vunpack.c.l.b16 %v322
      %v394 = vunpack.c.l.b16 %v323
      %v395 = vunpack.c.l.b16 %v324
      %v396 = vunpack.c.l.b16 %v325
      %v397 = vunpack.c.l.b16 %v326
      %v398 = vunpack.c.l.b16 %v327
      %v399 = vunpack.c.l.b16 %v328
      %v400 = vunpack.c.l.b16 %v329
      %v401 = vunpack.c.l.b16 %v330
      %v402 = vunpack.c.l.b16 %v331
      %v403 = vunpack.c.l.b16 %v332
      %v404 = vunpack.c.l.b16 %v333
      %v405 = vunpack.c.l.b16 %v334
      %v406 = vunpack.c.l.b16 %v335
      %v407 = vunpack.c.l.b16 %v336
      %v408 = vunpack.c.l.b16 %v337
      %v409 = vunpack.c.l.b16 %v338
      %v410 = vunpack.c.l.b16 %v339
      %v411 = vpack.c.b16 %v380, %v379
      %v412 = vpack.c.b16 %v382, %v381
      %v413 = vpack.c.b16 %v384, %v383
      %v414 = vpack.c.b16 %v386, %v385
      %v415 = vpack.c.b16 %v388, %v387
      %v416 = vpack.c.b16 %v390, %v389
      %v417 = vpack.c.b16 %v392, %v391
      %v418 = vpack.c.b16 %v394, %v393
      %v419 = vpack.c.b16 %v396, %v395
      %v420 = vpack.c.b16 %v398, %v397
      %v421 = vpack.c.b16 %v400, %v399
      %v422 = vpack.c.b16 %v402, %v401
      %v423 = vpack.c.b16 %v404, %v403
      %v424 = vpack.c.b16 %v406, %v405
      %v425 = vpack.c.b16 %v408, %v407
      %v426 = vpack.c.b16 %v410, %v409
      %443 = vmatprep.subr.bf16.mxu0 0
      %444 = vmatpush1.bf16.msra.mxu0 %v418
      %445 = vmatprep.subr.bf16.mxu0 0
      %446 = vmatpush1.bf16.msra.mxu0 %v417
      %447 = vmatprep.subr.bf16.mxu0 0
      %448 = vmatpush1.bf16.msra.mxu0 %v416
      %449 = vmatprep.subr.bf16.mxu0 0
      %450 = vmatpush1.bf16.msra.mxu0 %v415
      %451 = vmatprep.subr.bf16.mxu0 0
      %452 = vmatpush1.bf16.msra.mxu0 %v414
      %453 = vmatprep.subr.bf16.mxu0 0
      %454 = vmatpush1.bf16.msra.mxu0 %v413
      %455 = vmatprep.subr.bf16.mxu0 0
      %456 = vmatpush1.bf16.msra.mxu0 %v412
      %457 = vmatprep.subr.bf16.mxu0 0
      %458 = vmatpush1.bf16.msra.mxu0 %v411
      %459 = vmatprep.subr.bf16.mxu0 0
      %460 = vmatpush2.bf16.msra.mxu0 %v426
      %461 = vmatprep.subr.bf16.mxu0 0
      %462 = vmatpush2.bf16.msra.mxu0 %v425
      %463 = vmatprep.subr.bf16.mxu0 0
      %464 = vmatpush2.bf16.msra.mxu0 %v424
      %465 = vmatprep.subr.bf16.mxu0 0
      %466 = vmatpush2.bf16.msra.mxu0 %v423
      %467 = vmatprep.subr.bf16.mxu0 0
      %468 = vmatpush2.bf16.msra.mxu0 %v422
      %469 = vmatprep.subr.bf16.mxu0 0
      %470 = vmatpush2.bf16.msra.mxu0 %v421
      %471 = vmatprep.subr.bf16.mxu0 0
      %472 = vmatpush2.bf16.msra.mxu0 %v420
      %473 = vmatprep.subr.bf16.mxu0 0
      %474 = vmatpush2.bf16.msra.mxu0 %v419
      %475 = vmatprep.mubr.bf16.mxu0 %v344
      %476 = vmatmul.mubr.bf16.gmra.mxu0 %v343
      %v477 = vpop.f32.mrf.mxu0
      %v478 = vadd.f32 0.0, %v477
      %v479 = vpop.f32.mrf.mxu0
      %v480 = vpop.f32.mrf.mxu0
      %v481 = vpop.f32.mrf.mxu0
      %482 = vdwg.mxu0
      %v483 = vadd.f32 %v306, %v478
      %484 = vst [vmem:[%s299] sm:$0xff] %v483
      %p485 = scmp.eq.s32.totalorder %s22, 2
      // Predicated region
      $region41: #{_lambda_.22} parent=35 // pred_check
        %p486 = pneg %p485
      $region42: #{_lambda_.22} parent=35 // pred_check_branch
        %488 = sbr.rel (%p486) target = $region44
      $region43: #{_lambda_.22} parent=35 // pred_region
        %v489 = vld [vmem:[%s299] sm:$0xff]
        %v490 = vld [vmem:[%s289] sm:$0x1]
        %v492 = vlaneseq
        %v493 = vshrl.u32 %v492, 7
        %v494 = vsub.s32 0, %v493
        %v495 = vrot.slane %v490, %v494
        %v497 = vmul.f32 %v489, %v495
        %v498 = vld [vmem:[%s292] sm:$0x1]
        %v500 = vlaneseq
        %v501 = vshrl.u32 %v500, 7
        %v502 = vsub.s32 0, %v501
        %v503 = vrot.slane %v498, %v502
        %v505 = vadd.f32 %v497, %v503
        %v506 = vmax.f32 %v505, 0.0
        %507 = vst [vmem:[%s299] sm:$0xff] %v506
      $region44: #{_lambda_.22} parent=35 // pred_fallthru
        _
      %p508 = scmp.lt.s32.totalorder %s20, 0
      %s509 = scalar_select %p508, %s20, 0
      %p510 = scmp.lt.s32.totalorder %s21, 0
      %s511 = scalar_select %p510, %s21, 0
      %s512 = sadd.s32 %s511, %s509
      %s513 = smul.addr %s512, 8
      %s514 = scalar_lea.vmem %s4, %s513
      // Predicated region
      $region45: #{_lambda_.22} parent=35 // pred_check
        %p515 = pneg %p162
      $region46: #{_lambda_.22} parent=35 // pred_check_branch
        %517 = sbr.rel (%p515) target = $region48
      $region47: #{_lambda_.22} parent=35 // pred_region
        _
      $region48: #{_lambda_.22} parent=35 // pred_fallthru
        _
      // Predicated region
      $region49: #{_lambda_.22} parent=35 // pred_check
        %p518 = pneg %p162
      $region50: #{_lambda_.22} parent=35 // pred_check_branch
        %520 = sbr.rel (%p518) target = $region52
      $region51: #{_lambda_.22} parent=35 // pred_region
        %p521 = scmp.lt.s32.totalorder %s20, 0
        %s522 = scalar_select %p521, %s20, 0
        %p523 = scmp.lt.s32.totalorder %s21, 0
        %s524 = scalar_select %p523, %s21, 0
        %s525 = sadd.s32 %s524, %s522
        %s526 = smul.addr %s525, 8
        %s527 = scalar_lea.vmem %s4, %s526
      $region52: #{_lambda_.22} parent=35 // pred_fallthru
        _
    $region36: #{_lambda_.22} parent=5 // pred_fallthru
      _
    %p528 = scmp.le.s32.totalorder 2, %s10
    // Predicated region
    $region53: #{_lambda_.22} parent=5 // pred_check
      %p529 = pneg %p528
    $region54: #{_lambda_.22} parent=5 // pred_check_branch
      %531 = sbr.rel (%p529) target = $region56
    $region55: #{_lambda_.22} parent=5 // pred_region
      %s532 = ssub.s32 %s10, 2
    $region56: #{_lambda_.22} parent=5 // pred_fallthru
      _
  $region6: #{_lambda_.22} parent=0 // loop_footer
    %s14 = sadd.s32 1, %s10
  $region7: #{_lambda_.22} parent=0 // loop_footer_branch
    %9 = sbr.rel target = $region3
  $region8: #{_lambda_.22} parent=0 // loop_exit
    _

// kernel: _lambda_.23
$region0: #{_lambda_.23}
  #allocation0 [shape = 'u32[]', space=smem, size = 0x4, offset = 0x4, fixed_abs, tag = 'smem constant byte address 0x4 - core index']
  #allocation1 [shape = 'u32[144,128]{1,0:T(1,128)}', space=vmem, size = 0x12000, scoped, tag = 'internal scratch']
  %s0 = inlined_call_operand.vmem [shape: bf16[8,768], index: 0, kind: input, shape index: {}]
  %s1 = inlined_call_operand.vmem [shape: bf16[768,128], index: 1, kind: input, shape index: {}]
  %s2 = inlined_call_operand.vmem [shape: f32[1,128], index: 2, kind: input, shape index: {}]
  %s3 = inlined_call_operand.vmem [shape: f32[1,128], index: 3, kind: input, shape index: {}]
  %s4 = inlined_call_operand.vmem [shape: f32[8,128], index: 4, kind: output, shape index: {}]
  %s5 = sld [smem:[#allocation0]]
  $region57: #{_lambda_.23} parent=0
    _
  %s7 = ssub.s32 1, %s5
  %s8 = scalar_select 0, %s7, %s5
  loop: start=0, step=1, limit=5
  $region2: #{_lambda_.23} parent=0 // loop_pre_header
    _
  $region3: #{_lambda_.23} parent=0 // loop_header
    %s10 = sphi 0, %s14
    %p11 = scmp.ge.s32.totalorder %s10, 5
    %s17 = sphi 0, %s36
    %s18 = sphi 0, %s32
    %s19 = sphi 0, %s28
    %s20 = sphi 0, %s17
    %s21 = sphi 0, %s18
    %s22 = sphi 0, %s19
    %s23 = sphi 0, %s20
    %s24 = sphi 0, %s21
    %s25 = sphi 0, %s22
    %s41 = sphi 0, %s43
    %s44 = sphi 0, %s41
    %s45 = sphi 0, %s44
    %s61 = sphi 0, %s45
    %s69 = sphi 0, %s71
    %s72 = sphi 0, %s69
    %s73 = sphi 0, %s72
    %s89 = sphi 0, %s73
    %s95 = sphi 0, %s97
    %s98 = sphi 0, %s95
    %s99 = sphi 0, %s98
    %s115 = sphi 0, %s99
    %s121 = sphi 0, %s123
    %s124 = sphi 0, %s121
    %s125 = sphi 0, %s124
    %s141 = sphi 0, %s125
    %s149 = sphi 0, %s151
    %s152 = sphi 0, %s149
    %s153 = sphi 0, %s152
    %s169 = sphi 0, %s153
  $region4: #{_lambda_.23} parent=0 // loop_header_branch
    %13 = sbr.rel (%p11) target = $region8
  $region5: #{_lambda_.23} parent=0 // loop_body
    %s15 = ssub.s32 %s10, 1
    %s16 = ssub.s32 %s10, 2
    %s26 = sadd.s32 1, %s19
    %p27 = scmp.ge.s32.totalorder %s26, 3
    %s28 = scalar_select %p27, 0, %s26
    %s29 = sadd.s32 1, %s18
    %s30 = scalar_select %p27, %s29, %s18
    %p31 = scmp.ge.s32.totalorder %s30, 1
    %s32 = scalar_select %p31, 0, %s30
    %s33 = sadd.s32 1, %s17
    %s34 = scalar_select %p31, %s33, %s17
    %p35 = scmp.ge.s32.totalorder %s34, 1
    %s36 = scalar_select %p35, 0, %s34
    %s37 = ssub.s32 %s17, %s36
    %s38 = ssub.s32 %s19, %s28
    %s39 = sor.u32 %s37, %s38
    %p40 = scmp.eq.s32.totalorder %s39, 0
    %s42 = sadd.s32 %s41, 1
    %s43 = scalar_select %p40, %s41, %s42
    %p46 = pneg %p40
    %p47 = scmp.eq.s32.totalorder %s10, 2
    %p48 = por %p46, %p47
    %p49 = scmp.ne.s32.totalorder %s41, %s44
    %p50 = scmp.eq.s32.totalorder %s10, 0
    %p51 = por %p49, %p50
    %p52 = scmp.ne.s32.totalorder %s41, %s44
    %p53 = scmp.eq.s32.totalorder %s15, 2
    %p54 = por %p52, %p53
    %p55 = scmp.ne.s32.totalorder %s44, %s45
    %p56 = scmp.eq.s32.totalorder %s15, 0
    %p57 = por %p55, %p56
    %p58 = scmp.ne.s32.totalorder %s44, %s45
    %p59 = scmp.eq.s32.totalorder %s16, 2
    %p60 = por %p58, %p59
    %p62 = scmp.ne.s32.totalorder %s45, %s61
    %p63 = scmp.eq.s32.totalorder %s16, 0
    %p64 = por %p62, %p63
    %s65 = ssub.s32 %s19, %s28
    %s66 = ssub.s32 %s18, %s32
    %s67 = sor.u32 %s65, %s66
    %p68 = scmp.eq.s32.totalorder %s67, 0
    %s70 = sadd.s32 %s69, 1
    %s71 = scalar_select %p68, %s69, %s70
    %p74 = pneg %p68
    %p75 = scmp.eq.s32.totalorder %s10, 2
    %p76 = por %p74, %p75
    %p77 = scmp.ne.s32.totalorder %s69, %s72
    %p78 = scmp.eq.s32.totalorder %s10, 0
    %p79 = por %p77, %p78
    %p80 = scmp.ne.s32.totalorder %s69, %s72
    %p81 = scmp.eq.s32.totalorder %s15, 2
    %p82 = por %p80, %p81
    %p83 = scmp.ne.s32.totalorder %s72, %s73
    %p84 = scmp.eq.s32.totalorder %s15, 0
    %p85 = por %p83, %p84
    %p86 = scmp.ne.s32.totalorder %s72, %s73
    %p87 = scmp.eq.s32.totalorder %s16, 2
    %p88 = por %p86, %p87
    %p90 = scmp.ne.s32.totalorder %s73, %s89
    %p91 = scmp.eq.s32.totalorder %s16, 0
    %p92 = por %p90, %p91
    %s93 = ssub.s32 %s18, %s32
    %p94 = scmp.eq.s32.totalorder %s93, 0
    %s96 = sadd.s32 %s95, 1
    %s97 = scalar_select %p94, %s95, %s96
    %p100 = pneg %p94
    %p101 = scmp.eq.s32.totalorder %s10, 2
    %p102 = por %p100, %p101
    %p103 = scmp.ne.s32.totalorder %s95, %s98
    %p104 = scmp.eq.s32.totalorder %s10, 0
    %p105 = por %p103, %p104
    %p106 = scmp.ne.s32.totalorder %s95, %s98
    %p107 = scmp.eq.s32.totalorder %s15, 2
    %p108 = por %p106, %p107
    %p109 = scmp.ne.s32.totalorder %s98, %s99
    %p110 = scmp.eq.s32.totalorder %s15, 0
    %p111 = por %p109, %p110
    %p112 = scmp.ne.s32.totalorder %s98, %s99
    %p113 = scmp.eq.s32.totalorder %s16, 2
    %p114 = por %p112, %p113
    %p116 = scmp.ne.s32.totalorder %s99, %s115
    %p117 = scmp.eq.s32.totalorder %s16, 0
    %p118 = por %p116, %p117
    %s119 = ssub.s32 %s18, %s32
    %p120 = scmp.eq.s32.totalorder %s119, 0
    %s122 = sadd.s32 %s121, 1
    %s123 = scalar_select %p120, %s121, %s122
    %p126 = pneg %p120
    %p127 = scmp.eq.s32.totalorder %s10, 2
    %p128 = por %p126, %p127
    %p129 = scmp.ne.s32.totalorder %s121, %s124
    %p130 = scmp.eq.s32.totalorder %s10, 0
    %p131 = por %p129, %p130
    %p132 = scmp.ne.s32.totalorder %s121, %s124
    %p133 = scmp.eq.s32.totalorder %s15, 2
    %p134 = por %p132, %p133
    %p135 = scmp.ne.s32.totalorder %s124, %s125
    %p136 = scmp.eq.s32.totalorder %s15, 0
    %p137 = por %p135, %p136
    %p138 = scmp.ne.s32.totalorder %s124, %s125
    %p139 = scmp.eq.s32.totalorder %s16, 2
    %p140 = por %p138, %p139
    %p142 = scmp.ne.s32.totalorder %s125, %s141
    %p143 = scmp.eq.s32.totalorder %s16, 0
    %p144 = por %p142, %p143
    %s145 = ssub.s32 %s17, %s36
    %s146 = ssub.s32 %s18, %s32
    %s147 = sor.u32 %s145, %s146
    %p148 = scmp.eq.s32.totalorder %s147, 0
    %s150 = sadd.s32 %s149, 1
    %s151 = scalar_select %p148, %s149, %s150
    %p154 = pneg %p148
    %p155 = scmp.eq.s32.totalorder %s10, 2
    %p156 = por %p154, %p155
    %p157 = scmp.ne.s32.totalorder %s149, %s152
    %p158 = scmp.eq.s32.totalorder %s10, 0
    %p159 = por %p157, %p158
    %p160 = scmp.ne.s32.totalorder %s149, %s152
    %p161 = scmp.eq.s32.totalorder %s15, 2
    %p162 = por %p160, %p161
    %p163 = scmp.ne.s32.totalorder %s152, %s153
    %p164 = scmp.eq.s32.totalorder %s15, 0
    %p165 = por %p163, %p164
    %p166 = scmp.ne.s32.totalorder %s152, %s153
    %p167 = scmp.eq.s32.totalorder %s16, 2
    %p168 = por %p166, %p167
    %p170 = scmp.ne.s32.totalorder %s153, %s169
    %p171 = scmp.eq.s32.totalorder %s16, 0
    %p172 = por %p170, %p171
    %p173 = scmp.le.s32.totalorder 1, %s10
    %p174 = scmp.lt.s32.totalorder %s10, 4
    %p175 = pnand %p173, %p174
    %p176 = pneg %p175
    // Predicated region
    $region9: #{_lambda_.23} parent=5 // pred_check
      _
    $region10: #{_lambda_.23} parent=5 // pred_check_branch
      %178 = sbr.rel (%p175) target = $region12
    $region11: #{_lambda_.23} parent=5 // pred_region
      %s179 = ssub.s32 %s10, 1
      // Predicated region
      $region13: #{_lambda_.23} parent=11 // pred_check
        %p180 = pneg %p111
      $region14: #{_lambda_.23} parent=11 // pred_check_branch
        %182 = sbr.rel (%p180) target = $region16
      $region15: #{_lambda_.23} parent=11 // pred_region
        %p183 = scmp.lt.s32.totalorder %s21, 0
        %s184 = scalar_select %p183, %s21, 0
        %s185 = scalar_lea.vmem %s2, %s184
      $region16: #{_lambda_.23} parent=11 // pred_fallthru
        _
      // Predicated region
      $region17: #{_lambda_.23} parent=11 // pred_check
        %p186 = pneg %p137
      $region18: #{_lambda_.23} parent=11 // pred_check_branch
        %188 = sbr.rel (%p186) target = $region20
      $region19: #{_lambda_.23} parent=11 // pred_region
        %p189 = scmp.lt.s32.totalorder %s21, 0
        %s190 = scalar_select %p189, %s21, 0
        %s191 = scalar_lea.vmem %s3, %s190
      $region20: #{_lambda_.23} parent=11 // pred_fallthru
        _
    $region12: #{_lambda_.23} parent=5 // pred_fallthru
      _
    %p192 = scmp.lt.s32.totalorder %s10, 3
    // Predicated region
    $region21: #{_lambda_.23} parent=5 // pred_check
      %p193 = pneg %p192
    $region22: #{_lambda_.23} parent=5 // pred_check_branch
      %195 = sbr.rel (%p193) target = $region24
    $region23: #{_lambda_.23} parent=5 // pred_region
      // Predicated region
      $region25: #{_lambda_.23} parent=23 // pred_check
        %p196 = pneg %p51
      $region26: #{_lambda_.23} parent=23 // pred_check_branch
        %198 = sbr.rel (%p196) target = $region28
      $region27: #{_lambda_.23} parent=23 // pred_region
        %s199 = smul.u32 2, %s19
        %p200 = scmp.lt.s32.totalorder %s17, 0
        %s201 = scalar_select %p200, %s17, 0
        %p202 = scmp.lt.s32.totalorder %s199, 5
        %s203 = scalar_select %p202, %s199, 5
        %s204 = smul.addr %s201, 6
        %s205 = sadd.s32 %s203, %s204
        %s206 = smul.addr %s205, 4
        %s207 = scalar_lea.vmem %s0, %s206
        %s208 = smul.u32 2, %s19
      $region28: #{_lambda_.23} parent=23 // pred_fallthru
        _
      // Predicated region
      $region29: #{_lambda_.23} parent=23 // pred_check
        %p209 = pneg %p79
      $region30: #{_lambda_.23} parent=23 // pred_check_branch
        %211 = sbr.rel (%p209) target = $region32
      $region31: #{_lambda_.23} parent=23 // pred_region
        %s212 = smul.u32 32, %s19
        %p213 = scmp.lt.s32.totalorder %s212, 95
        %s214 = scalar_select %p213, %s212, 95
        %p215 = scmp.lt.s32.totalorder %s18, 0
        %s216 = scalar_select %p215, %s18, 0
        %s217 = sadd.s32 %s216, %s214
        %s218 = smul.addr %s217, 4
        %s219 = scalar_lea.vmem %s1, %s218
        %s220 = smul.u32 32, %s19
      $region32: #{_lambda_.23} parent=23 // pred_fallthru
        _
    $region24: #{_lambda_.23} parent=5 // pred_fallthru
      _
    %p221 = scmp.le.s32.totalorder 1, %s10
    %p222 = scmp.lt.s32.totalorder %s10, 4
    %p223 = pnand %p221, %p222
    %p224 = pneg %p223
    // Predicated region
    $region33: #{_lambda_.23} parent=5 // pred_check
      _
    $region34: #{_lambda_.23} parent=5 // pred_check_branch
      %226 = sbr.rel (%p223) target = $region36
    $region35: #{_lambda_.23} parent=5 // pred_region
      %s227 = ssub.s32 %s10, 1
      %s228 = smul.u32 2, %s22
      %p229 = scmp.lt.s32.totalorder %s20, 0
      %s230 = scalar_select %p229, %s20, 0
      %p231 = scmp.lt.s32.totalorder %s228, 5
      %s232 = scalar_select %p231, %s228, 5
      %s233 = smul.addr %s230, 6
      %s234 = sadd.s32 %s232, %s233
      %s235 = smul.addr %s234, 4
      %s236 = scalar_lea.vmem %s0, %s235
      %p237 = pneg %p57
      %p238 = pneg %p54
      %s239 = smul.u32 32, %s22
      %p240 = scmp.lt.s32.totalorder %s239, 95
      %s241 = scalar_select %p240, %s239, 95
      %p242 = scmp.lt.s32.totalorder %s21, 0
      %s243 = scalar_select %p242, %s21, 0
      %s244 = sadd.s32 %s243, %s241
      %s245 = smul.addr %s244, 4
      %s246 = scalar_lea.vmem %s1, %s245
      %p247 = pneg %p85
      %p248 = pneg %p82
      %p249 = scmp.lt.s32.totalorder %s21, 0
      %s250 = scalar_select %p249, %s21, 0
      %s251 = scalar_lea.vmem %s2, %s250
      %p252 = pneg %p111
      %p253 = pneg %p108
      %p254 = scmp.lt.s32.totalorder %s21, 0
      %s255 = scalar_select %p254, %s21, 0
      %s256 = scalar_lea.vmem %s3, %s255
      %p257 = pneg %p137
      %p258 = pneg %p134
      %p259 = pneg %p165
      %p260 = pneg %p162
      %p261 = scmp.lt.s32.totalorder %s20, 0
      %s262 = scalar_select %p261, %s20, 0
      %p263 = scmp.lt.s32.totalorder %s21, 0
      %s264 = scalar_select %p263, %s21, 0
      %s265 = sadd.s32 %s264, %s262
      %s266 = smul.addr %s265, 8
      %s267 = scalar_lea.vmem %s4, %s266
      %s268 = smul.u32 2, %s22
      %p269 = scmp.lt.s32.totalorder %s20, 0
      %s270 = scalar_select %p269, %s20, 0
      %p271 = scmp.lt.s32.totalorder %s268, 5
      %s272 = scalar_select %p271, %s268, 5
      %s273 = smul.addr %s270, 6
      %s274 = sadd.s32 %s272, %s273
      %s275 = smul.addr %s274, 4
      %s276 = scalar_lea.vmem %s0, %s275
      %s277 = smul.u32 2, %s22
      %s278 = smul.u32 32, %s22
      %p279 = scmp.lt.s32.totalorder %s278, 95
      %s280 = scalar_select %p279, %s278, 95
      %p281 = scmp.lt.s32.totalorder %s21, 0
      %s282 = scalar_select %p281, %s21, 0
      %s283 = sadd.s32 %s282, %s280
      %s284 = smul.addr %s283, 4
      %s285 = scalar_lea.vmem %s1, %s284
      %s286 = smul.u32 32, %s22
      %p287 = scmp.lt.s32.totalorder %s21, 0
      %s288 = scalar_select %p287, %s21, 0
      %s289 = scalar_lea.vmem %s2, %s288
      %p290 = scmp.lt.s32.totalorder %s21, 0
      %s291 = scalar_select %p290, %s21, 0
      %s292 = scalar_lea.vmem %s3, %s291
      %p293 = scmp.lt.s32.totalorder %s20, 0
      %s294 = scalar_select %p293, %s20, 0
      %p295 = scmp.lt.s32.totalorder %s21, 0
      %s296 = scalar_select %p295, %s21, 0
      %s297 = sadd.s32 %s296, %s294
      %s298 = smul.addr %s297, 8
      %s299 = scalar_lea.vmem %s4, %s298
      %p301 = scmp.eq.s32.totalorder %s22, 0
      // Predicated region
      $region37: #{_lambda_.23} parent=35 // pred_check
        %p302 = pneg %p301
      $region38: #{_lambda_.23} parent=35 // pred_check_branch
        %304 = sbr.rel (%p302) target = $region40
      $region39: #{_lambda_.23} parent=35 // pred_region
        %305 = vst [vmem:[%s299] sm:$0xff] 0.0
      $region40: #{_lambda_.23} parent=35 // pred_fallthru
        _
      %v306 = vld [vmem:[%s299] sm:$0xff]
      %v307 = vld [vmem:[%s276] sm:$0xff]
      %v308 = vld [vmem:[%s285] sm:$0xf]
      %v309 = vld [vmem:[%s285 + $0x4] sm:$0xf]
      %v310 = vld [vmem:[%s285 + $0x8] sm:$0xf]
      %v311 = vld [vmem:[%s285 + $0xc] sm:$0xf]
      %v312 = vld [vmem:[%s285 + $0x10] sm:$0xf]
      %v313 = vld [vmem:[%s285 + $0x14] sm:$0xf]
      %v314 = vld [vmem:[%s285 + $0x18] sm:$0xf]
      %v315 = vld [vmem:[%s285 + $0x1c] sm:$0xf]
      %v316 = vld [vmem:[%s285 + $0x20] sm:$0xf]
      %v317 = vld [vmem:[%s285 + $0x24] sm:$0xf]
      %v318 = vld [vmem:[%s285 + $0x28] sm:$0xf]
      %v319 = vld [vmem:[%s285 + $0x2c] sm:$0xf]
      %v320 = vld [vmem:[%s285 + $0x30] sm:$0xf]
      %v321 = vld [vmem:[%s285 + $0x34] sm:$0xf]
      %v322 = vld [vmem:[%s285 + $0x38] sm:$0xf]
      %v323 = vld [vmem:[%s285 + $0x3c] sm:$0xf]
      %v324 = vld [vmem:[%s285 + $0x40] sm:$0xf]
      %v325 = vld [vmem:[%s285 + $0x44] sm:$0xf]
      %v326 = vld [vmem:[%s285 + $0x48] sm:$0xf]
      %v327 = vld [vmem:[%s285 + $0x4c] sm:$0xf]
      %v328 = vld [vmem:[%s285 + $0x50] sm:$0xf]
      %v329 = vld [vmem:[%s285 + $0x54] sm:$0xf]
      %v330 = vld [vmem:[%s285 + $0x58] sm:$0xf]
      %v331 = vld [vmem:[%s285 + $0x5c] sm:$0xf]
      %v332 = vld [vmem:[%s285 + $0x60] sm:$0xf]
      %v333 = vld [vmem:[%s285 + $0x64] sm:$0xf]
      %v334 = vld [vmem:[%s285 + $0x68] sm:$0xf]
      %v335 = vld [vmem:[%s285 + $0x6c] sm:$0xf]
      %v336 = vld [vmem:[%s285 + $0x70] sm:$0xf]
      %v337 = vld [vmem:[%s285 + $0x74] sm:$0xf]
      %v338 = vld [vmem:[%s285 + $0x78] sm:$0xf]
      %v339 = vld [vmem:[%s285 + $0x7c] sm:$0xf]
      %v341 = vunpack.c.l.b16 %v307
      %v342 = vunpack.c.h.b16 %v307
      %v343 = vpack.c.b16 %v341, %v341
      %v344 = vpack.c.b16 %v342, %v342
      %v379 = vunpack.c.l.b16 %v308
      %v380 = vunpack.c.l.b16 %v309
      %v381 = vunpack.c.l.b16 %v310
      %v382 = vunpack.c.l.b16 %v311
      %v383 = vunpack.c.l.b16 %v312
      %v384 = vunpack.c.l.b16 %v313
      %v385 = vunpack.c.l.b16 %v314
      %v386 = vunpack.c.l.b16 %v315
      %v387 = vunpack.c.l.b16 %v316
      %v388 = vunpack.c.l.b16 %v317
      %v389 = vunpack.c.l.b16 %v318
      %v390 = vunpack.c.l.b16 %v319
      %v391 = vunpack.c.l.b16 %v320
      %v392 = vunpack.c.l.b16 %v321
      %v393 = vunpack.c.l.b16 %v322
      %v394 = vunpack.c.l.b16 %v323
      %v395 = vunpack.c.l.b16 %v324
      %v396 = vunpack.c.l.b16 %v325
      %v397 = vunpack.c.l.b16 %v326
      %v398 = vunpack.c.l.b16 %v327
      %v399 = vunpack.c.l.b16 %v328
      %v400 = vunpack.c.l.b16 %v329
      %v401 = vunpack.c.l.b16 %v330
      %v402 = vunpack.c.l.b16 %v331
      %v403 = vunpack.c.l.b16 %v332
      %v404 = vunpack.c.l.b16 %v333
      %v405 = vunpack.c.l.b16 %v334
      %v406 = vunpack.c.l.b16 %v335
      %v407 = vunpack.c.l.b16 %v336
      %v408 = vunpack.c.l.b16 %v337
      %v409 = vunpack.c.l.b16 %v338
      %v410 = vunpack.c.l.b16 %v339
      %v411 = vpack.c.b16 %v380, %v379
      %v412 = vpack.c.b16 %v382, %v381
      %v413 = vpack.c.b16 %v384, %v383
      %v414 = vpack.c.b16 %v386, %v385
      %v415 = vpack.c.b16 %v388, %v387
      %v416 = vpack.c.b16 %v390, %v389
      %v417 = vpack.c.b16 %v392, %v391
      %v418 = vpack.c.b16 %v394, %v393
      %v419 = vpack.c.b16 %v396, %v395
      %v420 = vpack.c.b16 %v398, %v397
      %v421 = vpack.c.b16 %v400, %v399
      %v422 = vpack.c.b16 %v402, %v401
      %v423 = vpack.c.b16 %v404, %v403
      %v424 = vpack.c.b16 %v406, %v405
      %v425 = vpack.c.b16 %v408, %v407
      %v426 = vpack.c.b16 %v410, %v409
      %443 = vmatprep.subr.bf16.mxu0 0
      %444 = vmatpush1.bf16.msra.mxu0 %v418
      %445 = vmatprep.subr.bf16.mxu0 0
      %446 = vmatpush1.bf16.msra.mxu0 %v417
      %447 = vmatprep.subr.bf16.mxu0 0
      %448 = vmatpush1.bf16.msra.mxu0 %v416
      %449 = vmatprep.subr.bf16.mxu0 0
      %450 = vmatpush1.bf16.msra.mxu0 %v415
      %451 = vmatprep.subr.bf16.mxu0 0
      %452 = vmatpush1.bf16.msra.mxu0 %v414
      %453 = vmatprep.subr.bf16.mxu0 0
      %454 = vmatpush1.bf16.msra.mxu0 %v413
      %455 = vmatprep.subr.bf16.mxu0 0
      %456 = vmatpush1.bf16.msra.mxu0 %v412
      %457 = vmatprep.subr.bf16.mxu0 0
      %458 = vmatpush1.bf16.msra.mxu0 %v411
      %459 = vmatprep.subr.bf16.mxu0 0
      %460 = vmatpush2.bf16.msra.mxu0 %v426
      %461 = vmatprep.subr.bf16.mxu0 0
      %462 = vmatpush2.bf16.msra.mxu0 %v425
      %463 = vmatprep.subr.bf16.mxu0 0
      %464 = vmatpush2.bf16.msra.mxu0 %v424
      %465 = vmatprep.subr.bf16.mxu0 0
      %466 = vmatpush2.bf16.msra.mxu0 %v423
      %467 = vmatprep.subr.bf16.mxu0 0
      %468 = vmatpush2.bf16.msra.mxu0 %v422
      %469 = vmatprep.subr.bf16.mxu0 0
      %470 = vmatpush2.bf16.msra.mxu0 %v421
      %471 = vmatprep.subr.bf16.mxu0 0
      %472 = vmatpush2.bf16.msra.mxu0 %v420
      %473 = vmatprep.subr.bf16.mxu0 0
      %474 = vmatpush2.bf16.msra.mxu0 %v419
      %475 = vmatprep.mubr.bf16.mxu0 %v344
      %476 = vmatmul.mubr.bf16.gmra.mxu0 %v343
      %v477 = vpop.f32.mrf.mxu0
      %v478 = vadd.f32 0.0, %v477
      %v479 = vpop.f32.mrf.mxu0
      %v480 = vpop.f32.mrf.mxu0
      %v481 = vpop.f32.mrf.mxu0
      %482 = vdwg.mxu0
      %v483 = vadd.f32 %v306, %v478
      %484 = vst [vmem:[%s299] sm:$0xff] %v483
      %p485 = scmp.eq.s32.totalorder %s22, 2
      // Predicated region
      $region41: #{_lambda_.23} parent=35 // pred_check
        %p486 = pneg %p485
      $region42: #{_lambda_.23} parent=35 // pred_check_branch
        %488 = sbr.rel (%p486) target = $region44
      $region43: #{_lambda_.23} parent=35 // pred_region
        %v489 = vld [vmem:[%s299] sm:$0xff]
        %v490 = vld [vmem:[%s289] sm:$0x1]
        %v492 = vlaneseq
        %v493 = vshrl.u32 %v492, 7
        %v494 = vsub.s32 0, %v493
        %v495 = vrot.slane %v490, %v494
        %v497 = vmul.f32 %v489, %v495
        %v498 = vld [vmem:[%s292] sm:$0x1]
        %v500 = vlaneseq
        %v501 = vshrl.u32 %v500, 7
        %v502 = vsub.s32 0, %v501
        %v503 = vrot.slane %v498, %v502
        %v505 = vadd.f32 %v497, %v503
        %506 = vst [vmem:[%s299] sm:$0xff] %v505
      $region44: #{_lambda_.23} parent=35 // pred_fallthru
        _
      %p507 = scmp.lt.s32.totalorder %s20, 0
      %s508 = scalar_select %p507, %s20, 0
      %p509 = scmp.lt.s32.totalorder %s21, 0
      %s510 = scalar_select %p509, %s21, 0
      %s511 = sadd.s32 %s510, %s508
      %s512 = smul.addr %s511, 8
      %s513 = scalar_lea.vmem %s4, %s512
      // Predicated region
      $region45: #{_lambda_.23} parent=35 // pred_check
        %p514 = pneg %p162
      $region46: #{_lambda_.23} parent=35 // pred_check_branch
        %516 = sbr.rel (%p514) target = $region48
      $region47: #{_lambda_.23} parent=35 // pred_region
        _
      $region48: #{_lambda_.23} parent=35 // pred_fallthru
        _
      // Predicated region
      $region49: #{_lambda_.23} parent=35 // pred_check
        %p517 = pneg %p162
      $region50: #{_lambda_.23} parent=35 // pred_check_branch
        %519 = sbr.rel (%p517) target = $region52
      $region51: #{_lambda_.23} parent=35 // pred_region
        %p520 = scmp.lt.s32.totalorder %s20, 0
        %s521 = scalar_select %p520, %s20, 0
        %p522 = scmp.lt.s32.totalorder %s21, 0
        %s523 = scalar_select %p522, %s21, 0
        %s524 = sadd.s32 %s523, %s521
        %s525 = smul.addr %s524, 8
        %s526 = scalar_lea.vmem %s4, %s525
      $region52: #{_lambda_.23} parent=35 // pred_fallthru
        _
    $region36: #{_lambda_.23} parent=5 // pred_fallthru
      _
    %p527 = scmp.le.s32.totalorder 2, %s10
    // Predicated region
    $region53: #{_lambda_.23} parent=5 // pred_check
      %p528 = pneg %p527
    $region54: #{_lambda_.23} parent=5 // pred_check_branch
      %530 = sbr.rel (%p528) target = $region56
    $region55: #{_lambda_.23} parent=5 // pred_region
      %s531 = ssub.s32 %s10, 2
    $region56: #{_lambda_.23} parent=5 // pred_fallthru
      _
  $region6: #{_lambda_.23} parent=0 // loop_footer
    %s14 = sadd.s32 1, %s10
  $region7: #{_lambda_.23} parent=0 // loop_footer_branch
    %9 = sbr.rel target = $region3
  $region8: #{_lambda_.23} parent=0 // loop_exit
    _

// kernel: _lambda_.24
$region0: #{_lambda_.24}
  #allocation0 [shape = 'u32[]', space=smem, size = 0x4, offset = 0x4, fixed_abs, tag = 'smem constant byte address 0x4 - core index']
  #allocation1 [shape = 'u32[144,128]{1,0:T(1,128)}', space=vmem, size = 0x12000, scoped, tag = 'internal scratch']
  %s0 = inlined_call_operand.vmem [shape: bf16[8,1280], index: 0, kind: input, shape index: {}]
  %s1 = inlined_call_operand.vmem [shape: bf16[1280,128], index: 1, kind: input, shape index: {}]
  %s2 = inlined_call_operand.vmem [shape: f32[1,128], index: 2, kind: input, shape index: {}]
  %s3 = inlined_call_operand.vmem [shape: f32[1,128], index: 3, kind: input, shape index: {}]
  %s4 = inlined_call_operand.vmem [shape: f32[8,128], index: 4, kind: input, shape index: {}]
  %s5 = inlined_call_operand.vmem [shape: f32[8,128], index: 5, kind: output, shape index: {}]
  %s6 = sld [smem:[#allocation0]]
  $region61: #{_lambda_.24} parent=0
    _
  %s8 = ssub.s32 1, %s6
  %s9 = scalar_select 0, %s8, %s6
  loop: start=0, step=1, limit=7
  $region2: #{_lambda_.24} parent=0 // loop_pre_header
    _
  $region3: #{_lambda_.24} parent=0 // loop_header
    %s11 = sphi 0, %s15
    %p12 = scmp.ge.s32.totalorder %s11, 7
    %s18 = sphi 0, %s37
    %s19 = sphi 0, %s33
    %s20 = sphi 0, %s29
    %s21 = sphi 0, %s18
    %s22 = sphi 0, %s19
    %s23 = sphi 0, %s20
    %s24 = sphi 0, %s21
    %s25 = sphi 0, %s22
    %s26 = sphi 0, %s23
    %s42 = sphi 0, %s44
    %s45 = sphi 0, %s42
    %s46 = sphi 0, %s45
    %s62 = sphi 0, %s46
    %s70 = sphi 0, %s72
    %s73 = sphi 0, %s70
    %s74 = sphi 0, %s73
    %s90 = sphi 0, %s74
    %s96 = sphi 0, %s98
    %s99 = sphi 0, %s96
    %s100 = sphi 0, %s99
    %s116 = sphi 0, %s100
    %s122 = sphi 0, %s124
    %s125 = sphi 0, %s122
    %s126 = sphi 0, %s125
    %s142 = sphi 0, %s126
    %s150 = sphi 0, %s152
    %s153 = sphi 0, %s150
    %s154 = sphi 0, %s153
    %s170 = sphi 0, %s154
    %s178 = sphi 0, %s180
    %s181 = sphi 0, %s178
    %s182 = sphi 0, %s181
    %s198 = sphi 0, %s182
  $region4: #{_lambda_.24} parent=0 // loop_header_branch
    %14 = sbr.rel (%p12) target = $region8
  $region5: #{_lambda_.24} parent=0 // loop_body
    %s16 = ssub.s32 %s11, 1
    %s17 = ssub.s32 %s11, 2
    %s27 = sadd.s32 1, %s20
    %p28 = scmp.ge.s32.totalorder %s27, 5
    %s29 = scalar_select %p28, 0, %s27
    %s30 = sadd.s32 1, %s19
    %s31 = scalar_select %p28, %s30, %s19
    %p32 = scmp.ge.s32.totalorder %s31, 1
    %s33 = scalar_select %p32, 0, %s31
    %s34 = sadd.s32 1, %s18
    %s35 = scalar_select %p32, %s34, %s18
    %p36 = scmp.ge.s32.totalorder %s35, 1
    %s37 = scalar_select %p36, 0, %s35
    %s38 = ssub.s32 %s18, %s37
    %s39 = ssub.s32 %s20, %s29
    %s40 = sor.u32 %s38, %s39
    %p41 = scmp.eq.s32.totalorder %s40, 0
    %s43 = sadd.s32 %s42, 1
    %s44 = scalar_select %p41, %s42, %s43
    %p47 = pneg %p41
    %p48 = scmp.eq.s32.totalorder %s11, 4
    %p49 = por %p47, %p48
    %p50 = scmp.ne.s32.totalorder %s42, %s45
    %p51 = scmp.eq.s32.totalorder %s11, 0
    %p52 = por %p50, %p51
    %p53 = scmp.ne.s32.totalorder %s42, %s45
    %p54 = scmp.eq.s32.totalorder %s16, 4
    %p55 = por %p53, %p54
    %p56 = scmp.ne.s32.totalorder %s45, %s46
    %p57 = scmp.eq.s32.totalorder %s16, 0
    %p58 = por %p56, %p57
    %p59 = scmp.ne.s32.totalorder %s45, %s46
    %p60 = scmp.eq.s32.totalorder %s17, 4
    %p61 = por %p59, %p60
    %p63 = scmp.ne.s32.totalorder %s46, %s62
    %p64 = scmp.eq.s32.totalorder %s17, 0
    %p65 = por %p63, %p64
    %s66 = ssub.s32 %s20, %s29
    %s67 = ssub.s32 %s19, %s33
    %s68 = sor.u32 %s66, %s67
    %p69 = scmp.eq.s32.totalorder %s68, 0
    %s71 = sadd.s32 %s70, 1
    %s72 = scalar_select %p69, %s70, %s71
    %p75 = pneg %p69
    %p76 = scmp.eq.s32.totalorder %s11, 4
    %p77 = por %p75, %p76
    %p78 = scmp.ne.s32.totalorder %s70, %s73
    %p79 = scmp.eq.s32.totalorder %s11, 0
    %p80 = por %p78, %p79
    %p81 = scmp.ne.s32.totalorder %s70, %s73
    %p82 = scmp.eq.s32.totalorder %s16, 4
    %p83 = por %p81, %p82
    %p84 = scmp.ne.s32.totalorder %s73, %s74
    %p85 = scmp.eq.s32.totalorder %s16, 0
    %p86 = por %p84, %p85
    %p87 = scmp.ne.s32.totalorder %s73, %s74
    %p88 = scmp.eq.s32.totalorder %s17, 4
    %p89 = por %p87, %p88
    %p91 = scmp.ne.s32.totalorder %s74, %s90
    %p92 = scmp.eq.s32.totalorder %s17, 0
    %p93 = por %p91, %p92
    %s94 = ssub.s32 %s19, %s33
    %p95 = scmp.eq.s32.totalorder %s94, 0
    %s97 = sadd.s32 %s96, 1
    %s98 = scalar_select %p95, %s96, %s97
    %p101 = pneg %p95
    %p102 = scmp.eq.s32.totalorder %s11, 4
    %p103 = por %p101, %p102
    %p104 = scmp.ne.s32.totalorder %s96, %s99
    %p105 = scmp.eq.s32.totalorder %s11, 0
    %p106 = por %p104, %p105
    %p107 = scmp.ne.s32.totalorder %s96, %s99
    %p108 = scmp.eq.s32.totalorder %s16, 4
    %p109 = por %p107, %p108
    %p110 = scmp.ne.s32.totalorder %s99, %s100
    %p111 = scmp.eq.s32.totalorder %s16, 0
    %p112 = por %p110, %p111
    %p113 = scmp.ne.s32.totalorder %s99, %s100
    %p114 = scmp.eq.s32.totalorder %s17, 4
    %p115 = por %p113, %p114
    %p117 = scmp.ne.s32.totalorder %s100, %s116
    %p118 = scmp.eq.s32.totalorder %s17, 0
    %p119 = por %p117, %p118
    %s120 = ssub.s32 %s19, %s33
    %p121 = scmp.eq.s32.totalorder %s120, 0
    %s123 = sadd.s32 %s122, 1
    %s124 = scalar_select %p121, %s122, %s123
    %p127 = pneg %p121
    %p128 = scmp.eq.s32.totalorder %s11, 4
    %p129 = por %p127, %p128
    %p130 = scmp.ne.s32.totalorder %s122, %s125
    %p131 = scmp.eq.s32.totalorder %s11, 0
    %p132 = por %p130, %p131
    %p133 = scmp.ne.s32.totalorder %s122, %s125
    %p134 = scmp.eq.s32.totalorder %s16, 4
    %p135 = por %p133, %p134
    %p136 = scmp.ne.s32.totalorder %s125, %s126
    %p137 = scmp.eq.s32.totalorder %s16, 0
    %p138 = por %p136, %p137
    %p139 = scmp.ne.s32.totalorder %s125, %s126
    %p140 = scmp.eq.s32.totalorder %s17, 4
    %p141 = por %p139, %p140
    %p143 = scmp.ne.s32.totalorder %s126, %s142
    %p144 = scmp.eq.s32.totalorder %s17, 0
    %p145 = por %p143, %p144
    %s146 = ssub.s32 %s18, %s37
    %s147 = ssub.s32 %s19, %s33
    %s148 = sor.u32 %s146, %s147
    %p149 = scmp.eq.s32.totalorder %s148, 0
    %s151 = sadd.s32 %s150, 1
    %s152 = scalar_select %p149, %s150, %s151
    %p155 = pneg %p149
    %p156 = scmp.eq.s32.totalorder %s11, 4
    %p157 = por %p155, %p156
    %p158 = scmp.ne.s32.totalorder %s150, %s153
    %p159 = scmp.eq.s32.totalorder %s11, 0
    %p160 = por %p158, %p159
    %p161 = scmp.ne.s32.totalorder %s150, %s153
    %p162 = scmp.eq.s32.totalorder %s16, 4
    %p163 = por %p161, %p162
    %p164 = scmp.ne.s32.totalorder %s153, %s154
    %p165 = scmp.eq.s32.totalorder %s16, 0
    %p166 = por %p164, %p165
    %p167 = scmp.ne.s32.totalorder %s153, %s154
    %p168 = scmp.eq.s32.totalorder %s17, 4
    %p169 = por %p167, %p168
    %p171 = scmp.ne.s32.totalorder %s154, %s170
    %p172 = scmp.eq.s32.totalorder %s17, 0
    %p173 = por %p171, %p172
    %s174 = ssub.s32 %s18, %s37
    %s175 = ssub.s32 %s19, %s33
    %s176 = sor.u32 %s174, %s175
    %p177 = scmp.eq.s32.totalorder %s176, 0
    %s179 = sadd.s32 %s178, 1
    %s180 = scalar_select %p177, %s178, %s179
    %p183 = pneg %p177
    %p184 = scmp.eq.s32.totalorder %s11, 4
    %p185 = por %p183, %p184
    %p186 = scmp.ne.s32.totalorder %s178, %s181
    %p187 = scmp.eq.s32.totalorder %s11, 0
    %p188 = por %p186, %p187
    %p189 = scmp.ne.s32.totalorder %s178, %s181
    %p190 = scmp.eq.s32.totalorder %s16, 4
    %p191 = por %p189, %p190
    %p192 = scmp.ne.s32.totalorder %s181, %s182
    %p193 = scmp.eq.s32.totalorder %s16, 0
    %p194 = por %p192, %p193
    %p195 = scmp.ne.s32.totalorder %s181, %s182
    %p196 = scmp.eq.s32.totalorder %s17, 4
    %p197 = por %p195, %p196
    %p199 = scmp.ne.s32.totalorder %s182, %s198
    %p200 = scmp.eq.s32.totalorder %s17, 0
    %p201 = por %p199, %p200
    %p202 = scmp.le.s32.totalorder 1, %s11
    %p203 = scmp.lt.s32.totalorder %s11, 6
    %p204 = pnand %p202, %p203
    %p205 = pneg %p204
    // Predicated region
    $region9: #{_lambda_.24} parent=5 // pred_check
      _
    $region10: #{_lambda_.24} parent=5 // pred_check_branch
      %207 = sbr.rel (%p204) target = $region12
    $region11: #{_lambda_.24} parent=5 // pred_region
      %s208 = ssub.s32 %s11, 1
      // Predicated region
      $region13: #{_lambda_.24} parent=11 // pred_check
        %p209 = pneg %p112
      $region14: #{_lambda_.24} parent=11 // pred_check_branch
        %211 = sbr.rel (%p209) target = $region16
      $region15: #{_lambda_.24} parent=11 // pred_region
        %p212 = scmp.lt.s32.totalorder %s22, 0
        %s213 = scalar_select %p212, %s22, 0
        %s214 = scalar_lea.vmem %s2, %s213
      $region16: #{_lambda_.24} parent=11 // pred_fallthru
        _
      // Predicated region
      $region17: #{_lambda_.24} parent=11 // pred_check
        %p215 = pneg %p138
      $region18: #{_lambda_.24} parent=11 // pred_check_branch
        %217 = sbr.rel (%p215) target = $region20
      $region19: #{_lambda_.24} parent=11 // pred_region
        %p218 = scmp.lt.s32.totalorder %s22, 0
        %s219 = scalar_select %p218, %s22, 0
        %s220 = scalar_lea.vmem %s3, %s219
      $region20: #{_lambda_.24} parent=11 // pred_fallthru
        _
      // Predicated region
      $region21: #{_lambda_.24} parent=11 // pred_check
        %p221 = pneg %p166
      $region22: #{_lambda_.24} parent=11 // pred_check_branch
        %223 = sbr.rel (%p221) target = $region24
      $region23: #{_lambda_.24} parent=11 // pred_region
        %p224 = scmp.lt.s32.totalorder %s21, 0
        %s225 = scalar_select %p224, %s21, 0
        %p226 = scmp.lt.s32.totalorder %s22, 0
        %s227 = scalar_select %p226, %s22, 0
        %s228 = sadd.s32 %s227, %s225
        %s229 = smul.addr %s228, 8
        %s230 = scalar_lea.vmem %s4, %s229
      $region24: #{_lambda_.24} parent=11 // pred_fallthru
        _
    $region12: #{_lambda_.24} parent=5 // pred_fallthru
      _
    %p231 = scmp.lt.s32.totalorder %s11, 5
    // Predicated region
    $region25: #{_lambda_.24} parent=5 // pred_check
      %p232 = pneg %p231
    $region26: #{_lambda_.24} parent=5 // pred_check_branch
      %234 = sbr.rel (%p232) target = $region28
    $region27: #{_lambda_.24} parent=5 // pred_region
      // Predicated region
      $region29: #{_lambda_.24} parent=27 // pred_check
        %p235 = pneg %p52
      $region30: #{_lambda_.24} parent=27 // pred_check_branch
        %237 = sbr.rel (%p235) target = $region32
      $region31: #{_lambda_.24} parent=27 // pred_region
        %s238 = smul.u32 2, %s20
        %p239 = scmp.lt.s32.totalorder %s18, 0
        %s240 = scalar_select %p239, %s18, 0
        %p241 = scmp.lt.s32.totalorder %s238, 9
        %s242 = scalar_select %p241, %s238, 9
        %s243 = smul.addr %s240, 10
        %s244 = sadd.s32 %s242, %s243
        %s245 = smul.addr %s244, 4
        %s246 = scalar_lea.vmem %s0, %s245
        %s247 = smul.u32 2, %s20
      $region32: #{_lambda_.24} parent=27 // pred_fallthru
        _
      // Predicated region
      $region33: #{_lambda_.24} parent=27 // pred_check
        %p248 = pneg %p80
      $region34: #{_lambda_.24} parent=27 // pred_check_branch
        %250 = sbr.rel (%p248) target = $region36
      $region35: #{_lambda_.24} parent=27 // pred_region
        %s251 = smul.u32 32, %s20
        %p252 = scmp.lt.s32.totalorder %s251, 159
        %s253 = scalar_select %p252, %s251, 159
        %p254 = scmp.lt.s32.totalorder %s19, 0
        %s255 = scalar_select %p254, %s19, 0
        %s256 = sadd.s32 %s255, %s253
        %s257 = smul.addr %s256, 4
        %s258 = scalar_lea.vmem %s1, %s257
        %s259 = smul.u32 32, %s20
      $region36: #{_lambda_.24} parent=27 // pred_fallthru
        _
    $region28: #{_lambda_.24} parent=5 // pred_fallthru
      _
    %p260 = scmp.le.s32.totalorder 1, %s11
    %p261 = scmp.lt.s32.totalorder %s11, 6
    %p262 = pnand %p260, %p261
    %p263 = pneg %p262
    // Predicated region
    $region37: #{_lambda_.24} parent=5 // pred_check
      _
    $region38: #{_lambda_.24} parent=5 // pred_check_branch
      %265 = sbr.rel (%p262) target = $region40
    $region39: #{_lambda_.24} parent=5 // pred_region
      %s266 = ssub.s32 %s11, 1
      %s267 = smul.u32 2, %s23
      %p268 = scmp.lt.s32.totalorder %s21, 0
      %s269 = scalar_select %p268, %s21, 0
      %p270 = scmp.lt.s32.totalorder %s267, 9
      %s271 = scalar_select %p270, %s267, 9
      %s272 = smul.addr %s269, 10
      %s273 = sadd.s32 %s271, %s272
      %s274 = smul.addr %s273, 4
      %s275 = scalar_lea.vmem %s0, %s274
      %p276 = pneg %p58
      %p277 = pneg %p55
      %s278 = smul.u32 32, %s23
      %p279 = scmp.lt.s32.totalorder %s278, 159
      %s280 = scalar_select %p279, %s278, 159
      %p281 = scmp.lt.s32.totalorder %s22, 0
      %s282 = scalar_select %p281, %s22, 0
      %s283 = sadd.s32 %s282, %s280
      %s284 = smul.addr %s283, 4
      %s285 = scalar_lea.vmem %s1, %s284
      %p286 = pneg %p86
      %p287 = pneg %p83
      %p288 = scmp.lt.s32.totalorder %s22, 0
      %s289 = scalar_select %p288, %s22, 0
      %s290 = scalar_lea.vmem %s2, %s289
      %p291 = pneg %p112
      %p292 = pneg %p109
      %p293 = scmp.lt.s32.totalorder %s22, 0
      %s294 = scalar_select %p293, %s22, 0
      %s295 = scalar_lea.vmem %s3, %s294
      %p296 = pneg %p138
      %p297 = pneg %p135
      %p298 = scmp.lt.s32.totalorder %s21, 0
      %s299 = scalar_select %p298, %s21, 0
      %p300 = scmp.lt.s32.totalorder %s22, 0
      %s301 = scalar_select %p300, %s22, 0
      %s302 = sadd.s32 %s301, %s299
      %s303 = smul.addr %s302, 8
      %s304 = scalar_lea.vmem %s4, %s303
      %p305 = pneg %p166
      %p306 = pneg %p163
      %p307 = pneg %p194
      %p308 = pneg %p191
      %p309 = scmp.lt.s32.totalorder %s21, 0
      %s310 = scalar_select %p309, %s21, 0
      %p311 = scmp.lt.s32.totalorder %s22, 0
      %s312 = scalar_select %p311, %s22, 0
      %s313 = sadd.s32 %s312, %s310
      %s314 = smul.addr %s313, 8
      %s315 = scalar_lea.vmem %s5, %s314
      %s316 = smul.u32 2, %s23
      %p317 = scmp.lt.s32.totalorder %s21, 0
      %s318 = scalar_select %p317, %s21, 0
      %p319 = scmp.lt.s32.totalorder %s316, 9
      %s320 = scalar_select %p319, %s316, 9
      %s321 = smul.addr %s318, 10
      %s322 = sadd.s32 %s320, %s321
      %s323 = smul.addr %s322, 4
      %s324 = scalar_lea.vmem %s0, %s323
      %s325 = smul.u32 2, %s23
      %s326 = smul.u32 32, %s23
      %p327 = scmp.lt.s32.totalorder %s326, 159
      %s328 = scalar_select %p327, %s326, 159
      %p329 = scmp.lt.s32.totalorder %s22, 0
      %s330 = scalar_select %p329, %s22, 0
      %s331 = sadd.s32 %s330, %s328
      %s332 = smul.addr %s331, 4
      %s333 = scalar_lea.vmem %s1, %s332
      %s334 = smul.u32 32, %s23
      %p335 = scmp.lt.s32.totalorder %s22, 0
      %s336 = scalar_select %p335, %s22, 0
      %s337 = scalar_lea.vmem %s2, %s336
      %p338 = scmp.lt.s32.totalorder %s22, 0
      %s339 = scalar_select %p338, %s22, 0
      %s340 = scalar_lea.vmem %s3, %s339
      %p341 = scmp.lt.s32.totalorder %s21, 0
      %s342 = scalar_select %p341, %s21, 0
      %p343 = scmp.lt.s32.totalorder %s22, 0
      %s344 = scalar_select %p343, %s22, 0
      %s345 = sadd.s32 %s344, %s342
      %s346 = smul.addr %s345, 8
      %s347 = scalar_lea.vmem %s4, %s346
      %p348 = scmp.lt.s32.totalorder %s21, 0
      %s349 = scalar_select %p348, %s21, 0
      %p350 = scmp.lt.s32.totalorder %s22, 0
      %s351 = scalar_select %p350, %s22, 0
      %s352 = sadd.s32 %s351, %s349
      %s353 = smul.addr %s352, 8
      %s354 = scalar_lea.vmem %s5, %s353
      %p356 = scmp.eq.s32.totalorder %s23, 0
      // Predicated region
      $region41: #{_lambda_.24} parent=39 // pred_check
        %p357 = pneg %p356
      $region42: #{_lambda_.24} parent=39 // pred_check_branch
        %359 = sbr.rel (%p357) target = $region44
      $region43: #{_lambda_.24} parent=39 // pred_region
        %360 = vst [vmem:[%s354] sm:$0xff] 0.0
      $region44: #{_lambda_.24} parent=39 // pred_fallthru
        _
      %v361 = vld [vmem:[%s354] sm:$0xff]
      %v362 = vld [vmem:[%s324] sm:$0xff]
      %v363 = vld [vmem:[%s333] sm:$0xf]
      %v364 = vld [vmem:[%s333 + $0x4] sm:$0xf]
      %v365 = vld [vmem:[%s333 + $0x8] sm:$0xf]
      %v366 = vld [vmem:[%s333 + $0xc] sm:$0xf]
      %v367 = vld [vmem:[%s333 + $0x10] sm:$0xf]
      %v368 = vld [vmem:[%s333 + $0x14] sm:$0xf]
      %v369 = vld [vmem:[%s333 + $0x18] sm:$0xf]
      %v370 = vld [vmem:[%s333 + $0x1c] sm:$0xf]
      %v371 = vld [vmem:[%s333 + $0x20] sm:$0xf]
      %v372 = vld [vmem:[%s333 + $0x24] sm:$0xf]
      %v373 = vld [vmem:[%s333 + $0x28] sm:$0xf]
      %v374 = vld [vmem:[%s333 + $0x2c] sm:$0xf]
      %v375 = vld [vmem:[%s333 + $0x30] sm:$0xf]
      %v376 = vld [vmem:[%s333 + $0x34] sm:$0xf]
      %v377 = vld [vmem:[%s333 + $0x38] sm:$0xf]
      %v378 = vld [vmem:[%s333 + $0x3c] sm:$0xf]
      %v379 = vld [vmem:[%s333 + $0x40] sm:$0xf]
      %v380 = vld [vmem:[%s333 + $0x44] sm:$0xf]
      %v381 = vld [vmem:[%s333 + $0x48] sm:$0xf]
      %v382 = vld [vmem:[%s333 + $0x4c] sm:$0xf]
      %v383 = vld [vmem:[%s333 + $0x50] sm:$0xf]
      %v384 = vld [vmem:[%s333 + $0x54] sm:$0xf]
      %v385 = vld [vmem:[%s333 + $0x58] sm:$0xf]
      %v386 = vld [vmem:[%s333 + $0x5c] sm:$0xf]
      %v387 = vld [vmem:[%s333 + $0x60] sm:$0xf]
      %v388 = vld [vmem:[%s333 + $0x64] sm:$0xf]
      %v389 = vld [vmem:[%s333 + $0x68] sm:$0xf]
      %v390 = vld [vmem:[%s333 + $0x6c] sm:$0xf]
      %v391 = vld [vmem:[%s333 + $0x70] sm:$0xf]
      %v392 = vld [vmem:[%s333 + $0x74] sm:$0xf]
      %v393 = vld [vmem:[%s333 + $0x78] sm:$0xf]
      %v394 = vld [vmem:[%s333 + $0x7c] sm:$0xf]
      %v396 = vunpack.c.l.b16 %v362
      %v397 = vunpack.c.h.b16 %v362
      %v398 = vpack.c.b16 %v396, %v396
      %v399 = vpack.c.b16 %v397, %v397
      %v434 = vunpack.c.l.b16 %v363
      %v435 = vunpack.c.l.b16 %v364
      %v436 = vunpack.c.l.b16 %v365
      %v437 = vunpack.c.l.b16 %v366
      %v438 = vunpack.c.l.b16 %v367
      %v439 = vunpack.c.l.b16 %v368
      %v440 = vunpack.c.l.b16 %v369
      %v441 = vunpack.c.l.b16 %v370
      %v442 = vunpack.c.l.b16 %v371
      %v443 = vunpack.c.l.b16 %v372
      %v444 = vunpack.c.l.b16 %v373
      %v445 = vunpack.c.l.b16 %v374
      %v446 = vunpack.c.l.b16 %v375
      %v447 = vunpack.c.l.b16 %v376
      %v448 = vunpack.c.l.b16 %v377
      %v449 = vunpack.c.l.b16 %v378
      %v450 = vunpack.c.l.b16 %v379
      %v451 = vunpack.c.l.b16 %v380
      %v452 = vunpack.c.l.b16 %v381
      %v453 = vunpack.c.l.b16 %v382
      %v454 = vunpack.c.l.b16 %v383
      %v455 = vunpack.c.l.b16 %v384
      %v456 = vunpack.c.l.b16 %v385
      %v457 = vunpack.c.l.b16 %v386
      %v458 = vunpack.c.l.b16 %v387
      %v459 = vunpack.c.l.b16 %v388
      %v460 = vunpack.c.l.b16 %v389
      %v461 = vunpack.c.l.b16 %v390
      %v462 = vunpack.c.l.b16 %v391
      %v463 = vunpack.c.l.b16 %v392
      %v464 = vunpack.c.l.b16 %v393
      %v465 = vunpack.c.l.b16 %v394
      %v466 = vpack.c.b16 %v435, %v434
      %v467 = vpack.c.b16 %v437, %v436
      %v468 = vpack.c.b16 %v439, %v438
      %v469 = vpack.c.b16 %v441, %v440
      %v470 = vpack.c.b16 %v443, %v442
      %v471 = vpack.c.b16 %v445, %v444
      %v472 = vpack.c.b16 %v447, %v446
      %v473 = vpack.c.b16 %v449, %v448
      %v474 = vpack.c.b16 %v451, %v450
      %v475 = vpack.c.b16 %v453, %v452
      %v476 = vpack.c.b16 %v455, %v454
      %v477 = vpack.c.b16 %v457, %v456
      %v478 = vpack.c.b16 %v459, %v458
      %v479 = vpack.c.b16 %v461, %v460
      %v480 = vpack.c.b16 %v463, %v462
      %v481 = vpack.c.b16 %v465, %v464
      %498 = vmatprep.subr.bf16.mxu0 0
      %499 = vmatpush1.bf16.msra.mxu0 %v473
      %500 = vmatprep.subr.bf16.mxu0 0
      %501 = vmatpush1.bf16.msra.mxu0 %v472
      %502 = vmatprep.subr.bf16.mxu0 0
      %503 = vmatpush1.bf16.msra.mxu0 %v471
      %504 = vmatprep.subr.bf16.mxu0 0
      %505 = vmatpush1.bf16.msra.mxu0 %v470
      %506 = vmatprep.subr.bf16.mxu0 0
      %507 = vmatpush1.bf16.msra.mxu0 %v469
      %508 = vmatprep.subr.bf16.mxu0 0
      %509 = vmatpush1.bf16.msra.mxu0 %v468
      %510 = vmatprep.subr.bf16.mxu0 0
      %511 = vmatpush1.bf16.msra.mxu0 %v467
      %512 = vmatprep.subr.bf16.mxu0 0
      %513 = vmatpush1.bf16.msra.mxu0 %v466
      %514 = vmatprep.subr.bf16.mxu0 0
      %515 = vmatpush2.bf16.msra.mxu0 %v481
      %516 = vmatprep.subr.bf16.mxu0 0
      %517 = vmatpush2.bf16.msra.mxu0 %v480
      %518 = vmatprep.subr.bf16.mxu0 0
      %519 = vmatpush2.bf16.msra.mxu0 %v479
      %520 = vmatprep.subr.bf16.mxu0 0
      %521 = vmatpush2.bf16.msra.mxu0 %v478
      %522 = vmatprep.subr.bf16.mxu0 0
      %523 = vmatpush2.bf16.msra.mxu0 %v477
      %524 = vmatprep.subr.bf16.mxu0 0
      %525 = vmatpush2.bf16.msra.mxu0 %v476
      %526 = vmatprep.subr.bf16.mxu0 0
      %527 = vmatpush2.bf16.msra.mxu0 %v475
      %528 = vmatprep.subr.bf16.mxu0 0
      %529 = vmatpush2.bf16.msra.mxu0 %v474
      %530 = vmatprep.mubr.bf16.mxu0 %v399
      %531 = vmatmul.mubr.bf16.gmra.mxu0 %v398
      %v532 = vpop.f32.mrf.mxu0
      %v533 = vadd.f32 0.0, %v532
      %v534 = vpop.f32.mrf.mxu0
      %v535 = vpop.f32.mrf.mxu0
      %v536 = vpop.f32.mrf.mxu0
      %537 = vdwg.mxu0
      %v538 = vadd.f32 %v361, %v533
      %539 = vst [vmem:[%s354] sm:$0xff] %v538
      %p540 = scmp.eq.s32.totalorder %s23, 4
      // Predicated region
      $region45: #{_lambda_.24} parent=39 // pred_check
        %p541 = pneg %p540
      $region46: #{_lambda_.24} parent=39 // pred_check_branch
        %543 = sbr.rel (%p541) target = $region48
      $region47: #{_lambda_.24} parent=39 // pred_region
        %v544 = vld [vmem:[%s354] sm:$0xff]
        %v545 = vld [vmem:[%s337] sm:$0x1]
        %v547 = vlaneseq
        %v548 = vshrl.u32 %v547, 7
        %v549 = vsub.s32 0, %v548
        %v550 = vrot.slane %v545, %v549
        %v552 = vmul.f32 %v544, %v550
        %v553 = vld [vmem:[%s340] sm:$0x1]
        %v555 = vlaneseq
        %v556 = vshrl.u32 %v555, 7
        %v557 = vsub.s32 0, %v556
        %v558 = vrot.slane %v553, %v557
        %v560 = vadd.f32 %v552, %v558
        %v561 = vld [vmem:[%s347] sm:$0xff]
        %v562 = vadd.f32 %v560, %v561
        %v563 = vmax.f32 %v562, 0.0
        %564 = vst [vmem:[%s354] sm:$0xff] %v563
      $region48: #{_lambda_.24} parent=39 // pred_fallthru
        _
      %p565 = scmp.lt.s32.totalorder %s21, 0
      %s566 = scalar_select %p565, %s21, 0
      %p567 = scmp.lt.s32.totalorder %s22, 0
      %s568 = scalar_select %p567, %s22, 0
      %s569 = sadd.s32 %s568, %s566
      %s570 = smul.addr %s569, 8
      %s571 = scalar_lea.vmem %s5, %s570
      // Predicated region
      $region49: #{_lambda_.24} parent=39 // pred_check
        %p572 = pneg %p191
      $region50: #{_lambda_.24} parent=39 // pred_check_branch
        %574 = sbr.rel (%p572) target = $region52
      $region51: #{_lambda_.24} parent=39 // pred_region
        _
      $region52: #{_lambda_.24} parent=39 // pred_fallthru
        _
      // Predicated region
      $region53: #{_lambda_.24} parent=39 // pred_check
        %p575 = pneg %p191
      $region54: #{_lambda_.24} parent=39 // pred_check_branch
        %577 = sbr.rel (%p575) target = $region56
      $region55: #{_lambda_.24} parent=39 // pred_region
        %p578 = scmp.lt.s32.totalorder %s21, 0
        %s579 = scalar_select %p578, %s21, 0
        %p580 = scmp.lt.s32.totalorder %s22, 0
        %s581 = scalar_select %p580, %s22, 0
        %s582 = sadd.s32 %s581, %s579
        %s583 = smul.addr %s582, 8
        %s584 = scalar_lea.vmem %s5, %s583
      $region56: #{_lambda_.24} parent=39 // pred_fallthru
        _
    $region40: #{_lambda_.24} parent=5 // pred_fallthru
      _
    %p585 = scmp.le.s32.totalorder 2, %s11
    // Predicated region
    $region57: #{_lambda_.24} parent=5 // pred_check
      %p586 = pneg %p585
    $region58: #{_lambda_.24} parent=5 // pred_check_branch
      %588 = sbr.rel (%p586) target = $region60
    $region59: #{_lambda_.24} parent=5 // pred_region
      %s589 = ssub.s32 %s11, 2
    $region60: #{_lambda_.24} parent=5 // pred_fallthru
      _
  $region6: #{_lambda_.24} parent=0 // loop_footer
    %s15 = sadd.s32 1, %s11
  $region7: #{_lambda_.24} parent=0 // loop_footer_branch
    %10 = sbr.rel target = $region3
  $region8: #{_lambda_.24} parent=0 // loop_exit
    _

// kernel: _lambda_.25
$region0: #{_lambda_.25}
  #allocation0 [shape = 'u32[]', space=smem, size = 0x4, offset = 0x4, fixed_abs, tag = 'smem constant byte address 0x4 - core index']
  #allocation1 [shape = 'u32[144,128]{1,0:T(1,128)}', space=vmem, size = 0x12000, scoped, tag = 'internal scratch']
  %s0 = inlined_call_operand.vmem [shape: bf16[8,128], index: 0, kind: input, shape index: {}]
  %s1 = inlined_call_operand.vmem [shape: bf16[128,128], index: 1, kind: input, shape index: {}]
  %s2 = inlined_call_operand.vmem [shape: f32[1,128], index: 2, kind: input, shape index: {}]
  %s3 = inlined_call_operand.vmem [shape: f32[1,128], index: 3, kind: input, shape index: {}]
  %s4 = inlined_call_operand.vmem [shape: f32[8,128], index: 4, kind: output, shape index: {}]
  %s5 = sld [smem:[#allocation0]]
  $region34: #{_lambda_.25} parent=0
    _
  %s7 = ssub.s32 1, %s5
  %s8 = scalar_select 0, %s7, %s5
  // Predicated region
  $region2: #{_lambda_.25} parent=0 // pred_check
    _
  $region3: #{_lambda_.25} parent=0 // pred_check_branch
    %10 = sbr.rel (0) target = $region5
  $region4: #{_lambda_.25} parent=0 // pred_region
    _
  $region5: #{_lambda_.25} parent=0 // pred_fallthru
    _
  // Predicated region
  $region6: #{_lambda_.25} parent=0 // pred_check
    _
  $region7: #{_lambda_.25} parent=0 // pred_check_branch
    %12 = sbr.rel (0) target = $region9
  $region8: #{_lambda_.25} parent=0 // pred_region
    _
  $region9: #{_lambda_.25} parent=0 // pred_fallthru
    _
  // Predicated region
  $region10: #{_lambda_.25} parent=0 // pred_check
    _
  $region11: #{_lambda_.25} parent=0 // pred_check_branch
    %14 = sbr.rel (0) target = $region13
  $region12: #{_lambda_.25} parent=0 // pred_region
    _
  $region13: #{_lambda_.25} parent=0 // pred_fallthru
    _
  // Predicated region
  $region14: #{_lambda_.25} parent=0 // pred_check
    _
  $region15: #{_lambda_.25} parent=0 // pred_check_branch
    %16 = sbr.rel (0) target = $region17
  $region16: #{_lambda_.25} parent=0 // pred_region
    _
  $region17: #{_lambda_.25} parent=0 // pred_fallthru
    _
  %p18 = scmp.eq.s32.totalorder 0, 0
  // Predicated region
  $region18: #{_lambda_.25} parent=0 // pred_check
    %p19 = pneg %p18
  $region19: #{_lambda_.25} parent=0 // pred_check_branch
    %21 = sbr.rel (%p19) target = $region21
  $region20: #{_lambda_.25} parent=0 // pred_region
    %22 = vst [vmem:[%s4] sm:$0xff] 0.0
  $region21: #{_lambda_.25} parent=0 // pred_fallthru
    _
  %v23 = vld [vmem:[%s4] sm:$0xff]
  %v24 = vld [vmem:[%s0] sm:$0xf]
  %v25 = vld [vmem:[%s1] sm:$0xf]
  %v26 = vld [vmem:[%s1 + $0x4] sm:$0xf]
  %v27 = vld [vmem:[%s1 + $0x8] sm:$0xf]
  %v28 = vld [vmem:[%s1 + $0xc] sm:$0xf]
  %v29 = vld [vmem:[%s1 + $0x10] sm:$0xf]
  %v30 = vld [vmem:[%s1 + $0x14] sm:$0xf]
  %v31 = vld [vmem:[%s1 + $0x18] sm:$0xf]
  %v32 = vld [vmem:[%s1 + $0x1c] sm:$0xf]
  %v33 = vld [vmem:[%s1 + $0x20] sm:$0xf]
  %v34 = vld [vmem:[%s1 + $0x24] sm:$0xf]
  %v35 = vld [vmem:[%s1 + $0x28] sm:$0xf]
  %v36 = vld [vmem:[%s1 + $0x2c] sm:$0xf]
  %v37 = vld [vmem:[%s1 + $0x30] sm:$0xf]
  %v38 = vld [vmem:[%s1 + $0x34] sm:$0xf]
  %v39 = vld [vmem:[%s1 + $0x38] sm:$0xf]
  %v40 = vld [vmem:[%s1 + $0x3c] sm:$0xf]
  %v57 = vunpack.c.l.b16 %v25
  %v58 = vunpack.c.l.b16 %v26
  %v59 = vunpack.c.l.b16 %v27
  %v60 = vunpack.c.l.b16 %v28
  %v61 = vunpack.c.l.b16 %v29
  %v62 = vunpack.c.l.b16 %v30
  %v63 = vunpack.c.l.b16 %v31
  %v64 = vunpack.c.l.b16 %v32
  %v65 = vunpack.c.l.b16 %v33
  %v66 = vunpack.c.l.b16 %v34
  %v67 = vunpack.c.l.b16 %v35
  %v68 = vunpack.c.l.b16 %v36
  %v69 = vunpack.c.l.b16 %v37
  %v70 = vunpack.c.l.b16 %v38
  %v71 = vunpack.c.l.b16 %v39
  %v72 = vunpack.c.l.b16 %v40
  %v73 = vpack.c.b16 %v58, %v57
  %v74 = vpack.c.b16 %v60, %v59
  %v75 = vpack.c.b16 %v62, %v61
  %v76 = vpack.c.b16 %v64, %v63
  %v77 = vpack.c.b16 %v66, %v65
  %v78 = vpack.c.b16 %v68, %v67
  %v79 = vpack.c.b16 %v70, %v69
  %v80 = vpack.c.b16 %v72, %v71
  %89 = vmatprep.subr.bf16.mxu0 0
  %90 = vmatpush1.bf16.msra.mxu0 %v80
  %91 = vmatprep.subr.bf16.mxu0 0
  %92 = vmatpush1.bf16.msra.mxu0 %v79
  %93 = vmatprep.subr.bf16.mxu0 0
  %94 = vmatpush1.bf16.msra.mxu0 %v78
  %95 = vmatprep.subr.bf16.mxu0 0
  %96 = vmatpush1.bf16.msra.mxu0 %v77
  %97 = vmatprep.subr.bf16.mxu0 0
  %98 = vmatpush1.bf16.msra.mxu0 %v76
  %99 = vmatprep.subr.bf16.mxu0 0
  %100 = vmatpush1.bf16.msra.mxu0 %v75
  %101 = vmatprep.subr.bf16.mxu0 0
  %102 = vmatpush1.bf16.msra.mxu0 %v74
  %103 = vmatprep.subr.bf16.mxu0 0
  %104 = vmatpush1.bf16.msra.mxu0 %v73
  %105 = vmatprep.subr.bf16.mxu0 0
  %106 = vmatpush2.bf16.msra.mxu0 0
  %107 = vmatprep.subr.bf16.mxu0 0
  %108 = vmatpush2.bf16.msra.mxu0 0
  %109 = vmatprep.subr.bf16.mxu0 0
  %110 = vmatpush2.bf16.msra.mxu0 0
  %111 = vmatprep.subr.bf16.mxu0 0
  %112 = vmatpush2.bf16.msra.mxu0 0
  %113 = vmatprep.subr.bf16.mxu0 0
  %114 = vmatpush2.bf16.msra.mxu0 0
  %115 = vmatprep.subr.bf16.mxu0 0
  %116 = vmatpush2.bf16.msra.mxu0 0
  %117 = vmatprep.subr.bf16.mxu0 0
  %118 = vmatpush2.bf16.msra.mxu0 0
  %119 = vmatprep.subr.bf16.mxu0 0
  %120 = vmatpush2.bf16.msra.mxu0 0
  %121 = vmatprep.mubr.bf16.mxu0 0
  %122 = vmatmul.mubr.bf16.gmra.mxu0 %v24
  %v123 = vpop.f32.mrf.mxu0
  %v124 = vadd.f32 0.0, %v123
  %v125 = vpop.f32.mrf.mxu0
  %v126 = vpop.f32.mrf.mxu0
  %v127 = vpop.f32.mrf.mxu0
  %128 = vdwg.mxu0
  %v129 = vadd.f32 %v23, %v124
  %130 = vst [vmem:[%s4] sm:$0xff] %v129
  // Predicated region
  $region22: #{_lambda_.25} parent=0 // pred_check
    %p131 = pneg %p18
  $region23: #{_lambda_.25} parent=0 // pred_check_branch
    %133 = sbr.rel (%p131) target = $region25
  $region24: #{_lambda_.25} parent=0 // pred_region
    %v134 = vld [vmem:[%s4] sm:$0xff]
    %v135 = vld [vmem:[%s2] sm:$0x1]
    %v137 = vlaneseq
    %v138 = vshrl.u32 %v137, 7
    %v139 = vsub.s32 0, %v138
    %v140 = vrot.slane %v135, %v139
    %v142 = vmul.f32 %v134, %v140
    %v143 = vld [vmem:[%s3] sm:$0x1]
    %v145 = vlaneseq
    %v146 = vshrl.u32 %v145, 7
    %v147 = vsub.s32 0, %v146
    %v148 = vrot.slane %v143, %v147
    %v150 = vadd.f32 %v142, %v148
    %151 = vst [vmem:[%s4] sm:$0xff] %v150
  $region25: #{_lambda_.25} parent=0 // pred_fallthru
    _
  // Predicated region
  $region26: #{_lambda_.25} parent=0 // pred_check
    _
  $region27: #{_lambda_.25} parent=0 // pred_check_branch
    %153 = sbr.rel (0) target = $region29
  $region28: #{_lambda_.25} parent=0 // pred_region
    _
  $region29: #{_lambda_.25} parent=0 // pred_fallthru
    _
  // Predicated region
  $region30: #{_lambda_.25} parent=0 // pred_check
    _
  $region31: #{_lambda_.25} parent=0 // pred_check_branch
    %155 = sbr.rel (0) target = $region33
  $region32: #{_lambda_.25} parent=0 // pred_region
    _
  $region33: #{_lambda_.25} parent=0 // pred_fallthru
    _

</llo_original>
